<compile_context>
chip_gen: v7x
topology: tpu7x:2x2x1
jax: 0.10.0
libtpu: 0.0.40
codegen_flags: <defaults>
</compile_context>

<pallas_src>
import jax
import jax.numpy as jnp
import numpy as np
from jax.experimental import pallas as pl
from jax.experimental.pallas import tpu as pltpu


# Feature dims (first-layer K padded 784 -> 896 = 7*128, last-layer N 10 -> 128).
D_IN, D_IN_PAD = 784, 896
D_H1, D_H2, D_H3 = 2048, 512, 256
D_OUT, D_OUT_PAD = 10, 128


def _round_up(x, m):
    return (x + m - 1) // m * m


def _choose_block_b(batch):
    b8 = _round_up(batch, 8)
    if b8 >= 512:
        return 256   # big tiles keep the 128/256-wide MXU busy
    if b8 >= 256:
        return 128   # >=2 grid tiles so v7x's two TensorCores both get work
    return b8        # small batch: one tile covers everything


def _mlp_kernel(x_ref, w1_ref, b1_ref, w2_ref, b2_ref, w3_ref, b3_ref,
                w4_ref, b4_ref, o_ref):
    """Fused 4-layer MLP forward for one batch tile.

    Weights are bf16 and fully VMEM-resident; each layer is one MXU matmul
    (fp32 accumulation) + fp32 bias-add + fp32 sigmoid on the VPU/EUP. The
    post-sigmoid activations are cast to bf16 only at the dot inputs.
    """
    h = x_ref[...].astype(jnp.bfloat16)
    z = jnp.dot(h, w1_ref[...], preferred_element_type=jnp.float32) + b1_ref[...]
    h = jax.nn.sigmoid(z).astype(jnp.bfloat16)
    z = jnp.dot(h, w2_ref[...], preferred_element_type=jnp.float32) + b2_ref[...]
    h = jax.nn.sigmoid(z).astype(jnp.bfloat16)
    z = jnp.dot(h, w3_ref[...], preferred_element_type=jnp.float32) + b3_ref[...]
    h = jax.nn.sigmoid(z).astype(jnp.bfloat16)
    o_ref[...] = (jnp.dot(h, w4_ref[...], preferred_element_type=jnp.float32)
                  + b4_ref[...]).astype(o_ref.dtype)


def prepare_params(params):
    """Pad + cast (in, out)-layout fp32 params into the kernel's layout.

    * w1 K-dim zero-padded 784 -> 896, w4/b4 output dim zero-padded 10 -> 128.
    * Weights cast to bf16 (fp32 MXU accumulation keeps accuracy), biases fp32.
    """
    w1 = jnp.pad(params["w1"], ((0, D_IN_PAD - D_IN), (0, 0)))
    w4 = jnp.pad(params["w4"], ((0, 0), (0, D_OUT_PAD - D_OUT)))
    b4 = jnp.pad(params["b4"], ((0, 0), (0, D_OUT_PAD - D_OUT)))
    return dict(
        w1=w1.astype(jnp.bfloat16),           b1=params["b1"].astype(jnp.float32),
        w2=params["w2"].astype(jnp.bfloat16), b2=params["b2"].astype(jnp.float32),
        w3=params["w3"].astype(jnp.bfloat16), b3=params["b3"].astype(jnp.float32),
        w4=w4.astype(jnp.bfloat16),           b4=b4.astype(jnp.float32),
    )


@jax.jit
def classifier_forward(x, prepared):
    """x: (B, 784) float32. prepared: output of prepare_params()."""
    B = x.shape[0]
    block_b = _choose_block_b(B)
    B_pad = _round_up(B, block_b)
    x_pad = jnp.pad(x.astype(jnp.float32),
                    ((0, B_pad - B), (0, D_IN_PAD - D_IN)))

    w1, b1 = prepared["w1"], prepared["b1"]
    w2, b2 = prepared["w2"], prepared["b2"]
    w3, b3 = prepared["w3"], prepared["b3"]
    w4, b4 = prepared["w4"], prepared["b4"]

    grid = (B_pad // block_b,)
    # Constant index_map: weights/biases are fetched once and reused across
    # batch tiles. bf16 weights keep even default double-buffering (~12 MiB)
    # well inside v7x's 64 MiB VMEM, so no Buffered(1) override is needed.
    const = lambda arr: pl.BlockSpec(arr.shape, lambda i: (0, 0))

    weight_bytes = sum(int(np.prod(w.shape)) * 2 for w in (w1, w2, w3, w4))
    bias_bytes = sum(int(np.prod(b.shape)) * 4 for b in (b1, b2, b3, b4))
    cost = pl.CostEstimate(
        flops=2 * B_pad * (D_IN_PAD * D_H1 + D_H1 * D_H2
                           + D_H2 * D_H3 + D_H3 * D_OUT_PAD),
        transcendentals=B_pad * (D_H1 + D_H2 + D_H3),
        bytes_accessed=(B_pad * D_IN_PAD * 4 + weight_bytes + bias_bytes
                        + B_pad * D_OUT_PAD * 4),
    )

    out = pl.pallas_call(
        _mlp_kernel,
        out_shape=jax.ShapeDtypeStruct((B_pad, D_OUT_PAD), jnp.float32),
        grid_spec=pltpu.PrefetchScalarGridSpec(
            num_scalar_prefetch=0,
            grid=grid,
            in_specs=[
                pl.BlockSpec((block_b, D_IN_PAD), lambda i: (i, 0)),  # x tile
                const(w1), const(b1),
                const(w2), const(b2),
                const(w3), const(b3),
                const(w4), const(b4),
            ],
            out_specs=pl.BlockSpec((block_b, D_OUT_PAD), lambda i: (i, 0)),
        ),
        compiler_params=pltpu.CompilerParams(
            dimension_semantics=("parallel",),
            vmem_limit_bytes=48 << 20,   # fits v7x's 64 MiB physical VMEM
        ),
        cost_estimate=cost,
    )(x_pad, w1, b1, w2, b2, w3, b3, w4, b4)

    return out[:B, :D_OUT]


def init_params(key):
    """Deterministic init mirroring nn.Linear's U(-1/sqrt(fan_in), +1/sqrt(fan_in)).

    Weights are created in (in_features, out_features) layout (i.e. W_pt.T),
    so the kernel computes y = x @ W + b, matching PyTorch's x @ W_pt.T + b.
    """
    dims = [(784, 2048), (2048, 512), (512, 256), (256, 10)]
    params = {}
    for idx, (d_in, d_out) in enumerate(dims, start=1):
        key, kw, kb = jax.random.split(key, 3)
        bound = 1.0 / np.sqrt(d_in)
        params[f"w{idx}"] = jax.random.uniform(
            kw, (d_in, d_out), jnp.float32, minval=-bound, maxval=bound)
        params[f"b{idx}"] = jax.random.uniform(
            kb, (1, d_out), jnp.float32, minval=-bound, maxval=bound)
    return params


def reference_forward(x, params, *, bf16=False):
    """Pure-JAX reference. bf16=True mirrors the kernel's bf16 dot inputs."""
    def dot(a, w):
        if bf16:
            a = a.astype(jnp.bfloat16)
            w = w.astype(jnp.bfloat16)
        return jnp.dot(a, w, preferred_element_type=jnp.float32)
    h = jax.nn.sigmoid(dot(x, params["w1"]) + params["b1"])
    h = jax.nn.sigmoid(dot(h, params["w2"]) + params["b2"])
    h = jax.nn.sigmoid(dot(h, params["w3"]) + params["b3"])
    return dot(h, params["w4"]) + params["b4"]


if __name__ == "__main__":
    key = jax.random.PRNGKey(0)
    key, kx = jax.random.split(key)
    B = 8
    x = jax.random.normal(kx, (B, D_IN), dtype=jnp.float32)
    params = init_params(key)
    prepared = prepare_params(params)

    out = jax.block_until_ready(classifier_forward(x, prepared))
    assert out.shape == (B, D_OUT)

    # Tight check against a reference using the same bf16 matmul inputs.
    ref_bf16 = jax.block_until_ready(reference_forward(x, params, bf16=True))
    np.testing.assert_allclose(np.asarray(out), np.asarray(ref_bf16),
                               rtol=1e-2, atol=1e-2)
    # Loose check against the exact fp32 PyTorch-equivalent reference.
    ref_f32 = jax.block_until_ready(reference_forward(x, params, bf16=False))
    np.testing.assert_allclose(np.asarray(out), np.asarray(ref_f32),
                               rtol=5e-2, atol=5e-2)

    print("KERNEL_OK")
</pallas_src>

<mosaic_0001>
module attributes {stable_mosaic.version = 11 : i64} {
  func.func @_mlp_kernel(%arg0: i32, %arg1: memref<8x896xf32, #tpu.memory_space<vmem>>, %arg2: memref<896x2048xbf16, #tpu.memory_space<vmem>>, %arg3: memref<1x2048xf32, #tpu.memory_space<vmem>>, %arg4: memref<2048x512xbf16, #tpu.memory_space<vmem>>, %arg5: memref<1x512xf32, #tpu.memory_space<vmem>>, %arg6: memref<512x256xbf16, #tpu.memory_space<vmem>>, %arg7: memref<1x256xf32, #tpu.memory_space<vmem>>, %arg8: memref<256x128xbf16, #tpu.memory_space<vmem>>, %arg9: memref<1x128xf32, #tpu.memory_space<vmem>>, %arg10: memref<8x128xf32, #tpu.memory_space<vmem>>) attributes {dimension_semantics = [#tpu.dimension_semantics<parallel>], iteration_bounds = array<i64: 1>, scalar_prefetch = 0 : i64, scratch_operands = 0 : i64, tpu.core_type = #tpu.core_type<tc>, window_params = [{transform_indices = @transform_0, window_bounds = array<i64: 8, 896>}, {pipeline_mode = #tpu.pipeline_mode<synchronous>, transform_indices = @transform_1, window_bounds = array<i64: 896, 2048>}, {pipeline_mode = #tpu.pipeline_mode<synchronous>, transform_indices = @transform_2, window_bounds = array<i64: 1, 2048>}, {pipeline_mode = #tpu.pipeline_mode<synchronous>, transform_indices = @transform_3, window_bounds = array<i64: 2048, 512>}, {pipeline_mode = #tpu.pipeline_mode<synchronous>, transform_indices = @transform_4, window_bounds = array<i64: 1, 512>}, {pipeline_mode = #tpu.pipeline_mode<synchronous>, transform_indices = @transform_5, window_bounds = array<i64: 512, 256>}, {pipeline_mode = #tpu.pipeline_mode<synchronous>, transform_indices = @transform_6, window_bounds = array<i64: 1, 256>}, {pipeline_mode = #tpu.pipeline_mode<synchronous>, transform_indices = @transform_7, window_bounds = array<i64: 256, 128>}, {pipeline_mode = #tpu.pipeline_mode<synchronous>, transform_indices = @transform_8, window_bounds = array<i64: 1, 128>}, {transform_indices = @transform_9, window_bounds = array<i64: 8, 128>}]} {
    %c0 = arith.constant 0 : index
    %c0_0 = arith.constant 0 : index
    %0 = vector.load %arg1[%c0, %c0_0] : memref<8x896xf32, #tpu.memory_space<vmem>>, vector<8x896xf32>
    %1 = arith.truncf %0 : vector<8x896xf32> to vector<8x896xbf16>
    %c0_1 = arith.constant 0 : index
    %c0_2 = arith.constant 0 : index
    %2 = vector.load %arg2[%c0_1, %c0_2] : memref<896x2048xbf16, #tpu.memory_space<vmem>>, vector<896x2048xbf16>
    %cst = arith.constant dense<0.000000e+00> : vector<8x2048xf32>
    %3 = tpu.matmul %1, %2, %cst {dimension_numbers = #tpu.dot_dimension_numbers<[1], [0], [0], [1], [0, 0, 1, 1], [], []>} : vector<8x896xbf16>, vector<896x2048xbf16>, vector<8x2048xf32> -> vector<8x2048xf32>
    %c0_3 = arith.constant 0 : index
    %c0_4 = arith.constant 0 : index
    %4 = vector.load %arg3[%c0_3, %c0_4] : memref<1x2048xf32, #tpu.memory_space<vmem>>, vector<1x2048xf32>
    %5 = vector.broadcast %4 : vector<1x2048xf32> to vector<8x2048xf32>
    %6 = arith.addf %3, %5 : vector<8x2048xf32>
    %7 = arith.negf %6 : vector<8x2048xf32>
    %8 = math.exp %7 : vector<8x2048xf32>
    %cst_5 = arith.constant 1.000000e+00 : f32
    %9 = vector.broadcast %cst_5 : f32 to vector<8x2048xf32>
    %10 = arith.addf %9, %8 : vector<8x2048xf32>
    %11 = arith.divf %9, %10 : vector<8x2048xf32>
    %12 = arith.truncf %11 : vector<8x2048xf32> to vector<8x2048xbf16>
    %c0_6 = arith.constant 0 : index
    %c0_7 = arith.constant 0 : index
    %13 = vector.load %arg4[%c0_6, %c0_7] : memref<2048x512xbf16, #tpu.memory_space<vmem>>, vector<2048x512xbf16>
    %cst_8 = arith.constant dense<0.000000e+00> : vector<8x512xf32>
    %14 = tpu.matmul %12, %13, %cst_8 {dimension_numbers = #tpu.dot_dimension_numbers<[1], [0], [0], [1], [0, 0, 1, 1], [], []>} : vector<8x2048xbf16>, vector<2048x512xbf16>, vector<8x512xf32> -> vector<8x512xf32>
    %c0_9 = arith.constant 0 : index
    %c0_10 = arith.constant 0 : index
    %15 = vector.load %arg5[%c0_9, %c0_10] : memref<1x512xf32, #tpu.memory_space<vmem>>, vector<1x512xf32>
    %16 = vector.broadcast %15 : vector<1x512xf32> to vector<8x512xf32>
    %17 = arith.addf %14, %16 : vector<8x512xf32>
    %18 = arith.negf %17 : vector<8x512xf32>
    %19 = math.exp %18 : vector<8x512xf32>
    %cst_11 = arith.constant 1.000000e+00 : f32
    %20 = vector.broadcast %cst_11 : f32 to vector<8x512xf32>
    %21 = arith.addf %20, %19 : vector<8x512xf32>
    %22 = arith.divf %20, %21 : vector<8x512xf32>
    %23 = arith.truncf %22 : vector<8x512xf32> to vector<8x512xbf16>
    %c0_12 = arith.constant 0 : index
    %c0_13 = arith.constant 0 : index
    %24 = vector.load %arg6[%c0_12, %c0_13] : memref<512x256xbf16, #tpu.memory_space<vmem>>, vector<512x256xbf16>
    %cst_14 = arith.constant dense<0.000000e+00> : vector<8x256xf32>
    %25 = tpu.matmul %23, %24, %cst_14 {dimension_numbers = #tpu.dot_dimension_numbers<[1], [0], [0], [1], [0, 0, 1, 1], [], []>} : vector<8x512xbf16>, vector<512x256xbf16>, vector<8x256xf32> -> vector<8x256xf32>
    %c0_15 = arith.constant 0 : index
    %c0_16 = arith.constant 0 : index
    %26 = vector.load %arg7[%c0_15, %c0_16] : memref<1x256xf32, #tpu.memory_space<vmem>>, vector<1x256xf32>
    %27 = vector.broadcast %26 : vector<1x256xf32> to vector<8x256xf32>
    %28 = arith.addf %25, %27 : vector<8x256xf32>
    %29 = arith.negf %28 : vector<8x256xf32>
    %30 = math.exp %29 : vector<8x256xf32>
    %cst_17 = arith.constant 1.000000e+00 : f32
    %31 = vector.broadcast %cst_17 : f32 to vector<8x256xf32>
    %32 = arith.addf %31, %30 : vector<8x256xf32>
    %33 = arith.divf %31, %32 : vector<8x256xf32>
    %34 = arith.truncf %33 : vector<8x256xf32> to vector<8x256xbf16>
    %c0_18 = arith.constant 0 : index
    %c0_19 = arith.constant 0 : index
    %35 = vector.load %arg8[%c0_18, %c0_19] : memref<256x128xbf16, #tpu.memory_space<vmem>>, vector<256x128xbf16>
    %cst_20 = arith.constant dense<0.000000e+00> : vector<8x128xf32>
    %36 = tpu.matmul %34, %35, %cst_20 {dimension_numbers = #tpu.dot_dimension_numbers<[1], [0], [0], [1], [0, 0, 1, 1], [], []>} : vector<8x256xbf16>, vector<256x128xbf16>, vector<8x128xf32> -> vector<8x128xf32>
    %c0_21 = arith.constant 0 : index
    %c0_22 = arith.constant 0 : index
    %37 = vector.load %arg9[%c0_21, %c0_22] : memref<1x128xf32, #tpu.memory_space<vmem>>, vector<1x128xf32>
    %38 = vector.broadcast %37 : vector<1x128xf32> to vector<8x128xf32>
    %39 = arith.addf %36, %38 : vector<8x128xf32>
    %c0_23 = arith.constant 0 : index
    %c0_24 = arith.constant 0 : index
    %40 = vector.load %arg10[%c0_23, %c0_24] : memref<8x128xf32, #tpu.memory_space<vmem>>, vector<8x128xf32>
    tpu.vector_store %arg10[%c0_23, %c0_24], %39 {strides = array<i32>} : memref<8x128xf32, #tpu.memory_space<vmem>>, vector<8x128xf32>,
    return
  }
  func.func @transform_0(%arg0: i32) -> (i32, i32) {
    %c0_i32 = arith.constant 0 : i32
    %c0_i32_0 = arith.constant 0 : i32
    return %arg0, %c0_i32 : i32, i32
  }
  func.func @transform_1(%arg0: i32) -> (i32, i32) {
    %c0_i32 = arith.constant 0 : i32
    %c0_i32_0 = arith.constant 0 : i32
    %c0_i32_1 = arith.constant 0 : i32
    return %c0_i32, %c0_i32_0 : i32, i32
  }
  func.func @transform_2(%arg0: i32) -> (i32, i32) {
    %c0_i32 = arith.constant 0 : i32
    %c0_i32_0 = arith.constant 0 : i32
    %c0_i32_1 = arith.constant 0 : i32
    return %c0_i32, %c0_i32_0 : i32, i32
  }
  func.func @transform_3(%arg0: i32) -> (i32, i32) {
    %c0_i32 = arith.constant 0 : i32
    %c0_i32_0 = arith.constant 0 : i32
    %c0_i32_1 = arith.constant 0 : i32
    return %c0_i32, %c0_i32_0 : i32, i32
  }
  func.func @transform_4(%arg0: i32) -> (i32, i32) {
    %c0_i32 = arith.constant 0 : i32
    %c0_i32_0 = arith.constant 0 : i32
    %c0_i32_1 = arith.constant 0 : i32
    return %c0_i32, %c0_i32_0 : i32, i32
  }
  func.func @transform_5(%arg0: i32) -> (i32, i32) {
    %c0_i32 = arith.constant 0 : i32
    %c0_i32_0 = arith.constant 0 : i32
    %c0_i32_1 = arith.constant 0 : i32
    return %c0_i32, %c0_i32_0 : i32, i32
  }
  func.func @transform_6(%arg0: i32) -> (i32, i32) {
    %c0_i32 = arith.constant 0 : i32
    %c0_i32_0 = arith.constant 0 : i32
    %c0_i32_1 = arith.constant 0 : i32
    return %c0_i32, %c0_i32_0 : i32, i32
  }
  func.func @transform_7(%arg0: i32) -> (i32, i32) {
    %c0_i32 = arith.constant 0 : i32
    %c0_i32_0 = arith.constant 0 : i32
    %c0_i32_1 = arith.constant 0 : i32
    return %c0_i32, %c0_i32_0 : i32, i32
  }
  func.func @transform_8(%arg0: i32) -> (i32, i32) {
    %c0_i32 = arith.constant 0 : i32
    %c0_i32_0 = arith.constant 0 : i32
    %c0_i32_1 = arith.constant 0 : i32
    return %c0_i32, %c0_i32_0 : i32, i32
  }
  func.func @transform_9(%arg0: i32) -> (i32, i32) {
    %c0_i32 = arith.constant 0 : i32
    %c0_i32_0 = arith.constant 0 : i32
    return %arg0, %c0_i32 : i32, i32
  }
}

</mosaic_0001>

<llo_original>
// kernel: classifier_forward.1
$region0: #{classifier_forward.1}
  #allocation0 [shape = 'u32[]', space=smem, size = 0x4, offset = 0x4, fixed_abs, tag = 'smem constant byte address 0x4 - core index']
  #allocation1 [shape = 'u32[144,128]{1,0:T(1,128)}', space=vmem, size = 0x12000, scoped, tag = 'internal scratch']
  %s0 = inlined_call_operand.vmem [shape: f32[8,896], index: 0, kind: input, shape index: {}]
  %s1 = inlined_call_operand.hbm [shape: bf16[896,2048], index: 1, kind: input, shape index: {}]
  %s2 = inlined_call_operand.hbm [shape: f32[1,2048], index: 2, kind: input, shape index: {}]
  %s3 = inlined_call_operand.hbm [shape: bf16[2048,512], index: 3, kind: input, shape index: {}]
  %s4 = inlined_call_operand.hbm [shape: f32[1,512], index: 4, kind: input, shape index: {}]
  %s5 = inlined_call_operand.hbm [shape: bf16[512,256], index: 5, kind: input, shape index: {}]
  %s6 = inlined_call_operand.hbm [shape: f32[1,256], index: 6, kind: input, shape index: {}]
  %s7 = inlined_call_operand.hbm [shape: bf16[256,128], index: 7, kind: input, shape index: {}]
  %s8 = inlined_call_operand.hbm [shape: f32[1,128], index: 8, kind: input, shape index: {}]
  %s9 = inlined_call_operand.hbm [shape: f32[8,128], index: 9, kind: output, shape index: {}]
  %s10 = sld [smem:[#allocation0]]
  $region78: #{classifier_forward.1} parent=0
    _
  %s12 = ssub.s32 1, %s10
  %s13 = scalar_select 0, %s12, %s10
  $region1: #{classifier_forward.1} parent=0
    #allocation2 [shape = 'u8[3670016]{0}', space=vmem, size = 0x380000, scoped, tag = 'input window, operand 1, single buffered']
    #allocation3 [shape = 's32[1]{0}', space=sflag, size = 0x4, scoped, tag = 'scoped memory for classifier_forward.1']
    #allocation4 [shape = 's32[1]{0}', space=sflag, size = 0x4, scoped, tag = 'scoped memory for classifier_forward.1']
    #allocation5 [shape = 'u8[8192]{0}', space=vmem, size = 0x2000, scoped, tag = 'input window, operand 2, single buffered']
    #allocation6 [shape = 's32[1]{0}', space=sflag, size = 0x4, scoped, tag = 'scoped memory for classifier_forward.1']
    #allocation7 [shape = 'u8[2097152]{0}', space=vmem, size = 0x200000, scoped, tag = 'input window, operand 3, single buffered']
    #allocation8 [shape = 'u8[2048]{0}', space=vmem, size = 0x800, scoped, tag = 'input window, operand 4, single buffered']
    #allocation9 [shape = 's32[1]{0}', space=sflag, size = 0x4, scoped, tag = 'scoped memory for classifier_forward.1']
    #allocation10 [shape = 'u8[262144]{0}', space=vmem, size = 0x40000, scoped, tag = 'input window, operand 5, single buffered']
    #allocation11 [shape = 'u8[1024]{0}', space=vmem, size = 0x400, scoped, tag = 'input window, operand 6, single buffered']
    #allocation12 [shape = 's32[1]{0}', space=sflag, size = 0x4, scoped, tag = 'scoped memory for classifier_forward.1']
    #allocation13 [shape = 'u8[65536]{0}', space=vmem, size = 0x10000, scoped, tag = 'input window, operand 7, single buffered']
    #allocation14 [shape = 'u8[512]{0}', space=vmem, size = 0x400, scoped, tag = 'input window, operand 8, single buffered']
    #allocation15 [shape = 's32[1]{0}', space=sflag, size = 0x4, scoped, tag = 'scoped memory for classifier_forward.1']
    #allocation16 [shape = 'u8[4096]{0}', space=vmem, size = 0x1000, scoped, tag = 'output window, operand 0, single buffered']
    %14 = vsyncpa [#allocation3], 0
    %15 = vsyncpa [#allocation6], 0
    %16 = vsyncpa [#allocation9], 0
    %17 = vsyncpa [#allocation12], 0
    %18 = vsyncpa [#allocation15], 0
    %19 = vsyncpa [#allocation4], 0
    // Predicated region
    $region2: #{classifier_forward.1} parent=1 // pred_check
      _
    $region3: #{classifier_forward.1} parent=1 // pred_check_branch
      %21 = sbr.rel (0) target = $region5
    $region4: #{classifier_forward.1} parent=1 // pred_region
      _
    $region5: #{classifier_forward.1} parent=1 // pred_fallthru
      _
    // Predicated region
    $region6: #{classifier_forward.1} parent=1 // pred_check
      _
    $region7: #{classifier_forward.1} parent=1 // pred_check_branch
      %23 = sbr.rel (0) target = $region9
    $region8: #{classifier_forward.1} parent=1 // pred_region
      %s25 = ssub.s32 114688, 114688
      %26 = vsyncadd [#allocation3], %s25
      %s27 = sshll.u32 [#allocation2], 4
      %s28 = int_to_ptr.vmem [resolvable:$true] %s27
      %33 = dma.hbm_to_vmem [thread:$0]  %s1, 114688, %s28, [#allocation3], 1024, 1024, 64
    $region9: #{classifier_forward.1} parent=1 // pred_fallthru
      _
    // Predicated region
    $region10: #{classifier_forward.1} parent=1 // pred_check
      _
    $region11: #{classifier_forward.1} parent=1 // pred_check_branch
      %35 = sbr.rel (0) target = $region13
    $region12: #{classifier_forward.1} parent=1 // pred_region
      %s37 = ssub.s32 256, 256
      %38 = vsyncadd [#allocation6], %s37
      %s40 = sshll.u32 [#allocation5], 4
      %s41 = int_to_ptr.vmem [resolvable:$true] %s40
      %43 = dma.hbm_to_vmem [thread:$0]  %s2, 256, %s41, [#allocation6]
    $region13: #{classifier_forward.1} parent=1 // pred_fallthru
      _
    // Predicated region
    $region14: #{classifier_forward.1} parent=1 // pred_check
      _
    $region15: #{classifier_forward.1} parent=1 // pred_check_branch
      %45 = sbr.rel (0) target = $region17
    $region16: #{classifier_forward.1} parent=1 // pred_region
      %s47 = ssub.s32 65536, 65536
      %48 = vsyncadd [#allocation6], %s47
      %s49 = sshll.u32 [#allocation7], 4
      %s50 = int_to_ptr.vmem [resolvable:$true] %s49
      %55 = dma.hbm_to_vmem [thread:$0]  %s3, 65536, %s50, [#allocation6], 256, 256, 16
    $region17: #{classifier_forward.1} parent=1 // pred_fallthru
      _
    // Predicated region
    $region18: #{classifier_forward.1} parent=1 // pred_check
      _
    $region19: #{classifier_forward.1} parent=1 // pred_check_branch
      %57 = sbr.rel (0) target = $region21
    $region20: #{classifier_forward.1} parent=1 // pred_region
      %s59 = ssub.s32 64, 64
      %60 = vsyncadd [#allocation9], %s59
      %s62 = sshll.u32 [#allocation8], 4
      %s63 = int_to_ptr.vmem [resolvable:$true] %s62
      %65 = dma.hbm_to_vmem [thread:$0]  %s4, 64, %s63, [#allocation9]
    $region21: #{classifier_forward.1} parent=1 // pred_fallthru
      _
    // Predicated region
    $region22: #{classifier_forward.1} parent=1 // pred_check
      _
    $region23: #{classifier_forward.1} parent=1 // pred_check_branch
      %67 = sbr.rel (0) target = $region25
    $region24: #{classifier_forward.1} parent=1 // pred_region
      %s69 = ssub.s32 8192, 8192
      %70 = vsyncadd [#allocation9], %s69
      %s71 = sshll.u32 [#allocation10], 4
      %s72 = int_to_ptr.vmem [resolvable:$true] %s71
      %77 = dma.hbm_to_vmem [thread:$0]  %s5, 8192, %s72, [#allocation9], 128, 128, 8
    $region25: #{classifier_forward.1} parent=1 // pred_fallthru
      _
    // Predicated region
    $region26: #{classifier_forward.1} parent=1 // pred_check
      _
    $region27: #{classifier_forward.1} parent=1 // pred_check_branch
      %79 = sbr.rel (0) target = $region29
    $region28: #{classifier_forward.1} parent=1 // pred_region
      %s81 = ssub.s32 32, 32
      %82 = vsyncadd [#allocation12], %s81
      %s84 = sshll.u32 [#allocation11], 4
      %s85 = int_to_ptr.vmem [resolvable:$true] %s84
      %87 = dma.hbm_to_vmem [thread:$0]  %s6, 32, %s85, [#allocation12]
    $region29: #{classifier_forward.1} parent=1 // pred_fallthru
      _
    // Predicated region
    $region30: #{classifier_forward.1} parent=1 // pred_check
      _
    $region31: #{classifier_forward.1} parent=1 // pred_check_branch
      %89 = sbr.rel (0) target = $region33
    $region32: #{classifier_forward.1} parent=1 // pred_region
      %s91 = ssub.s32 2048, 2048
      %92 = vsyncadd [#allocation12], %s91
      %s93 = sshll.u32 [#allocation13], 4
      %s94 = int_to_ptr.vmem [resolvable:$true] %s93
      %99 = dma.hbm_to_vmem [thread:$0]  %s7, 2048, %s94, [#allocation12], 64, 64, 4
    $region33: #{classifier_forward.1} parent=1 // pred_fallthru
      _
    // Predicated region
    $region34: #{classifier_forward.1} parent=1 // pred_check
      _
    $region35: #{classifier_forward.1} parent=1 // pred_check_branch
      %101 = sbr.rel (0) target = $region37
    $region36: #{classifier_forward.1} parent=1 // pred_region
      %s103 = ssub.s32 16, 16
      %104 = vsyncadd [#allocation15], %s103
      %s106 = sshll.u32 [#allocation14], 4
      %s107 = int_to_ptr.vmem [resolvable:$true] %s106
      %109 = dma.hbm_to_vmem [thread:$0]  %s8, 16, %s107, [#allocation15]
    $region37: #{classifier_forward.1} parent=1 // pred_fallthru
      _
    // Predicated region
    $region38: #{classifier_forward.1} parent=1 // pred_check
      _
    $region39: #{classifier_forward.1} parent=1 // pred_check_branch
      %111 = sbr.rel (0) target = $region41
    $region40: #{classifier_forward.1} parent=1 // pred_region
      %112 = dma.done [#allocation3], 114688
    $region41: #{classifier_forward.1} parent=1 // pred_fallthru
      _
    // Predicated region
    $region42: #{classifier_forward.1} parent=1 // pred_check
      _
    $region43: #{classifier_forward.1} parent=1 // pred_check_branch
      %114 = sbr.rel (0) target = $region45
    $region44: #{classifier_forward.1} parent=1 // pred_region
      %115 = dma.done [#allocation6], 256
    $region45: #{classifier_forward.1} parent=1 // pred_fallthru
      _
    // Predicated region
    $region46: #{classifier_forward.1} parent=1 // pred_check
      _
    $region47: #{classifier_forward.1} parent=1 // pred_check_branch
      %117 = sbr.rel (0) target = $region49
    $region48: #{classifier_forward.1} parent=1 // pred_region
      %118 = dma.done [#allocation6], 65536
    $region49: #{classifier_forward.1} parent=1 // pred_fallthru
      _
    // Predicated region
    $region50: #{classifier_forward.1} parent=1 // pred_check
      _
    $region51: #{classifier_forward.1} parent=1 // pred_check_branch
      %120 = sbr.rel (0) target = $region53
    $region52: #{classifier_forward.1} parent=1 // pred_region
      %121 = dma.done [#allocation9], 64
    $region53: #{classifier_forward.1} parent=1 // pred_fallthru
      _
    // Predicated region
    $region54: #{classifier_forward.1} parent=1 // pred_check
      _
    $region55: #{classifier_forward.1} parent=1 // pred_check_branch
      %123 = sbr.rel (0) target = $region57
    $region56: #{classifier_forward.1} parent=1 // pred_region
      %124 = dma.done [#allocation9], 8192
    $region57: #{classifier_forward.1} parent=1 // pred_fallthru
      _
    // Predicated region
    $region58: #{classifier_forward.1} parent=1 // pred_check
      _
    $region59: #{classifier_forward.1} parent=1 // pred_check_branch
      %126 = sbr.rel (0) target = $region61
    $region60: #{classifier_forward.1} parent=1 // pred_region
      %127 = dma.done [#allocation12], 32
    $region61: #{classifier_forward.1} parent=1 // pred_fallthru
      _
    // Predicated region
    $region62: #{classifier_forward.1} parent=1 // pred_check
      _
    $region63: #{classifier_forward.1} parent=1 // pred_check_branch
      %129 = sbr.rel (0) target = $region65
    $region64: #{classifier_forward.1} parent=1 // pred_region
      %130 = dma.done [#allocation12], 2048
    $region65: #{classifier_forward.1} parent=1 // pred_fallthru
      _
    // Predicated region
    $region66: #{classifier_forward.1} parent=1 // pred_check
      _
    $region67: #{classifier_forward.1} parent=1 // pred_check_branch
      %132 = sbr.rel (0) target = $region69
    $region68: #{classifier_forward.1} parent=1 // pred_region
      %133 = dma.done [#allocation15], 16
    $region69: #{classifier_forward.1} parent=1 // pred_fallthru
      _
    %v135 = vld [vmem:[%s0] sm:$0xff]
    %v136 = vld [vmem:[%s0 + $0x8] sm:$0xff]
    %v137 = vld [vmem:[%s0 + $0x10] sm:$0xff]
    %v138 = vld [vmem:[%s0 + $0x18] sm:$0xff]
    %v139 = vld [vmem:[%s0 + $0x20] sm:$0xff]
    %v140 = vld [vmem:[%s0 + $0x28] sm:$0xff]
    %v141 = vld [vmem:[%s0 + $0x30] sm:$0xff]
    %v142 = vpack.c.bf16 %v135, %v135
    %v143 = vpack.c.bf16 %v136, %v136
    %v144 = vpack.c.bf16 %v137, %v137
    %v145 = vpack.c.bf16 %v138, %v138
    %v146 = vpack.c.bf16 %v139, %v139
    %v147 = vpack.c.bf16 %v140, %v140
    %v148 = vpack.c.bf16 %v141, %v141
    %v149 = vld [vmem:[#allocation2] sm:$0xff]
    %v150 = vld [vmem:[#allocation2 + $0x8] sm:$0xff]
    %v151 = vld [vmem:[#allocation2 + $0x10] sm:$0xff]
    %v152 = vld [vmem:[#allocation2 + $0x18] sm:$0xff]
    %v153 = vld [vmem:[#allocation2 + $0x20] sm:$0xff]
    %v154 = vld [vmem:[#allocation2 + $0x28] sm:$0xff]
    %v155 = vld [vmem:[#allocation2 + $0x30] sm:$0xff]
    %v156 = vld [vmem:[#allocation2 + $0x38] sm:$0xff]
    %v157 = vld [vmem:[#allocation2 + $0x40] sm:$0xff]
    %v158 = vld [vmem:[#allocation2 + $0x48] sm:$0xff]
    %v159 = vld [vmem:[#allocation2 + $0x50] sm:$0xff]
    %v160 = vld [vmem:[#allocation2 + $0x58] sm:$0xff]
    %v161 = vld [vmem:[#allocation2 + $0x60] sm:$0xff]
    %v162 = vld [vmem:[#allocation2 + $0x68] sm:$0xff]
    %v163 = vld [vmem:[#allocation2 + $0x70] sm:$0xff]
    %v164 = vld [vmem:[#allocation2 + $0x78] sm:$0xff]
    %v165 = vld [vmem:[#allocation2 + $0x80] sm:$0xff]
    %v166 = vld [vmem:[#allocation2 + $0x88] sm:$0xff]
    %v167 = vld [vmem:[#allocation2 + $0x90] sm:$0xff]
    %v168 = vld [vmem:[#allocation2 + $0x98] sm:$0xff]
    %v169 = vld [vmem:[#allocation2 + $0xa0] sm:$0xff]
    %v170 = vld [vmem:[#allocation2 + $0xa8] sm:$0xff]
    %v171 = vld [vmem:[#allocation2 + $0xb0] sm:$0xff]
    %v172 = vld [vmem:[#allocation2 + $0xb8] sm:$0xff]
    %v173 = vld [vmem:[#allocation2 + $0xc0] sm:$0xff]
    %v174 = vld [vmem:[#allocation2 + $0xc8] sm:$0xff]
    %v175 = vld [vmem:[#allocation2 + $0xd0] sm:$0xff]
    %v176 = vld [vmem:[#allocation2 + $0xd8] sm:$0xff]
    %v177 = vld [vmem:[#allocation2 + $0xe0] sm:$0xff]
    %v178 = vld [vmem:[#allocation2 + $0xe8] sm:$0xff]
    %v179 = vld [vmem:[#allocation2 + $0xf0] sm:$0xff]
    %v180 = vld [vmem:[#allocation2 + $0xf8] sm:$0xff]
    %v181 = vld [vmem:[#allocation2 + $0x100] sm:$0xff]
    %v182 = vld [vmem:[#allocation2 + $0x108] sm:$0xff]
    %v183 = vld [vmem:[#allocation2 + $0x110] sm:$0xff]
    %v184 = vld [vmem:[#allocation2 + $0x118] sm:$0xff]
    %v185 = vld [vmem:[#allocation2 + $0x120] sm:$0xff]
    %v186 = vld [vmem:[#allocation2 + $0x128] sm:$0xff]
    %v187 = vld [vmem:[#allocation2 + $0x130] sm:$0xff]
    %v188 = vld [vmem:[#allocation2 + $0x138] sm:$0xff]
    %v189 = vld [vmem:[#allocation2 + $0x140] sm:$0xff]
    %v190 = vld [vmem:[#allocation2 + $0x148] sm:$0xff]
    %v191 = vld [vmem:[#allocation2 + $0x150] sm:$0xff]
    %v192 = vld [vmem:[#allocation2 + $0x158] sm:$0xff]
    %v193 = vld [vmem:[#allocation2 + $0x160] sm:$0xff]
    %v194 = vld [vmem:[#allocation2 + $0x168] sm:$0xff]
    %v195 = vld [vmem:[#allocation2 + $0x170] sm:$0xff]
    %v196 = vld [vmem:[#allocation2 + $0x178] sm:$0xff]
    %v197 = vld [vmem:[#allocation2 + $0x180] sm:$0xff]
    %v198 = vld [vmem:[#allocation2 + $0x188] sm:$0xff]
    %v199 = vld [vmem:[#allocation2 + $0x190] sm:$0xff]
    %v200 = vld [vmem:[#allocation2 + $0x198] sm:$0xff]
    %v201 = vld [vmem:[#allocation2 + $0x1a0] sm:$0xff]
    %v202 = vld [vmem:[#allocation2 + $0x1a8] sm:$0xff]
    %v203 = vld [vmem:[#allocation2 + $0x1b0] sm:$0xff]
    %v204 = vld [vmem:[#allocation2 + $0x1b8] sm:$0xff]
    %v205 = vld [vmem:[#allocation2 + $0x1c0] sm:$0xff]
    %v206 = vld [vmem:[#allocation2 + $0x1c8] sm:$0xff]
    %v207 = vld [vmem:[#allocation2 + $0x1d0] sm:$0xff]
    %v208 = vld [vmem:[#allocation2 + $0x1d8] sm:$0xff]
    %v209 = vld [vmem:[#allocation2 + $0x1e0] sm:$0xff]
    %v210 = vld [vmem:[#allocation2 + $0x1e8] sm:$0xff]
    %v211 = vld [vmem:[#allocation2 + $0x1f0] sm:$0xff]
    %v212 = vld [vmem:[#allocation2 + $0x1f8] sm:$0xff]
    %v213 = vld [vmem:[#allocation2 + $0x200] sm:$0xff]
    %v214 = vld [vmem:[#allocation2 + $0x208] sm:$0xff]
    %v215 = vld [vmem:[#allocation2 + $0x210] sm:$0xff]
    %v216 = vld [vmem:[#allocation2 + $0x218] sm:$0xff]
    %v217 = vld [vmem:[#allocation2 + $0x220] sm:$0xff]
    %v218 = vld [vmem:[#allocation2 + $0x228] sm:$0xff]
    %v219 = vld [vmem:[#allocation2 + $0x230] sm:$0xff]
    %v220 = vld [vmem:[#allocation2 + $0x238] sm:$0xff]
    %v221 = vld [vmem:[#allocation2 + $0x240] sm:$0xff]
    %v222 = vld [vmem:[#allocation2 + $0x248] sm:$0xff]
    %v223 = vld [vmem:[#allocation2 + $0x250] sm:$0xff]
    %v224 = vld [vmem:[#allocation2 + $0x258] sm:$0xff]
    %v225 = vld [vmem:[#allocation2 + $0x260] sm:$0xff]
    %v226 = vld [vmem:[#allocation2 + $0x268] sm:$0xff]
    %v227 = vld [vmem:[#allocation2 + $0x270] sm:$0xff]
    %v228 = vld [vmem:[#allocation2 + $0x278] sm:$0xff]
    %v229 = vld [vmem:[#allocation2 + $0x280] sm:$0xff]
    %v230 = vld [vmem:[#allocation2 + $0x288] sm:$0xff]
    %v231 = vld [vmem:[#allocation2 + $0x290] sm:$0xff]
    %v232 = vld [vmem:[#allocation2 + $0x298] sm:$0xff]
    %v233 = vld [vmem:[#allocation2 + $0x2a0] sm:$0xff]
    %v234 = vld [vmem:[#allocation2 + $0x2a8] sm:$0xff]
    %v235 = vld [vmem:[#allocation2 + $0x2b0] sm:$0xff]
    %v236 = vld [vmem:[#allocation2 + $0x2b8] sm:$0xff]
    %v237 = vld [vmem:[#allocation2 + $0x2c0] sm:$0xff]
    %v238 = vld [vmem:[#allocation2 + $0x2c8] sm:$0xff]
    %v239 = vld [vmem:[#allocation2 + $0x2d0] sm:$0xff]
    %v240 = vld [vmem:[#allocation2 + $0x2d8] sm:$0xff]
    %v241 = vld [vmem:[#allocation2 + $0x2e0] sm:$0xff]
    %v242 = vld [vmem:[#allocation2 + $0x2e8] sm:$0xff]
    %v243 = vld [vmem:[#allocation2 + $0x2f0] sm:$0xff]
    %v244 = vld [vmem:[#allocation2 + $0x2f8] sm:$0xff]
    %v245 = vld [vmem:[#allocation2 + $0x300] sm:$0xff]
    %v246 = vld [vmem:[#allocation2 + $0x308] sm:$0xff]
    %v247 = vld [vmem:[#allocation2 + $0x310] sm:$0xff]
    %v248 = vld [vmem:[#allocation2 + $0x318] sm:$0xff]
    %v249 = vld [vmem:[#allocation2 + $0x320] sm:$0xff]
    %v250 = vld [vmem:[#allocation2 + $0x328] sm:$0xff]
    %v251 = vld [vmem:[#allocation2 + $0x330] sm:$0xff]
    %v252 = vld [vmem:[#allocation2 + $0x338] sm:$0xff]
    %v253 = vld [vmem:[#allocation2 + $0x340] sm:$0xff]
    %v254 = vld [vmem:[#allocation2 + $0x348] sm:$0xff]
    %v255 = vld [vmem:[#allocation2 + $0x350] sm:$0xff]
    %v256 = vld [vmem:[#allocation2 + $0x358] sm:$0xff]
    %v257 = vld [vmem:[#allocation2 + $0x360] sm:$0xff]
    %v258 = vld [vmem:[#allocation2 + $0x368] sm:$0xff]
    %v259 = vld [vmem:[#allocation2 + $0x370] sm:$0xff]
    %v260 = vld [vmem:[#allocation2 + $0x378] sm:$0xff]
    %v261 = vld [vmem:[#allocation2 + $0x380] sm:$0xff]
    %v262 = vld [vmem:[#allocation2 + $0x388] sm:$0xff]
    %v263 = vld [vmem:[#allocation2 + $0x390] sm:$0xff]
    %v264 = vld [vmem:[#allocation2 + $0x398] sm:$0xff]
    %v265 = vld [vmem:[#allocation2 + $0x3a0] sm:$0xff]
    %v266 = vld [vmem:[#allocation2 + $0x3a8] sm:$0xff]
    %v267 = vld [vmem:[#allocation2 + $0x3b0] sm:$0xff]
    %v268 = vld [vmem:[#allocation2 + $0x3b8] sm:$0xff]
    %v269 = vld [vmem:[#allocation2 + $0x3c0] sm:$0xff]
    %v270 = vld [vmem:[#allocation2 + $0x3c8] sm:$0xff]
    %v271 = vld [vmem:[#allocation2 + $0x3d0] sm:$0xff]
    %v272 = vld [vmem:[#allocation2 + $0x3d8] sm:$0xff]
    %v273 = vld [vmem:[#allocation2 + $0x3e0] sm:$0xff]
    %v274 = vld [vmem:[#allocation2 + $0x3e8] sm:$0xff]
    %v275 = vld [vmem:[#allocation2 + $0x3f0] sm:$0xff]
    %v276 = vld [vmem:[#allocation2 + $0x3f8] sm:$0xff]
    %v277 = vld [vmem:[#allocation2 + $0x400] sm:$0xff]
    %v278 = vld [vmem:[#allocation2 + $0x408] sm:$0xff]
    %v279 = vld [vmem:[#allocation2 + $0x410] sm:$0xff]
    %v280 = vld [vmem:[#allocation2 + $0x418] sm:$0xff]
    %v281 = vld [vmem:[#allocation2 + $0x420] sm:$0xff]
    %v282 = vld [vmem:[#allocation2 + $0x428] sm:$0xff]
    %v283 = vld [vmem:[#allocation2 + $0x430] sm:$0xff]
    %v284 = vld [vmem:[#allocation2 + $0x438] sm:$0xff]
    %v285 = vld [vmem:[#allocation2 + $0x440] sm:$0xff]
    %v286 = vld [vmem:[#allocation2 + $0x448] sm:$0xff]
    %v287 = vld [vmem:[#allocation2 + $0x450] sm:$0xff]
    %v288 = vld [vmem:[#allocation2 + $0x458] sm:$0xff]
    %v289 = vld [vmem:[#allocation2 + $0x460] sm:$0xff]
    %v290 = vld [vmem:[#allocation2 + $0x468] sm:$0xff]
    %v291 = vld [vmem:[#allocation2 + $0x470] sm:$0xff]
    %v292 = vld [vmem:[#allocation2 + $0x478] sm:$0xff]
    %v293 = vld [vmem:[#allocation2 + $0x480] sm:$0xff]
    %v294 = vld [vmem:[#allocation2 + $0x488] sm:$0xff]
    %v295 = vld [vmem:[#allocation2 + $0x490] sm:$0xff]
    %v296 = vld [vmem:[#allocation2 + $0x498] sm:$0xff]
    %v297 = vld [vmem:[#allocation2 + $0x4a0] sm:$0xff]
    %v298 = vld [vmem:[#allocation2 + $0x4a8] sm:$0xff]
    %v299 = vld [vmem:[#allocation2 + $0x4b0] sm:$0xff]
    %v300 = vld [vmem:[#allocation2 + $0x4b8] sm:$0xff]
    %v301 = vld [vmem:[#allocation2 + $0x4c0] sm:$0xff]
    %v302 = vld [vmem:[#allocation2 + $0x4c8] sm:$0xff]
    %v303 = vld [vmem:[#allocation2 + $0x4d0] sm:$0xff]
    %v304 = vld [vmem:[#allocation2 + $0x4d8] sm:$0xff]
    %v305 = vld [vmem:[#allocation2 + $0x4e0] sm:$0xff]
    %v306 = vld [vmem:[#allocation2 + $0x4e8] sm:$0xff]
    %v307 = vld [vmem:[#allocation2 + $0x4f0] sm:$0xff]
    %v308 = vld [vmem:[#allocation2 + $0x4f8] sm:$0xff]
    %v309 = vld [vmem:[#allocation2 + $0x500] sm:$0xff]
    %v310 = vld [vmem:[#allocation2 + $0x508] sm:$0xff]
    %v311 = vld [vmem:[#allocation2 + $0x510] sm:$0xff]
    %v312 = vld [vmem:[#allocation2 + $0x518] sm:$0xff]
    %v313 = vld [vmem:[#allocation2 + $0x520] sm:$0xff]
    %v314 = vld [vmem:[#allocation2 + $0x528] sm:$0xff]
    %v315 = vld [vmem:[#allocation2 + $0x530] sm:$0xff]
    %v316 = vld [vmem:[#allocation2 + $0x538] sm:$0xff]
    %v317 = vld [vmem:[#allocation2 + $0x540] sm:$0xff]
    %v318 = vld [vmem:[#allocation2 + $0x548] sm:$0xff]
    %v319 = vld [vmem:[#allocation2 + $0x550] sm:$0xff]
    %v320 = vld [vmem:[#allocation2 + $0x558] sm:$0xff]
    %v321 = vld [vmem:[#allocation2 + $0x560] sm:$0xff]
    %v322 = vld [vmem:[#allocation2 + $0x568] sm:$0xff]
    %v323 = vld [vmem:[#allocation2 + $0x570] sm:$0xff]
    %v324 = vld [vmem:[#allocation2 + $0x578] sm:$0xff]
    %v325 = vld [vmem:[#allocation2 + $0x580] sm:$0xff]
    %v326 = vld [vmem:[#allocation2 + $0x588] sm:$0xff]
    %v327 = vld [vmem:[#allocation2 + $0x590] sm:$0xff]
    %v328 = vld [vmem:[#allocation2 + $0x598] sm:$0xff]
    %v329 = vld [vmem:[#allocation2 + $0x5a0] sm:$0xff]
    %v330 = vld [vmem:[#allocation2 + $0x5a8] sm:$0xff]
    %v331 = vld [vmem:[#allocation2 + $0x5b0] sm:$0xff]
    %v332 = vld [vmem:[#allocation2 + $0x5b8] sm:$0xff]
    %v333 = vld [vmem:[#allocation2 + $0x5c0] sm:$0xff]
    %v334 = vld [vmem:[#allocation2 + $0x5c8] sm:$0xff]
    %v335 = vld [vmem:[#allocation2 + $0x5d0] sm:$0xff]
    %v336 = vld [vmem:[#allocation2 + $0x5d8] sm:$0xff]
    %v337 = vld [vmem:[#allocation2 + $0x5e0] sm:$0xff]
    %v338 = vld [vmem:[#allocation2 + $0x5e8] sm:$0xff]
    %v339 = vld [vmem:[#allocation2 + $0x5f0] sm:$0xff]
    %v340 = vld [vmem:[#allocation2 + $0x5f8] sm:$0xff]
    %v341 = vld [vmem:[#allocation2 + $0x600] sm:$0xff]
    %v342 = vld [vmem:[#allocation2 + $0x608] sm:$0xff]
    %v343 = vld [vmem:[#allocation2 + $0x610] sm:$0xff]
    %v344 = vld [vmem:[#allocation2 + $0x618] sm:$0xff]
    %v345 = vld [vmem:[#allocation2 + $0x620] sm:$0xff]
    %v346 = vld [vmem:[#allocation2 + $0x628] sm:$0xff]
    %v347 = vld [vmem:[#allocation2 + $0x630] sm:$0xff]
    %v348 = vld [vmem:[#allocation2 + $0x638] sm:$0xff]
    %v349 = vld [vmem:[#allocation2 + $0x640] sm:$0xff]
    %v350 = vld [vmem:[#allocation2 + $0x648] sm:$0xff]
    %v351 = vld [vmem:[#allocation2 + $0x650] sm:$0xff]
    %v352 = vld [vmem:[#allocation2 + $0x658] sm:$0xff]
    %v353 = vld [vmem:[#allocation2 + $0x660] sm:$0xff]
    %v354 = vld [vmem:[#allocation2 + $0x668] sm:$0xff]
    %v355 = vld [vmem:[#allocation2 + $0x670] sm:$0xff]
    %v356 = vld [vmem:[#allocation2 + $0x678] sm:$0xff]
    %v357 = vld [vmem:[#allocation2 + $0x680] sm:$0xff]
    %v358 = vld [vmem:[#allocation2 + $0x688] sm:$0xff]
    %v359 = vld [vmem:[#allocation2 + $0x690] sm:$0xff]
    %v360 = vld [vmem:[#allocation2 + $0x698] sm:$0xff]
    %v361 = vld [vmem:[#allocation2 + $0x6a0] sm:$0xff]
    %v362 = vld [vmem:[#allocation2 + $0x6a8] sm:$0xff]
    %v363 = vld [vmem:[#allocation2 + $0x6b0] sm:$0xff]
    %v364 = vld [vmem:[#allocation2 + $0x6b8] sm:$0xff]
    %v365 = vld [vmem:[#allocation2 + $0x6c0] sm:$0xff]
    %v366 = vld [vmem:[#allocation2 + $0x6c8] sm:$0xff]
    %v367 = vld [vmem:[#allocation2 + $0x6d0] sm:$0xff]
    %v368 = vld [vmem:[#allocation2 + $0x6d8] sm:$0xff]
    %v369 = vld [vmem:[#allocation2 + $0x6e0] sm:$0xff]
    %v370 = vld [vmem:[#allocation2 + $0x6e8] sm:$0xff]
    %v371 = vld [vmem:[#allocation2 + $0x6f0] sm:$0xff]
    %v372 = vld [vmem:[#allocation2 + $0x6f8] sm:$0xff]
    %v373 = vld [vmem:[#allocation2 + $0x700] sm:$0xff]
    %v374 = vld [vmem:[#allocation2 + $0x708] sm:$0xff]
    %v375 = vld [vmem:[#allocation2 + $0x710] sm:$0xff]
    %v376 = vld [vmem:[#allocation2 + $0x718] sm:$0xff]
    %v377 = vld [vmem:[#allocation2 + $0x720] sm:$0xff]
    %v378 = vld [vmem:[#allocation2 + $0x728] sm:$0xff]
    %v379 = vld [vmem:[#allocation2 + $0x730] sm:$0xff]
    %v380 = vld [vmem:[#allocation2 + $0x738] sm:$0xff]
    %v381 = vld [vmem:[#allocation2 + $0x740] sm:$0xff]
    %v382 = vld [vmem:[#allocation2 + $0x748] sm:$0xff]
    %v383 = vld [vmem:[#allocation2 + $0x750] sm:$0xff]
    %v384 = vld [vmem:[#allocation2 + $0x758] sm:$0xff]
    %v385 = vld [vmem:[#allocation2 + $0x760] sm:$0xff]
    %v386 = vld [vmem:[#allocation2 + $0x768] sm:$0xff]
    %v387 = vld [vmem:[#allocation2 + $0x770] sm:$0xff]
    %v388 = vld [vmem:[#allocation2 + $0x778] sm:$0xff]
    %v389 = vld [vmem:[#allocation2 + $0x780] sm:$0xff]
    %v390 = vld [vmem:[#allocation2 + $0x788] sm:$0xff]
    %v391 = vld [vmem:[#allocation2 + $0x790] sm:$0xff]
    %v392 = vld [vmem:[#allocation2 + $0x798] sm:$0xff]
    %v393 = vld [vmem:[#allocation2 + $0x7a0] sm:$0xff]
    %v394 = vld [vmem:[#allocation2 + $0x7a8] sm:$0xff]
    %v395 = vld [vmem:[#allocation2 + $0x7b0] sm:$0xff]
    %v396 = vld [vmem:[#allocation2 + $0x7b8] sm:$0xff]
    %v397 = vld [vmem:[#allocation2 + $0x7c0] sm:$0xff]
    %v398 = vld [vmem:[#allocation2 + $0x7c8] sm:$0xff]
    %v399 = vld [vmem:[#allocation2 + $0x7d0] sm:$0xff]
    %v400 = vld [vmem:[#allocation2 + $0x7d8] sm:$0xff]
    %v401 = vld [vmem:[#allocation2 + $0x7e0] sm:$0xff]
    %v402 = vld [vmem:[#allocation2 + $0x7e8] sm:$0xff]
    %v403 = vld [vmem:[#allocation2 + $0x7f0] sm:$0xff]
    %v404 = vld [vmem:[#allocation2 + $0x7f8] sm:$0xff]
    %v405 = vld [vmem:[#allocation2 + $0x800] sm:$0xff]
    %v406 = vld [vmem:[#allocation2 + $0x808] sm:$0xff]
    %v407 = vld [vmem:[#allocation2 + $0x810] sm:$0xff]
    %v408 = vld [vmem:[#allocation2 + $0x818] sm:$0xff]
    %v409 = vld [vmem:[#allocation2 + $0x820] sm:$0xff]
    %v410 = vld [vmem:[#allocation2 + $0x828] sm:$0xff]
    %v411 = vld [vmem:[#allocation2 + $0x830] sm:$0xff]
    %v412 = vld [vmem:[#allocation2 + $0x838] sm:$0xff]
    %v413 = vld [vmem:[#allocation2 + $0x840] sm:$0xff]
    %v414 = vld [vmem:[#allocation2 + $0x848] sm:$0xff]
    %v415 = vld [vmem:[#allocation2 + $0x850] sm:$0xff]
    %v416 = vld [vmem:[#allocation2 + $0x858] sm:$0xff]
    %v417 = vld [vmem:[#allocation2 + $0x860] sm:$0xff]
    %v418 = vld [vmem:[#allocation2 + $0x868] sm:$0xff]
    %v419 = vld [vmem:[#allocation2 + $0x870] sm:$0xff]
    %v420 = vld [vmem:[#allocation2 + $0x878] sm:$0xff]
    %v421 = vld [vmem:[#allocation2 + $0x880] sm:$0xff]
    %v422 = vld [vmem:[#allocation2 + $0x888] sm:$0xff]
    %v423 = vld [vmem:[#allocation2 + $0x890] sm:$0xff]
    %v424 = vld [vmem:[#allocation2 + $0x898] sm:$0xff]
    %v425 = vld [vmem:[#allocation2 + $0x8a0] sm:$0xff]
    %v426 = vld [vmem:[#allocation2 + $0x8a8] sm:$0xff]
    %v427 = vld [vmem:[#allocation2 + $0x8b0] sm:$0xff]
    %v428 = vld [vmem:[#allocation2 + $0x8b8] sm:$0xff]
    %v429 = vld [vmem:[#allocation2 + $0x8c0] sm:$0xff]
    %v430 = vld [vmem:[#allocation2 + $0x8c8] sm:$0xff]
    %v431 = vld [vmem:[#allocation2 + $0x8d0] sm:$0xff]
    %v432 = vld [vmem:[#allocation2 + $0x8d8] sm:$0xff]
    %v433 = vld [vmem:[#allocation2 + $0x8e0] sm:$0xff]
    %v434 = vld [vmem:[#allocation2 + $0x8e8] sm:$0xff]
    %v435 = vld [vmem:[#allocation2 + $0x8f0] sm:$0xff]
    %v436 = vld [vmem:[#allocation2 + $0x8f8] sm:$0xff]
    %v437 = vld [vmem:[#allocation2 + $0x900] sm:$0xff]
    %v438 = vld [vmem:[#allocation2 + $0x908] sm:$0xff]
    %v439 = vld [vmem:[#allocation2 + $0x910] sm:$0xff]
    %v440 = vld [vmem:[#allocation2 + $0x918] sm:$0xff]
    %v441 = vld [vmem:[#allocation2 + $0x920] sm:$0xff]
    %v442 = vld [vmem:[#allocation2 + $0x928] sm:$0xff]
    %v443 = vld [vmem:[#allocation2 + $0x930] sm:$0xff]
    %v444 = vld [vmem:[#allocation2 + $0x938] sm:$0xff]
    %v445 = vld [vmem:[#allocation2 + $0x940] sm:$0xff]
    %v446 = vld [vmem:[#allocation2 + $0x948] sm:$0xff]
    %v447 = vld [vmem:[#allocation2 + $0x950] sm:$0xff]
    %v448 = vld [vmem:[#allocation2 + $0x958] sm:$0xff]
    %v449 = vld [vmem:[#allocation2 + $0x960] sm:$0xff]
    %v450 = vld [vmem:[#allocation2 + $0x968] sm:$0xff]
    %v451 = vld [vmem:[#allocation2 + $0x970] sm:$0xff]
    %v452 = vld [vmem:[#allocation2 + $0x978] sm:$0xff]
    %v453 = vld [vmem:[#allocation2 + $0x980] sm:$0xff]
    %v454 = vld [vmem:[#allocation2 + $0x988] sm:$0xff]
    %v455 = vld [vmem:[#allocation2 + $0x990] sm:$0xff]
    %v456 = vld [vmem:[#allocation2 + $0x998] sm:$0xff]
    %v457 = vld [vmem:[#allocation2 + $0x9a0] sm:$0xff]
    %v458 = vld [vmem:[#allocation2 + $0x9a8] sm:$0xff]
    %v459 = vld [vmem:[#allocation2 + $0x9b0] sm:$0xff]
    %v460 = vld [vmem:[#allocation2 + $0x9b8] sm:$0xff]
    %v461 = vld [vmem:[#allocation2 + $0x9c0] sm:$0xff]
    %v462 = vld [vmem:[#allocation2 + $0x9c8] sm:$0xff]
    %v463 = vld [vmem:[#allocation2 + $0x9d0] sm:$0xff]
    %v464 = vld [vmem:[#allocation2 + $0x9d8] sm:$0xff]
    %v465 = vld [vmem:[#allocation2 + $0x9e0] sm:$0xff]
    %v466 = vld [vmem:[#allocation2 + $0x9e8] sm:$0xff]
    %v467 = vld [vmem:[#allocation2 + $0x9f0] sm:$0xff]
    %v468 = vld [vmem:[#allocation2 + $0x9f8] sm:$0xff]
    %v469 = vld [vmem:[#allocation2 + $0xa00] sm:$0xff]
    %v470 = vld [vmem:[#allocation2 + $0xa08] sm:$0xff]
    %v471 = vld [vmem:[#allocation2 + $0xa10] sm:$0xff]
    %v472 = vld [vmem:[#allocation2 + $0xa18] sm:$0xff]
    %v473 = vld [vmem:[#allocation2 + $0xa20] sm:$0xff]
    %v474 = vld [vmem:[#allocation2 + $0xa28] sm:$0xff]
    %v475 = vld [vmem:[#allocation2 + $0xa30] sm:$0xff]
    %v476 = vld [vmem:[#allocation2 + $0xa38] sm:$0xff]
    %v477 = vld [vmem:[#allocation2 + $0xa40] sm:$0xff]
    %v478 = vld [vmem:[#allocation2 + $0xa48] sm:$0xff]
    %v479 = vld [vmem:[#allocation2 + $0xa50] sm:$0xff]
    %v480 = vld [vmem:[#allocation2 + $0xa58] sm:$0xff]
    %v481 = vld [vmem:[#allocation2 + $0xa60] sm:$0xff]
    %v482 = vld [vmem:[#allocation2 + $0xa68] sm:$0xff]
    %v483 = vld [vmem:[#allocation2 + $0xa70] sm:$0xff]
    %v484 = vld [vmem:[#allocation2 + $0xa78] sm:$0xff]
    %v485 = vld [vmem:[#allocation2 + $0xa80] sm:$0xff]
    %v486 = vld [vmem:[#allocation2 + $0xa88] sm:$0xff]
    %v487 = vld [vmem:[#allocation2 + $0xa90] sm:$0xff]
    %v488 = vld [vmem:[#allocation2 + $0xa98] sm:$0xff]
    %v489 = vld [vmem:[#allocation2 + $0xaa0] sm:$0xff]
    %v490 = vld [vmem:[#allocation2 + $0xaa8] sm:$0xff]
    %v491 = vld [vmem:[#allocation2 + $0xab0] sm:$0xff]
    %v492 = vld [vmem:[#allocation2 + $0xab8] sm:$0xff]
    %v493 = vld [vmem:[#allocation2 + $0xac0] sm:$0xff]
    %v494 = vld [vmem:[#allocation2 + $0xac8] sm:$0xff]
    %v495 = vld [vmem:[#allocation2 + $0xad0] sm:$0xff]
    %v496 = vld [vmem:[#allocation2 + $0xad8] sm:$0xff]
    %v497 = vld [vmem:[#allocation2 + $0xae0] sm:$0xff]
    %v498 = vld [vmem:[#allocation2 + $0xae8] sm:$0xff]
    %v499 = vld [vmem:[#allocation2 + $0xaf0] sm:$0xff]
    %v500 = vld [vmem:[#allocation2 + $0xaf8] sm:$0xff]
    %v501 = vld [vmem:[#allocation2 + $0xb00] sm:$0xff]
    %v502 = vld [vmem:[#allocation2 + $0xb08] sm:$0xff]
    %v503 = vld [vmem:[#allocation2 + $0xb10] sm:$0xff]
    %v504 = vld [vmem:[#allocation2 + $0xb18] sm:$0xff]
    %v505 = vld [vmem:[#allocation2 + $0xb20] sm:$0xff]
    %v506 = vld [vmem:[#allocation2 + $0xb28] sm:$0xff]
    %v507 = vld [vmem:[#allocation2 + $0xb30] sm:$0xff]
    %v508 = vld [vmem:[#allocation2 + $0xb38] sm:$0xff]
    %v509 = vld [vmem:[#allocation2 + $0xb40] sm:$0xff]
    %v510 = vld [vmem:[#allocation2 + $0xb48] sm:$0xff]
    %v511 = vld [vmem:[#allocation2 + $0xb50] sm:$0xff]
    %v512 = vld [vmem:[#allocation2 + $0xb58] sm:$0xff]
    %v513 = vld [vmem:[#allocation2 + $0xb60] sm:$0xff]
    %v514 = vld [vmem:[#allocation2 + $0xb68] sm:$0xff]
    %v515 = vld [vmem:[#allocation2 + $0xb70] sm:$0xff]
    %v516 = vld [vmem:[#allocation2 + $0xb78] sm:$0xff]
    %v517 = vld [vmem:[#allocation2 + $0xb80] sm:$0xff]
    %v518 = vld [vmem:[#allocation2 + $0xb88] sm:$0xff]
    %v519 = vld [vmem:[#allocation2 + $0xb90] sm:$0xff]
    %v520 = vld [vmem:[#allocation2 + $0xb98] sm:$0xff]
    %v521 = vld [vmem:[#allocation2 + $0xba0] sm:$0xff]
    %v522 = vld [vmem:[#allocation2 + $0xba8] sm:$0xff]
    %v523 = vld [vmem:[#allocation2 + $0xbb0] sm:$0xff]
    %v524 = vld [vmem:[#allocation2 + $0xbb8] sm:$0xff]
    %v525 = vld [vmem:[#allocation2 + $0xbc0] sm:$0xff]
    %v526 = vld [vmem:[#allocation2 + $0xbc8] sm:$0xff]
    %v527 = vld [vmem:[#allocation2 + $0xbd0] sm:$0xff]
    %v528 = vld [vmem:[#allocation2 + $0xbd8] sm:$0xff]
    %v529 = vld [vmem:[#allocation2 + $0xbe0] sm:$0xff]
    %v530 = vld [vmem:[#allocation2 + $0xbe8] sm:$0xff]
    %v531 = vld [vmem:[#allocation2 + $0xbf0] sm:$0xff]
    %v532 = vld [vmem:[#allocation2 + $0xbf8] sm:$0xff]
    %v533 = vld [vmem:[#allocation2 + $0xc00] sm:$0xff]
    %v534 = vld [vmem:[#allocation2 + $0xc08] sm:$0xff]
    %v535 = vld [vmem:[#allocation2 + $0xc10] sm:$0xff]
    %v536 = vld [vmem:[#allocation2 + $0xc18] sm:$0xff]
    %v537 = vld [vmem:[#allocation2 + $0xc20] sm:$0xff]
    %v538 = vld [vmem:[#allocation2 + $0xc28] sm:$0xff]
    %v539 = vld [vmem:[#allocation2 + $0xc30] sm:$0xff]
    %v540 = vld [vmem:[#allocation2 + $0xc38] sm:$0xff]
    %v541 = vld [vmem:[#allocation2 + $0xc40] sm:$0xff]
    %v542 = vld [vmem:[#allocation2 + $0xc48] sm:$0xff]
    %v543 = vld [vmem:[#allocation2 + $0xc50] sm:$0xff]
    %v544 = vld [vmem:[#allocation2 + $0xc58] sm:$0xff]
    %v545 = vld [vmem:[#allocation2 + $0xc60] sm:$0xff]
    %v546 = vld [vmem:[#allocation2 + $0xc68] sm:$0xff]
    %v547 = vld [vmem:[#allocation2 + $0xc70] sm:$0xff]
    %v548 = vld [vmem:[#allocation2 + $0xc78] sm:$0xff]
    %v549 = vld [vmem:[#allocation2 + $0xc80] sm:$0xff]
    %v550 = vld [vmem:[#allocation2 + $0xc88] sm:$0xff]
    %v551 = vld [vmem:[#allocation2 + $0xc90] sm:$0xff]
    %v552 = vld [vmem:[#allocation2 + $0xc98] sm:$0xff]
    %v553 = vld [vmem:[#allocation2 + $0xca0] sm:$0xff]
    %v554 = vld [vmem:[#allocation2 + $0xca8] sm:$0xff]
    %v555 = vld [vmem:[#allocation2 + $0xcb0] sm:$0xff]
    %v556 = vld [vmem:[#allocation2 + $0xcb8] sm:$0xff]
    %v557 = vld [vmem:[#allocation2 + $0xcc0] sm:$0xff]
    %v558 = vld [vmem:[#allocation2 + $0xcc8] sm:$0xff]
    %v559 = vld [vmem:[#allocation2 + $0xcd0] sm:$0xff]
    %v560 = vld [vmem:[#allocation2 + $0xcd8] sm:$0xff]
    %v561 = vld [vmem:[#allocation2 + $0xce0] sm:$0xff]
    %v562 = vld [vmem:[#allocation2 + $0xce8] sm:$0xff]
    %v563 = vld [vmem:[#allocation2 + $0xcf0] sm:$0xff]
    %v564 = vld [vmem:[#allocation2 + $0xcf8] sm:$0xff]
    %v565 = vld [vmem:[#allocation2 + $0xd00] sm:$0xff]
    %v566 = vld [vmem:[#allocation2 + $0xd08] sm:$0xff]
    %v567 = vld [vmem:[#allocation2 + $0xd10] sm:$0xff]
    %v568 = vld [vmem:[#allocation2 + $0xd18] sm:$0xff]
    %v569 = vld [vmem:[#allocation2 + $0xd20] sm:$0xff]
    %v570 = vld [vmem:[#allocation2 + $0xd28] sm:$0xff]
    %v571 = vld [vmem:[#allocation2 + $0xd30] sm:$0xff]
    %v572 = vld [vmem:[#allocation2 + $0xd38] sm:$0xff]
    %v573 = vld [vmem:[#allocation2 + $0xd40] sm:$0xff]
    %v574 = vld [vmem:[#allocation2 + $0xd48] sm:$0xff]
    %v575 = vld [vmem:[#allocation2 + $0xd50] sm:$0xff]
    %v576 = vld [vmem:[#allocation2 + $0xd58] sm:$0xff]
    %v577 = vld [vmem:[#allocation2 + $0xd60] sm:$0xff]
    %v578 = vld [vmem:[#allocation2 + $0xd68] sm:$0xff]
    %v579 = vld [vmem:[#allocation2 + $0xd70] sm:$0xff]
    %v580 = vld [vmem:[#allocation2 + $0xd78] sm:$0xff]
    %v581 = vld [vmem:[#allocation2 + $0xd80] sm:$0xff]
    %v582 = vld [vmem:[#allocation2 + $0xd88] sm:$0xff]
    %v583 = vld [vmem:[#allocation2 + $0xd90] sm:$0xff]
    %v584 = vld [vmem:[#allocation2 + $0xd98] sm:$0xff]
    %v585 = vld [vmem:[#allocation2 + $0xda0] sm:$0xff]
    %v586 = vld [vmem:[#allocation2 + $0xda8] sm:$0xff]
    %v587 = vld [vmem:[#allocation2 + $0xdb0] sm:$0xff]
    %v588 = vld [vmem:[#allocation2 + $0xdb8] sm:$0xff]
    %v589 = vld [vmem:[#allocation2 + $0xdc0] sm:$0xff]
    %v590 = vld [vmem:[#allocation2 + $0xdc8] sm:$0xff]
    %v591 = vld [vmem:[#allocation2 + $0xdd0] sm:$0xff]
    %v592 = vld [vmem:[#allocation2 + $0xdd8] sm:$0xff]
    %v593 = vld [vmem:[#allocation2 + $0xde0] sm:$0xff]
    %v594 = vld [vmem:[#allocation2 + $0xde8] sm:$0xff]
    %v595 = vld [vmem:[#allocation2 + $0xdf0] sm:$0xff]
    %v596 = vld [vmem:[#allocation2 + $0xdf8] sm:$0xff]
    %v597 = vld [vmem:[#allocation2 + $0xe00] sm:$0xff]
    %v598 = vld [vmem:[#allocation2 + $0xe08] sm:$0xff]
    %v599 = vld [vmem:[#allocation2 + $0xe10] sm:$0xff]
    %v600 = vld [vmem:[#allocation2 + $0xe18] sm:$0xff]
    %v601 = vld [vmem:[#allocation2 + $0xe20] sm:$0xff]
    %v602 = vld [vmem:[#allocation2 + $0xe28] sm:$0xff]
    %v603 = vld [vmem:[#allocation2 + $0xe30] sm:$0xff]
    %v604 = vld [vmem:[#allocation2 + $0xe38] sm:$0xff]
    %v605 = vld [vmem:[#allocation2 + $0xe40] sm:$0xff]
    %v606 = vld [vmem:[#allocation2 + $0xe48] sm:$0xff]
    %v607 = vld [vmem:[#allocation2 + $0xe50] sm:$0xff]
    %v608 = vld [vmem:[#allocation2 + $0xe58] sm:$0xff]
    %v609 = vld [vmem:[#allocation2 + $0xe60] sm:$0xff]
    %v610 = vld [vmem:[#allocation2 + $0xe68] sm:$0xff]
    %v611 = vld [vmem:[#allocation2 + $0xe70] sm:$0xff]
    %v612 = vld [vmem:[#allocation2 + $0xe78] sm:$0xff]
    %v613 = vld [vmem:[#allocation2 + $0xe80] sm:$0xff]
    %v614 = vld [vmem:[#allocation2 + $0xe88] sm:$0xff]
    %v615 = vld [vmem:[#allocation2 + $0xe90] sm:$0xff]
    %v616 = vld [vmem:[#allocation2 + $0xe98] sm:$0xff]
    %v617 = vld [vmem:[#allocation2 + $0xea0] sm:$0xff]
    %v618 = vld [vmem:[#allocation2 + $0xea8] sm:$0xff]
    %v619 = vld [vmem:[#allocation2 + $0xeb0] sm:$0xff]
    %v620 = vld [vmem:[#allocation2 + $0xeb8] sm:$0xff]
    %v621 = vld [vmem:[#allocation2 + $0xec0] sm:$0xff]
    %v622 = vld [vmem:[#allocation2 + $0xec8] sm:$0xff]
    %v623 = vld [vmem:[#allocation2 + $0xed0] sm:$0xff]
    %v624 = vld [vmem:[#allocation2 + $0xed8] sm:$0xff]
    %v625 = vld [vmem:[#allocation2 + $0xee0] sm:$0xff]
    %v626 = vld [vmem:[#allocation2 + $0xee8] sm:$0xff]
    %v627 = vld [vmem:[#allocation2 + $0xef0] sm:$0xff]
    %v628 = vld [vmem:[#allocation2 + $0xef8] sm:$0xff]
    %v629 = vld [vmem:[#allocation2 + $0xf00] sm:$0xff]
    %v630 = vld [vmem:[#allocation2 + $0xf08] sm:$0xff]
    %v631 = vld [vmem:[#allocation2 + $0xf10] sm:$0xff]
    %v632 = vld [vmem:[#allocation2 + $0xf18] sm:$0xff]
    %v633 = vld [vmem:[#allocation2 + $0xf20] sm:$0xff]
    %v634 = vld [vmem:[#allocation2 + $0xf28] sm:$0xff]
    %v635 = vld [vmem:[#allocation2 + $0xf30] sm:$0xff]
    %v636 = vld [vmem:[#allocation2 + $0xf38] sm:$0xff]
    %v637 = vld [vmem:[#allocation2 + $0xf40] sm:$0xff]
    %v638 = vld [vmem:[#allocation2 + $0xf48] sm:$0xff]
    %v639 = vld [vmem:[#allocation2 + $0xf50] sm:$0xff]
    %v640 = vld [vmem:[#allocation2 + $0xf58] sm:$0xff]
    %v641 = vld [vmem:[#allocation2 + $0xf60] sm:$0xff]
    %v642 = vld [vmem:[#allocation2 + $0xf68] sm:$0xff]
    %v643 = vld [vmem:[#allocation2 + $0xf70] sm:$0xff]
    %v644 = vld [vmem:[#allocation2 + $0xf78] sm:$0xff]
    %v645 = vld [vmem:[#allocation2 + $0xf80] sm:$0xff]
    %v646 = vld [vmem:[#allocation2 + $0xf88] sm:$0xff]
    %v647 = vld [vmem:[#allocation2 + $0xf90] sm:$0xff]
    %v648 = vld [vmem:[#allocation2 + $0xf98] sm:$0xff]
    %v649 = vld [vmem:[#allocation2 + $0xfa0] sm:$0xff]
    %v650 = vld [vmem:[#allocation2 + $0xfa8] sm:$0xff]
    %v651 = vld [vmem:[#allocation2 + $0xfb0] sm:$0xff]
    %v652 = vld [vmem:[#allocation2 + $0xfb8] sm:$0xff]
    %v653 = vld [vmem:[#allocation2 + $0xfc0] sm:$0xff]
    %v654 = vld [vmem:[#allocation2 + $0xfc8] sm:$0xff]
    %v655 = vld [vmem:[#allocation2 + $0xfd0] sm:$0xff]
    %v656 = vld [vmem:[#allocation2 + $0xfd8] sm:$0xff]
    %v657 = vld [vmem:[#allocation2 + $0xfe0] sm:$0xff]
    %v658 = vld [vmem:[#allocation2 + $0xfe8] sm:$0xff]
    %v659 = vld [vmem:[#allocation2 + $0xff0] sm:$0xff]
    %v660 = vld [vmem:[#allocation2 + $0xff8] sm:$0xff]
    %v661 = vld [vmem:[#allocation2 + $0x1000] sm:$0xff]
    %v662 = vld [vmem:[#allocation2 + $0x1008] sm:$0xff]
    %v663 = vld [vmem:[#allocation2 + $0x1010] sm:$0xff]
    %v664 = vld [vmem:[#allocation2 + $0x1018] sm:$0xff]
    %v665 = vld [vmem:[#allocation2 + $0x1020] sm:$0xff]
    %v666 = vld [vmem:[#allocation2 + $0x1028] sm:$0xff]
    %v667 = vld [vmem:[#allocation2 + $0x1030] sm:$0xff]
    %v668 = vld [vmem:[#allocation2 + $0x1038] sm:$0xff]
    %v669 = vld [vmem:[#allocation2 + $0x1040] sm:$0xff]
    %v670 = vld [vmem:[#allocation2 + $0x1048] sm:$0xff]
    %v671 = vld [vmem:[#allocation2 + $0x1050] sm:$0xff]
    %v672 = vld [vmem:[#allocation2 + $0x1058] sm:$0xff]
    %v673 = vld [vmem:[#allocation2 + $0x1060] sm:$0xff]
    %v674 = vld [vmem:[#allocation2 + $0x1068] sm:$0xff]
    %v675 = vld [vmem:[#allocation2 + $0x1070] sm:$0xff]
    %v676 = vld [vmem:[#allocation2 + $0x1078] sm:$0xff]
    %v677 = vld [vmem:[#allocation2 + $0x1080] sm:$0xff]
    %v678 = vld [vmem:[#allocation2 + $0x1088] sm:$0xff]
    %v679 = vld [vmem:[#allocation2 + $0x1090] sm:$0xff]
    %v680 = vld [vmem:[#allocation2 + $0x1098] sm:$0xff]
    %v681 = vld [vmem:[#allocation2 + $0x10a0] sm:$0xff]
    %v682 = vld [vmem:[#allocation2 + $0x10a8] sm:$0xff]
    %v683 = vld [vmem:[#allocation2 + $0x10b0] sm:$0xff]
    %v684 = vld [vmem:[#allocation2 + $0x10b8] sm:$0xff]
    %v685 = vld [vmem:[#allocation2 + $0x10c0] sm:$0xff]
    %v686 = vld [vmem:[#allocation2 + $0x10c8] sm:$0xff]
    %v687 = vld [vmem:[#allocation2 + $0x10d0] sm:$0xff]
    %v688 = vld [vmem:[#allocation2 + $0x10d8] sm:$0xff]
    %v689 = vld [vmem:[#allocation2 + $0x10e0] sm:$0xff]
    %v690 = vld [vmem:[#allocation2 + $0x10e8] sm:$0xff]
    %v691 = vld [vmem:[#allocation2 + $0x10f0] sm:$0xff]
    %v692 = vld [vmem:[#allocation2 + $0x10f8] sm:$0xff]
    %v693 = vld [vmem:[#allocation2 + $0x1100] sm:$0xff]
    %v694 = vld [vmem:[#allocation2 + $0x1108] sm:$0xff]
    %v695 = vld [vmem:[#allocation2 + $0x1110] sm:$0xff]
    %v696 = vld [vmem:[#allocation2 + $0x1118] sm:$0xff]
    %v697 = vld [vmem:[#allocation2 + $0x1120] sm:$0xff]
    %v698 = vld [vmem:[#allocation2 + $0x1128] sm:$0xff]
    %v699 = vld [vmem:[#allocation2 + $0x1130] sm:$0xff]
    %v700 = vld [vmem:[#allocation2 + $0x1138] sm:$0xff]
    %v701 = vld [vmem:[#allocation2 + $0x1140] sm:$0xff]
    %v702 = vld [vmem:[#allocation2 + $0x1148] sm:$0xff]
    %v703 = vld [vmem:[#allocation2 + $0x1150] sm:$0xff]
    %v704 = vld [vmem:[#allocation2 + $0x1158] sm:$0xff]
    %v705 = vld [vmem:[#allocation2 + $0x1160] sm:$0xff]
    %v706 = vld [vmem:[#allocation2 + $0x1168] sm:$0xff]
    %v707 = vld [vmem:[#allocation2 + $0x1170] sm:$0xff]
    %v708 = vld [vmem:[#allocation2 + $0x1178] sm:$0xff]
    %v709 = vld [vmem:[#allocation2 + $0x1180] sm:$0xff]
    %v710 = vld [vmem:[#allocation2 + $0x1188] sm:$0xff]
    %v711 = vld [vmem:[#allocation2 + $0x1190] sm:$0xff]
    %v712 = vld [vmem:[#allocation2 + $0x1198] sm:$0xff]
    %v713 = vld [vmem:[#allocation2 + $0x11a0] sm:$0xff]
    %v714 = vld [vmem:[#allocation2 + $0x11a8] sm:$0xff]
    %v715 = vld [vmem:[#allocation2 + $0x11b0] sm:$0xff]
    %v716 = vld [vmem:[#allocation2 + $0x11b8] sm:$0xff]
    %v717 = vld [vmem:[#allocation2 + $0x11c0] sm:$0xff]
    %v718 = vld [vmem:[#allocation2 + $0x11c8] sm:$0xff]
    %v719 = vld [vmem:[#allocation2 + $0x11d0] sm:$0xff]
    %v720 = vld [vmem:[#allocation2 + $0x11d8] sm:$0xff]
    %v721 = vld [vmem:[#allocation2 + $0x11e0] sm:$0xff]
    %v722 = vld [vmem:[#allocation2 + $0x11e8] sm:$0xff]
    %v723 = vld [vmem:[#allocation2 + $0x11f0] sm:$0xff]
    %v724 = vld [vmem:[#allocation2 + $0x11f8] sm:$0xff]
    %v725 = vld [vmem:[#allocation2 + $0x1200] sm:$0xff]
    %v726 = vld [vmem:[#allocation2 + $0x1208] sm:$0xff]
    %v727 = vld [vmem:[#allocation2 + $0x1210] sm:$0xff]
    %v728 = vld [vmem:[#allocation2 + $0x1218] sm:$0xff]
    %v729 = vld [vmem:[#allocation2 + $0x1220] sm:$0xff]
    %v730 = vld [vmem:[#allocation2 + $0x1228] sm:$0xff]
    %v731 = vld [vmem:[#allocation2 + $0x1230] sm:$0xff]
    %v732 = vld [vmem:[#allocation2 + $0x1238] sm:$0xff]
    %v733 = vld [vmem:[#allocation2 + $0x1240] sm:$0xff]
    %v734 = vld [vmem:[#allocation2 + $0x1248] sm:$0xff]
    %v735 = vld [vmem:[#allocation2 + $0x1250] sm:$0xff]
    %v736 = vld [vmem:[#allocation2 + $0x1258] sm:$0xff]
    %v737 = vld [vmem:[#allocation2 + $0x1260] sm:$0xff]
    %v738 = vld [vmem:[#allocation2 + $0x1268] sm:$0xff]
    %v739 = vld [vmem:[#allocation2 + $0x1270] sm:$0xff]
    %v740 = vld [vmem:[#allocation2 + $0x1278] sm:$0xff]
    %v741 = vld [vmem:[#allocation2 + $0x1280] sm:$0xff]
    %v742 = vld [vmem:[#allocation2 + $0x1288] sm:$0xff]
    %v743 = vld [vmem:[#allocation2 + $0x1290] sm:$0xff]
    %v744 = vld [vmem:[#allocation2 + $0x1298] sm:$0xff]
    %v745 = vld [vmem:[#allocation2 + $0x12a0] sm:$0xff]
    %v746 = vld [vmem:[#allocation2 + $0x12a8] sm:$0xff]
    %v747 = vld [vmem:[#allocation2 + $0x12b0] sm:$0xff]
    %v748 = vld [vmem:[#allocation2 + $0x12b8] sm:$0xff]
    %v749 = vld [vmem:[#allocation2 + $0x12c0] sm:$0xff]
    %v750 = vld [vmem:[#allocation2 + $0x12c8] sm:$0xff]
    %v751 = vld [vmem:[#allocation2 + $0x12d0] sm:$0xff]
    %v752 = vld [vmem:[#allocation2 + $0x12d8] sm:$0xff]
    %v753 = vld [vmem:[#allocation2 + $0x12e0] sm:$0xff]
    %v754 = vld [vmem:[#allocation2 + $0x12e8] sm:$0xff]
    %v755 = vld [vmem:[#allocation2 + $0x12f0] sm:$0xff]
    %v756 = vld [vmem:[#allocation2 + $0x12f8] sm:$0xff]
    %v757 = vld [vmem:[#allocation2 + $0x1300] sm:$0xff]
    %v758 = vld [vmem:[#allocation2 + $0x1308] sm:$0xff]
    %v759 = vld [vmem:[#allocation2 + $0x1310] sm:$0xff]
    %v760 = vld [vmem:[#allocation2 + $0x1318] sm:$0xff]
    %v761 = vld [vmem:[#allocation2 + $0x1320] sm:$0xff]
    %v762 = vld [vmem:[#allocation2 + $0x1328] sm:$0xff]
    %v763 = vld [vmem:[#allocation2 + $0x1330] sm:$0xff]
    %v764 = vld [vmem:[#allocation2 + $0x1338] sm:$0xff]
    %v765 = vld [vmem:[#allocation2 + $0x1340] sm:$0xff]
    %v766 = vld [vmem:[#allocation2 + $0x1348] sm:$0xff]
    %v767 = vld [vmem:[#allocation2 + $0x1350] sm:$0xff]
    %v768 = vld [vmem:[#allocation2 + $0x1358] sm:$0xff]
    %v769 = vld [vmem:[#allocation2 + $0x1360] sm:$0xff]
    %v770 = vld [vmem:[#allocation2 + $0x1368] sm:$0xff]
    %v771 = vld [vmem:[#allocation2 + $0x1370] sm:$0xff]
    %v772 = vld [vmem:[#allocation2 + $0x1378] sm:$0xff]
    %v773 = vld [vmem:[#allocation2 + $0x1380] sm:$0xff]
    %v774 = vld [vmem:[#allocation2 + $0x1388] sm:$0xff]
    %v775 = vld [vmem:[#allocation2 + $0x1390] sm:$0xff]
    %v776 = vld [vmem:[#allocation2 + $0x1398] sm:$0xff]
    %v777 = vld [vmem:[#allocation2 + $0x13a0] sm:$0xff]
    %v778 = vld [vmem:[#allocation2 + $0x13a8] sm:$0xff]
    %v779 = vld [vmem:[#allocation2 + $0x13b0] sm:$0xff]
    %v780 = vld [vmem:[#allocation2 + $0x13b8] sm:$0xff]
    %v781 = vld [vmem:[#allocation2 + $0x13c0] sm:$0xff]
    %v782 = vld [vmem:[#allocation2 + $0x13c8] sm:$0xff]
    %v783 = vld [vmem:[#allocation2 + $0x13d0] sm:$0xff]
    %v784 = vld [vmem:[#allocation2 + $0x13d8] sm:$0xff]
    %v785 = vld [vmem:[#allocation2 + $0x13e0] sm:$0xff]
    %v786 = vld [vmem:[#allocation2 + $0x13e8] sm:$0xff]
    %v787 = vld [vmem:[#allocation2 + $0x13f0] sm:$0xff]
    %v788 = vld [vmem:[#allocation2 + $0x13f8] sm:$0xff]
    %v789 = vld [vmem:[#allocation2 + $0x1400] sm:$0xff]
    %v790 = vld [vmem:[#allocation2 + $0x1408] sm:$0xff]
    %v791 = vld [vmem:[#allocation2 + $0x1410] sm:$0xff]
    %v792 = vld [vmem:[#allocation2 + $0x1418] sm:$0xff]
    %v793 = vld [vmem:[#allocation2 + $0x1420] sm:$0xff]
    %v794 = vld [vmem:[#allocation2 + $0x1428] sm:$0xff]
    %v795 = vld [vmem:[#allocation2 + $0x1430] sm:$0xff]
    %v796 = vld [vmem:[#allocation2 + $0x1438] sm:$0xff]
    %v797 = vld [vmem:[#allocation2 + $0x1440] sm:$0xff]
    %v798 = vld [vmem:[#allocation2 + $0x1448] sm:$0xff]
    %v799 = vld [vmem:[#allocation2 + $0x1450] sm:$0xff]
    %v800 = vld [vmem:[#allocation2 + $0x1458] sm:$0xff]
    %v801 = vld [vmem:[#allocation2 + $0x1460] sm:$0xff]
    %v802 = vld [vmem:[#allocation2 + $0x1468] sm:$0xff]
    %v803 = vld [vmem:[#allocation2 + $0x1470] sm:$0xff]
    %v804 = vld [vmem:[#allocation2 + $0x1478] sm:$0xff]
    %v805 = vld [vmem:[#allocation2 + $0x1480] sm:$0xff]
    %v806 = vld [vmem:[#allocation2 + $0x1488] sm:$0xff]
    %v807 = vld [vmem:[#allocation2 + $0x1490] sm:$0xff]
    %v808 = vld [vmem:[#allocation2 + $0x1498] sm:$0xff]
    %v809 = vld [vmem:[#allocation2 + $0x14a0] sm:$0xff]
    %v810 = vld [vmem:[#allocation2 + $0x14a8] sm:$0xff]
    %v811 = vld [vmem:[#allocation2 + $0x14b0] sm:$0xff]
    %v812 = vld [vmem:[#allocation2 + $0x14b8] sm:$0xff]
    %v813 = vld [vmem:[#allocation2 + $0x14c0] sm:$0xff]
    %v814 = vld [vmem:[#allocation2 + $0x14c8] sm:$0xff]
    %v815 = vld [vmem:[#allocation2 + $0x14d0] sm:$0xff]
    %v816 = vld [vmem:[#allocation2 + $0x14d8] sm:$0xff]
    %v817 = vld [vmem:[#allocation2 + $0x14e0] sm:$0xff]
    %v818 = vld [vmem:[#allocation2 + $0x14e8] sm:$0xff]
    %v819 = vld [vmem:[#allocation2 + $0x14f0] sm:$0xff]
    %v820 = vld [vmem:[#allocation2 + $0x14f8] sm:$0xff]
    %v821 = vld [vmem:[#allocation2 + $0x1500] sm:$0xff]
    %v822 = vld [vmem:[#allocation2 + $0x1508] sm:$0xff]
    %v823 = vld [vmem:[#allocation2 + $0x1510] sm:$0xff]
    %v824 = vld [vmem:[#allocation2 + $0x1518] sm:$0xff]
    %v825 = vld [vmem:[#allocation2 + $0x1520] sm:$0xff]
    %v826 = vld [vmem:[#allocation2 + $0x1528] sm:$0xff]
    %v827 = vld [vmem:[#allocation2 + $0x1530] sm:$0xff]
    %v828 = vld [vmem:[#allocation2 + $0x1538] sm:$0xff]
    %v829 = vld [vmem:[#allocation2 + $0x1540] sm:$0xff]
    %v830 = vld [vmem:[#allocation2 + $0x1548] sm:$0xff]
    %v831 = vld [vmem:[#allocation2 + $0x1550] sm:$0xff]
    %v832 = vld [vmem:[#allocation2 + $0x1558] sm:$0xff]
    %v833 = vld [vmem:[#allocation2 + $0x1560] sm:$0xff]
    %v834 = vld [vmem:[#allocation2 + $0x1568] sm:$0xff]
    %v835 = vld [vmem:[#allocation2 + $0x1570] sm:$0xff]
    %v836 = vld [vmem:[#allocation2 + $0x1578] sm:$0xff]
    %v837 = vld [vmem:[#allocation2 + $0x1580] sm:$0xff]
    %v838 = vld [vmem:[#allocation2 + $0x1588] sm:$0xff]
    %v839 = vld [vmem:[#allocation2 + $0x1590] sm:$0xff]
    %v840 = vld [vmem:[#allocation2 + $0x1598] sm:$0xff]
    %v841 = vld [vmem:[#allocation2 + $0x15a0] sm:$0xff]
    %v842 = vld [vmem:[#allocation2 + $0x15a8] sm:$0xff]
    %v843 = vld [vmem:[#allocation2 + $0x15b0] sm:$0xff]
    %v844 = vld [vmem:[#allocation2 + $0x15b8] sm:$0xff]
    %v845 = vld [vmem:[#allocation2 + $0x15c0] sm:$0xff]
    %v846 = vld [vmem:[#allocation2 + $0x15c8] sm:$0xff]
    %v847 = vld [vmem:[#allocation2 + $0x15d0] sm:$0xff]
    %v848 = vld [vmem:[#allocation2 + $0x15d8] sm:$0xff]
    %v849 = vld [vmem:[#allocation2 + $0x15e0] sm:$0xff]
    %v850 = vld [vmem:[#allocation2 + $0x15e8] sm:$0xff]
    %v851 = vld [vmem:[#allocation2 + $0x15f0] sm:$0xff]
    %v852 = vld [vmem:[#allocation2 + $0x15f8] sm:$0xff]
    %v853 = vld [vmem:[#allocation2 + $0x1600] sm:$0xff]
    %v854 = vld [vmem:[#allocation2 + $0x1608] sm:$0xff]
    %v855 = vld [vmem:[#allocation2 + $0x1610] sm:$0xff]
    %v856 = vld [vmem:[#allocation2 + $0x1618] sm:$0xff]
    %v857 = vld [vmem:[#allocation2 + $0x1620] sm:$0xff]
    %v858 = vld [vmem:[#allocation2 + $0x1628] sm:$0xff]
    %v859 = vld [vmem:[#allocation2 + $0x1630] sm:$0xff]
    %v860 = vld [vmem:[#allocation2 + $0x1638] sm:$0xff]
    %v861 = vld [vmem:[#allocation2 + $0x1640] sm:$0xff]
    %v862 = vld [vmem:[#allocation2 + $0x1648] sm:$0xff]
    %v863 = vld [vmem:[#allocation2 + $0x1650] sm:$0xff]
    %v864 = vld [vmem:[#allocation2 + $0x1658] sm:$0xff]
    %v865 = vld [vmem:[#allocation2 + $0x1660] sm:$0xff]
    %v866 = vld [vmem:[#allocation2 + $0x1668] sm:$0xff]
    %v867 = vld [vmem:[#allocation2 + $0x1670] sm:$0xff]
    %v868 = vld [vmem:[#allocation2 + $0x1678] sm:$0xff]
    %v869 = vld [vmem:[#allocation2 + $0x1680] sm:$0xff]
    %v870 = vld [vmem:[#allocation2 + $0x1688] sm:$0xff]
    %v871 = vld [vmem:[#allocation2 + $0x1690] sm:$0xff]
    %v872 = vld [vmem:[#allocation2 + $0x1698] sm:$0xff]
    %v873 = vld [vmem:[#allocation2 + $0x16a0] sm:$0xff]
    %v874 = vld [vmem:[#allocation2 + $0x16a8] sm:$0xff]
    %v875 = vld [vmem:[#allocation2 + $0x16b0] sm:$0xff]
    %v876 = vld [vmem:[#allocation2 + $0x16b8] sm:$0xff]
    %v877 = vld [vmem:[#allocation2 + $0x16c0] sm:$0xff]
    %v878 = vld [vmem:[#allocation2 + $0x16c8] sm:$0xff]
    %v879 = vld [vmem:[#allocation2 + $0x16d0] sm:$0xff]
    %v880 = vld [vmem:[#allocation2 + $0x16d8] sm:$0xff]
    %v881 = vld [vmem:[#allocation2 + $0x16e0] sm:$0xff]
    %v882 = vld [vmem:[#allocation2 + $0x16e8] sm:$0xff]
    %v883 = vld [vmem:[#allocation2 + $0x16f0] sm:$0xff]
    %v884 = vld [vmem:[#allocation2 + $0x16f8] sm:$0xff]
    %v885 = vld [vmem:[#allocation2 + $0x1700] sm:$0xff]
    %v886 = vld [vmem:[#allocation2 + $0x1708] sm:$0xff]
    %v887 = vld [vmem:[#allocation2 + $0x1710] sm:$0xff]
    %v888 = vld [vmem:[#allocation2 + $0x1718] sm:$0xff]
    %v889 = vld [vmem:[#allocation2 + $0x1720] sm:$0xff]
    %v890 = vld [vmem:[#allocation2 + $0x1728] sm:$0xff]
    %v891 = vld [vmem:[#allocation2 + $0x1730] sm:$0xff]
    %v892 = vld [vmem:[#allocation2 + $0x1738] sm:$0xff]
    %v893 = vld [vmem:[#allocation2 + $0x1740] sm:$0xff]
    %v894 = vld [vmem:[#allocation2 + $0x1748] sm:$0xff]
    %v895 = vld [vmem:[#allocation2 + $0x1750] sm:$0xff]
    %v896 = vld [vmem:[#allocation2 + $0x1758] sm:$0xff]
    %v897 = vld [vmem:[#allocation2 + $0x1760] sm:$0xff]
    %v898 = vld [vmem:[#allocation2 + $0x1768] sm:$0xff]
    %v899 = vld [vmem:[#allocation2 + $0x1770] sm:$0xff]
    %v900 = vld [vmem:[#allocation2 + $0x1778] sm:$0xff]
    %v901 = vld [vmem:[#allocation2 + $0x1780] sm:$0xff]
    %v902 = vld [vmem:[#allocation2 + $0x1788] sm:$0xff]
    %v903 = vld [vmem:[#allocation2 + $0x1790] sm:$0xff]
    %v904 = vld [vmem:[#allocation2 + $0x1798] sm:$0xff]
    %v905 = vld [vmem:[#allocation2 + $0x17a0] sm:$0xff]
    %v906 = vld [vmem:[#allocation2 + $0x17a8] sm:$0xff]
    %v907 = vld [vmem:[#allocation2 + $0x17b0] sm:$0xff]
    %v908 = vld [vmem:[#allocation2 + $0x17b8] sm:$0xff]
    %v909 = vld [vmem:[#allocation2 + $0x17c0] sm:$0xff]
    %v910 = vld [vmem:[#allocation2 + $0x17c8] sm:$0xff]
    %v911 = vld [vmem:[#allocation2 + $0x17d0] sm:$0xff]
    %v912 = vld [vmem:[#allocation2 + $0x17d8] sm:$0xff]
    %v913 = vld [vmem:[#allocation2 + $0x17e0] sm:$0xff]
    %v914 = vld [vmem:[#allocation2 + $0x17e8] sm:$0xff]
    %v915 = vld [vmem:[#allocation2 + $0x17f0] sm:$0xff]
    %v916 = vld [vmem:[#allocation2 + $0x17f8] sm:$0xff]
    %v917 = vld [vmem:[#allocation2 + $0x1800] sm:$0xff]
    %v918 = vld [vmem:[#allocation2 + $0x1808] sm:$0xff]
    %v919 = vld [vmem:[#allocation2 + $0x1810] sm:$0xff]
    %v920 = vld [vmem:[#allocation2 + $0x1818] sm:$0xff]
    %v921 = vld [vmem:[#allocation2 + $0x1820] sm:$0xff]
    %v922 = vld [vmem:[#allocation2 + $0x1828] sm:$0xff]
    %v923 = vld [vmem:[#allocation2 + $0x1830] sm:$0xff]
    %v924 = vld [vmem:[#allocation2 + $0x1838] sm:$0xff]
    %v925 = vld [vmem:[#allocation2 + $0x1840] sm:$0xff]
    %v926 = vld [vmem:[#allocation2 + $0x1848] sm:$0xff]
    %v927 = vld [vmem:[#allocation2 + $0x1850] sm:$0xff]
    %v928 = vld [vmem:[#allocation2 + $0x1858] sm:$0xff]
    %v929 = vld [vmem:[#allocation2 + $0x1860] sm:$0xff]
    %v930 = vld [vmem:[#allocation2 + $0x1868] sm:$0xff]
    %v931 = vld [vmem:[#allocation2 + $0x1870] sm:$0xff]
    %v932 = vld [vmem:[#allocation2 + $0x1878] sm:$0xff]
    %v933 = vld [vmem:[#allocation2 + $0x1880] sm:$0xff]
    %v934 = vld [vmem:[#allocation2 + $0x1888] sm:$0xff]
    %v935 = vld [vmem:[#allocation2 + $0x1890] sm:$0xff]
    %v936 = vld [vmem:[#allocation2 + $0x1898] sm:$0xff]
    %v937 = vld [vmem:[#allocation2 + $0x18a0] sm:$0xff]
    %v938 = vld [vmem:[#allocation2 + $0x18a8] sm:$0xff]
    %v939 = vld [vmem:[#allocation2 + $0x18b0] sm:$0xff]
    %v940 = vld [vmem:[#allocation2 + $0x18b8] sm:$0xff]
    %v941 = vld [vmem:[#allocation2 + $0x18c0] sm:$0xff]
    %v942 = vld [vmem:[#allocation2 + $0x18c8] sm:$0xff]
    %v943 = vld [vmem:[#allocation2 + $0x18d0] sm:$0xff]
    %v944 = vld [vmem:[#allocation2 + $0x18d8] sm:$0xff]
    %v945 = vld [vmem:[#allocation2 + $0x18e0] sm:$0xff]
    %v946 = vld [vmem:[#allocation2 + $0x18e8] sm:$0xff]
    %v947 = vld [vmem:[#allocation2 + $0x18f0] sm:$0xff]
    %v948 = vld [vmem:[#allocation2 + $0x18f8] sm:$0xff]
    %v949 = vld [vmem:[#allocation2 + $0x1900] sm:$0xff]
    %v950 = vld [vmem:[#allocation2 + $0x1908] sm:$0xff]
    %v951 = vld [vmem:[#allocation2 + $0x1910] sm:$0xff]
    %v952 = vld [vmem:[#allocation2 + $0x1918] sm:$0xff]
    %v953 = vld [vmem:[#allocation2 + $0x1920] sm:$0xff]
    %v954 = vld [vmem:[#allocation2 + $0x1928] sm:$0xff]
    %v955 = vld [vmem:[#allocation2 + $0x1930] sm:$0xff]
    %v956 = vld [vmem:[#allocation2 + $0x1938] sm:$0xff]
    %v957 = vld [vmem:[#allocation2 + $0x1940] sm:$0xff]
    %v958 = vld [vmem:[#allocation2 + $0x1948] sm:$0xff]
    %v959 = vld [vmem:[#allocation2 + $0x1950] sm:$0xff]
    %v960 = vld [vmem:[#allocation2 + $0x1958] sm:$0xff]
    %v961 = vld [vmem:[#allocation2 + $0x1960] sm:$0xff]
    %v962 = vld [vmem:[#allocation2 + $0x1968] sm:$0xff]
    %v963 = vld [vmem:[#allocation2 + $0x1970] sm:$0xff]
    %v964 = vld [vmem:[#allocation2 + $0x1978] sm:$0xff]
    %v965 = vld [vmem:[#allocation2 + $0x1980] sm:$0xff]
    %v966 = vld [vmem:[#allocation2 + $0x1988] sm:$0xff]
    %v967 = vld [vmem:[#allocation2 + $0x1990] sm:$0xff]
    %v968 = vld [vmem:[#allocation2 + $0x1998] sm:$0xff]
    %v969 = vld [vmem:[#allocation2 + $0x19a0] sm:$0xff]
    %v970 = vld [vmem:[#allocation2 + $0x19a8] sm:$0xff]
    %v971 = vld [vmem:[#allocation2 + $0x19b0] sm:$0xff]
    %v972 = vld [vmem:[#allocation2 + $0x19b8] sm:$0xff]
    %v973 = vld [vmem:[#allocation2 + $0x19c0] sm:$0xff]
    %v974 = vld [vmem:[#allocation2 + $0x19c8] sm:$0xff]
    %v975 = vld [vmem:[#allocation2 + $0x19d0] sm:$0xff]
    %v976 = vld [vmem:[#allocation2 + $0x19d8] sm:$0xff]
    %v977 = vld [vmem:[#allocation2 + $0x19e0] sm:$0xff]
    %v978 = vld [vmem:[#allocation2 + $0x19e8] sm:$0xff]
    %v979 = vld [vmem:[#allocation2 + $0x19f0] sm:$0xff]
    %v980 = vld [vmem:[#allocation2 + $0x19f8] sm:$0xff]
    %v981 = vld [vmem:[#allocation2 + $0x1a00] sm:$0xff]
    %v982 = vld [vmem:[#allocation2 + $0x1a08] sm:$0xff]
    %v983 = vld [vmem:[#allocation2 + $0x1a10] sm:$0xff]
    %v984 = vld [vmem:[#allocation2 + $0x1a18] sm:$0xff]
    %v985 = vld [vmem:[#allocation2 + $0x1a20] sm:$0xff]
    %v986 = vld [vmem:[#allocation2 + $0x1a28] sm:$0xff]
    %v987 = vld [vmem:[#allocation2 + $0x1a30] sm:$0xff]
    %v988 = vld [vmem:[#allocation2 + $0x1a38] sm:$0xff]
    %v989 = vld [vmem:[#allocation2 + $0x1a40] sm:$0xff]
    %v990 = vld [vmem:[#allocation2 + $0x1a48] sm:$0xff]
    %v991 = vld [vmem:[#allocation2 + $0x1a50] sm:$0xff]
    %v992 = vld [vmem:[#allocation2 + $0x1a58] sm:$0xff]
    %v993 = vld [vmem:[#allocation2 + $0x1a60] sm:$0xff]
    %v994 = vld [vmem:[#allocation2 + $0x1a68] sm:$0xff]
    %v995 = vld [vmem:[#allocation2 + $0x1a70] sm:$0xff]
    %v996 = vld [vmem:[#allocation2 + $0x1a78] sm:$0xff]
    %v997 = vld [vmem:[#allocation2 + $0x1a80] sm:$0xff]
    %v998 = vld [vmem:[#allocation2 + $0x1a88] sm:$0xff]
    %v999 = vld [vmem:[#allocation2 + $0x1a90] sm:$0xff]
    %v1000 = vld [vmem:[#allocation2 + $0x1a98] sm:$0xff]
    %v1001 = vld [vmem:[#allocation2 + $0x1aa0] sm:$0xff]
    %v1002 = vld [vmem:[#allocation2 + $0x1aa8] sm:$0xff]
    %v1003 = vld [vmem:[#allocation2 + $0x1ab0] sm:$0xff]
    %v1004 = vld [vmem:[#allocation2 + $0x1ab8] sm:$0xff]
    %v1005 = vld [vmem:[#allocation2 + $0x1ac0] sm:$0xff]
    %v1006 = vld [vmem:[#allocation2 + $0x1ac8] sm:$0xff]
    %v1007 = vld [vmem:[#allocation2 + $0x1ad0] sm:$0xff]
    %v1008 = vld [vmem:[#allocation2 + $0x1ad8] sm:$0xff]
    %v1009 = vld [vmem:[#allocation2 + $0x1ae0] sm:$0xff]
    %v1010 = vld [vmem:[#allocation2 + $0x1ae8] sm:$0xff]
    %v1011 = vld [vmem:[#allocation2 + $0x1af0] sm:$0xff]
    %v1012 = vld [vmem:[#allocation2 + $0x1af8] sm:$0xff]
    %v1013 = vld [vmem:[#allocation2 + $0x1b00] sm:$0xff]
    %v1014 = vld [vmem:[#allocation2 + $0x1b08] sm:$0xff]
    %v1015 = vld [vmem:[#allocation2 + $0x1b10] sm:$0xff]
    %v1016 = vld [vmem:[#allocation2 + $0x1b18] sm:$0xff]
    %v1017 = vld [vmem:[#allocation2 + $0x1b20] sm:$0xff]
    %v1018 = vld [vmem:[#allocation2 + $0x1b28] sm:$0xff]
    %v1019 = vld [vmem:[#allocation2 + $0x1b30] sm:$0xff]
    %v1020 = vld [vmem:[#allocation2 + $0x1b38] sm:$0xff]
    %v1021 = vld [vmem:[#allocation2 + $0x1b40] sm:$0xff]
    %v1022 = vld [vmem:[#allocation2 + $0x1b48] sm:$0xff]
    %v1023 = vld [vmem:[#allocation2 + $0x1b50] sm:$0xff]
    %v1024 = vld [vmem:[#allocation2 + $0x1b58] sm:$0xff]
    %v1025 = vld [vmem:[#allocation2 + $0x1b60] sm:$0xff]
    %v1026 = vld [vmem:[#allocation2 + $0x1b68] sm:$0xff]
    %v1027 = vld [vmem:[#allocation2 + $0x1b70] sm:$0xff]
    %v1028 = vld [vmem:[#allocation2 + $0x1b78] sm:$0xff]
    %v1029 = vld [vmem:[#allocation2 + $0x1b80] sm:$0xff]
    %v1030 = vld [vmem:[#allocation2 + $0x1b88] sm:$0xff]
    %v1031 = vld [vmem:[#allocation2 + $0x1b90] sm:$0xff]
    %v1032 = vld [vmem:[#allocation2 + $0x1b98] sm:$0xff]
    %v1033 = vld [vmem:[#allocation2 + $0x1ba0] sm:$0xff]
    %v1034 = vld [vmem:[#allocation2 + $0x1ba8] sm:$0xff]
    %v1035 = vld [vmem:[#allocation2 + $0x1bb0] sm:$0xff]
    %v1036 = vld [vmem:[#allocation2 + $0x1bb8] sm:$0xff]
    %v1037 = vld [vmem:[#allocation2 + $0x1bc0] sm:$0xff]
    %v1038 = vld [vmem:[#allocation2 + $0x1bc8] sm:$0xff]
    %v1039 = vld [vmem:[#allocation2 + $0x1bd0] sm:$0xff]
    %v1040 = vld [vmem:[#allocation2 + $0x1bd8] sm:$0xff]
    %v1041 = vld [vmem:[#allocation2 + $0x1be0] sm:$0xff]
    %v1042 = vld [vmem:[#allocation2 + $0x1be8] sm:$0xff]
    %v1043 = vld [vmem:[#allocation2 + $0x1bf0] sm:$0xff]
    %v1044 = vld [vmem:[#allocation2 + $0x1bf8] sm:$0xff]
    %v1045 = vld [vmem:[#allocation5] sm:$0xff]
    %v1046 = vld [vmem:[#allocation5 + $0x8] sm:$0xff]
    %v1049 = vlaneseq
    %v1050 = vshrl.u32 %v1049, 7
    %v1051 = vsub.s32 0, %v1050
    %v1052 = vrot.slane %v1045, %v1051
    %v1053 = vlaneseq
    %v1054 = vshrl.u32 %v1053, 7
    %v1055 = vsub.s32 1, %v1054
    %v1056 = vrot.slane %v1045, %v1055
    %v1057 = vlaneseq
    %v1058 = vshrl.u32 %v1057, 7
    %v1059 = vsub.s32 2, %v1058
    %v1060 = vrot.slane %v1045, %v1059
    %v1061 = vlaneseq
    %v1062 = vshrl.u32 %v1061, 7
    %v1063 = vsub.s32 3, %v1062
    %v1064 = vrot.slane %v1045, %v1063
    %v1065 = vlaneseq
    %v1066 = vshrl.u32 %v1065, 7
    %v1067 = vsub.s32 4, %v1066
    %v1068 = vrot.slane %v1045, %v1067
    %v1069 = vlaneseq
    %v1070 = vshrl.u32 %v1069, 7
    %v1071 = vsub.s32 5, %v1070
    %v1072 = vrot.slane %v1045, %v1071
    %v1073 = vlaneseq
    %v1074 = vshrl.u32 %v1073, 7
    %v1075 = vsub.s32 6, %v1074
    %v1076 = vrot.slane %v1045, %v1075
    %v1077 = vlaneseq
    %v1078 = vshrl.u32 %v1077, 7
    %v1079 = vsub.s32 7, %v1078
    %v1080 = vrot.slane %v1045, %v1079
    %v1081 = vlaneseq
    %v1082 = vshrl.u32 %v1081, 7
    %v1083 = vsub.s32 0, %v1082
    %v1084 = vrot.slane %v1046, %v1083
    %v1085 = vlaneseq
    %v1086 = vshrl.u32 %v1085, 7
    %v1087 = vsub.s32 1, %v1086
    %v1088 = vrot.slane %v1046, %v1087
    %v1089 = vlaneseq
    %v1090 = vshrl.u32 %v1089, 7
    %v1091 = vsub.s32 2, %v1090
    %v1092 = vrot.slane %v1046, %v1091
    %v1093 = vlaneseq
    %v1094 = vshrl.u32 %v1093, 7
    %v1095 = vsub.s32 3, %v1094
    %v1096 = vrot.slane %v1046, %v1095
    %v1097 = vlaneseq
    %v1098 = vshrl.u32 %v1097, 7
    %v1099 = vsub.s32 4, %v1098
    %v1100 = vrot.slane %v1046, %v1099
    %v1101 = vlaneseq
    %v1102 = vshrl.u32 %v1101, 7
    %v1103 = vsub.s32 5, %v1102
    %v1104 = vrot.slane %v1046, %v1103
    %v1105 = vlaneseq
    %v1106 = vshrl.u32 %v1105, 7
    %v1107 = vsub.s32 6, %v1106
    %v1108 = vrot.slane %v1046, %v1107
    %v1109 = vlaneseq
    %v1110 = vshrl.u32 %v1109, 7
    %v1111 = vsub.s32 7, %v1110
    %v1112 = vrot.slane %v1046, %v1111
    %v2025 = vunpack.c.l.b16 %v149
    %v2026 = vunpack.c.h.b16 %v149
    %v2027 = vunpack.c.l.b16 %v150
    %v2028 = vunpack.c.h.b16 %v150
    %v2029 = vunpack.c.l.b16 %v151
    %v2030 = vunpack.c.h.b16 %v151
    %v2031 = vunpack.c.l.b16 %v152
    %v2032 = vunpack.c.h.b16 %v152
    %v2033 = vunpack.c.l.b16 %v153
    %v2034 = vunpack.c.h.b16 %v153
    %v2035 = vunpack.c.l.b16 %v154
    %v2036 = vunpack.c.h.b16 %v154
    %v2037 = vunpack.c.l.b16 %v155
    %v2038 = vunpack.c.h.b16 %v155
    %v2039 = vunpack.c.l.b16 %v156
    %v2040 = vunpack.c.h.b16 %v156
    %v2041 = vunpack.c.l.b16 %v157
    %v2042 = vunpack.c.h.b16 %v157
    %v2043 = vunpack.c.l.b16 %v158
    %v2044 = vunpack.c.h.b16 %v158
    %v2045 = vunpack.c.l.b16 %v159
    %v2046 = vunpack.c.h.b16 %v159
    %v2047 = vunpack.c.l.b16 %v160
    %v2048 = vunpack.c.h.b16 %v160
    %v2049 = vunpack.c.l.b16 %v161
    %v2050 = vunpack.c.h.b16 %v161
    %v2051 = vunpack.c.l.b16 %v162
    %v2052 = vunpack.c.h.b16 %v162
    %v2053 = vunpack.c.l.b16 %v163
    %v2054 = vunpack.c.h.b16 %v163
    %v2055 = vunpack.c.l.b16 %v164
    %v2056 = vunpack.c.h.b16 %v164
    %v2057 = vunpack.c.l.b16 %v165
    %v2058 = vunpack.c.h.b16 %v165
    %v2059 = vunpack.c.l.b16 %v166
    %v2060 = vunpack.c.h.b16 %v166
    %v2061 = vunpack.c.l.b16 %v167
    %v2062 = vunpack.c.h.b16 %v167
    %v2063 = vunpack.c.l.b16 %v168
    %v2064 = vunpack.c.h.b16 %v168
    %v2065 = vunpack.c.l.b16 %v169
    %v2066 = vunpack.c.h.b16 %v169
    %v2067 = vunpack.c.l.b16 %v170
    %v2068 = vunpack.c.h.b16 %v170
    %v2069 = vunpack.c.l.b16 %v171
    %v2070 = vunpack.c.h.b16 %v171
    %v2071 = vunpack.c.l.b16 %v172
    %v2072 = vunpack.c.h.b16 %v172
    %v2073 = vunpack.c.l.b16 %v173
    %v2074 = vunpack.c.h.b16 %v173
    %v2075 = vunpack.c.l.b16 %v174
    %v2076 = vunpack.c.h.b16 %v174
    %v2077 = vunpack.c.l.b16 %v175
    %v2078 = vunpack.c.h.b16 %v175
    %v2079 = vunpack.c.l.b16 %v176
    %v2080 = vunpack.c.h.b16 %v176
    %v2081 = vunpack.c.l.b16 %v177
    %v2082 = vunpack.c.h.b16 %v177
    %v2083 = vunpack.c.l.b16 %v178
    %v2084 = vunpack.c.h.b16 %v178
    %v2085 = vunpack.c.l.b16 %v179
    %v2086 = vunpack.c.h.b16 %v179
    %v2087 = vunpack.c.l.b16 %v180
    %v2088 = vunpack.c.h.b16 %v180
    %v2089 = vunpack.c.l.b16 %v181
    %v2090 = vunpack.c.h.b16 %v181
    %v2091 = vunpack.c.l.b16 %v182
    %v2092 = vunpack.c.h.b16 %v182
    %v2093 = vunpack.c.l.b16 %v183
    %v2094 = vunpack.c.h.b16 %v183
    %v2095 = vunpack.c.l.b16 %v184
    %v2096 = vunpack.c.h.b16 %v184
    %v2097 = vunpack.c.l.b16 %v185
    %v2098 = vunpack.c.h.b16 %v185
    %v2099 = vunpack.c.l.b16 %v186
    %v2100 = vunpack.c.h.b16 %v186
    %v2101 = vunpack.c.l.b16 %v187
    %v2102 = vunpack.c.h.b16 %v187
    %v2103 = vunpack.c.l.b16 %v188
    %v2104 = vunpack.c.h.b16 %v188
    %v2105 = vunpack.c.l.b16 %v189
    %v2106 = vunpack.c.h.b16 %v189
    %v2107 = vunpack.c.l.b16 %v190
    %v2108 = vunpack.c.h.b16 %v190
    %v2109 = vunpack.c.l.b16 %v191
    %v2110 = vunpack.c.h.b16 %v191
    %v2111 = vunpack.c.l.b16 %v192
    %v2112 = vunpack.c.h.b16 %v192
    %v2113 = vunpack.c.l.b16 %v193
    %v2114 = vunpack.c.h.b16 %v193
    %v2115 = vunpack.c.l.b16 %v194
    %v2116 = vunpack.c.h.b16 %v194
    %v2117 = vunpack.c.l.b16 %v195
    %v2118 = vunpack.c.h.b16 %v195
    %v2119 = vunpack.c.l.b16 %v196
    %v2120 = vunpack.c.h.b16 %v196
    %v2121 = vunpack.c.l.b16 %v197
    %v2122 = vunpack.c.h.b16 %v197
    %v2123 = vunpack.c.l.b16 %v198
    %v2124 = vunpack.c.h.b16 %v198
    %v2125 = vunpack.c.l.b16 %v199
    %v2126 = vunpack.c.h.b16 %v199
    %v2127 = vunpack.c.l.b16 %v200
    %v2128 = vunpack.c.h.b16 %v200
    %v2129 = vunpack.c.l.b16 %v201
    %v2130 = vunpack.c.h.b16 %v201
    %v2131 = vunpack.c.l.b16 %v202
    %v2132 = vunpack.c.h.b16 %v202
    %v2133 = vunpack.c.l.b16 %v203
    %v2134 = vunpack.c.h.b16 %v203
    %v2135 = vunpack.c.l.b16 %v204
    %v2136 = vunpack.c.h.b16 %v204
    %v2137 = vunpack.c.l.b16 %v205
    %v2138 = vunpack.c.h.b16 %v205
    %v2139 = vunpack.c.l.b16 %v206
    %v2140 = vunpack.c.h.b16 %v206
    %v2141 = vunpack.c.l.b16 %v207
    %v2142 = vunpack.c.h.b16 %v207
    %v2143 = vunpack.c.l.b16 %v208
    %v2144 = vunpack.c.h.b16 %v208
    %v2145 = vunpack.c.l.b16 %v209
    %v2146 = vunpack.c.h.b16 %v209
    %v2147 = vunpack.c.l.b16 %v210
    %v2148 = vunpack.c.h.b16 %v210
    %v2149 = vunpack.c.l.b16 %v211
    %v2150 = vunpack.c.h.b16 %v211
    %v2151 = vunpack.c.l.b16 %v212
    %v2152 = vunpack.c.h.b16 %v212
    %v2153 = vunpack.c.l.b16 %v213
    %v2154 = vunpack.c.h.b16 %v213
    %v2155 = vunpack.c.l.b16 %v214
    %v2156 = vunpack.c.h.b16 %v214
    %v2157 = vunpack.c.l.b16 %v215
    %v2158 = vunpack.c.h.b16 %v215
    %v2159 = vunpack.c.l.b16 %v216
    %v2160 = vunpack.c.h.b16 %v216
    %v2161 = vunpack.c.l.b16 %v217
    %v2162 = vunpack.c.h.b16 %v217
    %v2163 = vunpack.c.l.b16 %v218
    %v2164 = vunpack.c.h.b16 %v218
    %v2165 = vunpack.c.l.b16 %v219
    %v2166 = vunpack.c.h.b16 %v219
    %v2167 = vunpack.c.l.b16 %v220
    %v2168 = vunpack.c.h.b16 %v220
    %v2169 = vunpack.c.l.b16 %v221
    %v2170 = vunpack.c.h.b16 %v221
    %v2171 = vunpack.c.l.b16 %v222
    %v2172 = vunpack.c.h.b16 %v222
    %v2173 = vunpack.c.l.b16 %v223
    %v2174 = vunpack.c.h.b16 %v223
    %v2175 = vunpack.c.l.b16 %v224
    %v2176 = vunpack.c.h.b16 %v224
    %v2177 = vunpack.c.l.b16 %v225
    %v2178 = vunpack.c.h.b16 %v225
    %v2179 = vunpack.c.l.b16 %v226
    %v2180 = vunpack.c.h.b16 %v226
    %v2181 = vunpack.c.l.b16 %v227
    %v2182 = vunpack.c.h.b16 %v227
    %v2183 = vunpack.c.l.b16 %v228
    %v2184 = vunpack.c.h.b16 %v228
    %v2185 = vunpack.c.l.b16 %v229
    %v2186 = vunpack.c.h.b16 %v229
    %v2187 = vunpack.c.l.b16 %v230
    %v2188 = vunpack.c.h.b16 %v230
    %v2189 = vunpack.c.l.b16 %v231
    %v2190 = vunpack.c.h.b16 %v231
    %v2191 = vunpack.c.l.b16 %v232
    %v2192 = vunpack.c.h.b16 %v232
    %v2193 = vunpack.c.l.b16 %v233
    %v2194 = vunpack.c.h.b16 %v233
    %v2195 = vunpack.c.l.b16 %v234
    %v2196 = vunpack.c.h.b16 %v234
    %v2197 = vunpack.c.l.b16 %v235
    %v2198 = vunpack.c.h.b16 %v235
    %v2199 = vunpack.c.l.b16 %v236
    %v2200 = vunpack.c.h.b16 %v236
    %v2201 = vunpack.c.l.b16 %v237
    %v2202 = vunpack.c.h.b16 %v237
    %v2203 = vunpack.c.l.b16 %v238
    %v2204 = vunpack.c.h.b16 %v238
    %v2205 = vunpack.c.l.b16 %v239
    %v2206 = vunpack.c.h.b16 %v239
    %v2207 = vunpack.c.l.b16 %v240
    %v2208 = vunpack.c.h.b16 %v240
    %v2209 = vunpack.c.l.b16 %v241
    %v2210 = vunpack.c.h.b16 %v241
    %v2211 = vunpack.c.l.b16 %v242
    %v2212 = vunpack.c.h.b16 %v242
    %v2213 = vunpack.c.l.b16 %v243
    %v2214 = vunpack.c.h.b16 %v243
    %v2215 = vunpack.c.l.b16 %v244
    %v2216 = vunpack.c.h.b16 %v244
    %v2217 = vunpack.c.l.b16 %v245
    %v2218 = vunpack.c.h.b16 %v245
    %v2219 = vunpack.c.l.b16 %v246
    %v2220 = vunpack.c.h.b16 %v246
    %v2221 = vunpack.c.l.b16 %v247
    %v2222 = vunpack.c.h.b16 %v247
    %v2223 = vunpack.c.l.b16 %v248
    %v2224 = vunpack.c.h.b16 %v248
    %v2225 = vunpack.c.l.b16 %v249
    %v2226 = vunpack.c.h.b16 %v249
    %v2227 = vunpack.c.l.b16 %v250
    %v2228 = vunpack.c.h.b16 %v250
    %v2229 = vunpack.c.l.b16 %v251
    %v2230 = vunpack.c.h.b16 %v251
    %v2231 = vunpack.c.l.b16 %v252
    %v2232 = vunpack.c.h.b16 %v252
    %v2233 = vunpack.c.l.b16 %v253
    %v2234 = vunpack.c.h.b16 %v253
    %v2235 = vunpack.c.l.b16 %v254
    %v2236 = vunpack.c.h.b16 %v254
    %v2237 = vunpack.c.l.b16 %v255
    %v2238 = vunpack.c.h.b16 %v255
    %v2239 = vunpack.c.l.b16 %v256
    %v2240 = vunpack.c.h.b16 %v256
    %v2241 = vunpack.c.l.b16 %v257
    %v2242 = vunpack.c.h.b16 %v257
    %v2243 = vunpack.c.l.b16 %v258
    %v2244 = vunpack.c.h.b16 %v258
    %v2245 = vunpack.c.l.b16 %v259
    %v2246 = vunpack.c.h.b16 %v259
    %v2247 = vunpack.c.l.b16 %v260
    %v2248 = vunpack.c.h.b16 %v260
    %v2249 = vunpack.c.l.b16 %v261
    %v2250 = vunpack.c.h.b16 %v261
    %v2251 = vunpack.c.l.b16 %v262
    %v2252 = vunpack.c.h.b16 %v262
    %v2253 = vunpack.c.l.b16 %v263
    %v2254 = vunpack.c.h.b16 %v263
    %v2255 = vunpack.c.l.b16 %v264
    %v2256 = vunpack.c.h.b16 %v264
    %v2257 = vunpack.c.l.b16 %v265
    %v2258 = vunpack.c.h.b16 %v265
    %v2259 = vunpack.c.l.b16 %v266
    %v2260 = vunpack.c.h.b16 %v266
    %v2261 = vunpack.c.l.b16 %v267
    %v2262 = vunpack.c.h.b16 %v267
    %v2263 = vunpack.c.l.b16 %v268
    %v2264 = vunpack.c.h.b16 %v268
    %v2265 = vunpack.c.l.b16 %v269
    %v2266 = vunpack.c.h.b16 %v269
    %v2267 = vunpack.c.l.b16 %v270
    %v2268 = vunpack.c.h.b16 %v270
    %v2269 = vunpack.c.l.b16 %v271
    %v2270 = vunpack.c.h.b16 %v271
    %v2271 = vunpack.c.l.b16 %v272
    %v2272 = vunpack.c.h.b16 %v272
    %v2273 = vunpack.c.l.b16 %v273
    %v2274 = vunpack.c.h.b16 %v273
    %v2275 = vunpack.c.l.b16 %v274
    %v2276 = vunpack.c.h.b16 %v274
    %v2277 = vunpack.c.l.b16 %v275
    %v2278 = vunpack.c.h.b16 %v275
    %v2279 = vunpack.c.l.b16 %v276
    %v2280 = vunpack.c.h.b16 %v276
    %v2281 = vunpack.c.l.b16 %v277
    %v2282 = vunpack.c.h.b16 %v277
    %v2283 = vunpack.c.l.b16 %v278
    %v2284 = vunpack.c.h.b16 %v278
    %v2285 = vunpack.c.l.b16 %v279
    %v2286 = vunpack.c.h.b16 %v279
    %v2287 = vunpack.c.l.b16 %v280
    %v2288 = vunpack.c.h.b16 %v280
    %v2289 = vunpack.c.l.b16 %v281
    %v2290 = vunpack.c.h.b16 %v281
    %v2291 = vunpack.c.l.b16 %v282
    %v2292 = vunpack.c.h.b16 %v282
    %v2293 = vunpack.c.l.b16 %v283
    %v2294 = vunpack.c.h.b16 %v283
    %v2295 = vunpack.c.l.b16 %v284
    %v2296 = vunpack.c.h.b16 %v284
    %v2297 = vunpack.c.l.b16 %v285
    %v2298 = vunpack.c.h.b16 %v285
    %v2299 = vunpack.c.l.b16 %v286
    %v2300 = vunpack.c.h.b16 %v286
    %v2301 = vunpack.c.l.b16 %v287
    %v2302 = vunpack.c.h.b16 %v287
    %v2303 = vunpack.c.l.b16 %v288
    %v2304 = vunpack.c.h.b16 %v288
    %v2305 = vunpack.c.l.b16 %v289
    %v2306 = vunpack.c.h.b16 %v289
    %v2307 = vunpack.c.l.b16 %v290
    %v2308 = vunpack.c.h.b16 %v290
    %v2309 = vunpack.c.l.b16 %v291
    %v2310 = vunpack.c.h.b16 %v291
    %v2311 = vunpack.c.l.b16 %v292
    %v2312 = vunpack.c.h.b16 %v292
    %v2313 = vunpack.c.l.b16 %v293
    %v2314 = vunpack.c.h.b16 %v293
    %v2315 = vunpack.c.l.b16 %v294
    %v2316 = vunpack.c.h.b16 %v294
    %v2317 = vunpack.c.l.b16 %v295
    %v2318 = vunpack.c.h.b16 %v295
    %v2319 = vunpack.c.l.b16 %v296
    %v2320 = vunpack.c.h.b16 %v296
    %v2321 = vunpack.c.l.b16 %v297
    %v2322 = vunpack.c.h.b16 %v297
    %v2323 = vunpack.c.l.b16 %v298
    %v2324 = vunpack.c.h.b16 %v298
    %v2325 = vunpack.c.l.b16 %v299
    %v2326 = vunpack.c.h.b16 %v299
    %v2327 = vunpack.c.l.b16 %v300
    %v2328 = vunpack.c.h.b16 %v300
    %v2329 = vunpack.c.l.b16 %v301
    %v2330 = vunpack.c.h.b16 %v301
    %v2331 = vunpack.c.l.b16 %v302
    %v2332 = vunpack.c.h.b16 %v302
    %v2333 = vunpack.c.l.b16 %v303
    %v2334 = vunpack.c.h.b16 %v303
    %v2335 = vunpack.c.l.b16 %v304
    %v2336 = vunpack.c.h.b16 %v304
    %v2337 = vunpack.c.l.b16 %v305
    %v2338 = vunpack.c.h.b16 %v305
    %v2339 = vunpack.c.l.b16 %v306
    %v2340 = vunpack.c.h.b16 %v306
    %v2341 = vunpack.c.l.b16 %v307
    %v2342 = vunpack.c.h.b16 %v307
    %v2343 = vunpack.c.l.b16 %v308
    %v2344 = vunpack.c.h.b16 %v308
    %v2345 = vunpack.c.l.b16 %v309
    %v2346 = vunpack.c.h.b16 %v309
    %v2347 = vunpack.c.l.b16 %v310
    %v2348 = vunpack.c.h.b16 %v310
    %v2349 = vunpack.c.l.b16 %v311
    %v2350 = vunpack.c.h.b16 %v311
    %v2351 = vunpack.c.l.b16 %v312
    %v2352 = vunpack.c.h.b16 %v312
    %v2353 = vunpack.c.l.b16 %v313
    %v2354 = vunpack.c.h.b16 %v313
    %v2355 = vunpack.c.l.b16 %v314
    %v2356 = vunpack.c.h.b16 %v314
    %v2357 = vunpack.c.l.b16 %v315
    %v2358 = vunpack.c.h.b16 %v315
    %v2359 = vunpack.c.l.b16 %v316
    %v2360 = vunpack.c.h.b16 %v316
    %v2361 = vunpack.c.l.b16 %v317
    %v2362 = vunpack.c.h.b16 %v317
    %v2363 = vunpack.c.l.b16 %v318
    %v2364 = vunpack.c.h.b16 %v318
    %v2365 = vunpack.c.l.b16 %v319
    %v2366 = vunpack.c.h.b16 %v319
    %v2367 = vunpack.c.l.b16 %v320
    %v2368 = vunpack.c.h.b16 %v320
    %v2369 = vunpack.c.l.b16 %v321
    %v2370 = vunpack.c.h.b16 %v321
    %v2371 = vunpack.c.l.b16 %v322
    %v2372 = vunpack.c.h.b16 %v322
    %v2373 = vunpack.c.l.b16 %v323
    %v2374 = vunpack.c.h.b16 %v323
    %v2375 = vunpack.c.l.b16 %v324
    %v2376 = vunpack.c.h.b16 %v324
    %v2377 = vunpack.c.l.b16 %v325
    %v2378 = vunpack.c.h.b16 %v325
    %v2379 = vunpack.c.l.b16 %v326
    %v2380 = vunpack.c.h.b16 %v326
    %v2381 = vunpack.c.l.b16 %v327
    %v2382 = vunpack.c.h.b16 %v327
    %v2383 = vunpack.c.l.b16 %v328
    %v2384 = vunpack.c.h.b16 %v328
    %v2385 = vunpack.c.l.b16 %v329
    %v2386 = vunpack.c.h.b16 %v329
    %v2387 = vunpack.c.l.b16 %v330
    %v2388 = vunpack.c.h.b16 %v330
    %v2389 = vunpack.c.l.b16 %v331
    %v2390 = vunpack.c.h.b16 %v331
    %v2391 = vunpack.c.l.b16 %v332
    %v2392 = vunpack.c.h.b16 %v332
    %v2393 = vunpack.c.l.b16 %v333
    %v2394 = vunpack.c.h.b16 %v333
    %v2395 = vunpack.c.l.b16 %v334
    %v2396 = vunpack.c.h.b16 %v334
    %v2397 = vunpack.c.l.b16 %v335
    %v2398 = vunpack.c.h.b16 %v335
    %v2399 = vunpack.c.l.b16 %v336
    %v2400 = vunpack.c.h.b16 %v336
    %v2401 = vunpack.c.l.b16 %v337
    %v2402 = vunpack.c.h.b16 %v337
    %v2403 = vunpack.c.l.b16 %v338
    %v2404 = vunpack.c.h.b16 %v338
    %v2405 = vunpack.c.l.b16 %v339
    %v2406 = vunpack.c.h.b16 %v339
    %v2407 = vunpack.c.l.b16 %v340
    %v2408 = vunpack.c.h.b16 %v340
    %v2409 = vunpack.c.l.b16 %v341
    %v2410 = vunpack.c.h.b16 %v341
    %v2411 = vunpack.c.l.b16 %v342
    %v2412 = vunpack.c.h.b16 %v342
    %v2413 = vunpack.c.l.b16 %v343
    %v2414 = vunpack.c.h.b16 %v343
    %v2415 = vunpack.c.l.b16 %v344
    %v2416 = vunpack.c.h.b16 %v344
    %v2417 = vunpack.c.l.b16 %v345
    %v2418 = vunpack.c.h.b16 %v345
    %v2419 = vunpack.c.l.b16 %v346
    %v2420 = vunpack.c.h.b16 %v346
    %v2421 = vunpack.c.l.b16 %v347
    %v2422 = vunpack.c.h.b16 %v347
    %v2423 = vunpack.c.l.b16 %v348
    %v2424 = vunpack.c.h.b16 %v348
    %v2425 = vunpack.c.l.b16 %v349
    %v2426 = vunpack.c.h.b16 %v349
    %v2427 = vunpack.c.l.b16 %v350
    %v2428 = vunpack.c.h.b16 %v350
    %v2429 = vunpack.c.l.b16 %v351
    %v2430 = vunpack.c.h.b16 %v351
    %v2431 = vunpack.c.l.b16 %v352
    %v2432 = vunpack.c.h.b16 %v352
    %v2433 = vunpack.c.l.b16 %v353
    %v2434 = vunpack.c.h.b16 %v353
    %v2435 = vunpack.c.l.b16 %v354
    %v2436 = vunpack.c.h.b16 %v354
    %v2437 = vunpack.c.l.b16 %v355
    %v2438 = vunpack.c.h.b16 %v355
    %v2439 = vunpack.c.l.b16 %v356
    %v2440 = vunpack.c.h.b16 %v356
    %v2441 = vunpack.c.l.b16 %v357
    %v2442 = vunpack.c.h.b16 %v357
    %v2443 = vunpack.c.l.b16 %v358
    %v2444 = vunpack.c.h.b16 %v358
    %v2445 = vunpack.c.l.b16 %v359
    %v2446 = vunpack.c.h.b16 %v359
    %v2447 = vunpack.c.l.b16 %v360
    %v2448 = vunpack.c.h.b16 %v360
    %v2449 = vunpack.c.l.b16 %v361
    %v2450 = vunpack.c.h.b16 %v361
    %v2451 = vunpack.c.l.b16 %v362
    %v2452 = vunpack.c.h.b16 %v362
    %v2453 = vunpack.c.l.b16 %v363
    %v2454 = vunpack.c.h.b16 %v363
    %v2455 = vunpack.c.l.b16 %v364
    %v2456 = vunpack.c.h.b16 %v364
    %v2457 = vunpack.c.l.b16 %v365
    %v2458 = vunpack.c.h.b16 %v365
    %v2459 = vunpack.c.l.b16 %v366
    %v2460 = vunpack.c.h.b16 %v366
    %v2461 = vunpack.c.l.b16 %v367
    %v2462 = vunpack.c.h.b16 %v367
    %v2463 = vunpack.c.l.b16 %v368
    %v2464 = vunpack.c.h.b16 %v368
    %v2465 = vunpack.c.l.b16 %v369
    %v2466 = vunpack.c.h.b16 %v369
    %v2467 = vunpack.c.l.b16 %v370
    %v2468 = vunpack.c.h.b16 %v370
    %v2469 = vunpack.c.l.b16 %v371
    %v2470 = vunpack.c.h.b16 %v371
    %v2471 = vunpack.c.l.b16 %v372
    %v2472 = vunpack.c.h.b16 %v372
    %v2473 = vunpack.c.l.b16 %v373
    %v2474 = vunpack.c.h.b16 %v373
    %v2475 = vunpack.c.l.b16 %v374
    %v2476 = vunpack.c.h.b16 %v374
    %v2477 = vunpack.c.l.b16 %v375
    %v2478 = vunpack.c.h.b16 %v375
    %v2479 = vunpack.c.l.b16 %v376
    %v2480 = vunpack.c.h.b16 %v376
    %v2481 = vunpack.c.l.b16 %v377
    %v2482 = vunpack.c.h.b16 %v377
    %v2483 = vunpack.c.l.b16 %v378
    %v2484 = vunpack.c.h.b16 %v378
    %v2485 = vunpack.c.l.b16 %v379
    %v2486 = vunpack.c.h.b16 %v379
    %v2487 = vunpack.c.l.b16 %v380
    %v2488 = vunpack.c.h.b16 %v380
    %v2489 = vunpack.c.l.b16 %v381
    %v2490 = vunpack.c.h.b16 %v381
    %v2491 = vunpack.c.l.b16 %v382
    %v2492 = vunpack.c.h.b16 %v382
    %v2493 = vunpack.c.l.b16 %v383
    %v2494 = vunpack.c.h.b16 %v383
    %v2495 = vunpack.c.l.b16 %v384
    %v2496 = vunpack.c.h.b16 %v384
    %v2497 = vunpack.c.l.b16 %v385
    %v2498 = vunpack.c.h.b16 %v385
    %v2499 = vunpack.c.l.b16 %v386
    %v2500 = vunpack.c.h.b16 %v386
    %v2501 = vunpack.c.l.b16 %v387
    %v2502 = vunpack.c.h.b16 %v387
    %v2503 = vunpack.c.l.b16 %v388
    %v2504 = vunpack.c.h.b16 %v388
    %v2505 = vunpack.c.l.b16 %v389
    %v2506 = vunpack.c.h.b16 %v389
    %v2507 = vunpack.c.l.b16 %v390
    %v2508 = vunpack.c.h.b16 %v390
    %v2509 = vunpack.c.l.b16 %v391
    %v2510 = vunpack.c.h.b16 %v391
    %v2511 = vunpack.c.l.b16 %v392
    %v2512 = vunpack.c.h.b16 %v392
    %v2513 = vunpack.c.l.b16 %v393
    %v2514 = vunpack.c.h.b16 %v393
    %v2515 = vunpack.c.l.b16 %v394
    %v2516 = vunpack.c.h.b16 %v394
    %v2517 = vunpack.c.l.b16 %v395
    %v2518 = vunpack.c.h.b16 %v395
    %v2519 = vunpack.c.l.b16 %v396
    %v2520 = vunpack.c.h.b16 %v396
    %v2521 = vunpack.c.l.b16 %v397
    %v2522 = vunpack.c.h.b16 %v397
    %v2523 = vunpack.c.l.b16 %v398
    %v2524 = vunpack.c.h.b16 %v398
    %v2525 = vunpack.c.l.b16 %v399
    %v2526 = vunpack.c.h.b16 %v399
    %v2527 = vunpack.c.l.b16 %v400
    %v2528 = vunpack.c.h.b16 %v400
    %v2529 = vunpack.c.l.b16 %v401
    %v2530 = vunpack.c.h.b16 %v401
    %v2531 = vunpack.c.l.b16 %v402
    %v2532 = vunpack.c.h.b16 %v402
    %v2533 = vunpack.c.l.b16 %v403
    %v2534 = vunpack.c.h.b16 %v403
    %v2535 = vunpack.c.l.b16 %v404
    %v2536 = vunpack.c.h.b16 %v404
    %v2537 = vunpack.c.l.b16 %v405
    %v2538 = vunpack.c.h.b16 %v405
    %v2539 = vunpack.c.l.b16 %v406
    %v2540 = vunpack.c.h.b16 %v406
    %v2541 = vunpack.c.l.b16 %v407
    %v2542 = vunpack.c.h.b16 %v407
    %v2543 = vunpack.c.l.b16 %v408
    %v2544 = vunpack.c.h.b16 %v408
    %v2545 = vunpack.c.l.b16 %v409
    %v2546 = vunpack.c.h.b16 %v409
    %v2547 = vunpack.c.l.b16 %v410
    %v2548 = vunpack.c.h.b16 %v410
    %v2549 = vunpack.c.l.b16 %v411
    %v2550 = vunpack.c.h.b16 %v411
    %v2551 = vunpack.c.l.b16 %v412
    %v2552 = vunpack.c.h.b16 %v412
    %v2553 = vunpack.c.l.b16 %v413
    %v2554 = vunpack.c.h.b16 %v413
    %v2555 = vunpack.c.l.b16 %v414
    %v2556 = vunpack.c.h.b16 %v414
    %v2557 = vunpack.c.l.b16 %v415
    %v2558 = vunpack.c.h.b16 %v415
    %v2559 = vunpack.c.l.b16 %v416
    %v2560 = vunpack.c.h.b16 %v416
    %v2561 = vunpack.c.l.b16 %v417
    %v2562 = vunpack.c.h.b16 %v417
    %v2563 = vunpack.c.l.b16 %v418
    %v2564 = vunpack.c.h.b16 %v418
    %v2565 = vunpack.c.l.b16 %v419
    %v2566 = vunpack.c.h.b16 %v419
    %v2567 = vunpack.c.l.b16 %v420
    %v2568 = vunpack.c.h.b16 %v420
    %v2569 = vunpack.c.l.b16 %v421
    %v2570 = vunpack.c.h.b16 %v421
    %v2571 = vunpack.c.l.b16 %v422
    %v2572 = vunpack.c.h.b16 %v422
    %v2573 = vunpack.c.l.b16 %v423
    %v2574 = vunpack.c.h.b16 %v423
    %v2575 = vunpack.c.l.b16 %v424
    %v2576 = vunpack.c.h.b16 %v424
    %v2577 = vunpack.c.l.b16 %v425
    %v2578 = vunpack.c.h.b16 %v425
    %v2579 = vunpack.c.l.b16 %v426
    %v2580 = vunpack.c.h.b16 %v426
    %v2581 = vunpack.c.l.b16 %v427
    %v2582 = vunpack.c.h.b16 %v427
    %v2583 = vunpack.c.l.b16 %v428
    %v2584 = vunpack.c.h.b16 %v428
    %v2585 = vunpack.c.l.b16 %v429
    %v2586 = vunpack.c.h.b16 %v429
    %v2587 = vunpack.c.l.b16 %v430
    %v2588 = vunpack.c.h.b16 %v430
    %v2589 = vunpack.c.l.b16 %v431
    %v2590 = vunpack.c.h.b16 %v431
    %v2591 = vunpack.c.l.b16 %v432
    %v2592 = vunpack.c.h.b16 %v432
    %v2593 = vunpack.c.l.b16 %v433
    %v2594 = vunpack.c.h.b16 %v433
    %v2595 = vunpack.c.l.b16 %v434
    %v2596 = vunpack.c.h.b16 %v434
    %v2597 = vunpack.c.l.b16 %v435
    %v2598 = vunpack.c.h.b16 %v435
    %v2599 = vunpack.c.l.b16 %v436
    %v2600 = vunpack.c.h.b16 %v436
    %v2601 = vunpack.c.l.b16 %v437
    %v2602 = vunpack.c.h.b16 %v437
    %v2603 = vunpack.c.l.b16 %v438
    %v2604 = vunpack.c.h.b16 %v438
    %v2605 = vunpack.c.l.b16 %v439
    %v2606 = vunpack.c.h.b16 %v439
    %v2607 = vunpack.c.l.b16 %v440
    %v2608 = vunpack.c.h.b16 %v440
    %v2609 = vunpack.c.l.b16 %v441
    %v2610 = vunpack.c.h.b16 %v441
    %v2611 = vunpack.c.l.b16 %v442
    %v2612 = vunpack.c.h.b16 %v442
    %v2613 = vunpack.c.l.b16 %v443
    %v2614 = vunpack.c.h.b16 %v443
    %v2615 = vunpack.c.l.b16 %v444
    %v2616 = vunpack.c.h.b16 %v444
    %v2617 = vunpack.c.l.b16 %v445
    %v2618 = vunpack.c.h.b16 %v445
    %v2619 = vunpack.c.l.b16 %v446
    %v2620 = vunpack.c.h.b16 %v446
    %v2621 = vunpack.c.l.b16 %v447
    %v2622 = vunpack.c.h.b16 %v447
    %v2623 = vunpack.c.l.b16 %v448
    %v2624 = vunpack.c.h.b16 %v448
    %v2625 = vunpack.c.l.b16 %v449
    %v2626 = vunpack.c.h.b16 %v449
    %v2627 = vunpack.c.l.b16 %v450
    %v2628 = vunpack.c.h.b16 %v450
    %v2629 = vunpack.c.l.b16 %v451
    %v2630 = vunpack.c.h.b16 %v451
    %v2631 = vunpack.c.l.b16 %v452
    %v2632 = vunpack.c.h.b16 %v452
    %v2633 = vunpack.c.l.b16 %v453
    %v2634 = vunpack.c.h.b16 %v453
    %v2635 = vunpack.c.l.b16 %v454
    %v2636 = vunpack.c.h.b16 %v454
    %v2637 = vunpack.c.l.b16 %v455
    %v2638 = vunpack.c.h.b16 %v455
    %v2639 = vunpack.c.l.b16 %v456
    %v2640 = vunpack.c.h.b16 %v456
    %v2641 = vunpack.c.l.b16 %v457
    %v2642 = vunpack.c.h.b16 %v457
    %v2643 = vunpack.c.l.b16 %v458
    %v2644 = vunpack.c.h.b16 %v458
    %v2645 = vunpack.c.l.b16 %v459
    %v2646 = vunpack.c.h.b16 %v459
    %v2647 = vunpack.c.l.b16 %v460
    %v2648 = vunpack.c.h.b16 %v460
    %v2649 = vunpack.c.l.b16 %v461
    %v2650 = vunpack.c.h.b16 %v461
    %v2651 = vunpack.c.l.b16 %v462
    %v2652 = vunpack.c.h.b16 %v462
    %v2653 = vunpack.c.l.b16 %v463
    %v2654 = vunpack.c.h.b16 %v463
    %v2655 = vunpack.c.l.b16 %v464
    %v2656 = vunpack.c.h.b16 %v464
    %v2657 = vunpack.c.l.b16 %v465
    %v2658 = vunpack.c.h.b16 %v465
    %v2659 = vunpack.c.l.b16 %v466
    %v2660 = vunpack.c.h.b16 %v466
    %v2661 = vunpack.c.l.b16 %v467
    %v2662 = vunpack.c.h.b16 %v467
    %v2663 = vunpack.c.l.b16 %v468
    %v2664 = vunpack.c.h.b16 %v468
    %v2665 = vunpack.c.l.b16 %v469
    %v2666 = vunpack.c.h.b16 %v469
    %v2667 = vunpack.c.l.b16 %v470
    %v2668 = vunpack.c.h.b16 %v470
    %v2669 = vunpack.c.l.b16 %v471
    %v2670 = vunpack.c.h.b16 %v471
    %v2671 = vunpack.c.l.b16 %v472
    %v2672 = vunpack.c.h.b16 %v472
    %v2673 = vunpack.c.l.b16 %v473
    %v2674 = vunpack.c.h.b16 %v473
    %v2675 = vunpack.c.l.b16 %v474
    %v2676 = vunpack.c.h.b16 %v474
    %v2677 = vunpack.c.l.b16 %v475
    %v2678 = vunpack.c.h.b16 %v475
    %v2679 = vunpack.c.l.b16 %v476
    %v2680 = vunpack.c.h.b16 %v476
    %v2681 = vunpack.c.l.b16 %v477
    %v2682 = vunpack.c.h.b16 %v477
    %v2683 = vunpack.c.l.b16 %v478
    %v2684 = vunpack.c.h.b16 %v478
    %v2685 = vunpack.c.l.b16 %v479
    %v2686 = vunpack.c.h.b16 %v479
    %v2687 = vunpack.c.l.b16 %v480
    %v2688 = vunpack.c.h.b16 %v480
    %v2689 = vunpack.c.l.b16 %v481
    %v2690 = vunpack.c.h.b16 %v481
    %v2691 = vunpack.c.l.b16 %v482
    %v2692 = vunpack.c.h.b16 %v482
    %v2693 = vunpack.c.l.b16 %v483
    %v2694 = vunpack.c.h.b16 %v483
    %v2695 = vunpack.c.l.b16 %v484
    %v2696 = vunpack.c.h.b16 %v484
    %v2697 = vunpack.c.l.b16 %v485
    %v2698 = vunpack.c.h.b16 %v485
    %v2699 = vunpack.c.l.b16 %v486
    %v2700 = vunpack.c.h.b16 %v486
    %v2701 = vunpack.c.l.b16 %v487
    %v2702 = vunpack.c.h.b16 %v487
    %v2703 = vunpack.c.l.b16 %v488
    %v2704 = vunpack.c.h.b16 %v488
    %v2705 = vunpack.c.l.b16 %v489
    %v2706 = vunpack.c.h.b16 %v489
    %v2707 = vunpack.c.l.b16 %v490
    %v2708 = vunpack.c.h.b16 %v490
    %v2709 = vunpack.c.l.b16 %v491
    %v2710 = vunpack.c.h.b16 %v491
    %v2711 = vunpack.c.l.b16 %v492
    %v2712 = vunpack.c.h.b16 %v492
    %v2713 = vunpack.c.l.b16 %v493
    %v2714 = vunpack.c.h.b16 %v493
    %v2715 = vunpack.c.l.b16 %v494
    %v2716 = vunpack.c.h.b16 %v494
    %v2717 = vunpack.c.l.b16 %v495
    %v2718 = vunpack.c.h.b16 %v495
    %v2719 = vunpack.c.l.b16 %v496
    %v2720 = vunpack.c.h.b16 %v496
    %v2721 = vunpack.c.l.b16 %v497
    %v2722 = vunpack.c.h.b16 %v497
    %v2723 = vunpack.c.l.b16 %v498
    %v2724 = vunpack.c.h.b16 %v498
    %v2725 = vunpack.c.l.b16 %v499
    %v2726 = vunpack.c.h.b16 %v499
    %v2727 = vunpack.c.l.b16 %v500
    %v2728 = vunpack.c.h.b16 %v500
    %v2729 = vunpack.c.l.b16 %v501
    %v2730 = vunpack.c.h.b16 %v501
    %v2731 = vunpack.c.l.b16 %v502
    %v2732 = vunpack.c.h.b16 %v502
    %v2733 = vunpack.c.l.b16 %v503
    %v2734 = vunpack.c.h.b16 %v503
    %v2735 = vunpack.c.l.b16 %v504
    %v2736 = vunpack.c.h.b16 %v504
    %v2737 = vunpack.c.l.b16 %v505
    %v2738 = vunpack.c.h.b16 %v505
    %v2739 = vunpack.c.l.b16 %v506
    %v2740 = vunpack.c.h.b16 %v506
    %v2741 = vunpack.c.l.b16 %v507
    %v2742 = vunpack.c.h.b16 %v507
    %v2743 = vunpack.c.l.b16 %v508
    %v2744 = vunpack.c.h.b16 %v508
    %v2745 = vunpack.c.l.b16 %v509
    %v2746 = vunpack.c.h.b16 %v509
    %v2747 = vunpack.c.l.b16 %v510
    %v2748 = vunpack.c.h.b16 %v510
    %v2749 = vunpack.c.l.b16 %v511
    %v2750 = vunpack.c.h.b16 %v511
    %v2751 = vunpack.c.l.b16 %v512
    %v2752 = vunpack.c.h.b16 %v512
    %v2753 = vunpack.c.l.b16 %v513
    %v2754 = vunpack.c.h.b16 %v513
    %v2755 = vunpack.c.l.b16 %v514
    %v2756 = vunpack.c.h.b16 %v514
    %v2757 = vunpack.c.l.b16 %v515
    %v2758 = vunpack.c.h.b16 %v515
    %v2759 = vunpack.c.l.b16 %v516
    %v2760 = vunpack.c.h.b16 %v516
    %v2761 = vunpack.c.l.b16 %v517
    %v2762 = vunpack.c.h.b16 %v517
    %v2763 = vunpack.c.l.b16 %v518
    %v2764 = vunpack.c.h.b16 %v518
    %v2765 = vunpack.c.l.b16 %v519
    %v2766 = vunpack.c.h.b16 %v519
    %v2767 = vunpack.c.l.b16 %v520
    %v2768 = vunpack.c.h.b16 %v520
    %v2769 = vunpack.c.l.b16 %v521
    %v2770 = vunpack.c.h.b16 %v521
    %v2771 = vunpack.c.l.b16 %v522
    %v2772 = vunpack.c.h.b16 %v522
    %v2773 = vunpack.c.l.b16 %v523
    %v2774 = vunpack.c.h.b16 %v523
    %v2775 = vunpack.c.l.b16 %v524
    %v2776 = vunpack.c.h.b16 %v524
    %v2777 = vunpack.c.l.b16 %v525
    %v2778 = vunpack.c.h.b16 %v525
    %v2779 = vunpack.c.l.b16 %v526
    %v2780 = vunpack.c.h.b16 %v526
    %v2781 = vunpack.c.l.b16 %v527
    %v2782 = vunpack.c.h.b16 %v527
    %v2783 = vunpack.c.l.b16 %v528
    %v2784 = vunpack.c.h.b16 %v528
    %v2785 = vunpack.c.l.b16 %v529
    %v2786 = vunpack.c.h.b16 %v529
    %v2787 = vunpack.c.l.b16 %v530
    %v2788 = vunpack.c.h.b16 %v530
    %v2789 = vunpack.c.l.b16 %v531
    %v2790 = vunpack.c.h.b16 %v531
    %v2791 = vunpack.c.l.b16 %v532
    %v2792 = vunpack.c.h.b16 %v532
    %v2793 = vunpack.c.l.b16 %v533
    %v2794 = vunpack.c.h.b16 %v533
    %v2795 = vunpack.c.l.b16 %v534
    %v2796 = vunpack.c.h.b16 %v534
    %v2797 = vunpack.c.l.b16 %v535
    %v2798 = vunpack.c.h.b16 %v535
    %v2799 = vunpack.c.l.b16 %v536
    %v2800 = vunpack.c.h.b16 %v536
    %v2801 = vunpack.c.l.b16 %v537
    %v2802 = vunpack.c.h.b16 %v537
    %v2803 = vunpack.c.l.b16 %v538
    %v2804 = vunpack.c.h.b16 %v538
    %v2805 = vunpack.c.l.b16 %v539
    %v2806 = vunpack.c.h.b16 %v539
    %v2807 = vunpack.c.l.b16 %v540
    %v2808 = vunpack.c.h.b16 %v540
    %v2809 = vunpack.c.l.b16 %v541
    %v2810 = vunpack.c.h.b16 %v541
    %v2811 = vunpack.c.l.b16 %v542
    %v2812 = vunpack.c.h.b16 %v542
    %v2813 = vunpack.c.l.b16 %v543
    %v2814 = vunpack.c.h.b16 %v543
    %v2815 = vunpack.c.l.b16 %v544
    %v2816 = vunpack.c.h.b16 %v544
    %v2817 = vunpack.c.l.b16 %v545
    %v2818 = vunpack.c.h.b16 %v545
    %v2819 = vunpack.c.l.b16 %v546
    %v2820 = vunpack.c.h.b16 %v546
    %v2821 = vunpack.c.l.b16 %v547
    %v2822 = vunpack.c.h.b16 %v547
    %v2823 = vunpack.c.l.b16 %v548
    %v2824 = vunpack.c.h.b16 %v548
    %v2825 = vunpack.c.l.b16 %v549
    %v2826 = vunpack.c.h.b16 %v549
    %v2827 = vunpack.c.l.b16 %v550
    %v2828 = vunpack.c.h.b16 %v550
    %v2829 = vunpack.c.l.b16 %v551
    %v2830 = vunpack.c.h.b16 %v551
    %v2831 = vunpack.c.l.b16 %v552
    %v2832 = vunpack.c.h.b16 %v552
    %v2833 = vunpack.c.l.b16 %v553
    %v2834 = vunpack.c.h.b16 %v553
    %v2835 = vunpack.c.l.b16 %v554
    %v2836 = vunpack.c.h.b16 %v554
    %v2837 = vunpack.c.l.b16 %v555
    %v2838 = vunpack.c.h.b16 %v555
    %v2839 = vunpack.c.l.b16 %v556
    %v2840 = vunpack.c.h.b16 %v556
    %v2841 = vunpack.c.l.b16 %v557
    %v2842 = vunpack.c.h.b16 %v557
    %v2843 = vunpack.c.l.b16 %v558
    %v2844 = vunpack.c.h.b16 %v558
    %v2845 = vunpack.c.l.b16 %v559
    %v2846 = vunpack.c.h.b16 %v559
    %v2847 = vunpack.c.l.b16 %v560
    %v2848 = vunpack.c.h.b16 %v560
    %v2849 = vunpack.c.l.b16 %v561
    %v2850 = vunpack.c.h.b16 %v561
    %v2851 = vunpack.c.l.b16 %v562
    %v2852 = vunpack.c.h.b16 %v562
    %v2853 = vunpack.c.l.b16 %v563
    %v2854 = vunpack.c.h.b16 %v563
    %v2855 = vunpack.c.l.b16 %v564
    %v2856 = vunpack.c.h.b16 %v564
    %v2857 = vunpack.c.l.b16 %v565
    %v2858 = vunpack.c.h.b16 %v565
    %v2859 = vunpack.c.l.b16 %v566
    %v2860 = vunpack.c.h.b16 %v566
    %v2861 = vunpack.c.l.b16 %v567
    %v2862 = vunpack.c.h.b16 %v567
    %v2863 = vunpack.c.l.b16 %v568
    %v2864 = vunpack.c.h.b16 %v568
    %v2865 = vunpack.c.l.b16 %v569
    %v2866 = vunpack.c.h.b16 %v569
    %v2867 = vunpack.c.l.b16 %v570
    %v2868 = vunpack.c.h.b16 %v570
    %v2869 = vunpack.c.l.b16 %v571
    %v2870 = vunpack.c.h.b16 %v571
    %v2871 = vunpack.c.l.b16 %v572
    %v2872 = vunpack.c.h.b16 %v572
    %v2873 = vunpack.c.l.b16 %v573
    %v2874 = vunpack.c.h.b16 %v573
    %v2875 = vunpack.c.l.b16 %v574
    %v2876 = vunpack.c.h.b16 %v574
    %v2877 = vunpack.c.l.b16 %v575
    %v2878 = vunpack.c.h.b16 %v575
    %v2879 = vunpack.c.l.b16 %v576
    %v2880 = vunpack.c.h.b16 %v576
    %v2881 = vunpack.c.l.b16 %v577
    %v2882 = vunpack.c.h.b16 %v577
    %v2883 = vunpack.c.l.b16 %v578
    %v2884 = vunpack.c.h.b16 %v578
    %v2885 = vunpack.c.l.b16 %v579
    %v2886 = vunpack.c.h.b16 %v579
    %v2887 = vunpack.c.l.b16 %v580
    %v2888 = vunpack.c.h.b16 %v580
    %v2889 = vunpack.c.l.b16 %v581
    %v2890 = vunpack.c.h.b16 %v581
    %v2891 = vunpack.c.l.b16 %v582
    %v2892 = vunpack.c.h.b16 %v582
    %v2893 = vunpack.c.l.b16 %v583
    %v2894 = vunpack.c.h.b16 %v583
    %v2895 = vunpack.c.l.b16 %v584
    %v2896 = vunpack.c.h.b16 %v584
    %v2897 = vunpack.c.l.b16 %v585
    %v2898 = vunpack.c.h.b16 %v585
    %v2899 = vunpack.c.l.b16 %v586
    %v2900 = vunpack.c.h.b16 %v586
    %v2901 = vunpack.c.l.b16 %v587
    %v2902 = vunpack.c.h.b16 %v587
    %v2903 = vunpack.c.l.b16 %v588
    %v2904 = vunpack.c.h.b16 %v588
    %v2905 = vunpack.c.l.b16 %v589
    %v2906 = vunpack.c.h.b16 %v589
    %v2907 = vunpack.c.l.b16 %v590
    %v2908 = vunpack.c.h.b16 %v590
    %v2909 = vunpack.c.l.b16 %v591
    %v2910 = vunpack.c.h.b16 %v591
    %v2911 = vunpack.c.l.b16 %v592
    %v2912 = vunpack.c.h.b16 %v592
    %v2913 = vunpack.c.l.b16 %v593
    %v2914 = vunpack.c.h.b16 %v593
    %v2915 = vunpack.c.l.b16 %v594
    %v2916 = vunpack.c.h.b16 %v594
    %v2917 = vunpack.c.l.b16 %v595
    %v2918 = vunpack.c.h.b16 %v595
    %v2919 = vunpack.c.l.b16 %v596
    %v2920 = vunpack.c.h.b16 %v596
    %v2921 = vunpack.c.l.b16 %v597
    %v2922 = vunpack.c.h.b16 %v597
    %v2923 = vunpack.c.l.b16 %v598
    %v2924 = vunpack.c.h.b16 %v598
    %v2925 = vunpack.c.l.b16 %v599
    %v2926 = vunpack.c.h.b16 %v599
    %v2927 = vunpack.c.l.b16 %v600
    %v2928 = vunpack.c.h.b16 %v600
    %v2929 = vunpack.c.l.b16 %v601
    %v2930 = vunpack.c.h.b16 %v601
    %v2931 = vunpack.c.l.b16 %v602
    %v2932 = vunpack.c.h.b16 %v602
    %v2933 = vunpack.c.l.b16 %v603
    %v2934 = vunpack.c.h.b16 %v603
    %v2935 = vunpack.c.l.b16 %v604
    %v2936 = vunpack.c.h.b16 %v604
    %v2937 = vunpack.c.l.b16 %v605
    %v2938 = vunpack.c.h.b16 %v605
    %v2939 = vunpack.c.l.b16 %v606
    %v2940 = vunpack.c.h.b16 %v606
    %v2941 = vunpack.c.l.b16 %v607
    %v2942 = vunpack.c.h.b16 %v607
    %v2943 = vunpack.c.l.b16 %v608
    %v2944 = vunpack.c.h.b16 %v608
    %v2945 = vunpack.c.l.b16 %v609
    %v2946 = vunpack.c.h.b16 %v609
    %v2947 = vunpack.c.l.b16 %v610
    %v2948 = vunpack.c.h.b16 %v610
    %v2949 = vunpack.c.l.b16 %v611
    %v2950 = vunpack.c.h.b16 %v611
    %v2951 = vunpack.c.l.b16 %v612
    %v2952 = vunpack.c.h.b16 %v612
    %v2953 = vunpack.c.l.b16 %v613
    %v2954 = vunpack.c.h.b16 %v613
    %v2955 = vunpack.c.l.b16 %v614
    %v2956 = vunpack.c.h.b16 %v614
    %v2957 = vunpack.c.l.b16 %v615
    %v2958 = vunpack.c.h.b16 %v615
    %v2959 = vunpack.c.l.b16 %v616
    %v2960 = vunpack.c.h.b16 %v616
    %v2961 = vunpack.c.l.b16 %v617
    %v2962 = vunpack.c.h.b16 %v617
    %v2963 = vunpack.c.l.b16 %v618
    %v2964 = vunpack.c.h.b16 %v618
    %v2965 = vunpack.c.l.b16 %v619
    %v2966 = vunpack.c.h.b16 %v619
    %v2967 = vunpack.c.l.b16 %v620
    %v2968 = vunpack.c.h.b16 %v620
    %v2969 = vunpack.c.l.b16 %v621
    %v2970 = vunpack.c.h.b16 %v621
    %v2971 = vunpack.c.l.b16 %v622
    %v2972 = vunpack.c.h.b16 %v622
    %v2973 = vunpack.c.l.b16 %v623
    %v2974 = vunpack.c.h.b16 %v623
    %v2975 = vunpack.c.l.b16 %v624
    %v2976 = vunpack.c.h.b16 %v624
    %v2977 = vunpack.c.l.b16 %v625
    %v2978 = vunpack.c.h.b16 %v625
    %v2979 = vunpack.c.l.b16 %v626
    %v2980 = vunpack.c.h.b16 %v626
    %v2981 = vunpack.c.l.b16 %v627
    %v2982 = vunpack.c.h.b16 %v627
    %v2983 = vunpack.c.l.b16 %v628
    %v2984 = vunpack.c.h.b16 %v628
    %v2985 = vunpack.c.l.b16 %v629
    %v2986 = vunpack.c.h.b16 %v629
    %v2987 = vunpack.c.l.b16 %v630
    %v2988 = vunpack.c.h.b16 %v630
    %v2989 = vunpack.c.l.b16 %v631
    %v2990 = vunpack.c.h.b16 %v631
    %v2991 = vunpack.c.l.b16 %v632
    %v2992 = vunpack.c.h.b16 %v632
    %v2993 = vunpack.c.l.b16 %v633
    %v2994 = vunpack.c.h.b16 %v633
    %v2995 = vunpack.c.l.b16 %v634
    %v2996 = vunpack.c.h.b16 %v634
    %v2997 = vunpack.c.l.b16 %v635
    %v2998 = vunpack.c.h.b16 %v635
    %v2999 = vunpack.c.l.b16 %v636
    %v3000 = vunpack.c.h.b16 %v636
    %v3001 = vunpack.c.l.b16 %v637
    %v3002 = vunpack.c.h.b16 %v637
    %v3003 = vunpack.c.l.b16 %v638
    %v3004 = vunpack.c.h.b16 %v638
    %v3005 = vunpack.c.l.b16 %v639
    %v3006 = vunpack.c.h.b16 %v639
    %v3007 = vunpack.c.l.b16 %v640
    %v3008 = vunpack.c.h.b16 %v640
    %v3009 = vunpack.c.l.b16 %v641
    %v3010 = vunpack.c.h.b16 %v641
    %v3011 = vunpack.c.l.b16 %v642
    %v3012 = vunpack.c.h.b16 %v642
    %v3013 = vunpack.c.l.b16 %v643
    %v3014 = vunpack.c.h.b16 %v643
    %v3015 = vunpack.c.l.b16 %v644
    %v3016 = vunpack.c.h.b16 %v644
    %v3017 = vunpack.c.l.b16 %v645
    %v3018 = vunpack.c.h.b16 %v645
    %v3019 = vunpack.c.l.b16 %v646
    %v3020 = vunpack.c.h.b16 %v646
    %v3021 = vunpack.c.l.b16 %v647
    %v3022 = vunpack.c.h.b16 %v647
    %v3023 = vunpack.c.l.b16 %v648
    %v3024 = vunpack.c.h.b16 %v648
    %v3025 = vunpack.c.l.b16 %v649
    %v3026 = vunpack.c.h.b16 %v649
    %v3027 = vunpack.c.l.b16 %v650
    %v3028 = vunpack.c.h.b16 %v650
    %v3029 = vunpack.c.l.b16 %v651
    %v3030 = vunpack.c.h.b16 %v651
    %v3031 = vunpack.c.l.b16 %v652
    %v3032 = vunpack.c.h.b16 %v652
    %v3033 = vunpack.c.l.b16 %v653
    %v3034 = vunpack.c.h.b16 %v653
    %v3035 = vunpack.c.l.b16 %v654
    %v3036 = vunpack.c.h.b16 %v654
    %v3037 = vunpack.c.l.b16 %v655
    %v3038 = vunpack.c.h.b16 %v655
    %v3039 = vunpack.c.l.b16 %v656
    %v3040 = vunpack.c.h.b16 %v656
    %v3041 = vunpack.c.l.b16 %v657
    %v3042 = vunpack.c.h.b16 %v657
    %v3043 = vunpack.c.l.b16 %v658
    %v3044 = vunpack.c.h.b16 %v658
    %v3045 = vunpack.c.l.b16 %v659
    %v3046 = vunpack.c.h.b16 %v659
    %v3047 = vunpack.c.l.b16 %v660
    %v3048 = vunpack.c.h.b16 %v660
    %v3049 = vunpack.c.l.b16 %v661
    %v3050 = vunpack.c.h.b16 %v661
    %v3051 = vunpack.c.l.b16 %v662
    %v3052 = vunpack.c.h.b16 %v662
    %v3053 = vunpack.c.l.b16 %v663
    %v3054 = vunpack.c.h.b16 %v663
    %v3055 = vunpack.c.l.b16 %v664
    %v3056 = vunpack.c.h.b16 %v664
    %v3057 = vunpack.c.l.b16 %v665
    %v3058 = vunpack.c.h.b16 %v665
    %v3059 = vunpack.c.l.b16 %v666
    %v3060 = vunpack.c.h.b16 %v666
    %v3061 = vunpack.c.l.b16 %v667
    %v3062 = vunpack.c.h.b16 %v667
    %v3063 = vunpack.c.l.b16 %v668
    %v3064 = vunpack.c.h.b16 %v668
    %v3065 = vunpack.c.l.b16 %v669
    %v3066 = vunpack.c.h.b16 %v669
    %v3067 = vunpack.c.l.b16 %v670
    %v3068 = vunpack.c.h.b16 %v670
    %v3069 = vunpack.c.l.b16 %v671
    %v3070 = vunpack.c.h.b16 %v671
    %v3071 = vunpack.c.l.b16 %v672
    %v3072 = vunpack.c.h.b16 %v672
    %v3073 = vunpack.c.l.b16 %v673
    %v3074 = vunpack.c.h.b16 %v673
    %v3075 = vunpack.c.l.b16 %v674
    %v3076 = vunpack.c.h.b16 %v674
    %v3077 = vunpack.c.l.b16 %v675
    %v3078 = vunpack.c.h.b16 %v675
    %v3079 = vunpack.c.l.b16 %v676
    %v3080 = vunpack.c.h.b16 %v676
    %v3081 = vunpack.c.l.b16 %v677
    %v3082 = vunpack.c.h.b16 %v677
    %v3083 = vunpack.c.l.b16 %v678
    %v3084 = vunpack.c.h.b16 %v678
    %v3085 = vunpack.c.l.b16 %v679
    %v3086 = vunpack.c.h.b16 %v679
    %v3087 = vunpack.c.l.b16 %v680
    %v3088 = vunpack.c.h.b16 %v680
    %v3089 = vunpack.c.l.b16 %v681
    %v3090 = vunpack.c.h.b16 %v681
    %v3091 = vunpack.c.l.b16 %v682
    %v3092 = vunpack.c.h.b16 %v682
    %v3093 = vunpack.c.l.b16 %v683
    %v3094 = vunpack.c.h.b16 %v683
    %v3095 = vunpack.c.l.b16 %v684
    %v3096 = vunpack.c.h.b16 %v684
    %v3097 = vunpack.c.l.b16 %v685
    %v3098 = vunpack.c.h.b16 %v685
    %v3099 = vunpack.c.l.b16 %v686
    %v3100 = vunpack.c.h.b16 %v686
    %v3101 = vunpack.c.l.b16 %v687
    %v3102 = vunpack.c.h.b16 %v687
    %v3103 = vunpack.c.l.b16 %v688
    %v3104 = vunpack.c.h.b16 %v688
    %v3105 = vunpack.c.l.b16 %v689
    %v3106 = vunpack.c.h.b16 %v689
    %v3107 = vunpack.c.l.b16 %v690
    %v3108 = vunpack.c.h.b16 %v690
    %v3109 = vunpack.c.l.b16 %v691
    %v3110 = vunpack.c.h.b16 %v691
    %v3111 = vunpack.c.l.b16 %v692
    %v3112 = vunpack.c.h.b16 %v692
    %v3113 = vunpack.c.l.b16 %v693
    %v3114 = vunpack.c.h.b16 %v693
    %v3115 = vunpack.c.l.b16 %v694
    %v3116 = vunpack.c.h.b16 %v694
    %v3117 = vunpack.c.l.b16 %v695
    %v3118 = vunpack.c.h.b16 %v695
    %v3119 = vunpack.c.l.b16 %v696
    %v3120 = vunpack.c.h.b16 %v696
    %v3121 = vunpack.c.l.b16 %v697
    %v3122 = vunpack.c.h.b16 %v697
    %v3123 = vunpack.c.l.b16 %v698
    %v3124 = vunpack.c.h.b16 %v698
    %v3125 = vunpack.c.l.b16 %v699
    %v3126 = vunpack.c.h.b16 %v699
    %v3127 = vunpack.c.l.b16 %v700
    %v3128 = vunpack.c.h.b16 %v700
    %v3129 = vunpack.c.l.b16 %v701
    %v3130 = vunpack.c.h.b16 %v701
    %v3131 = vunpack.c.l.b16 %v702
    %v3132 = vunpack.c.h.b16 %v702
    %v3133 = vunpack.c.l.b16 %v703
    %v3134 = vunpack.c.h.b16 %v703
    %v3135 = vunpack.c.l.b16 %v704
    %v3136 = vunpack.c.h.b16 %v704
    %v3137 = vunpack.c.l.b16 %v705
    %v3138 = vunpack.c.h.b16 %v705
    %v3139 = vunpack.c.l.b16 %v706
    %v3140 = vunpack.c.h.b16 %v706
    %v3141 = vunpack.c.l.b16 %v707
    %v3142 = vunpack.c.h.b16 %v707
    %v3143 = vunpack.c.l.b16 %v708
    %v3144 = vunpack.c.h.b16 %v708
    %v3145 = vunpack.c.l.b16 %v709
    %v3146 = vunpack.c.h.b16 %v709
    %v3147 = vunpack.c.l.b16 %v710
    %v3148 = vunpack.c.h.b16 %v710
    %v3149 = vunpack.c.l.b16 %v711
    %v3150 = vunpack.c.h.b16 %v711
    %v3151 = vunpack.c.l.b16 %v712
    %v3152 = vunpack.c.h.b16 %v712
    %v3153 = vunpack.c.l.b16 %v713
    %v3154 = vunpack.c.h.b16 %v713
    %v3155 = vunpack.c.l.b16 %v714
    %v3156 = vunpack.c.h.b16 %v714
    %v3157 = vunpack.c.l.b16 %v715
    %v3158 = vunpack.c.h.b16 %v715
    %v3159 = vunpack.c.l.b16 %v716
    %v3160 = vunpack.c.h.b16 %v716
    %v3161 = vunpack.c.l.b16 %v717
    %v3162 = vunpack.c.h.b16 %v717
    %v3163 = vunpack.c.l.b16 %v718
    %v3164 = vunpack.c.h.b16 %v718
    %v3165 = vunpack.c.l.b16 %v719
    %v3166 = vunpack.c.h.b16 %v719
    %v3167 = vunpack.c.l.b16 %v720
    %v3168 = vunpack.c.h.b16 %v720
    %v3169 = vunpack.c.l.b16 %v721
    %v3170 = vunpack.c.h.b16 %v721
    %v3171 = vunpack.c.l.b16 %v722
    %v3172 = vunpack.c.h.b16 %v722
    %v3173 = vunpack.c.l.b16 %v723
    %v3174 = vunpack.c.h.b16 %v723
    %v3175 = vunpack.c.l.b16 %v724
    %v3176 = vunpack.c.h.b16 %v724
    %v3177 = vunpack.c.l.b16 %v725
    %v3178 = vunpack.c.h.b16 %v725
    %v3179 = vunpack.c.l.b16 %v726
    %v3180 = vunpack.c.h.b16 %v726
    %v3181 = vunpack.c.l.b16 %v727
    %v3182 = vunpack.c.h.b16 %v727
    %v3183 = vunpack.c.l.b16 %v728
    %v3184 = vunpack.c.h.b16 %v728
    %v3185 = vunpack.c.l.b16 %v729
    %v3186 = vunpack.c.h.b16 %v729
    %v3187 = vunpack.c.l.b16 %v730
    %v3188 = vunpack.c.h.b16 %v730
    %v3189 = vunpack.c.l.b16 %v731
    %v3190 = vunpack.c.h.b16 %v731
    %v3191 = vunpack.c.l.b16 %v732
    %v3192 = vunpack.c.h.b16 %v732
    %v3193 = vunpack.c.l.b16 %v733
    %v3194 = vunpack.c.h.b16 %v733
    %v3195 = vunpack.c.l.b16 %v734
    %v3196 = vunpack.c.h.b16 %v734
    %v3197 = vunpack.c.l.b16 %v735
    %v3198 = vunpack.c.h.b16 %v735
    %v3199 = vunpack.c.l.b16 %v736
    %v3200 = vunpack.c.h.b16 %v736
    %v3201 = vunpack.c.l.b16 %v737
    %v3202 = vunpack.c.h.b16 %v737
    %v3203 = vunpack.c.l.b16 %v738
    %v3204 = vunpack.c.h.b16 %v738
    %v3205 = vunpack.c.l.b16 %v739
    %v3206 = vunpack.c.h.b16 %v739
    %v3207 = vunpack.c.l.b16 %v740
    %v3208 = vunpack.c.h.b16 %v740
    %v3209 = vunpack.c.l.b16 %v741
    %v3210 = vunpack.c.h.b16 %v741
    %v3211 = vunpack.c.l.b16 %v742
    %v3212 = vunpack.c.h.b16 %v742
    %v3213 = vunpack.c.l.b16 %v743
    %v3214 = vunpack.c.h.b16 %v743
    %v3215 = vunpack.c.l.b16 %v744
    %v3216 = vunpack.c.h.b16 %v744
    %v3217 = vunpack.c.l.b16 %v745
    %v3218 = vunpack.c.h.b16 %v745
    %v3219 = vunpack.c.l.b16 %v746
    %v3220 = vunpack.c.h.b16 %v746
    %v3221 = vunpack.c.l.b16 %v747
    %v3222 = vunpack.c.h.b16 %v747
    %v3223 = vunpack.c.l.b16 %v748
    %v3224 = vunpack.c.h.b16 %v748
    %v3225 = vunpack.c.l.b16 %v749
    %v3226 = vunpack.c.h.b16 %v749
    %v3227 = vunpack.c.l.b16 %v750
    %v3228 = vunpack.c.h.b16 %v750
    %v3229 = vunpack.c.l.b16 %v751
    %v3230 = vunpack.c.h.b16 %v751
    %v3231 = vunpack.c.l.b16 %v752
    %v3232 = vunpack.c.h.b16 %v752
    %v3233 = vunpack.c.l.b16 %v753
    %v3234 = vunpack.c.h.b16 %v753
    %v3235 = vunpack.c.l.b16 %v754
    %v3236 = vunpack.c.h.b16 %v754
    %v3237 = vunpack.c.l.b16 %v755
    %v3238 = vunpack.c.h.b16 %v755
    %v3239 = vunpack.c.l.b16 %v756
    %v3240 = vunpack.c.h.b16 %v756
    %v3241 = vunpack.c.l.b16 %v757
    %v3242 = vunpack.c.h.b16 %v757
    %v3243 = vunpack.c.l.b16 %v758
    %v3244 = vunpack.c.h.b16 %v758
    %v3245 = vunpack.c.l.b16 %v759
    %v3246 = vunpack.c.h.b16 %v759
    %v3247 = vunpack.c.l.b16 %v760
    %v3248 = vunpack.c.h.b16 %v760
    %v3249 = vunpack.c.l.b16 %v761
    %v3250 = vunpack.c.h.b16 %v761
    %v3251 = vunpack.c.l.b16 %v762
    %v3252 = vunpack.c.h.b16 %v762
    %v3253 = vunpack.c.l.b16 %v763
    %v3254 = vunpack.c.h.b16 %v763
    %v3255 = vunpack.c.l.b16 %v764
    %v3256 = vunpack.c.h.b16 %v764
    %v3257 = vunpack.c.l.b16 %v765
    %v3258 = vunpack.c.h.b16 %v765
    %v3259 = vunpack.c.l.b16 %v766
    %v3260 = vunpack.c.h.b16 %v766
    %v3261 = vunpack.c.l.b16 %v767
    %v3262 = vunpack.c.h.b16 %v767
    %v3263 = vunpack.c.l.b16 %v768
    %v3264 = vunpack.c.h.b16 %v768
    %v3265 = vunpack.c.l.b16 %v769
    %v3266 = vunpack.c.h.b16 %v769
    %v3267 = vunpack.c.l.b16 %v770
    %v3268 = vunpack.c.h.b16 %v770
    %v3269 = vunpack.c.l.b16 %v771
    %v3270 = vunpack.c.h.b16 %v771
    %v3271 = vunpack.c.l.b16 %v772
    %v3272 = vunpack.c.h.b16 %v772
    %v3273 = vunpack.c.l.b16 %v773
    %v3274 = vunpack.c.h.b16 %v773
    %v3275 = vunpack.c.l.b16 %v774
    %v3276 = vunpack.c.h.b16 %v774
    %v3277 = vunpack.c.l.b16 %v775
    %v3278 = vunpack.c.h.b16 %v775
    %v3279 = vunpack.c.l.b16 %v776
    %v3280 = vunpack.c.h.b16 %v776
    %v3281 = vunpack.c.l.b16 %v777
    %v3282 = vunpack.c.h.b16 %v777
    %v3283 = vunpack.c.l.b16 %v778
    %v3284 = vunpack.c.h.b16 %v778
    %v3285 = vunpack.c.l.b16 %v779
    %v3286 = vunpack.c.h.b16 %v779
    %v3287 = vunpack.c.l.b16 %v780
    %v3288 = vunpack.c.h.b16 %v780
    %v3289 = vunpack.c.l.b16 %v781
    %v3290 = vunpack.c.h.b16 %v781
    %v3291 = vunpack.c.l.b16 %v782
    %v3292 = vunpack.c.h.b16 %v782
    %v3293 = vunpack.c.l.b16 %v783
    %v3294 = vunpack.c.h.b16 %v783
    %v3295 = vunpack.c.l.b16 %v784
    %v3296 = vunpack.c.h.b16 %v784
    %v3297 = vunpack.c.l.b16 %v785
    %v3298 = vunpack.c.h.b16 %v785
    %v3299 = vunpack.c.l.b16 %v786
    %v3300 = vunpack.c.h.b16 %v786
    %v3301 = vunpack.c.l.b16 %v787
    %v3302 = vunpack.c.h.b16 %v787
    %v3303 = vunpack.c.l.b16 %v788
    %v3304 = vunpack.c.h.b16 %v788
    %v3305 = vunpack.c.l.b16 %v789
    %v3306 = vunpack.c.h.b16 %v789
    %v3307 = vunpack.c.l.b16 %v790
    %v3308 = vunpack.c.h.b16 %v790
    %v3309 = vunpack.c.l.b16 %v791
    %v3310 = vunpack.c.h.b16 %v791
    %v3311 = vunpack.c.l.b16 %v792
    %v3312 = vunpack.c.h.b16 %v792
    %v3313 = vunpack.c.l.b16 %v793
    %v3314 = vunpack.c.h.b16 %v793
    %v3315 = vunpack.c.l.b16 %v794
    %v3316 = vunpack.c.h.b16 %v794
    %v3317 = vunpack.c.l.b16 %v795
    %v3318 = vunpack.c.h.b16 %v795
    %v3319 = vunpack.c.l.b16 %v796
    %v3320 = vunpack.c.h.b16 %v796
    %v3321 = vunpack.c.l.b16 %v797
    %v3322 = vunpack.c.h.b16 %v797
    %v3323 = vunpack.c.l.b16 %v798
    %v3324 = vunpack.c.h.b16 %v798
    %v3325 = vunpack.c.l.b16 %v799
    %v3326 = vunpack.c.h.b16 %v799
    %v3327 = vunpack.c.l.b16 %v800
    %v3328 = vunpack.c.h.b16 %v800
    %v3329 = vunpack.c.l.b16 %v801
    %v3330 = vunpack.c.h.b16 %v801
    %v3331 = vunpack.c.l.b16 %v802
    %v3332 = vunpack.c.h.b16 %v802
    %v3333 = vunpack.c.l.b16 %v803
    %v3334 = vunpack.c.h.b16 %v803
    %v3335 = vunpack.c.l.b16 %v804
    %v3336 = vunpack.c.h.b16 %v804
    %v3337 = vunpack.c.l.b16 %v805
    %v3338 = vunpack.c.h.b16 %v805
    %v3339 = vunpack.c.l.b16 %v806
    %v3340 = vunpack.c.h.b16 %v806
    %v3341 = vunpack.c.l.b16 %v807
    %v3342 = vunpack.c.h.b16 %v807
    %v3343 = vunpack.c.l.b16 %v808
    %v3344 = vunpack.c.h.b16 %v808
    %v3345 = vunpack.c.l.b16 %v809
    %v3346 = vunpack.c.h.b16 %v809
    %v3347 = vunpack.c.l.b16 %v810
    %v3348 = vunpack.c.h.b16 %v810
    %v3349 = vunpack.c.l.b16 %v811
    %v3350 = vunpack.c.h.b16 %v811
    %v3351 = vunpack.c.l.b16 %v812
    %v3352 = vunpack.c.h.b16 %v812
    %v3353 = vunpack.c.l.b16 %v813
    %v3354 = vunpack.c.h.b16 %v813
    %v3355 = vunpack.c.l.b16 %v814
    %v3356 = vunpack.c.h.b16 %v814
    %v3357 = vunpack.c.l.b16 %v815
    %v3358 = vunpack.c.h.b16 %v815
    %v3359 = vunpack.c.l.b16 %v816
    %v3360 = vunpack.c.h.b16 %v816
    %v3361 = vunpack.c.l.b16 %v817
    %v3362 = vunpack.c.h.b16 %v817
    %v3363 = vunpack.c.l.b16 %v818
    %v3364 = vunpack.c.h.b16 %v818
    %v3365 = vunpack.c.l.b16 %v819
    %v3366 = vunpack.c.h.b16 %v819
    %v3367 = vunpack.c.l.b16 %v820
    %v3368 = vunpack.c.h.b16 %v820
    %v3369 = vunpack.c.l.b16 %v821
    %v3370 = vunpack.c.h.b16 %v821
    %v3371 = vunpack.c.l.b16 %v822
    %v3372 = vunpack.c.h.b16 %v822
    %v3373 = vunpack.c.l.b16 %v823
    %v3374 = vunpack.c.h.b16 %v823
    %v3375 = vunpack.c.l.b16 %v824
    %v3376 = vunpack.c.h.b16 %v824
    %v3377 = vunpack.c.l.b16 %v825
    %v3378 = vunpack.c.h.b16 %v825
    %v3379 = vunpack.c.l.b16 %v826
    %v3380 = vunpack.c.h.b16 %v826
    %v3381 = vunpack.c.l.b16 %v827
    %v3382 = vunpack.c.h.b16 %v827
    %v3383 = vunpack.c.l.b16 %v828
    %v3384 = vunpack.c.h.b16 %v828
    %v3385 = vunpack.c.l.b16 %v829
    %v3386 = vunpack.c.h.b16 %v829
    %v3387 = vunpack.c.l.b16 %v830
    %v3388 = vunpack.c.h.b16 %v830
    %v3389 = vunpack.c.l.b16 %v831
    %v3390 = vunpack.c.h.b16 %v831
    %v3391 = vunpack.c.l.b16 %v832
    %v3392 = vunpack.c.h.b16 %v832
    %v3393 = vunpack.c.l.b16 %v833
    %v3394 = vunpack.c.h.b16 %v833
    %v3395 = vunpack.c.l.b16 %v834
    %v3396 = vunpack.c.h.b16 %v834
    %v3397 = vunpack.c.l.b16 %v835
    %v3398 = vunpack.c.h.b16 %v835
    %v3399 = vunpack.c.l.b16 %v836
    %v3400 = vunpack.c.h.b16 %v836
    %v3401 = vunpack.c.l.b16 %v837
    %v3402 = vunpack.c.h.b16 %v837
    %v3403 = vunpack.c.l.b16 %v838
    %v3404 = vunpack.c.h.b16 %v838
    %v3405 = vunpack.c.l.b16 %v839
    %v3406 = vunpack.c.h.b16 %v839
    %v3407 = vunpack.c.l.b16 %v840
    %v3408 = vunpack.c.h.b16 %v840
    %v3409 = vunpack.c.l.b16 %v841
    %v3410 = vunpack.c.h.b16 %v841
    %v3411 = vunpack.c.l.b16 %v842
    %v3412 = vunpack.c.h.b16 %v842
    %v3413 = vunpack.c.l.b16 %v843
    %v3414 = vunpack.c.h.b16 %v843
    %v3415 = vunpack.c.l.b16 %v844
    %v3416 = vunpack.c.h.b16 %v844
    %v3417 = vunpack.c.l.b16 %v845
    %v3418 = vunpack.c.h.b16 %v845
    %v3419 = vunpack.c.l.b16 %v846
    %v3420 = vunpack.c.h.b16 %v846
    %v3421 = vunpack.c.l.b16 %v847
    %v3422 = vunpack.c.h.b16 %v847
    %v3423 = vunpack.c.l.b16 %v848
    %v3424 = vunpack.c.h.b16 %v848
    %v3425 = vunpack.c.l.b16 %v849
    %v3426 = vunpack.c.h.b16 %v849
    %v3427 = vunpack.c.l.b16 %v850
    %v3428 = vunpack.c.h.b16 %v850
    %v3429 = vunpack.c.l.b16 %v851
    %v3430 = vunpack.c.h.b16 %v851
    %v3431 = vunpack.c.l.b16 %v852
    %v3432 = vunpack.c.h.b16 %v852
    %v3433 = vunpack.c.l.b16 %v853
    %v3434 = vunpack.c.h.b16 %v853
    %v3435 = vunpack.c.l.b16 %v854
    %v3436 = vunpack.c.h.b16 %v854
    %v3437 = vunpack.c.l.b16 %v855
    %v3438 = vunpack.c.h.b16 %v855
    %v3439 = vunpack.c.l.b16 %v856
    %v3440 = vunpack.c.h.b16 %v856
    %v3441 = vunpack.c.l.b16 %v857
    %v3442 = vunpack.c.h.b16 %v857
    %v3443 = vunpack.c.l.b16 %v858
    %v3444 = vunpack.c.h.b16 %v858
    %v3445 = vunpack.c.l.b16 %v859
    %v3446 = vunpack.c.h.b16 %v859
    %v3447 = vunpack.c.l.b16 %v860
    %v3448 = vunpack.c.h.b16 %v860
    %v3449 = vunpack.c.l.b16 %v861
    %v3450 = vunpack.c.h.b16 %v861
    %v3451 = vunpack.c.l.b16 %v862
    %v3452 = vunpack.c.h.b16 %v862
    %v3453 = vunpack.c.l.b16 %v863
    %v3454 = vunpack.c.h.b16 %v863
    %v3455 = vunpack.c.l.b16 %v864
    %v3456 = vunpack.c.h.b16 %v864
    %v3457 = vunpack.c.l.b16 %v865
    %v3458 = vunpack.c.h.b16 %v865
    %v3459 = vunpack.c.l.b16 %v866
    %v3460 = vunpack.c.h.b16 %v866
    %v3461 = vunpack.c.l.b16 %v867
    %v3462 = vunpack.c.h.b16 %v867
    %v3463 = vunpack.c.l.b16 %v868
    %v3464 = vunpack.c.h.b16 %v868
    %v3465 = vunpack.c.l.b16 %v869
    %v3466 = vunpack.c.h.b16 %v869
    %v3467 = vunpack.c.l.b16 %v870
    %v3468 = vunpack.c.h.b16 %v870
    %v3469 = vunpack.c.l.b16 %v871
    %v3470 = vunpack.c.h.b16 %v871
    %v3471 = vunpack.c.l.b16 %v872
    %v3472 = vunpack.c.h.b16 %v872
    %v3473 = vunpack.c.l.b16 %v873
    %v3474 = vunpack.c.h.b16 %v873
    %v3475 = vunpack.c.l.b16 %v874
    %v3476 = vunpack.c.h.b16 %v874
    %v3477 = vunpack.c.l.b16 %v875
    %v3478 = vunpack.c.h.b16 %v875
    %v3479 = vunpack.c.l.b16 %v876
    %v3480 = vunpack.c.h.b16 %v876
    %v3481 = vunpack.c.l.b16 %v877
    %v3482 = vunpack.c.h.b16 %v877
    %v3483 = vunpack.c.l.b16 %v878
    %v3484 = vunpack.c.h.b16 %v878
    %v3485 = vunpack.c.l.b16 %v879
    %v3486 = vunpack.c.h.b16 %v879
    %v3487 = vunpack.c.l.b16 %v880
    %v3488 = vunpack.c.h.b16 %v880
    %v3489 = vunpack.c.l.b16 %v881
    %v3490 = vunpack.c.h.b16 %v881
    %v3491 = vunpack.c.l.b16 %v882
    %v3492 = vunpack.c.h.b16 %v882
    %v3493 = vunpack.c.l.b16 %v883
    %v3494 = vunpack.c.h.b16 %v883
    %v3495 = vunpack.c.l.b16 %v884
    %v3496 = vunpack.c.h.b16 %v884
    %v3497 = vunpack.c.l.b16 %v885
    %v3498 = vunpack.c.h.b16 %v885
    %v3499 = vunpack.c.l.b16 %v886
    %v3500 = vunpack.c.h.b16 %v886
    %v3501 = vunpack.c.l.b16 %v887
    %v3502 = vunpack.c.h.b16 %v887
    %v3503 = vunpack.c.l.b16 %v888
    %v3504 = vunpack.c.h.b16 %v888
    %v3505 = vunpack.c.l.b16 %v889
    %v3506 = vunpack.c.h.b16 %v889
    %v3507 = vunpack.c.l.b16 %v890
    %v3508 = vunpack.c.h.b16 %v890
    %v3509 = vunpack.c.l.b16 %v891
    %v3510 = vunpack.c.h.b16 %v891
    %v3511 = vunpack.c.l.b16 %v892
    %v3512 = vunpack.c.h.b16 %v892
    %v3513 = vunpack.c.l.b16 %v893
    %v3514 = vunpack.c.h.b16 %v893
    %v3515 = vunpack.c.l.b16 %v894
    %v3516 = vunpack.c.h.b16 %v894
    %v3517 = vunpack.c.l.b16 %v895
    %v3518 = vunpack.c.h.b16 %v895
    %v3519 = vunpack.c.l.b16 %v896
    %v3520 = vunpack.c.h.b16 %v896
    %v3521 = vunpack.c.l.b16 %v897
    %v3522 = vunpack.c.h.b16 %v897
    %v3523 = vunpack.c.l.b16 %v898
    %v3524 = vunpack.c.h.b16 %v898
    %v3525 = vunpack.c.l.b16 %v899
    %v3526 = vunpack.c.h.b16 %v899
    %v3527 = vunpack.c.l.b16 %v900
    %v3528 = vunpack.c.h.b16 %v900
    %v3529 = vunpack.c.l.b16 %v901
    %v3530 = vunpack.c.h.b16 %v901
    %v3531 = vunpack.c.l.b16 %v902
    %v3532 = vunpack.c.h.b16 %v902
    %v3533 = vunpack.c.l.b16 %v903
    %v3534 = vunpack.c.h.b16 %v903
    %v3535 = vunpack.c.l.b16 %v904
    %v3536 = vunpack.c.h.b16 %v904
    %v3537 = vunpack.c.l.b16 %v905
    %v3538 = vunpack.c.h.b16 %v905
    %v3539 = vunpack.c.l.b16 %v906
    %v3540 = vunpack.c.h.b16 %v906
    %v3541 = vunpack.c.l.b16 %v907
    %v3542 = vunpack.c.h.b16 %v907
    %v3543 = vunpack.c.l.b16 %v908
    %v3544 = vunpack.c.h.b16 %v908
    %v3545 = vunpack.c.l.b16 %v909
    %v3546 = vunpack.c.h.b16 %v909
    %v3547 = vunpack.c.l.b16 %v910
    %v3548 = vunpack.c.h.b16 %v910
    %v3549 = vunpack.c.l.b16 %v911
    %v3550 = vunpack.c.h.b16 %v911
    %v3551 = vunpack.c.l.b16 %v912
    %v3552 = vunpack.c.h.b16 %v912
    %v3553 = vunpack.c.l.b16 %v913
    %v3554 = vunpack.c.h.b16 %v913
    %v3555 = vunpack.c.l.b16 %v914
    %v3556 = vunpack.c.h.b16 %v914
    %v3557 = vunpack.c.l.b16 %v915
    %v3558 = vunpack.c.h.b16 %v915
    %v3559 = vunpack.c.l.b16 %v916
    %v3560 = vunpack.c.h.b16 %v916
    %v3561 = vunpack.c.l.b16 %v917
    %v3562 = vunpack.c.h.b16 %v917
    %v3563 = vunpack.c.l.b16 %v918
    %v3564 = vunpack.c.h.b16 %v918
    %v3565 = vunpack.c.l.b16 %v919
    %v3566 = vunpack.c.h.b16 %v919
    %v3567 = vunpack.c.l.b16 %v920
    %v3568 = vunpack.c.h.b16 %v920
    %v3569 = vunpack.c.l.b16 %v921
    %v3570 = vunpack.c.h.b16 %v921
    %v3571 = vunpack.c.l.b16 %v922
    %v3572 = vunpack.c.h.b16 %v922
    %v3573 = vunpack.c.l.b16 %v923
    %v3574 = vunpack.c.h.b16 %v923
    %v3575 = vunpack.c.l.b16 %v924
    %v3576 = vunpack.c.h.b16 %v924
    %v3577 = vunpack.c.l.b16 %v925
    %v3578 = vunpack.c.h.b16 %v925
    %v3579 = vunpack.c.l.b16 %v926
    %v3580 = vunpack.c.h.b16 %v926
    %v3581 = vunpack.c.l.b16 %v927
    %v3582 = vunpack.c.h.b16 %v927
    %v3583 = vunpack.c.l.b16 %v928
    %v3584 = vunpack.c.h.b16 %v928
    %v3585 = vunpack.c.l.b16 %v929
    %v3586 = vunpack.c.h.b16 %v929
    %v3587 = vunpack.c.l.b16 %v930
    %v3588 = vunpack.c.h.b16 %v930
    %v3589 = vunpack.c.l.b16 %v931
    %v3590 = vunpack.c.h.b16 %v931
    %v3591 = vunpack.c.l.b16 %v932
    %v3592 = vunpack.c.h.b16 %v932
    %v3593 = vunpack.c.l.b16 %v933
    %v3594 = vunpack.c.h.b16 %v933
    %v3595 = vunpack.c.l.b16 %v934
    %v3596 = vunpack.c.h.b16 %v934
    %v3597 = vunpack.c.l.b16 %v935
    %v3598 = vunpack.c.h.b16 %v935
    %v3599 = vunpack.c.l.b16 %v936
    %v3600 = vunpack.c.h.b16 %v936
    %v3601 = vunpack.c.l.b16 %v937
    %v3602 = vunpack.c.h.b16 %v937
    %v3603 = vunpack.c.l.b16 %v938
    %v3604 = vunpack.c.h.b16 %v938
    %v3605 = vunpack.c.l.b16 %v939
    %v3606 = vunpack.c.h.b16 %v939
    %v3607 = vunpack.c.l.b16 %v940
    %v3608 = vunpack.c.h.b16 %v940
    %v3609 = vunpack.c.l.b16 %v941
    %v3610 = vunpack.c.h.b16 %v941
    %v3611 = vunpack.c.l.b16 %v942
    %v3612 = vunpack.c.h.b16 %v942
    %v3613 = vunpack.c.l.b16 %v943
    %v3614 = vunpack.c.h.b16 %v943
    %v3615 = vunpack.c.l.b16 %v944
    %v3616 = vunpack.c.h.b16 %v944
    %v3617 = vunpack.c.l.b16 %v945
    %v3618 = vunpack.c.h.b16 %v945
    %v3619 = vunpack.c.l.b16 %v946
    %v3620 = vunpack.c.h.b16 %v946
    %v3621 = vunpack.c.l.b16 %v947
    %v3622 = vunpack.c.h.b16 %v947
    %v3623 = vunpack.c.l.b16 %v948
    %v3624 = vunpack.c.h.b16 %v948
    %v3625 = vunpack.c.l.b16 %v949
    %v3626 = vunpack.c.h.b16 %v949
    %v3627 = vunpack.c.l.b16 %v950
    %v3628 = vunpack.c.h.b16 %v950
    %v3629 = vunpack.c.l.b16 %v951
    %v3630 = vunpack.c.h.b16 %v951
    %v3631 = vunpack.c.l.b16 %v952
    %v3632 = vunpack.c.h.b16 %v952
    %v3633 = vunpack.c.l.b16 %v953
    %v3634 = vunpack.c.h.b16 %v953
    %v3635 = vunpack.c.l.b16 %v954
    %v3636 = vunpack.c.h.b16 %v954
    %v3637 = vunpack.c.l.b16 %v955
    %v3638 = vunpack.c.h.b16 %v955
    %v3639 = vunpack.c.l.b16 %v956
    %v3640 = vunpack.c.h.b16 %v956
    %v3641 = vunpack.c.l.b16 %v957
    %v3642 = vunpack.c.h.b16 %v957
    %v3643 = vunpack.c.l.b16 %v958
    %v3644 = vunpack.c.h.b16 %v958
    %v3645 = vunpack.c.l.b16 %v959
    %v3646 = vunpack.c.h.b16 %v959
    %v3647 = vunpack.c.l.b16 %v960
    %v3648 = vunpack.c.h.b16 %v960
    %v3649 = vunpack.c.l.b16 %v961
    %v3650 = vunpack.c.h.b16 %v961
    %v3651 = vunpack.c.l.b16 %v962
    %v3652 = vunpack.c.h.b16 %v962
    %v3653 = vunpack.c.l.b16 %v963
    %v3654 = vunpack.c.h.b16 %v963
    %v3655 = vunpack.c.l.b16 %v964
    %v3656 = vunpack.c.h.b16 %v964
    %v3657 = vunpack.c.l.b16 %v965
    %v3658 = vunpack.c.h.b16 %v965
    %v3659 = vunpack.c.l.b16 %v966
    %v3660 = vunpack.c.h.b16 %v966
    %v3661 = vunpack.c.l.b16 %v967
    %v3662 = vunpack.c.h.b16 %v967
    %v3663 = vunpack.c.l.b16 %v968
    %v3664 = vunpack.c.h.b16 %v968
    %v3665 = vunpack.c.l.b16 %v969
    %v3666 = vunpack.c.h.b16 %v969
    %v3667 = vunpack.c.l.b16 %v970
    %v3668 = vunpack.c.h.b16 %v970
    %v3669 = vunpack.c.l.b16 %v971
    %v3670 = vunpack.c.h.b16 %v971
    %v3671 = vunpack.c.l.b16 %v972
    %v3672 = vunpack.c.h.b16 %v972
    %v3673 = vunpack.c.l.b16 %v973
    %v3674 = vunpack.c.h.b16 %v973
    %v3675 = vunpack.c.l.b16 %v974
    %v3676 = vunpack.c.h.b16 %v974
    %v3677 = vunpack.c.l.b16 %v975
    %v3678 = vunpack.c.h.b16 %v975
    %v3679 = vunpack.c.l.b16 %v976
    %v3680 = vunpack.c.h.b16 %v976
    %v3681 = vunpack.c.l.b16 %v977
    %v3682 = vunpack.c.h.b16 %v977
    %v3683 = vunpack.c.l.b16 %v978
    %v3684 = vunpack.c.h.b16 %v978
    %v3685 = vunpack.c.l.b16 %v979
    %v3686 = vunpack.c.h.b16 %v979
    %v3687 = vunpack.c.l.b16 %v980
    %v3688 = vunpack.c.h.b16 %v980
    %v3689 = vunpack.c.l.b16 %v981
    %v3690 = vunpack.c.h.b16 %v981
    %v3691 = vunpack.c.l.b16 %v982
    %v3692 = vunpack.c.h.b16 %v982
    %v3693 = vunpack.c.l.b16 %v983
    %v3694 = vunpack.c.h.b16 %v983
    %v3695 = vunpack.c.l.b16 %v984
    %v3696 = vunpack.c.h.b16 %v984
    %v3697 = vunpack.c.l.b16 %v985
    %v3698 = vunpack.c.h.b16 %v985
    %v3699 = vunpack.c.l.b16 %v986
    %v3700 = vunpack.c.h.b16 %v986
    %v3701 = vunpack.c.l.b16 %v987
    %v3702 = vunpack.c.h.b16 %v987
    %v3703 = vunpack.c.l.b16 %v988
    %v3704 = vunpack.c.h.b16 %v988
    %v3705 = vunpack.c.l.b16 %v989
    %v3706 = vunpack.c.h.b16 %v989
    %v3707 = vunpack.c.l.b16 %v990
    %v3708 = vunpack.c.h.b16 %v990
    %v3709 = vunpack.c.l.b16 %v991
    %v3710 = vunpack.c.h.b16 %v991
    %v3711 = vunpack.c.l.b16 %v992
    %v3712 = vunpack.c.h.b16 %v992
    %v3713 = vunpack.c.l.b16 %v993
    %v3714 = vunpack.c.h.b16 %v993
    %v3715 = vunpack.c.l.b16 %v994
    %v3716 = vunpack.c.h.b16 %v994
    %v3717 = vunpack.c.l.b16 %v995
    %v3718 = vunpack.c.h.b16 %v995
    %v3719 = vunpack.c.l.b16 %v996
    %v3720 = vunpack.c.h.b16 %v996
    %v3721 = vunpack.c.l.b16 %v997
    %v3722 = vunpack.c.h.b16 %v997
    %v3723 = vunpack.c.l.b16 %v998
    %v3724 = vunpack.c.h.b16 %v998
    %v3725 = vunpack.c.l.b16 %v999
    %v3726 = vunpack.c.h.b16 %v999
    %v3727 = vunpack.c.l.b16 %v1000
    %v3728 = vunpack.c.h.b16 %v1000
    %v3729 = vunpack.c.l.b16 %v1001
    %v3730 = vunpack.c.h.b16 %v1001
    %v3731 = vunpack.c.l.b16 %v1002
    %v3732 = vunpack.c.h.b16 %v1002
    %v3733 = vunpack.c.l.b16 %v1003
    %v3734 = vunpack.c.h.b16 %v1003
    %v3735 = vunpack.c.l.b16 %v1004
    %v3736 = vunpack.c.h.b16 %v1004
    %v3737 = vunpack.c.l.b16 %v1005
    %v3738 = vunpack.c.h.b16 %v1005
    %v3739 = vunpack.c.l.b16 %v1006
    %v3740 = vunpack.c.h.b16 %v1006
    %v3741 = vunpack.c.l.b16 %v1007
    %v3742 = vunpack.c.h.b16 %v1007
    %v3743 = vunpack.c.l.b16 %v1008
    %v3744 = vunpack.c.h.b16 %v1008
    %v3745 = vunpack.c.l.b16 %v1009
    %v3746 = vunpack.c.h.b16 %v1009
    %v3747 = vunpack.c.l.b16 %v1010
    %v3748 = vunpack.c.h.b16 %v1010
    %v3749 = vunpack.c.l.b16 %v1011
    %v3750 = vunpack.c.h.b16 %v1011
    %v3751 = vunpack.c.l.b16 %v1012
    %v3752 = vunpack.c.h.b16 %v1012
    %v3753 = vunpack.c.l.b16 %v1013
    %v3754 = vunpack.c.h.b16 %v1013
    %v3755 = vunpack.c.l.b16 %v1014
    %v3756 = vunpack.c.h.b16 %v1014
    %v3757 = vunpack.c.l.b16 %v1015
    %v3758 = vunpack.c.h.b16 %v1015
    %v3759 = vunpack.c.l.b16 %v1016
    %v3760 = vunpack.c.h.b16 %v1016
    %v3761 = vunpack.c.l.b16 %v1017
    %v3762 = vunpack.c.h.b16 %v1017
    %v3763 = vunpack.c.l.b16 %v1018
    %v3764 = vunpack.c.h.b16 %v1018
    %v3765 = vunpack.c.l.b16 %v1019
    %v3766 = vunpack.c.h.b16 %v1019
    %v3767 = vunpack.c.l.b16 %v1020
    %v3768 = vunpack.c.h.b16 %v1020
    %v3769 = vunpack.c.l.b16 %v1021
    %v3770 = vunpack.c.h.b16 %v1021
    %v3771 = vunpack.c.l.b16 %v1022
    %v3772 = vunpack.c.h.b16 %v1022
    %v3773 = vunpack.c.l.b16 %v1023
    %v3774 = vunpack.c.h.b16 %v1023
    %v3775 = vunpack.c.l.b16 %v1024
    %v3776 = vunpack.c.h.b16 %v1024
    %v3777 = vunpack.c.l.b16 %v1025
    %v3778 = vunpack.c.h.b16 %v1025
    %v3779 = vunpack.c.l.b16 %v1026
    %v3780 = vunpack.c.h.b16 %v1026
    %v3781 = vunpack.c.l.b16 %v1027
    %v3782 = vunpack.c.h.b16 %v1027
    %v3783 = vunpack.c.l.b16 %v1028
    %v3784 = vunpack.c.h.b16 %v1028
    %v3785 = vunpack.c.l.b16 %v1029
    %v3786 = vunpack.c.h.b16 %v1029
    %v3787 = vunpack.c.l.b16 %v1030
    %v3788 = vunpack.c.h.b16 %v1030
    %v3789 = vunpack.c.l.b16 %v1031
    %v3790 = vunpack.c.h.b16 %v1031
    %v3791 = vunpack.c.l.b16 %v1032
    %v3792 = vunpack.c.h.b16 %v1032
    %v3793 = vunpack.c.l.b16 %v1033
    %v3794 = vunpack.c.h.b16 %v1033
    %v3795 = vunpack.c.l.b16 %v1034
    %v3796 = vunpack.c.h.b16 %v1034
    %v3797 = vunpack.c.l.b16 %v1035
    %v3798 = vunpack.c.h.b16 %v1035
    %v3799 = vunpack.c.l.b16 %v1036
    %v3800 = vunpack.c.h.b16 %v1036
    %v3801 = vunpack.c.l.b16 %v1037
    %v3802 = vunpack.c.h.b16 %v1037
    %v3803 = vunpack.c.l.b16 %v1038
    %v3804 = vunpack.c.h.b16 %v1038
    %v3805 = vunpack.c.l.b16 %v1039
    %v3806 = vunpack.c.h.b16 %v1039
    %v3807 = vunpack.c.l.b16 %v1040
    %v3808 = vunpack.c.h.b16 %v1040
    %v3809 = vunpack.c.l.b16 %v1041
    %v3810 = vunpack.c.h.b16 %v1041
    %v3811 = vunpack.c.l.b16 %v1042
    %v3812 = vunpack.c.h.b16 %v1042
    %v3813 = vunpack.c.l.b16 %v1043
    %v3814 = vunpack.c.h.b16 %v1043
    %v3815 = vunpack.c.l.b16 %v1044
    %v3816 = vunpack.c.h.b16 %v1044
    %v3817 = vpack.c.b16 %v2041, %v2025
    %v3818 = vpack.c.b16 %v2042, %v2026
    %v3819 = vpack.c.b16 %v2043, %v2027
    %v3820 = vpack.c.b16 %v2044, %v2028
    %v3821 = vpack.c.b16 %v2045, %v2029
    %v3822 = vpack.c.b16 %v2046, %v2030
    %v3823 = vpack.c.b16 %v2047, %v2031
    %v3824 = vpack.c.b16 %v2048, %v2032
    %v3825 = vpack.c.b16 %v2049, %v2033
    %v3826 = vpack.c.b16 %v2050, %v2034
    %v3827 = vpack.c.b16 %v2051, %v2035
    %v3828 = vpack.c.b16 %v2052, %v2036
    %v3829 = vpack.c.b16 %v2053, %v2037
    %v3830 = vpack.c.b16 %v2054, %v2038
    %v3831 = vpack.c.b16 %v2055, %v2039
    %v3832 = vpack.c.b16 %v2056, %v2040
    %v3833 = vpack.c.b16 %v2073, %v2057
    %v3834 = vpack.c.b16 %v2074, %v2058
    %v3835 = vpack.c.b16 %v2075, %v2059
    %v3836 = vpack.c.b16 %v2076, %v2060
    %v3837 = vpack.c.b16 %v2077, %v2061
    %v3838 = vpack.c.b16 %v2078, %v2062
    %v3839 = vpack.c.b16 %v2079, %v2063
    %v3840 = vpack.c.b16 %v2080, %v2064
    %v3841 = vpack.c.b16 %v2081, %v2065
    %v3842 = vpack.c.b16 %v2082, %v2066
    %v3843 = vpack.c.b16 %v2083, %v2067
    %v3844 = vpack.c.b16 %v2084, %v2068
    %v3845 = vpack.c.b16 %v2085, %v2069
    %v3846 = vpack.c.b16 %v2086, %v2070
    %v3847 = vpack.c.b16 %v2087, %v2071
    %v3848 = vpack.c.b16 %v2088, %v2072
    %v3849 = vpack.c.b16 %v2105, %v2089
    %v3850 = vpack.c.b16 %v2106, %v2090
    %v3851 = vpack.c.b16 %v2107, %v2091
    %v3852 = vpack.c.b16 %v2108, %v2092
    %v3853 = vpack.c.b16 %v2109, %v2093
    %v3854 = vpack.c.b16 %v2110, %v2094
    %v3855 = vpack.c.b16 %v2111, %v2095
    %v3856 = vpack.c.b16 %v2112, %v2096
    %v3857 = vpack.c.b16 %v2113, %v2097
    %v3858 = vpack.c.b16 %v2114, %v2098
    %v3859 = vpack.c.b16 %v2115, %v2099
    %v3860 = vpack.c.b16 %v2116, %v2100
    %v3861 = vpack.c.b16 %v2117, %v2101
    %v3862 = vpack.c.b16 %v2118, %v2102
    %v3863 = vpack.c.b16 %v2119, %v2103
    %v3864 = vpack.c.b16 %v2120, %v2104
    %v3865 = vpack.c.b16 %v2137, %v2121
    %v3866 = vpack.c.b16 %v2138, %v2122
    %v3867 = vpack.c.b16 %v2139, %v2123
    %v3868 = vpack.c.b16 %v2140, %v2124
    %v3869 = vpack.c.b16 %v2141, %v2125
    %v3870 = vpack.c.b16 %v2142, %v2126
    %v3871 = vpack.c.b16 %v2143, %v2127
    %v3872 = vpack.c.b16 %v2144, %v2128
    %v3873 = vpack.c.b16 %v2145, %v2129
    %v3874 = vpack.c.b16 %v2146, %v2130
    %v3875 = vpack.c.b16 %v2147, %v2131
    %v3876 = vpack.c.b16 %v2148, %v2132
    %v3877 = vpack.c.b16 %v2149, %v2133
    %v3878 = vpack.c.b16 %v2150, %v2134
    %v3879 = vpack.c.b16 %v2151, %v2135
    %v3880 = vpack.c.b16 %v2152, %v2136
    %v3881 = vpack.c.b16 %v2169, %v2153
    %v3882 = vpack.c.b16 %v2170, %v2154
    %v3883 = vpack.c.b16 %v2171, %v2155
    %v3884 = vpack.c.b16 %v2172, %v2156
    %v3885 = vpack.c.b16 %v2173, %v2157
    %v3886 = vpack.c.b16 %v2174, %v2158
    %v3887 = vpack.c.b16 %v2175, %v2159
    %v3888 = vpack.c.b16 %v2176, %v2160
    %v3889 = vpack.c.b16 %v2177, %v2161
    %v3890 = vpack.c.b16 %v2178, %v2162
    %v3891 = vpack.c.b16 %v2179, %v2163
    %v3892 = vpack.c.b16 %v2180, %v2164
    %v3893 = vpack.c.b16 %v2181, %v2165
    %v3894 = vpack.c.b16 %v2182, %v2166
    %v3895 = vpack.c.b16 %v2183, %v2167
    %v3896 = vpack.c.b16 %v2184, %v2168
    %v3897 = vpack.c.b16 %v2201, %v2185
    %v3898 = vpack.c.b16 %v2202, %v2186
    %v3899 = vpack.c.b16 %v2203, %v2187
    %v3900 = vpack.c.b16 %v2204, %v2188
    %v3901 = vpack.c.b16 %v2205, %v2189
    %v3902 = vpack.c.b16 %v2206, %v2190
    %v3903 = vpack.c.b16 %v2207, %v2191
    %v3904 = vpack.c.b16 %v2208, %v2192
    %v3905 = vpack.c.b16 %v2209, %v2193
    %v3906 = vpack.c.b16 %v2210, %v2194
    %v3907 = vpack.c.b16 %v2211, %v2195
    %v3908 = vpack.c.b16 %v2212, %v2196
    %v3909 = vpack.c.b16 %v2213, %v2197
    %v3910 = vpack.c.b16 %v2214, %v2198
    %v3911 = vpack.c.b16 %v2215, %v2199
    %v3912 = vpack.c.b16 %v2216, %v2200
    %v3913 = vpack.c.b16 %v2233, %v2217
    %v3914 = vpack.c.b16 %v2234, %v2218
    %v3915 = vpack.c.b16 %v2235, %v2219
    %v3916 = vpack.c.b16 %v2236, %v2220
    %v3917 = vpack.c.b16 %v2237, %v2221
    %v3918 = vpack.c.b16 %v2238, %v2222
    %v3919 = vpack.c.b16 %v2239, %v2223
    %v3920 = vpack.c.b16 %v2240, %v2224
    %v3921 = vpack.c.b16 %v2241, %v2225
    %v3922 = vpack.c.b16 %v2242, %v2226
    %v3923 = vpack.c.b16 %v2243, %v2227
    %v3924 = vpack.c.b16 %v2244, %v2228
    %v3925 = vpack.c.b16 %v2245, %v2229
    %v3926 = vpack.c.b16 %v2246, %v2230
    %v3927 = vpack.c.b16 %v2247, %v2231
    %v3928 = vpack.c.b16 %v2248, %v2232
    %v3929 = vpack.c.b16 %v2265, %v2249
    %v3930 = vpack.c.b16 %v2266, %v2250
    %v3931 = vpack.c.b16 %v2267, %v2251
    %v3932 = vpack.c.b16 %v2268, %v2252
    %v3933 = vpack.c.b16 %v2269, %v2253
    %v3934 = vpack.c.b16 %v2270, %v2254
    %v3935 = vpack.c.b16 %v2271, %v2255
    %v3936 = vpack.c.b16 %v2272, %v2256
    %v3937 = vpack.c.b16 %v2273, %v2257
    %v3938 = vpack.c.b16 %v2274, %v2258
    %v3939 = vpack.c.b16 %v2275, %v2259
    %v3940 = vpack.c.b16 %v2276, %v2260
    %v3941 = vpack.c.b16 %v2277, %v2261
    %v3942 = vpack.c.b16 %v2278, %v2262
    %v3943 = vpack.c.b16 %v2279, %v2263
    %v3944 = vpack.c.b16 %v2280, %v2264
    %v3945 = vpack.c.b16 %v2297, %v2281
    %v3946 = vpack.c.b16 %v2298, %v2282
    %v3947 = vpack.c.b16 %v2299, %v2283
    %v3948 = vpack.c.b16 %v2300, %v2284
    %v3949 = vpack.c.b16 %v2301, %v2285
    %v3950 = vpack.c.b16 %v2302, %v2286
    %v3951 = vpack.c.b16 %v2303, %v2287
    %v3952 = vpack.c.b16 %v2304, %v2288
    %v3953 = vpack.c.b16 %v2305, %v2289
    %v3954 = vpack.c.b16 %v2306, %v2290
    %v3955 = vpack.c.b16 %v2307, %v2291
    %v3956 = vpack.c.b16 %v2308, %v2292
    %v3957 = vpack.c.b16 %v2309, %v2293
    %v3958 = vpack.c.b16 %v2310, %v2294
    %v3959 = vpack.c.b16 %v2311, %v2295
    %v3960 = vpack.c.b16 %v2312, %v2296
    %v3961 = vpack.c.b16 %v2329, %v2313
    %v3962 = vpack.c.b16 %v2330, %v2314
    %v3963 = vpack.c.b16 %v2331, %v2315
    %v3964 = vpack.c.b16 %v2332, %v2316
    %v3965 = vpack.c.b16 %v2333, %v2317
    %v3966 = vpack.c.b16 %v2334, %v2318
    %v3967 = vpack.c.b16 %v2335, %v2319
    %v3968 = vpack.c.b16 %v2336, %v2320
    %v3969 = vpack.c.b16 %v2337, %v2321
    %v3970 = vpack.c.b16 %v2338, %v2322
    %v3971 = vpack.c.b16 %v2339, %v2323
    %v3972 = vpack.c.b16 %v2340, %v2324
    %v3973 = vpack.c.b16 %v2341, %v2325
    %v3974 = vpack.c.b16 %v2342, %v2326
    %v3975 = vpack.c.b16 %v2343, %v2327
    %v3976 = vpack.c.b16 %v2344, %v2328
    %v3977 = vpack.c.b16 %v2361, %v2345
    %v3978 = vpack.c.b16 %v2362, %v2346
    %v3979 = vpack.c.b16 %v2363, %v2347
    %v3980 = vpack.c.b16 %v2364, %v2348
    %v3981 = vpack.c.b16 %v2365, %v2349
    %v3982 = vpack.c.b16 %v2366, %v2350
    %v3983 = vpack.c.b16 %v2367, %v2351
    %v3984 = vpack.c.b16 %v2368, %v2352
    %v3985 = vpack.c.b16 %v2369, %v2353
    %v3986 = vpack.c.b16 %v2370, %v2354
    %v3987 = vpack.c.b16 %v2371, %v2355
    %v3988 = vpack.c.b16 %v2372, %v2356
    %v3989 = vpack.c.b16 %v2373, %v2357
    %v3990 = vpack.c.b16 %v2374, %v2358
    %v3991 = vpack.c.b16 %v2375, %v2359
    %v3992 = vpack.c.b16 %v2376, %v2360
    %v3993 = vpack.c.b16 %v2393, %v2377
    %v3994 = vpack.c.b16 %v2394, %v2378
    %v3995 = vpack.c.b16 %v2395, %v2379
    %v3996 = vpack.c.b16 %v2396, %v2380
    %v3997 = vpack.c.b16 %v2397, %v2381
    %v3998 = vpack.c.b16 %v2398, %v2382
    %v3999 = vpack.c.b16 %v2399, %v2383
    %v4000 = vpack.c.b16 %v2400, %v2384
    %v4001 = vpack.c.b16 %v2401, %v2385
    %v4002 = vpack.c.b16 %v2402, %v2386
    %v4003 = vpack.c.b16 %v2403, %v2387
    %v4004 = vpack.c.b16 %v2404, %v2388
    %v4005 = vpack.c.b16 %v2405, %v2389
    %v4006 = vpack.c.b16 %v2406, %v2390
    %v4007 = vpack.c.b16 %v2407, %v2391
    %v4008 = vpack.c.b16 %v2408, %v2392
    %v4009 = vpack.c.b16 %v2425, %v2409
    %v4010 = vpack.c.b16 %v2426, %v2410
    %v4011 = vpack.c.b16 %v2427, %v2411
    %v4012 = vpack.c.b16 %v2428, %v2412
    %v4013 = vpack.c.b16 %v2429, %v2413
    %v4014 = vpack.c.b16 %v2430, %v2414
    %v4015 = vpack.c.b16 %v2431, %v2415
    %v4016 = vpack.c.b16 %v2432, %v2416
    %v4017 = vpack.c.b16 %v2433, %v2417
    %v4018 = vpack.c.b16 %v2434, %v2418
    %v4019 = vpack.c.b16 %v2435, %v2419
    %v4020 = vpack.c.b16 %v2436, %v2420
    %v4021 = vpack.c.b16 %v2437, %v2421
    %v4022 = vpack.c.b16 %v2438, %v2422
    %v4023 = vpack.c.b16 %v2439, %v2423
    %v4024 = vpack.c.b16 %v2440, %v2424
    %v4025 = vpack.c.b16 %v2457, %v2441
    %v4026 = vpack.c.b16 %v2458, %v2442
    %v4027 = vpack.c.b16 %v2459, %v2443
    %v4028 = vpack.c.b16 %v2460, %v2444
    %v4029 = vpack.c.b16 %v2461, %v2445
    %v4030 = vpack.c.b16 %v2462, %v2446
    %v4031 = vpack.c.b16 %v2463, %v2447
    %v4032 = vpack.c.b16 %v2464, %v2448
    %v4033 = vpack.c.b16 %v2465, %v2449
    %v4034 = vpack.c.b16 %v2466, %v2450
    %v4035 = vpack.c.b16 %v2467, %v2451
    %v4036 = vpack.c.b16 %v2468, %v2452
    %v4037 = vpack.c.b16 %v2469, %v2453
    %v4038 = vpack.c.b16 %v2470, %v2454
    %v4039 = vpack.c.b16 %v2471, %v2455
    %v4040 = vpack.c.b16 %v2472, %v2456
    %v4041 = vpack.c.b16 %v2489, %v2473
    %v4042 = vpack.c.b16 %v2490, %v2474
    %v4043 = vpack.c.b16 %v2491, %v2475
    %v4044 = vpack.c.b16 %v2492, %v2476
    %v4045 = vpack.c.b16 %v2493, %v2477
    %v4046 = vpack.c.b16 %v2494, %v2478
    %v4047 = vpack.c.b16 %v2495, %v2479
    %v4048 = vpack.c.b16 %v2496, %v2480
    %v4049 = vpack.c.b16 %v2497, %v2481
    %v4050 = vpack.c.b16 %v2498, %v2482
    %v4051 = vpack.c.b16 %v2499, %v2483
    %v4052 = vpack.c.b16 %v2500, %v2484
    %v4053 = vpack.c.b16 %v2501, %v2485
    %v4054 = vpack.c.b16 %v2502, %v2486
    %v4055 = vpack.c.b16 %v2503, %v2487
    %v4056 = vpack.c.b16 %v2504, %v2488
    %v4057 = vpack.c.b16 %v2521, %v2505
    %v4058 = vpack.c.b16 %v2522, %v2506
    %v4059 = vpack.c.b16 %v2523, %v2507
    %v4060 = vpack.c.b16 %v2524, %v2508
    %v4061 = vpack.c.b16 %v2525, %v2509
    %v4062 = vpack.c.b16 %v2526, %v2510
    %v4063 = vpack.c.b16 %v2527, %v2511
    %v4064 = vpack.c.b16 %v2528, %v2512
    %v4065 = vpack.c.b16 %v2529, %v2513
    %v4066 = vpack.c.b16 %v2530, %v2514
    %v4067 = vpack.c.b16 %v2531, %v2515
    %v4068 = vpack.c.b16 %v2532, %v2516
    %v4069 = vpack.c.b16 %v2533, %v2517
    %v4070 = vpack.c.b16 %v2534, %v2518
    %v4071 = vpack.c.b16 %v2535, %v2519
    %v4072 = vpack.c.b16 %v2536, %v2520
    %v4073 = vpack.c.b16 %v2553, %v2537
    %v4074 = vpack.c.b16 %v2554, %v2538
    %v4075 = vpack.c.b16 %v2555, %v2539
    %v4076 = vpack.c.b16 %v2556, %v2540
    %v4077 = vpack.c.b16 %v2557, %v2541
    %v4078 = vpack.c.b16 %v2558, %v2542
    %v4079 = vpack.c.b16 %v2559, %v2543
    %v4080 = vpack.c.b16 %v2560, %v2544
    %v4081 = vpack.c.b16 %v2561, %v2545
    %v4082 = vpack.c.b16 %v2562, %v2546
    %v4083 = vpack.c.b16 %v2563, %v2547
    %v4084 = vpack.c.b16 %v2564, %v2548
    %v4085 = vpack.c.b16 %v2565, %v2549
    %v4086 = vpack.c.b16 %v2566, %v2550
    %v4087 = vpack.c.b16 %v2567, %v2551
    %v4088 = vpack.c.b16 %v2568, %v2552
    %v4089 = vpack.c.b16 %v2585, %v2569
    %v4090 = vpack.c.b16 %v2586, %v2570
    %v4091 = vpack.c.b16 %v2587, %v2571
    %v4092 = vpack.c.b16 %v2588, %v2572
    %v4093 = vpack.c.b16 %v2589, %v2573
    %v4094 = vpack.c.b16 %v2590, %v2574
    %v4095 = vpack.c.b16 %v2591, %v2575
    %v4096 = vpack.c.b16 %v2592, %v2576
    %v4097 = vpack.c.b16 %v2593, %v2577
    %v4098 = vpack.c.b16 %v2594, %v2578
    %v4099 = vpack.c.b16 %v2595, %v2579
    %v4100 = vpack.c.b16 %v2596, %v2580
    %v4101 = vpack.c.b16 %v2597, %v2581
    %v4102 = vpack.c.b16 %v2598, %v2582
    %v4103 = vpack.c.b16 %v2599, %v2583
    %v4104 = vpack.c.b16 %v2600, %v2584
    %v4105 = vpack.c.b16 %v2617, %v2601
    %v4106 = vpack.c.b16 %v2618, %v2602
    %v4107 = vpack.c.b16 %v2619, %v2603
    %v4108 = vpack.c.b16 %v2620, %v2604
    %v4109 = vpack.c.b16 %v2621, %v2605
    %v4110 = vpack.c.b16 %v2622, %v2606
    %v4111 = vpack.c.b16 %v2623, %v2607
    %v4112 = vpack.c.b16 %v2624, %v2608
    %v4113 = vpack.c.b16 %v2625, %v2609
    %v4114 = vpack.c.b16 %v2626, %v2610
    %v4115 = vpack.c.b16 %v2627, %v2611
    %v4116 = vpack.c.b16 %v2628, %v2612
    %v4117 = vpack.c.b16 %v2629, %v2613
    %v4118 = vpack.c.b16 %v2630, %v2614
    %v4119 = vpack.c.b16 %v2631, %v2615
    %v4120 = vpack.c.b16 %v2632, %v2616
    %v4121 = vpack.c.b16 %v2649, %v2633
    %v4122 = vpack.c.b16 %v2650, %v2634
    %v4123 = vpack.c.b16 %v2651, %v2635
    %v4124 = vpack.c.b16 %v2652, %v2636
    %v4125 = vpack.c.b16 %v2653, %v2637
    %v4126 = vpack.c.b16 %v2654, %v2638
    %v4127 = vpack.c.b16 %v2655, %v2639
    %v4128 = vpack.c.b16 %v2656, %v2640
    %v4129 = vpack.c.b16 %v2657, %v2641
    %v4130 = vpack.c.b16 %v2658, %v2642
    %v4131 = vpack.c.b16 %v2659, %v2643
    %v4132 = vpack.c.b16 %v2660, %v2644
    %v4133 = vpack.c.b16 %v2661, %v2645
    %v4134 = vpack.c.b16 %v2662, %v2646
    %v4135 = vpack.c.b16 %v2663, %v2647
    %v4136 = vpack.c.b16 %v2664, %v2648
    %v4137 = vpack.c.b16 %v2681, %v2665
    %v4138 = vpack.c.b16 %v2682, %v2666
    %v4139 = vpack.c.b16 %v2683, %v2667
    %v4140 = vpack.c.b16 %v2684, %v2668
    %v4141 = vpack.c.b16 %v2685, %v2669
    %v4142 = vpack.c.b16 %v2686, %v2670
    %v4143 = vpack.c.b16 %v2687, %v2671
    %v4144 = vpack.c.b16 %v2688, %v2672
    %v4145 = vpack.c.b16 %v2689, %v2673
    %v4146 = vpack.c.b16 %v2690, %v2674
    %v4147 = vpack.c.b16 %v2691, %v2675
    %v4148 = vpack.c.b16 %v2692, %v2676
    %v4149 = vpack.c.b16 %v2693, %v2677
    %v4150 = vpack.c.b16 %v2694, %v2678
    %v4151 = vpack.c.b16 %v2695, %v2679
    %v4152 = vpack.c.b16 %v2696, %v2680
    %v4153 = vpack.c.b16 %v2713, %v2697
    %v4154 = vpack.c.b16 %v2714, %v2698
    %v4155 = vpack.c.b16 %v2715, %v2699
    %v4156 = vpack.c.b16 %v2716, %v2700
    %v4157 = vpack.c.b16 %v2717, %v2701
    %v4158 = vpack.c.b16 %v2718, %v2702
    %v4159 = vpack.c.b16 %v2719, %v2703
    %v4160 = vpack.c.b16 %v2720, %v2704
    %v4161 = vpack.c.b16 %v2721, %v2705
    %v4162 = vpack.c.b16 %v2722, %v2706
    %v4163 = vpack.c.b16 %v2723, %v2707
    %v4164 = vpack.c.b16 %v2724, %v2708
    %v4165 = vpack.c.b16 %v2725, %v2709
    %v4166 = vpack.c.b16 %v2726, %v2710
    %v4167 = vpack.c.b16 %v2727, %v2711
    %v4168 = vpack.c.b16 %v2728, %v2712
    %v4169 = vpack.c.b16 %v2745, %v2729
    %v4170 = vpack.c.b16 %v2746, %v2730
    %v4171 = vpack.c.b16 %v2747, %v2731
    %v4172 = vpack.c.b16 %v2748, %v2732
    %v4173 = vpack.c.b16 %v2749, %v2733
    %v4174 = vpack.c.b16 %v2750, %v2734
    %v4175 = vpack.c.b16 %v2751, %v2735
    %v4176 = vpack.c.b16 %v2752, %v2736
    %v4177 = vpack.c.b16 %v2753, %v2737
    %v4178 = vpack.c.b16 %v2754, %v2738
    %v4179 = vpack.c.b16 %v2755, %v2739
    %v4180 = vpack.c.b16 %v2756, %v2740
    %v4181 = vpack.c.b16 %v2757, %v2741
    %v4182 = vpack.c.b16 %v2758, %v2742
    %v4183 = vpack.c.b16 %v2759, %v2743
    %v4184 = vpack.c.b16 %v2760, %v2744
    %v4185 = vpack.c.b16 %v2777, %v2761
    %v4186 = vpack.c.b16 %v2778, %v2762
    %v4187 = vpack.c.b16 %v2779, %v2763
    %v4188 = vpack.c.b16 %v2780, %v2764
    %v4189 = vpack.c.b16 %v2781, %v2765
    %v4190 = vpack.c.b16 %v2782, %v2766
    %v4191 = vpack.c.b16 %v2783, %v2767
    %v4192 = vpack.c.b16 %v2784, %v2768
    %v4193 = vpack.c.b16 %v2785, %v2769
    %v4194 = vpack.c.b16 %v2786, %v2770
    %v4195 = vpack.c.b16 %v2787, %v2771
    %v4196 = vpack.c.b16 %v2788, %v2772
    %v4197 = vpack.c.b16 %v2789, %v2773
    %v4198 = vpack.c.b16 %v2790, %v2774
    %v4199 = vpack.c.b16 %v2791, %v2775
    %v4200 = vpack.c.b16 %v2792, %v2776
    %v4201 = vpack.c.b16 %v2809, %v2793
    %v4202 = vpack.c.b16 %v2810, %v2794
    %v4203 = vpack.c.b16 %v2811, %v2795
    %v4204 = vpack.c.b16 %v2812, %v2796
    %v4205 = vpack.c.b16 %v2813, %v2797
    %v4206 = vpack.c.b16 %v2814, %v2798
    %v4207 = vpack.c.b16 %v2815, %v2799
    %v4208 = vpack.c.b16 %v2816, %v2800
    %v4209 = vpack.c.b16 %v2817, %v2801
    %v4210 = vpack.c.b16 %v2818, %v2802
    %v4211 = vpack.c.b16 %v2819, %v2803
    %v4212 = vpack.c.b16 %v2820, %v2804
    %v4213 = vpack.c.b16 %v2821, %v2805
    %v4214 = vpack.c.b16 %v2822, %v2806
    %v4215 = vpack.c.b16 %v2823, %v2807
    %v4216 = vpack.c.b16 %v2824, %v2808
    %v4217 = vpack.c.b16 %v2841, %v2825
    %v4218 = vpack.c.b16 %v2842, %v2826
    %v4219 = vpack.c.b16 %v2843, %v2827
    %v4220 = vpack.c.b16 %v2844, %v2828
    %v4221 = vpack.c.b16 %v2845, %v2829
    %v4222 = vpack.c.b16 %v2846, %v2830
    %v4223 = vpack.c.b16 %v2847, %v2831
    %v4224 = vpack.c.b16 %v2848, %v2832
    %v4225 = vpack.c.b16 %v2849, %v2833
    %v4226 = vpack.c.b16 %v2850, %v2834
    %v4227 = vpack.c.b16 %v2851, %v2835
    %v4228 = vpack.c.b16 %v2852, %v2836
    %v4229 = vpack.c.b16 %v2853, %v2837
    %v4230 = vpack.c.b16 %v2854, %v2838
    %v4231 = vpack.c.b16 %v2855, %v2839
    %v4232 = vpack.c.b16 %v2856, %v2840
    %v4233 = vpack.c.b16 %v2873, %v2857
    %v4234 = vpack.c.b16 %v2874, %v2858
    %v4235 = vpack.c.b16 %v2875, %v2859
    %v4236 = vpack.c.b16 %v2876, %v2860
    %v4237 = vpack.c.b16 %v2877, %v2861
    %v4238 = vpack.c.b16 %v2878, %v2862
    %v4239 = vpack.c.b16 %v2879, %v2863
    %v4240 = vpack.c.b16 %v2880, %v2864
    %v4241 = vpack.c.b16 %v2881, %v2865
    %v4242 = vpack.c.b16 %v2882, %v2866
    %v4243 = vpack.c.b16 %v2883, %v2867
    %v4244 = vpack.c.b16 %v2884, %v2868
    %v4245 = vpack.c.b16 %v2885, %v2869
    %v4246 = vpack.c.b16 %v2886, %v2870
    %v4247 = vpack.c.b16 %v2887, %v2871
    %v4248 = vpack.c.b16 %v2888, %v2872
    %v4249 = vpack.c.b16 %v2905, %v2889
    %v4250 = vpack.c.b16 %v2906, %v2890
    %v4251 = vpack.c.b16 %v2907, %v2891
    %v4252 = vpack.c.b16 %v2908, %v2892
    %v4253 = vpack.c.b16 %v2909, %v2893
    %v4254 = vpack.c.b16 %v2910, %v2894
    %v4255 = vpack.c.b16 %v2911, %v2895
    %v4256 = vpack.c.b16 %v2912, %v2896
    %v4257 = vpack.c.b16 %v2913, %v2897
    %v4258 = vpack.c.b16 %v2914, %v2898
    %v4259 = vpack.c.b16 %v2915, %v2899
    %v4260 = vpack.c.b16 %v2916, %v2900
    %v4261 = vpack.c.b16 %v2917, %v2901
    %v4262 = vpack.c.b16 %v2918, %v2902
    %v4263 = vpack.c.b16 %v2919, %v2903
    %v4264 = vpack.c.b16 %v2920, %v2904
    %v4265 = vpack.c.b16 %v2937, %v2921
    %v4266 = vpack.c.b16 %v2938, %v2922
    %v4267 = vpack.c.b16 %v2939, %v2923
    %v4268 = vpack.c.b16 %v2940, %v2924
    %v4269 = vpack.c.b16 %v2941, %v2925
    %v4270 = vpack.c.b16 %v2942, %v2926
    %v4271 = vpack.c.b16 %v2943, %v2927
    %v4272 = vpack.c.b16 %v2944, %v2928
    %v4273 = vpack.c.b16 %v2945, %v2929
    %v4274 = vpack.c.b16 %v2946, %v2930
    %v4275 = vpack.c.b16 %v2947, %v2931
    %v4276 = vpack.c.b16 %v2948, %v2932
    %v4277 = vpack.c.b16 %v2949, %v2933
    %v4278 = vpack.c.b16 %v2950, %v2934
    %v4279 = vpack.c.b16 %v2951, %v2935
    %v4280 = vpack.c.b16 %v2952, %v2936
    %v4281 = vpack.c.b16 %v2969, %v2953
    %v4282 = vpack.c.b16 %v2970, %v2954
    %v4283 = vpack.c.b16 %v2971, %v2955
    %v4284 = vpack.c.b16 %v2972, %v2956
    %v4285 = vpack.c.b16 %v2973, %v2957
    %v4286 = vpack.c.b16 %v2974, %v2958
    %v4287 = vpack.c.b16 %v2975, %v2959
    %v4288 = vpack.c.b16 %v2976, %v2960
    %v4289 = vpack.c.b16 %v2977, %v2961
    %v4290 = vpack.c.b16 %v2978, %v2962
    %v4291 = vpack.c.b16 %v2979, %v2963
    %v4292 = vpack.c.b16 %v2980, %v2964
    %v4293 = vpack.c.b16 %v2981, %v2965
    %v4294 = vpack.c.b16 %v2982, %v2966
    %v4295 = vpack.c.b16 %v2983, %v2967
    %v4296 = vpack.c.b16 %v2984, %v2968
    %v4297 = vpack.c.b16 %v3001, %v2985
    %v4298 = vpack.c.b16 %v3002, %v2986
    %v4299 = vpack.c.b16 %v3003, %v2987
    %v4300 = vpack.c.b16 %v3004, %v2988
    %v4301 = vpack.c.b16 %v3005, %v2989
    %v4302 = vpack.c.b16 %v3006, %v2990
    %v4303 = vpack.c.b16 %v3007, %v2991
    %v4304 = vpack.c.b16 %v3008, %v2992
    %v4305 = vpack.c.b16 %v3009, %v2993
    %v4306 = vpack.c.b16 %v3010, %v2994
    %v4307 = vpack.c.b16 %v3011, %v2995
    %v4308 = vpack.c.b16 %v3012, %v2996
    %v4309 = vpack.c.b16 %v3013, %v2997
    %v4310 = vpack.c.b16 %v3014, %v2998
    %v4311 = vpack.c.b16 %v3015, %v2999
    %v4312 = vpack.c.b16 %v3016, %v3000
    %v4313 = vpack.c.b16 %v3033, %v3017
    %v4314 = vpack.c.b16 %v3034, %v3018
    %v4315 = vpack.c.b16 %v3035, %v3019
    %v4316 = vpack.c.b16 %v3036, %v3020
    %v4317 = vpack.c.b16 %v3037, %v3021
    %v4318 = vpack.c.b16 %v3038, %v3022
    %v4319 = vpack.c.b16 %v3039, %v3023
    %v4320 = vpack.c.b16 %v3040, %v3024
    %v4321 = vpack.c.b16 %v3041, %v3025
    %v4322 = vpack.c.b16 %v3042, %v3026
    %v4323 = vpack.c.b16 %v3043, %v3027
    %v4324 = vpack.c.b16 %v3044, %v3028
    %v4325 = vpack.c.b16 %v3045, %v3029
    %v4326 = vpack.c.b16 %v3046, %v3030
    %v4327 = vpack.c.b16 %v3047, %v3031
    %v4328 = vpack.c.b16 %v3048, %v3032
    %v4329 = vpack.c.b16 %v3065, %v3049
    %v4330 = vpack.c.b16 %v3066, %v3050
    %v4331 = vpack.c.b16 %v3067, %v3051
    %v4332 = vpack.c.b16 %v3068, %v3052
    %v4333 = vpack.c.b16 %v3069, %v3053
    %v4334 = vpack.c.b16 %v3070, %v3054
    %v4335 = vpack.c.b16 %v3071, %v3055
    %v4336 = vpack.c.b16 %v3072, %v3056
    %v4337 = vpack.c.b16 %v3073, %v3057
    %v4338 = vpack.c.b16 %v3074, %v3058
    %v4339 = vpack.c.b16 %v3075, %v3059
    %v4340 = vpack.c.b16 %v3076, %v3060
    %v4341 = vpack.c.b16 %v3077, %v3061
    %v4342 = vpack.c.b16 %v3078, %v3062
    %v4343 = vpack.c.b16 %v3079, %v3063
    %v4344 = vpack.c.b16 %v3080, %v3064
    %v4345 = vpack.c.b16 %v3097, %v3081
    %v4346 = vpack.c.b16 %v3098, %v3082
    %v4347 = vpack.c.b16 %v3099, %v3083
    %v4348 = vpack.c.b16 %v3100, %v3084
    %v4349 = vpack.c.b16 %v3101, %v3085
    %v4350 = vpack.c.b16 %v3102, %v3086
    %v4351 = vpack.c.b16 %v3103, %v3087
    %v4352 = vpack.c.b16 %v3104, %v3088
    %v4353 = vpack.c.b16 %v3105, %v3089
    %v4354 = vpack.c.b16 %v3106, %v3090
    %v4355 = vpack.c.b16 %v3107, %v3091
    %v4356 = vpack.c.b16 %v3108, %v3092
    %v4357 = vpack.c.b16 %v3109, %v3093
    %v4358 = vpack.c.b16 %v3110, %v3094
    %v4359 = vpack.c.b16 %v3111, %v3095
    %v4360 = vpack.c.b16 %v3112, %v3096
    %v4361 = vpack.c.b16 %v3129, %v3113
    %v4362 = vpack.c.b16 %v3130, %v3114
    %v4363 = vpack.c.b16 %v3131, %v3115
    %v4364 = vpack.c.b16 %v3132, %v3116
    %v4365 = vpack.c.b16 %v3133, %v3117
    %v4366 = vpack.c.b16 %v3134, %v3118
    %v4367 = vpack.c.b16 %v3135, %v3119
    %v4368 = vpack.c.b16 %v3136, %v3120
    %v4369 = vpack.c.b16 %v3137, %v3121
    %v4370 = vpack.c.b16 %v3138, %v3122
    %v4371 = vpack.c.b16 %v3139, %v3123
    %v4372 = vpack.c.b16 %v3140, %v3124
    %v4373 = vpack.c.b16 %v3141, %v3125
    %v4374 = vpack.c.b16 %v3142, %v3126
    %v4375 = vpack.c.b16 %v3143, %v3127
    %v4376 = vpack.c.b16 %v3144, %v3128
    %v4377 = vpack.c.b16 %v3161, %v3145
    %v4378 = vpack.c.b16 %v3162, %v3146
    %v4379 = vpack.c.b16 %v3163, %v3147
    %v4380 = vpack.c.b16 %v3164, %v3148
    %v4381 = vpack.c.b16 %v3165, %v3149
    %v4382 = vpack.c.b16 %v3166, %v3150
    %v4383 = vpack.c.b16 %v3167, %v3151
    %v4384 = vpack.c.b16 %v3168, %v3152
    %v4385 = vpack.c.b16 %v3169, %v3153
    %v4386 = vpack.c.b16 %v3170, %v3154
    %v4387 = vpack.c.b16 %v3171, %v3155
    %v4388 = vpack.c.b16 %v3172, %v3156
    %v4389 = vpack.c.b16 %v3173, %v3157
    %v4390 = vpack.c.b16 %v3174, %v3158
    %v4391 = vpack.c.b16 %v3175, %v3159
    %v4392 = vpack.c.b16 %v3176, %v3160
    %v4393 = vpack.c.b16 %v3193, %v3177
    %v4394 = vpack.c.b16 %v3194, %v3178
    %v4395 = vpack.c.b16 %v3195, %v3179
    %v4396 = vpack.c.b16 %v3196, %v3180
    %v4397 = vpack.c.b16 %v3197, %v3181
    %v4398 = vpack.c.b16 %v3198, %v3182
    %v4399 = vpack.c.b16 %v3199, %v3183
    %v4400 = vpack.c.b16 %v3200, %v3184
    %v4401 = vpack.c.b16 %v3201, %v3185
    %v4402 = vpack.c.b16 %v3202, %v3186
    %v4403 = vpack.c.b16 %v3203, %v3187
    %v4404 = vpack.c.b16 %v3204, %v3188
    %v4405 = vpack.c.b16 %v3205, %v3189
    %v4406 = vpack.c.b16 %v3206, %v3190
    %v4407 = vpack.c.b16 %v3207, %v3191
    %v4408 = vpack.c.b16 %v3208, %v3192
    %v4409 = vpack.c.b16 %v3225, %v3209
    %v4410 = vpack.c.b16 %v3226, %v3210
    %v4411 = vpack.c.b16 %v3227, %v3211
    %v4412 = vpack.c.b16 %v3228, %v3212
    %v4413 = vpack.c.b16 %v3229, %v3213
    %v4414 = vpack.c.b16 %v3230, %v3214
    %v4415 = vpack.c.b16 %v3231, %v3215
    %v4416 = vpack.c.b16 %v3232, %v3216
    %v4417 = vpack.c.b16 %v3233, %v3217
    %v4418 = vpack.c.b16 %v3234, %v3218
    %v4419 = vpack.c.b16 %v3235, %v3219
    %v4420 = vpack.c.b16 %v3236, %v3220
    %v4421 = vpack.c.b16 %v3237, %v3221
    %v4422 = vpack.c.b16 %v3238, %v3222
    %v4423 = vpack.c.b16 %v3239, %v3223
    %v4424 = vpack.c.b16 %v3240, %v3224
    %v4425 = vpack.c.b16 %v3257, %v3241
    %v4426 = vpack.c.b16 %v3258, %v3242
    %v4427 = vpack.c.b16 %v3259, %v3243
    %v4428 = vpack.c.b16 %v3260, %v3244
    %v4429 = vpack.c.b16 %v3261, %v3245
    %v4430 = vpack.c.b16 %v3262, %v3246
    %v4431 = vpack.c.b16 %v3263, %v3247
    %v4432 = vpack.c.b16 %v3264, %v3248
    %v4433 = vpack.c.b16 %v3265, %v3249
    %v4434 = vpack.c.b16 %v3266, %v3250
    %v4435 = vpack.c.b16 %v3267, %v3251
    %v4436 = vpack.c.b16 %v3268, %v3252
    %v4437 = vpack.c.b16 %v3269, %v3253
    %v4438 = vpack.c.b16 %v3270, %v3254
    %v4439 = vpack.c.b16 %v3271, %v3255
    %v4440 = vpack.c.b16 %v3272, %v3256
    %v4441 = vpack.c.b16 %v3289, %v3273
    %v4442 = vpack.c.b16 %v3290, %v3274
    %v4443 = vpack.c.b16 %v3291, %v3275
    %v4444 = vpack.c.b16 %v3292, %v3276
    %v4445 = vpack.c.b16 %v3293, %v3277
    %v4446 = vpack.c.b16 %v3294, %v3278
    %v4447 = vpack.c.b16 %v3295, %v3279
    %v4448 = vpack.c.b16 %v3296, %v3280
    %v4449 = vpack.c.b16 %v3297, %v3281
    %v4450 = vpack.c.b16 %v3298, %v3282
    %v4451 = vpack.c.b16 %v3299, %v3283
    %v4452 = vpack.c.b16 %v3300, %v3284
    %v4453 = vpack.c.b16 %v3301, %v3285
    %v4454 = vpack.c.b16 %v3302, %v3286
    %v4455 = vpack.c.b16 %v3303, %v3287
    %v4456 = vpack.c.b16 %v3304, %v3288
    %v4457 = vpack.c.b16 %v3321, %v3305
    %v4458 = vpack.c.b16 %v3322, %v3306
    %v4459 = vpack.c.b16 %v3323, %v3307
    %v4460 = vpack.c.b16 %v3324, %v3308
    %v4461 = vpack.c.b16 %v3325, %v3309
    %v4462 = vpack.c.b16 %v3326, %v3310
    %v4463 = vpack.c.b16 %v3327, %v3311
    %v4464 = vpack.c.b16 %v3328, %v3312
    %v4465 = vpack.c.b16 %v3329, %v3313
    %v4466 = vpack.c.b16 %v3330, %v3314
    %v4467 = vpack.c.b16 %v3331, %v3315
    %v4468 = vpack.c.b16 %v3332, %v3316
    %v4469 = vpack.c.b16 %v3333, %v3317
    %v4470 = vpack.c.b16 %v3334, %v3318
    %v4471 = vpack.c.b16 %v3335, %v3319
    %v4472 = vpack.c.b16 %v3336, %v3320
    %v4473 = vpack.c.b16 %v3353, %v3337
    %v4474 = vpack.c.b16 %v3354, %v3338
    %v4475 = vpack.c.b16 %v3355, %v3339
    %v4476 = vpack.c.b16 %v3356, %v3340
    %v4477 = vpack.c.b16 %v3357, %v3341
    %v4478 = vpack.c.b16 %v3358, %v3342
    %v4479 = vpack.c.b16 %v3359, %v3343
    %v4480 = vpack.c.b16 %v3360, %v3344
    %v4481 = vpack.c.b16 %v3361, %v3345
    %v4482 = vpack.c.b16 %v3362, %v3346
    %v4483 = vpack.c.b16 %v3363, %v3347
    %v4484 = vpack.c.b16 %v3364, %v3348
    %v4485 = vpack.c.b16 %v3365, %v3349
    %v4486 = vpack.c.b16 %v3366, %v3350
    %v4487 = vpack.c.b16 %v3367, %v3351
    %v4488 = vpack.c.b16 %v3368, %v3352
    %v4489 = vpack.c.b16 %v3385, %v3369
    %v4490 = vpack.c.b16 %v3386, %v3370
    %v4491 = vpack.c.b16 %v3387, %v3371
    %v4492 = vpack.c.b16 %v3388, %v3372
    %v4493 = vpack.c.b16 %v3389, %v3373
    %v4494 = vpack.c.b16 %v3390, %v3374
    %v4495 = vpack.c.b16 %v3391, %v3375
    %v4496 = vpack.c.b16 %v3392, %v3376
    %v4497 = vpack.c.b16 %v3393, %v3377
    %v4498 = vpack.c.b16 %v3394, %v3378
    %v4499 = vpack.c.b16 %v3395, %v3379
    %v4500 = vpack.c.b16 %v3396, %v3380
    %v4501 = vpack.c.b16 %v3397, %v3381
    %v4502 = vpack.c.b16 %v3398, %v3382
    %v4503 = vpack.c.b16 %v3399, %v3383
    %v4504 = vpack.c.b16 %v3400, %v3384
    %v4505 = vpack.c.b16 %v3417, %v3401
    %v4506 = vpack.c.b16 %v3418, %v3402
    %v4507 = vpack.c.b16 %v3419, %v3403
    %v4508 = vpack.c.b16 %v3420, %v3404
    %v4509 = vpack.c.b16 %v3421, %v3405
    %v4510 = vpack.c.b16 %v3422, %v3406
    %v4511 = vpack.c.b16 %v3423, %v3407
    %v4512 = vpack.c.b16 %v3424, %v3408
    %v4513 = vpack.c.b16 %v3425, %v3409
    %v4514 = vpack.c.b16 %v3426, %v3410
    %v4515 = vpack.c.b16 %v3427, %v3411
    %v4516 = vpack.c.b16 %v3428, %v3412
    %v4517 = vpack.c.b16 %v3429, %v3413
    %v4518 = vpack.c.b16 %v3430, %v3414
    %v4519 = vpack.c.b16 %v3431, %v3415
    %v4520 = vpack.c.b16 %v3432, %v3416
    %v4521 = vpack.c.b16 %v3449, %v3433
    %v4522 = vpack.c.b16 %v3450, %v3434
    %v4523 = vpack.c.b16 %v3451, %v3435
    %v4524 = vpack.c.b16 %v3452, %v3436
    %v4525 = vpack.c.b16 %v3453, %v3437
    %v4526 = vpack.c.b16 %v3454, %v3438
    %v4527 = vpack.c.b16 %v3455, %v3439
    %v4528 = vpack.c.b16 %v3456, %v3440
    %v4529 = vpack.c.b16 %v3457, %v3441
    %v4530 = vpack.c.b16 %v3458, %v3442
    %v4531 = vpack.c.b16 %v3459, %v3443
    %v4532 = vpack.c.b16 %v3460, %v3444
    %v4533 = vpack.c.b16 %v3461, %v3445
    %v4534 = vpack.c.b16 %v3462, %v3446
    %v4535 = vpack.c.b16 %v3463, %v3447
    %v4536 = vpack.c.b16 %v3464, %v3448
    %v4537 = vpack.c.b16 %v3481, %v3465
    %v4538 = vpack.c.b16 %v3482, %v3466
    %v4539 = vpack.c.b16 %v3483, %v3467
    %v4540 = vpack.c.b16 %v3484, %v3468
    %v4541 = vpack.c.b16 %v3485, %v3469
    %v4542 = vpack.c.b16 %v3486, %v3470
    %v4543 = vpack.c.b16 %v3487, %v3471
    %v4544 = vpack.c.b16 %v3488, %v3472
    %v4545 = vpack.c.b16 %v3489, %v3473
    %v4546 = vpack.c.b16 %v3490, %v3474
    %v4547 = vpack.c.b16 %v3491, %v3475
    %v4548 = vpack.c.b16 %v3492, %v3476
    %v4549 = vpack.c.b16 %v3493, %v3477
    %v4550 = vpack.c.b16 %v3494, %v3478
    %v4551 = vpack.c.b16 %v3495, %v3479
    %v4552 = vpack.c.b16 %v3496, %v3480
    %v4553 = vpack.c.b16 %v3513, %v3497
    %v4554 = vpack.c.b16 %v3514, %v3498
    %v4555 = vpack.c.b16 %v3515, %v3499
    %v4556 = vpack.c.b16 %v3516, %v3500
    %v4557 = vpack.c.b16 %v3517, %v3501
    %v4558 = vpack.c.b16 %v3518, %v3502
    %v4559 = vpack.c.b16 %v3519, %v3503
    %v4560 = vpack.c.b16 %v3520, %v3504
    %v4561 = vpack.c.b16 %v3521, %v3505
    %v4562 = vpack.c.b16 %v3522, %v3506
    %v4563 = vpack.c.b16 %v3523, %v3507
    %v4564 = vpack.c.b16 %v3524, %v3508
    %v4565 = vpack.c.b16 %v3525, %v3509
    %v4566 = vpack.c.b16 %v3526, %v3510
    %v4567 = vpack.c.b16 %v3527, %v3511
    %v4568 = vpack.c.b16 %v3528, %v3512
    %v4569 = vpack.c.b16 %v3545, %v3529
    %v4570 = vpack.c.b16 %v3546, %v3530
    %v4571 = vpack.c.b16 %v3547, %v3531
    %v4572 = vpack.c.b16 %v3548, %v3532
    %v4573 = vpack.c.b16 %v3549, %v3533
    %v4574 = vpack.c.b16 %v3550, %v3534
    %v4575 = vpack.c.b16 %v3551, %v3535
    %v4576 = vpack.c.b16 %v3552, %v3536
    %v4577 = vpack.c.b16 %v3553, %v3537
    %v4578 = vpack.c.b16 %v3554, %v3538
    %v4579 = vpack.c.b16 %v3555, %v3539
    %v4580 = vpack.c.b16 %v3556, %v3540
    %v4581 = vpack.c.b16 %v3557, %v3541
    %v4582 = vpack.c.b16 %v3558, %v3542
    %v4583 = vpack.c.b16 %v3559, %v3543
    %v4584 = vpack.c.b16 %v3560, %v3544
    %v4585 = vpack.c.b16 %v3577, %v3561
    %v4586 = vpack.c.b16 %v3578, %v3562
    %v4587 = vpack.c.b16 %v3579, %v3563
    %v4588 = vpack.c.b16 %v3580, %v3564
    %v4589 = vpack.c.b16 %v3581, %v3565
    %v4590 = vpack.c.b16 %v3582, %v3566
    %v4591 = vpack.c.b16 %v3583, %v3567
    %v4592 = vpack.c.b16 %v3584, %v3568
    %v4593 = vpack.c.b16 %v3585, %v3569
    %v4594 = vpack.c.b16 %v3586, %v3570
    %v4595 = vpack.c.b16 %v3587, %v3571
    %v4596 = vpack.c.b16 %v3588, %v3572
    %v4597 = vpack.c.b16 %v3589, %v3573
    %v4598 = vpack.c.b16 %v3590, %v3574
    %v4599 = vpack.c.b16 %v3591, %v3575
    %v4600 = vpack.c.b16 %v3592, %v3576
    %v4601 = vpack.c.b16 %v3609, %v3593
    %v4602 = vpack.c.b16 %v3610, %v3594
    %v4603 = vpack.c.b16 %v3611, %v3595
    %v4604 = vpack.c.b16 %v3612, %v3596
    %v4605 = vpack.c.b16 %v3613, %v3597
    %v4606 = vpack.c.b16 %v3614, %v3598
    %v4607 = vpack.c.b16 %v3615, %v3599
    %v4608 = vpack.c.b16 %v3616, %v3600
    %v4609 = vpack.c.b16 %v3617, %v3601
    %v4610 = vpack.c.b16 %v3618, %v3602
    %v4611 = vpack.c.b16 %v3619, %v3603
    %v4612 = vpack.c.b16 %v3620, %v3604
    %v4613 = vpack.c.b16 %v3621, %v3605
    %v4614 = vpack.c.b16 %v3622, %v3606
    %v4615 = vpack.c.b16 %v3623, %v3607
    %v4616 = vpack.c.b16 %v3624, %v3608
    %v4617 = vpack.c.b16 %v3641, %v3625
    %v4618 = vpack.c.b16 %v3642, %v3626
    %v4619 = vpack.c.b16 %v3643, %v3627
    %v4620 = vpack.c.b16 %v3644, %v3628
    %v4621 = vpack.c.b16 %v3645, %v3629
    %v4622 = vpack.c.b16 %v3646, %v3630
    %v4623 = vpack.c.b16 %v3647, %v3631
    %v4624 = vpack.c.b16 %v3648, %v3632
    %v4625 = vpack.c.b16 %v3649, %v3633
    %v4626 = vpack.c.b16 %v3650, %v3634
    %v4627 = vpack.c.b16 %v3651, %v3635
    %v4628 = vpack.c.b16 %v3652, %v3636
    %v4629 = vpack.c.b16 %v3653, %v3637
    %v4630 = vpack.c.b16 %v3654, %v3638
    %v4631 = vpack.c.b16 %v3655, %v3639
    %v4632 = vpack.c.b16 %v3656, %v3640
    %v4633 = vpack.c.b16 %v3673, %v3657
    %v4634 = vpack.c.b16 %v3674, %v3658
    %v4635 = vpack.c.b16 %v3675, %v3659
    %v4636 = vpack.c.b16 %v3676, %v3660
    %v4637 = vpack.c.b16 %v3677, %v3661
    %v4638 = vpack.c.b16 %v3678, %v3662
    %v4639 = vpack.c.b16 %v3679, %v3663
    %v4640 = vpack.c.b16 %v3680, %v3664
    %v4641 = vpack.c.b16 %v3681, %v3665
    %v4642 = vpack.c.b16 %v3682, %v3666
    %v4643 = vpack.c.b16 %v3683, %v3667
    %v4644 = vpack.c.b16 %v3684, %v3668
    %v4645 = vpack.c.b16 %v3685, %v3669
    %v4646 = vpack.c.b16 %v3686, %v3670
    %v4647 = vpack.c.b16 %v3687, %v3671
    %v4648 = vpack.c.b16 %v3688, %v3672
    %v4649 = vpack.c.b16 %v3705, %v3689
    %v4650 = vpack.c.b16 %v3706, %v3690
    %v4651 = vpack.c.b16 %v3707, %v3691
    %v4652 = vpack.c.b16 %v3708, %v3692
    %v4653 = vpack.c.b16 %v3709, %v3693
    %v4654 = vpack.c.b16 %v3710, %v3694
    %v4655 = vpack.c.b16 %v3711, %v3695
    %v4656 = vpack.c.b16 %v3712, %v3696
    %v4657 = vpack.c.b16 %v3713, %v3697
    %v4658 = vpack.c.b16 %v3714, %v3698
    %v4659 = vpack.c.b16 %v3715, %v3699
    %v4660 = vpack.c.b16 %v3716, %v3700
    %v4661 = vpack.c.b16 %v3717, %v3701
    %v4662 = vpack.c.b16 %v3718, %v3702
    %v4663 = vpack.c.b16 %v3719, %v3703
    %v4664 = vpack.c.b16 %v3720, %v3704
    %v4665 = vpack.c.b16 %v3737, %v3721
    %v4666 = vpack.c.b16 %v3738, %v3722
    %v4667 = vpack.c.b16 %v3739, %v3723
    %v4668 = vpack.c.b16 %v3740, %v3724
    %v4669 = vpack.c.b16 %v3741, %v3725
    %v4670 = vpack.c.b16 %v3742, %v3726
    %v4671 = vpack.c.b16 %v3743, %v3727
    %v4672 = vpack.c.b16 %v3744, %v3728
    %v4673 = vpack.c.b16 %v3745, %v3729
    %v4674 = vpack.c.b16 %v3746, %v3730
    %v4675 = vpack.c.b16 %v3747, %v3731
    %v4676 = vpack.c.b16 %v3748, %v3732
    %v4677 = vpack.c.b16 %v3749, %v3733
    %v4678 = vpack.c.b16 %v3750, %v3734
    %v4679 = vpack.c.b16 %v3751, %v3735
    %v4680 = vpack.c.b16 %v3752, %v3736
    %v4681 = vpack.c.b16 %v3769, %v3753
    %v4682 = vpack.c.b16 %v3770, %v3754
    %v4683 = vpack.c.b16 %v3771, %v3755
    %v4684 = vpack.c.b16 %v3772, %v3756
    %v4685 = vpack.c.b16 %v3773, %v3757
    %v4686 = vpack.c.b16 %v3774, %v3758
    %v4687 = vpack.c.b16 %v3775, %v3759
    %v4688 = vpack.c.b16 %v3776, %v3760
    %v4689 = vpack.c.b16 %v3777, %v3761
    %v4690 = vpack.c.b16 %v3778, %v3762
    %v4691 = vpack.c.b16 %v3779, %v3763
    %v4692 = vpack.c.b16 %v3780, %v3764
    %v4693 = vpack.c.b16 %v3781, %v3765
    %v4694 = vpack.c.b16 %v3782, %v3766
    %v4695 = vpack.c.b16 %v3783, %v3767
    %v4696 = vpack.c.b16 %v3784, %v3768
    %v4697 = vpack.c.b16 %v3801, %v3785
    %v4698 = vpack.c.b16 %v3802, %v3786
    %v4699 = vpack.c.b16 %v3803, %v3787
    %v4700 = vpack.c.b16 %v3804, %v3788
    %v4701 = vpack.c.b16 %v3805, %v3789
    %v4702 = vpack.c.b16 %v3806, %v3790
    %v4703 = vpack.c.b16 %v3807, %v3791
    %v4704 = vpack.c.b16 %v3808, %v3792
    %v4705 = vpack.c.b16 %v3809, %v3793
    %v4706 = vpack.c.b16 %v3810, %v3794
    %v4707 = vpack.c.b16 %v3811, %v3795
    %v4708 = vpack.c.b16 %v3812, %v3796
    %v4709 = vpack.c.b16 %v3813, %v3797
    %v4710 = vpack.c.b16 %v3814, %v3798
    %v4711 = vpack.c.b16 %v3815, %v3799
    %v4712 = vpack.c.b16 %v3816, %v3800
    %5609 = vmatprep.subr.bf16.mxu0 %v3818
    %5610 = vmatpush1.bf16.msra.mxu0 %v3817
    %5611 = vmatprep.subr.bf16.mxu0 %v3834
    %5612 = vmatpush1.bf16.msra.mxu0 %v3833
    %5613 = vmatprep.subr.bf16.mxu0 %v3850
    %5614 = vmatpush1.bf16.msra.mxu0 %v3849
    %5615 = vmatprep.subr.bf16.mxu0 %v3866
    %5616 = vmatpush1.bf16.msra.mxu0 %v3865
    %5617 = vmatprep.subr.bf16.mxu0 %v3882
    %5618 = vmatpush1.bf16.msra.mxu0 %v3881
    %5619 = vmatprep.subr.bf16.mxu0 %v3898
    %5620 = vmatpush1.bf16.msra.mxu0 %v3897
    %5621 = vmatprep.subr.bf16.mxu0 %v3914
    %5622 = vmatpush1.bf16.msra.mxu0 %v3913
    %5623 = vmatprep.subr.bf16.mxu0 %v3930
    %5624 = vmatpush1.bf16.msra.mxu0 %v3929
    %5625 = vmatprep.subr.bf16.mxu0 %v3946
    %5626 = vmatpush1.bf16.msra.mxu0 %v3945
    %5627 = vmatprep.subr.bf16.mxu0 %v3962
    %5628 = vmatpush1.bf16.msra.mxu0 %v3961
    %5629 = vmatprep.subr.bf16.mxu0 %v3978
    %5630 = vmatpush1.bf16.msra.mxu0 %v3977
    %5631 = vmatprep.subr.bf16.mxu0 %v3994
    %5632 = vmatpush1.bf16.msra.mxu0 %v3993
    %5633 = vmatprep.subr.bf16.mxu0 %v4010
    %5634 = vmatpush1.bf16.msra.mxu0 %v4009
    %5635 = vmatprep.subr.bf16.mxu0 %v4026
    %5636 = vmatpush1.bf16.msra.mxu0 %v4025
    %5637 = vmatprep.subr.bf16.mxu0 %v4042
    %5638 = vmatpush1.bf16.msra.mxu0 %v4041
    %5639 = vmatprep.subr.bf16.mxu0 %v4058
    %5640 = vmatpush1.bf16.msra.mxu0 %v4057
    %5641 = vmatprep.mubr.bf16.mxu0 %v143
    %5642 = vmatmul.mubr.bf16.gmra.mrb[0].mxu0 %v142
    %v5643 = vpop.f32.mrb[0].mxu0
    %v5644 = vadd.f32 %v1052, %v5643
    %v5645 = vpop.f32.mrb[0].mxu0
    %v5646 = vadd.f32 %v1056, %v5645
    %v5647 = vpop.f32.mrb[0].mxu0
    %v5648 = vpop.f32.mrb[0].mxu0
    %5649 = vdwg.mxu0
    %5650 = vmatprep.subr.bf16.mxu0 %v4074
    %5651 = vmatpush1.bf16.msra.mxu0 %v4073
    %5652 = vmatprep.subr.bf16.mxu0 %v4090
    %5653 = vmatpush1.bf16.msra.mxu0 %v4089
    %5654 = vmatprep.subr.bf16.mxu0 %v4106
    %5655 = vmatpush1.bf16.msra.mxu0 %v4105
    %5656 = vmatprep.subr.bf16.mxu0 %v4122
    %5657 = vmatpush1.bf16.msra.mxu0 %v4121
    %5658 = vmatprep.subr.bf16.mxu0 %v4138
    %5659 = vmatpush1.bf16.msra.mxu0 %v4137
    %5660 = vmatprep.subr.bf16.mxu0 %v4154
    %5661 = vmatpush1.bf16.msra.mxu0 %v4153
    %5662 = vmatprep.subr.bf16.mxu0 %v4170
    %5663 = vmatpush1.bf16.msra.mxu0 %v4169
    %5664 = vmatprep.subr.bf16.mxu0 %v4186
    %5665 = vmatpush1.bf16.msra.mxu0 %v4185
    %5666 = vmatprep.subr.bf16.mxu0 %v4202
    %5667 = vmatpush1.bf16.msra.mxu0 %v4201
    %5668 = vmatprep.subr.bf16.mxu0 %v4218
    %5669 = vmatpush1.bf16.msra.mxu0 %v4217
    %5670 = vmatprep.subr.bf16.mxu0 %v4234
    %5671 = vmatpush1.bf16.msra.mxu0 %v4233
    %5672 = vmatprep.subr.bf16.mxu0 %v4250
    %5673 = vmatpush1.bf16.msra.mxu0 %v4249
    %5674 = vmatprep.subr.bf16.mxu0 %v4266
    %5675 = vmatpush1.bf16.msra.mxu0 %v4265
    %5676 = vmatprep.subr.bf16.mxu0 %v4282
    %5677 = vmatpush1.bf16.msra.mxu0 %v4281
    %5678 = vmatprep.subr.bf16.mxu0 %v4298
    %5679 = vmatpush1.bf16.msra.mxu0 %v4297
    %5680 = vmatprep.subr.bf16.mxu0 %v4314
    %5681 = vmatpush1.bf16.msra.mxu0 %v4313
    %5682 = vmatprep.mubr.bf16.mxu0 %v145
    %5683 = vmatmul.mubr.bf16.gmra.mrb[0].mxu0 %v144
    %v5684 = vpop.f32.mrb[0].mxu0
    %v5685 = vadd.f32 %v5644, %v5684
    %v5686 = vpop.f32.mrb[0].mxu0
    %v5687 = vadd.f32 %v5646, %v5686
    %v5688 = vpop.f32.mrb[0].mxu0
    %v5689 = vpop.f32.mrb[0].mxu0
    %5690 = vdwg.mxu0
    %5691 = vmatprep.subr.bf16.mxu0 %v4330
    %5692 = vmatpush1.bf16.msra.mxu0 %v4329
    %5693 = vmatprep.subr.bf16.mxu0 %v4346
    %5694 = vmatpush1.bf16.msra.mxu0 %v4345
    %5695 = vmatprep.subr.bf16.mxu0 %v4362
    %5696 = vmatpush1.bf16.msra.mxu0 %v4361
    %5697 = vmatprep.subr.bf16.mxu0 %v4378
    %5698 = vmatpush1.bf16.msra.mxu0 %v4377
    %5699 = vmatprep.subr.bf16.mxu0 %v4394
    %5700 = vmatpush1.bf16.msra.mxu0 %v4393
    %5701 = vmatprep.subr.bf16.mxu0 %v4410
    %5702 = vmatpush1.bf16.msra.mxu0 %v4409
    %5703 = vmatprep.subr.bf16.mxu0 %v4426
    %5704 = vmatpush1.bf16.msra.mxu0 %v4425
    %5705 = vmatprep.subr.bf16.mxu0 %v4442
    %5706 = vmatpush1.bf16.msra.mxu0 %v4441
    %5707 = vmatprep.subr.bf16.mxu0 %v4458
    %5708 = vmatpush1.bf16.msra.mxu0 %v4457
    %5709 = vmatprep.subr.bf16.mxu0 %v4474
    %5710 = vmatpush1.bf16.msra.mxu0 %v4473
    %5711 = vmatprep.subr.bf16.mxu0 %v4490
    %5712 = vmatpush1.bf16.msra.mxu0 %v4489
    %5713 = vmatprep.subr.bf16.mxu0 %v4506
    %5714 = vmatpush1.bf16.msra.mxu0 %v4505
    %5715 = vmatprep.subr.bf16.mxu0 %v4522
    %5716 = vmatpush1.bf16.msra.mxu0 %v4521
    %5717 = vmatprep.subr.bf16.mxu0 %v4538
    %5718 = vmatpush1.bf16.msra.mxu0 %v4537
    %5719 = vmatprep.subr.bf16.mxu0 %v4554
    %5720 = vmatpush1.bf16.msra.mxu0 %v4553
    %5721 = vmatprep.subr.bf16.mxu0 %v4570
    %5722 = vmatpush1.bf16.msra.mxu0 %v4569
    %5723 = vmatprep.mubr.bf16.mxu0 %v147
    %5724 = vmatmul.mubr.bf16.gmra.mrb[0].mxu0 %v146
    %v5725 = vpop.f32.mrb[0].mxu0
    %v5726 = vadd.f32 %v5685, %v5725
    %v5727 = vpop.f32.mrb[0].mxu0
    %v5728 = vadd.f32 %v5687, %v5727
    %v5729 = vpop.f32.mrb[0].mxu0
    %v5730 = vpop.f32.mrb[0].mxu0
    %5731 = vdwg.mxu0
    %5732 = vmatprep.subr.bf16.mxu0 %v4586
    %5733 = vmatpush1.bf16.msra.mxu0 %v4585
    %5734 = vmatprep.subr.bf16.mxu0 %v4602
    %5735 = vmatpush1.bf16.msra.mxu0 %v4601
    %5736 = vmatprep.subr.bf16.mxu0 %v4618
    %5737 = vmatpush1.bf16.msra.mxu0 %v4617
    %5738 = vmatprep.subr.bf16.mxu0 %v4634
    %5739 = vmatpush1.bf16.msra.mxu0 %v4633
    %5740 = vmatprep.subr.bf16.mxu0 %v4650
    %5741 = vmatpush1.bf16.msra.mxu0 %v4649
    %5742 = vmatprep.subr.bf16.mxu0 %v4666
    %5743 = vmatpush1.bf16.msra.mxu0 %v4665
    %5744 = vmatprep.subr.bf16.mxu0 %v4682
    %5745 = vmatpush1.bf16.msra.mxu0 %v4681
    %5746 = vmatprep.subr.bf16.mxu0 %v4698
    %5747 = vmatpush1.bf16.msra.mxu0 %v4697
    %5748 = vmatprep.subr.bf16.mxu0 0
    %5749 = vmatpush1.bf16.msra.mxu0 0
    %5750 = vmatprep.subr.bf16.mxu0 0
    %5751 = vmatpush1.bf16.msra.mxu0 0
    %5752 = vmatprep.subr.bf16.mxu0 0
    %5753 = vmatpush1.bf16.msra.mxu0 0
    %5754 = vmatprep.subr.bf16.mxu0 0
    %5755 = vmatpush1.bf16.msra.mxu0 0
    %5756 = vmatprep.subr.bf16.mxu0 0
    %5757 = vmatpush1.bf16.msra.mxu0 0
    %5758 = vmatprep.subr.bf16.mxu0 0
    %5759 = vmatpush1.bf16.msra.mxu0 0
    %5760 = vmatprep.subr.bf16.mxu0 0
    %5761 = vmatpush1.bf16.msra.mxu0 0
    %5762 = vmatprep.subr.bf16.mxu0 0
    %5763 = vmatpush1.bf16.msra.mxu0 0
    %5764 = vmatprep.mubr.bf16.mxu0 0
    %5765 = vmatmul.mubr.bf16.gmra.mrb[0].mxu0 %v148
    %v5766 = vpop.f32.mrb[0].mxu0
    %v5767 = vadd.f32 %v5726, %v5766
    %v5768 = vpop.f32.mrb[0].mxu0
    %v5769 = vadd.f32 %v5728, %v5768
    %v5770 = vpop.f32.mrb[0].mxu0
    %v5771 = vpop.f32.mrb[0].mxu0
    %5772 = vdwg.mxu0
    %5773 = vmatprep.subr.bf16.mxu0 %v3820
    %5774 = vmatpush1.bf16.msra.mxu0 %v3819
    %5775 = vmatprep.subr.bf16.mxu0 %v3836
    %5776 = vmatpush1.bf16.msra.mxu0 %v3835
    %5777 = vmatprep.subr.bf16.mxu0 %v3852
    %5778 = vmatpush1.bf16.msra.mxu0 %v3851
    %5779 = vmatprep.subr.bf16.mxu0 %v3868
    %5780 = vmatpush1.bf16.msra.mxu0 %v3867
    %5781 = vmatprep.subr.bf16.mxu0 %v3884
    %5782 = vmatpush1.bf16.msra.mxu0 %v3883
    %5783 = vmatprep.subr.bf16.mxu0 %v3900
    %5784 = vmatpush1.bf16.msra.mxu0 %v3899
    %5785 = vmatprep.subr.bf16.mxu0 %v3916
    %5786 = vmatpush1.bf16.msra.mxu0 %v3915
    %5787 = vmatprep.subr.bf16.mxu0 %v3932
    %5788 = vmatpush1.bf16.msra.mxu0 %v3931
    %5789 = vmatprep.subr.bf16.mxu0 %v3948
    %5790 = vmatpush1.bf16.msra.mxu0 %v3947
    %5791 = vmatprep.subr.bf16.mxu0 %v3964
    %5792 = vmatpush1.bf16.msra.mxu0 %v3963
    %5793 = vmatprep.subr.bf16.mxu0 %v3980
    %5794 = vmatpush1.bf16.msra.mxu0 %v3979
    %5795 = vmatprep.subr.bf16.mxu0 %v3996
    %5796 = vmatpush1.bf16.msra.mxu0 %v3995
    %5797 = vmatprep.subr.bf16.mxu0 %v4012
    %5798 = vmatpush1.bf16.msra.mxu0 %v4011
    %5799 = vmatprep.subr.bf16.mxu0 %v4028
    %5800 = vmatpush1.bf16.msra.mxu0 %v4027
    %5801 = vmatprep.subr.bf16.mxu0 %v4044
    %5802 = vmatpush1.bf16.msra.mxu0 %v4043
    %5803 = vmatprep.subr.bf16.mxu0 %v4060
    %5804 = vmatpush1.bf16.msra.mxu0 %v4059
    %5805 = vmatprep.mubr.bf16.mxu0 %v143
    %5806 = vmatmul.mubr.bf16.gmra.mrb[0].mxu0 %v142
    %v5807 = vpop.f32.mrb[0].mxu0
    %v5808 = vadd.f32 %v1060, %v5807
    %v5809 = vpop.f32.mrb[0].mxu0
    %v5810 = vadd.f32 %v1064, %v5809
    %v5811 = vpop.f32.mrb[0].mxu0
    %v5812 = vpop.f32.mrb[0].mxu0
    %5813 = vdwg.mxu0
    %5814 = vmatprep.subr.bf16.mxu0 %v4076
    %5815 = vmatpush1.bf16.msra.mxu0 %v4075
    %5816 = vmatprep.subr.bf16.mxu0 %v4092
    %5817 = vmatpush1.bf16.msra.mxu0 %v4091
    %5818 = vmatprep.subr.bf16.mxu0 %v4108
    %5819 = vmatpush1.bf16.msra.mxu0 %v4107
    %5820 = vmatprep.subr.bf16.mxu0 %v4124
    %5821 = vmatpush1.bf16.msra.mxu0 %v4123
    %5822 = vmatprep.subr.bf16.mxu0 %v4140
    %5823 = vmatpush1.bf16.msra.mxu0 %v4139
    %5824 = vmatprep.subr.bf16.mxu0 %v4156
    %5825 = vmatpush1.bf16.msra.mxu0 %v4155
    %5826 = vmatprep.subr.bf16.mxu0 %v4172
    %5827 = vmatpush1.bf16.msra.mxu0 %v4171
    %5828 = vmatprep.subr.bf16.mxu0 %v4188
    %5829 = vmatpush1.bf16.msra.mxu0 %v4187
    %5830 = vmatprep.subr.bf16.mxu0 %v4204
    %5831 = vmatpush1.bf16.msra.mxu0 %v4203
    %5832 = vmatprep.subr.bf16.mxu0 %v4220
    %5833 = vmatpush1.bf16.msra.mxu0 %v4219
    %5834 = vmatprep.subr.bf16.mxu0 %v4236
    %5835 = vmatpush1.bf16.msra.mxu0 %v4235
    %5836 = vmatprep.subr.bf16.mxu0 %v4252
    %5837 = vmatpush1.bf16.msra.mxu0 %v4251
    %5838 = vmatprep.subr.bf16.mxu0 %v4268
    %5839 = vmatpush1.bf16.msra.mxu0 %v4267
    %5840 = vmatprep.subr.bf16.mxu0 %v4284
    %5841 = vmatpush1.bf16.msra.mxu0 %v4283
    %5842 = vmatprep.subr.bf16.mxu0 %v4300
    %5843 = vmatpush1.bf16.msra.mxu0 %v4299
    %5844 = vmatprep.subr.bf16.mxu0 %v4316
    %5845 = vmatpush1.bf16.msra.mxu0 %v4315
    %5846 = vmatprep.mubr.bf16.mxu0 %v145
    %5847 = vmatmul.mubr.bf16.gmra.mrb[0].mxu0 %v144
    %v5848 = vpop.f32.mrb[0].mxu0
    %v5849 = vadd.f32 %v5808, %v5848
    %v5850 = vpop.f32.mrb[0].mxu0
    %v5851 = vadd.f32 %v5810, %v5850
    %v5852 = vpop.f32.mrb[0].mxu0
    %v5853 = vpop.f32.mrb[0].mxu0
    %5854 = vdwg.mxu0
    %5855 = vmatprep.subr.bf16.mxu0 %v4332
    %5856 = vmatpush1.bf16.msra.mxu0 %v4331
    %5857 = vmatprep.subr.bf16.mxu0 %v4348
    %5858 = vmatpush1.bf16.msra.mxu0 %v4347
    %5859 = vmatprep.subr.bf16.mxu0 %v4364
    %5860 = vmatpush1.bf16.msra.mxu0 %v4363
    %5861 = vmatprep.subr.bf16.mxu0 %v4380
    %5862 = vmatpush1.bf16.msra.mxu0 %v4379
    %5863 = vmatprep.subr.bf16.mxu0 %v4396
    %5864 = vmatpush1.bf16.msra.mxu0 %v4395
    %5865 = vmatprep.subr.bf16.mxu0 %v4412
    %5866 = vmatpush1.bf16.msra.mxu0 %v4411
    %5867 = vmatprep.subr.bf16.mxu0 %v4428
    %5868 = vmatpush1.bf16.msra.mxu0 %v4427
    %5869 = vmatprep.subr.bf16.mxu0 %v4444
    %5870 = vmatpush1.bf16.msra.mxu0 %v4443
    %5871 = vmatprep.subr.bf16.mxu0 %v4460
    %5872 = vmatpush1.bf16.msra.mxu0 %v4459
    %5873 = vmatprep.subr.bf16.mxu0 %v4476
    %5874 = vmatpush1.bf16.msra.mxu0 %v4475
    %5875 = vmatprep.subr.bf16.mxu0 %v4492
    %5876 = vmatpush1.bf16.msra.mxu0 %v4491
    %5877 = vmatprep.subr.bf16.mxu0 %v4508
    %5878 = vmatpush1.bf16.msra.mxu0 %v4507
    %5879 = vmatprep.subr.bf16.mxu0 %v4524
    %5880 = vmatpush1.bf16.msra.mxu0 %v4523
    %5881 = vmatprep.subr.bf16.mxu0 %v4540
    %5882 = vmatpush1.bf16.msra.mxu0 %v4539
    %5883 = vmatprep.subr.bf16.mxu0 %v4556
    %5884 = vmatpush1.bf16.msra.mxu0 %v4555
    %5885 = vmatprep.subr.bf16.mxu0 %v4572
    %5886 = vmatpush1.bf16.msra.mxu0 %v4571
    %5887 = vmatprep.mubr.bf16.mxu0 %v147
    %5888 = vmatmul.mubr.bf16.gmra.mrb[0].mxu0 %v146
    %v5889 = vpop.f32.mrb[0].mxu0
    %v5890 = vadd.f32 %v5849, %v5889
    %v5891 = vpop.f32.mrb[0].mxu0
    %v5892 = vadd.f32 %v5851, %v5891
    %v5893 = vpop.f32.mrb[0].mxu0
    %v5894 = vpop.f32.mrb[0].mxu0
    %5895 = vdwg.mxu0
    %5896 = vmatprep.subr.bf16.mxu0 %v4588
    %5897 = vmatpush1.bf16.msra.mxu0 %v4587
    %5898 = vmatprep.subr.bf16.mxu0 %v4604
    %5899 = vmatpush1.bf16.msra.mxu0 %v4603
    %5900 = vmatprep.subr.bf16.mxu0 %v4620
    %5901 = vmatpush1.bf16.msra.mxu0 %v4619
    %5902 = vmatprep.subr.bf16.mxu0 %v4636
    %5903 = vmatpush1.bf16.msra.mxu0 %v4635
    %5904 = vmatprep.subr.bf16.mxu0 %v4652
    %5905 = vmatpush1.bf16.msra.mxu0 %v4651
    %5906 = vmatprep.subr.bf16.mxu0 %v4668
    %5907 = vmatpush1.bf16.msra.mxu0 %v4667
    %5908 = vmatprep.subr.bf16.mxu0 %v4684
    %5909 = vmatpush1.bf16.msra.mxu0 %v4683
    %5910 = vmatprep.subr.bf16.mxu0 %v4700
    %5911 = vmatpush1.bf16.msra.mxu0 %v4699
    %5912 = vmatprep.subr.bf16.mxu0 0
    %5913 = vmatpush1.bf16.msra.mxu0 0
    %5914 = vmatprep.subr.bf16.mxu0 0
    %5915 = vmatpush1.bf16.msra.mxu0 0
    %5916 = vmatprep.subr.bf16.mxu0 0
    %5917 = vmatpush1.bf16.msra.mxu0 0
    %5918 = vmatprep.subr.bf16.mxu0 0
    %5919 = vmatpush1.bf16.msra.mxu0 0
    %5920 = vmatprep.subr.bf16.mxu0 0
    %5921 = vmatpush1.bf16.msra.mxu0 0
    %5922 = vmatprep.subr.bf16.mxu0 0
    %5923 = vmatpush1.bf16.msra.mxu0 0
    %5924 = vmatprep.subr.bf16.mxu0 0
    %5925 = vmatpush1.bf16.msra.mxu0 0
    %5926 = vmatprep.subr.bf16.mxu0 0
    %5927 = vmatpush1.bf16.msra.mxu0 0
    %5928 = vmatprep.mubr.bf16.mxu0 0
    %5929 = vmatmul.mubr.bf16.gmra.mrb[0].mxu0 %v148
    %v5930 = vpop.f32.mrb[0].mxu0
    %v5931 = vadd.f32 %v5890, %v5930
    %v5932 = vpop.f32.mrb[0].mxu0
    %v5933 = vadd.f32 %v5892, %v5932
    %v5934 = vpop.f32.mrb[0].mxu0
    %v5935 = vpop.f32.mrb[0].mxu0
    %5936 = vdwg.mxu0
    %5937 = vmatprep.subr.bf16.mxu0 %v3822
    %5938 = vmatpush1.bf16.msra.mxu0 %v3821
    %5939 = vmatprep.subr.bf16.mxu0 %v3838
    %5940 = vmatpush1.bf16.msra.mxu0 %v3837
    %5941 = vmatprep.subr.bf16.mxu0 %v3854
    %5942 = vmatpush1.bf16.msra.mxu0 %v3853
    %5943 = vmatprep.subr.bf16.mxu0 %v3870
    %5944 = vmatpush1.bf16.msra.mxu0 %v3869
    %5945 = vmatprep.subr.bf16.mxu0 %v3886
    %5946 = vmatpush1.bf16.msra.mxu0 %v3885
    %5947 = vmatprep.subr.bf16.mxu0 %v3902
    %5948 = vmatpush1.bf16.msra.mxu0 %v3901
    %5949 = vmatprep.subr.bf16.mxu0 %v3918
    %5950 = vmatpush1.bf16.msra.mxu0 %v3917
    %5951 = vmatprep.subr.bf16.mxu0 %v3934
    %5952 = vmatpush1.bf16.msra.mxu0 %v3933
    %5953 = vmatprep.subr.bf16.mxu0 %v3950
    %5954 = vmatpush1.bf16.msra.mxu0 %v3949
    %5955 = vmatprep.subr.bf16.mxu0 %v3966
    %5956 = vmatpush1.bf16.msra.mxu0 %v3965
    %5957 = vmatprep.subr.bf16.mxu0 %v3982
    %5958 = vmatpush1.bf16.msra.mxu0 %v3981
    %5959 = vmatprep.subr.bf16.mxu0 %v3998
    %5960 = vmatpush1.bf16.msra.mxu0 %v3997
    %5961 = vmatprep.subr.bf16.mxu0 %v4014
    %5962 = vmatpush1.bf16.msra.mxu0 %v4013
    %5963 = vmatprep.subr.bf16.mxu0 %v4030
    %5964 = vmatpush1.bf16.msra.mxu0 %v4029
    %5965 = vmatprep.subr.bf16.mxu0 %v4046
    %5966 = vmatpush1.bf16.msra.mxu0 %v4045
    %5967 = vmatprep.subr.bf16.mxu0 %v4062
    %5968 = vmatpush1.bf16.msra.mxu0 %v4061
    %5969 = vmatprep.mubr.bf16.mxu0 %v143
    %5970 = vmatmul.mubr.bf16.gmra.mrb[0].mxu0 %v142
    %v5971 = vpop.f32.mrb[0].mxu0
    %v5972 = vadd.f32 %v1068, %v5971
    %v5973 = vpop.f32.mrb[0].mxu0
    %v5974 = vadd.f32 %v1072, %v5973
    %v5975 = vpop.f32.mrb[0].mxu0
    %v5976 = vpop.f32.mrb[0].mxu0
    %5977 = vdwg.mxu0
    %5978 = vmatprep.subr.bf16.mxu0 %v4078
    %5979 = vmatpush1.bf16.msra.mxu0 %v4077
    %5980 = vmatprep.subr.bf16.mxu0 %v4094
    %5981 = vmatpush1.bf16.msra.mxu0 %v4093
    %5982 = vmatprep.subr.bf16.mxu0 %v4110
    %5983 = vmatpush1.bf16.msra.mxu0 %v4109
    %5984 = vmatprep.subr.bf16.mxu0 %v4126
    %5985 = vmatpush1.bf16.msra.mxu0 %v4125
    %5986 = vmatprep.subr.bf16.mxu0 %v4142
    %5987 = vmatpush1.bf16.msra.mxu0 %v4141
    %5988 = vmatprep.subr.bf16.mxu0 %v4158
    %5989 = vmatpush1.bf16.msra.mxu0 %v4157
    %5990 = vmatprep.subr.bf16.mxu0 %v4174
    %5991 = vmatpush1.bf16.msra.mxu0 %v4173
    %5992 = vmatprep.subr.bf16.mxu0 %v4190
    %5993 = vmatpush1.bf16.msra.mxu0 %v4189
    %5994 = vmatprep.subr.bf16.mxu0 %v4206
    %5995 = vmatpush1.bf16.msra.mxu0 %v4205
    %5996 = vmatprep.subr.bf16.mxu0 %v4222
    %5997 = vmatpush1.bf16.msra.mxu0 %v4221
    %5998 = vmatprep.subr.bf16.mxu0 %v4238
    %5999 = vmatpush1.bf16.msra.mxu0 %v4237
    %6000 = vmatprep.subr.bf16.mxu0 %v4254
    %6001 = vmatpush1.bf16.msra.mxu0 %v4253
    %6002 = vmatprep.subr.bf16.mxu0 %v4270
    %6003 = vmatpush1.bf16.msra.mxu0 %v4269
    %6004 = vmatprep.subr.bf16.mxu0 %v4286
    %6005 = vmatpush1.bf16.msra.mxu0 %v4285
    %6006 = vmatprep.subr.bf16.mxu0 %v4302
    %6007 = vmatpush1.bf16.msra.mxu0 %v4301
    %6008 = vmatprep.subr.bf16.mxu0 %v4318
    %6009 = vmatpush1.bf16.msra.mxu0 %v4317
    %6010 = vmatprep.mubr.bf16.mxu0 %v145
    %6011 = vmatmul.mubr.bf16.gmra.mrb[0].mxu0 %v144
    %v6012 = vpop.f32.mrb[0].mxu0
    %v6013 = vadd.f32 %v5972, %v6012
    %v6014 = vpop.f32.mrb[0].mxu0
    %v6015 = vadd.f32 %v5974, %v6014
    %v6016 = vpop.f32.mrb[0].mxu0
    %v6017 = vpop.f32.mrb[0].mxu0
    %6018 = vdwg.mxu0
    %6019 = vmatprep.subr.bf16.mxu0 %v4334
    %6020 = vmatpush1.bf16.msra.mxu0 %v4333
    %6021 = vmatprep.subr.bf16.mxu0 %v4350
    %6022 = vmatpush1.bf16.msra.mxu0 %v4349
    %6023 = vmatprep.subr.bf16.mxu0 %v4366
    %6024 = vmatpush1.bf16.msra.mxu0 %v4365
    %6025 = vmatprep.subr.bf16.mxu0 %v4382
    %6026 = vmatpush1.bf16.msra.mxu0 %v4381
    %6027 = vmatprep.subr.bf16.mxu0 %v4398
    %6028 = vmatpush1.bf16.msra.mxu0 %v4397
    %6029 = vmatprep.subr.bf16.mxu0 %v4414
    %6030 = vmatpush1.bf16.msra.mxu0 %v4413
    %6031 = vmatprep.subr.bf16.mxu0 %v4430
    %6032 = vmatpush1.bf16.msra.mxu0 %v4429
    %6033 = vmatprep.subr.bf16.mxu0 %v4446
    %6034 = vmatpush1.bf16.msra.mxu0 %v4445
    %6035 = vmatprep.subr.bf16.mxu0 %v4462
    %6036 = vmatpush1.bf16.msra.mxu0 %v4461
    %6037 = vmatprep.subr.bf16.mxu0 %v4478
    %6038 = vmatpush1.bf16.msra.mxu0 %v4477
    %6039 = vmatprep.subr.bf16.mxu0 %v4494
    %6040 = vmatpush1.bf16.msra.mxu0 %v4493
    %6041 = vmatprep.subr.bf16.mxu0 %v4510
    %6042 = vmatpush1.bf16.msra.mxu0 %v4509
    %6043 = vmatprep.subr.bf16.mxu0 %v4526
    %6044 = vmatpush1.bf16.msra.mxu0 %v4525
    %6045 = vmatprep.subr.bf16.mxu0 %v4542
    %6046 = vmatpush1.bf16.msra.mxu0 %v4541
    %6047 = vmatprep.subr.bf16.mxu0 %v4558
    %6048 = vmatpush1.bf16.msra.mxu0 %v4557
    %6049 = vmatprep.subr.bf16.mxu0 %v4574
    %6050 = vmatpush1.bf16.msra.mxu0 %v4573
    %6051 = vmatprep.mubr.bf16.mxu0 %v147
    %6052 = vmatmul.mubr.bf16.gmra.mrb[0].mxu0 %v146
    %v6053 = vpop.f32.mrb[0].mxu0
    %v6054 = vadd.f32 %v6013, %v6053
    %v6055 = vpop.f32.mrb[0].mxu0
    %v6056 = vadd.f32 %v6015, %v6055
    %v6057 = vpop.f32.mrb[0].mxu0
    %v6058 = vpop.f32.mrb[0].mxu0
    %6059 = vdwg.mxu0
    %6060 = vmatprep.subr.bf16.mxu0 %v4590
    %6061 = vmatpush1.bf16.msra.mxu0 %v4589
    %6062 = vmatprep.subr.bf16.mxu0 %v4606
    %6063 = vmatpush1.bf16.msra.mxu0 %v4605
    %6064 = vmatprep.subr.bf16.mxu0 %v4622
    %6065 = vmatpush1.bf16.msra.mxu0 %v4621
    %6066 = vmatprep.subr.bf16.mxu0 %v4638
    %6067 = vmatpush1.bf16.msra.mxu0 %v4637
    %6068 = vmatprep.subr.bf16.mxu0 %v4654
    %6069 = vmatpush1.bf16.msra.mxu0 %v4653
    %6070 = vmatprep.subr.bf16.mxu0 %v4670
    %6071 = vmatpush1.bf16.msra.mxu0 %v4669
    %6072 = vmatprep.subr.bf16.mxu0 %v4686
    %6073 = vmatpush1.bf16.msra.mxu0 %v4685
    %6074 = vmatprep.subr.bf16.mxu0 %v4702
    %6075 = vmatpush1.bf16.msra.mxu0 %v4701
    %6076 = vmatprep.subr.bf16.mxu0 0
    %6077 = vmatpush1.bf16.msra.mxu0 0
    %6078 = vmatprep.subr.bf16.mxu0 0
    %6079 = vmatpush1.bf16.msra.mxu0 0
    %6080 = vmatprep.subr.bf16.mxu0 0
    %6081 = vmatpush1.bf16.msra.mxu0 0
    %6082 = vmatprep.subr.bf16.mxu0 0
    %6083 = vmatpush1.bf16.msra.mxu0 0
    %6084 = vmatprep.subr.bf16.mxu0 0
    %6085 = vmatpush1.bf16.msra.mxu0 0
    %6086 = vmatprep.subr.bf16.mxu0 0
    %6087 = vmatpush1.bf16.msra.mxu0 0
    %6088 = vmatprep.subr.bf16.mxu0 0
    %6089 = vmatpush1.bf16.msra.mxu0 0
    %6090 = vmatprep.subr.bf16.mxu0 0
    %6091 = vmatpush1.bf16.msra.mxu0 0
    %6092 = vmatprep.mubr.bf16.mxu0 0
    %6093 = vmatmul.mubr.bf16.gmra.mrb[0].mxu0 %v148
    %v6094 = vpop.f32.mrb[0].mxu0
    %v6095 = vadd.f32 %v6054, %v6094
    %v6096 = vpop.f32.mrb[0].mxu0
    %v6097 = vadd.f32 %v6056, %v6096
    %v6098 = vpop.f32.mrb[0].mxu0
    %v6099 = vpop.f32.mrb[0].mxu0
    %6100 = vdwg.mxu0
    %6101 = vmatprep.subr.bf16.mxu0 %v3824
    %6102 = vmatpush1.bf16.msra.mxu0 %v3823
    %6103 = vmatprep.subr.bf16.mxu0 %v3840
    %6104 = vmatpush1.bf16.msra.mxu0 %v3839
    %6105 = vmatprep.subr.bf16.mxu0 %v3856
    %6106 = vmatpush1.bf16.msra.mxu0 %v3855
    %6107 = vmatprep.subr.bf16.mxu0 %v3872
    %6108 = vmatpush1.bf16.msra.mxu0 %v3871
    %6109 = vmatprep.subr.bf16.mxu0 %v3888
    %6110 = vmatpush1.bf16.msra.mxu0 %v3887
    %6111 = vmatprep.subr.bf16.mxu0 %v3904
    %6112 = vmatpush1.bf16.msra.mxu0 %v3903
    %6113 = vmatprep.subr.bf16.mxu0 %v3920
    %6114 = vmatpush1.bf16.msra.mxu0 %v3919
    %6115 = vmatprep.subr.bf16.mxu0 %v3936
    %6116 = vmatpush1.bf16.msra.mxu0 %v3935
    %6117 = vmatprep.subr.bf16.mxu0 %v3952
    %6118 = vmatpush1.bf16.msra.mxu0 %v3951
    %6119 = vmatprep.subr.bf16.mxu0 %v3968
    %6120 = vmatpush1.bf16.msra.mxu0 %v3967
    %6121 = vmatprep.subr.bf16.mxu0 %v3984
    %6122 = vmatpush1.bf16.msra.mxu0 %v3983
    %6123 = vmatprep.subr.bf16.mxu0 %v4000
    %6124 = vmatpush1.bf16.msra.mxu0 %v3999
    %6125 = vmatprep.subr.bf16.mxu0 %v4016
    %6126 = vmatpush1.bf16.msra.mxu0 %v4015
    %6127 = vmatprep.subr.bf16.mxu0 %v4032
    %6128 = vmatpush1.bf16.msra.mxu0 %v4031
    %6129 = vmatprep.subr.bf16.mxu0 %v4048
    %6130 = vmatpush1.bf16.msra.mxu0 %v4047
    %6131 = vmatprep.subr.bf16.mxu0 %v4064
    %6132 = vmatpush1.bf16.msra.mxu0 %v4063
    %6133 = vmatprep.mubr.bf16.mxu0 %v143
    %6134 = vmatmul.mubr.bf16.gmra.mrb[0].mxu0 %v142
    %v6135 = vpop.f32.mrb[0].mxu0
    %v6136 = vadd.f32 %v1076, %v6135
    %v6137 = vpop.f32.mrb[0].mxu0
    %v6138 = vadd.f32 %v1080, %v6137
    %v6139 = vpop.f32.mrb[0].mxu0
    %v6140 = vpop.f32.mrb[0].mxu0
    %6141 = vdwg.mxu0
    %6142 = vmatprep.subr.bf16.mxu0 %v4080
    %6143 = vmatpush1.bf16.msra.mxu0 %v4079
    %6144 = vmatprep.subr.bf16.mxu0 %v4096
    %6145 = vmatpush1.bf16.msra.mxu0 %v4095
    %6146 = vmatprep.subr.bf16.mxu0 %v4112
    %6147 = vmatpush1.bf16.msra.mxu0 %v4111
    %6148 = vmatprep.subr.bf16.mxu0 %v4128
    %6149 = vmatpush1.bf16.msra.mxu0 %v4127
    %6150 = vmatprep.subr.bf16.mxu0 %v4144
    %6151 = vmatpush1.bf16.msra.mxu0 %v4143
    %6152 = vmatprep.subr.bf16.mxu0 %v4160
    %6153 = vmatpush1.bf16.msra.mxu0 %v4159
    %6154 = vmatprep.subr.bf16.mxu0 %v4176
    %6155 = vmatpush1.bf16.msra.mxu0 %v4175
    %6156 = vmatprep.subr.bf16.mxu0 %v4192
    %6157 = vmatpush1.bf16.msra.mxu0 %v4191
    %6158 = vmatprep.subr.bf16.mxu0 %v4208
    %6159 = vmatpush1.bf16.msra.mxu0 %v4207
    %6160 = vmatprep.subr.bf16.mxu0 %v4224
    %6161 = vmatpush1.bf16.msra.mxu0 %v4223
    %6162 = vmatprep.subr.bf16.mxu0 %v4240
    %6163 = vmatpush1.bf16.msra.mxu0 %v4239
    %6164 = vmatprep.subr.bf16.mxu0 %v4256
    %6165 = vmatpush1.bf16.msra.mxu0 %v4255
    %6166 = vmatprep.subr.bf16.mxu0 %v4272
    %6167 = vmatpush1.bf16.msra.mxu0 %v4271
    %6168 = vmatprep.subr.bf16.mxu0 %v4288
    %6169 = vmatpush1.bf16.msra.mxu0 %v4287
    %6170 = vmatprep.subr.bf16.mxu0 %v4304
    %6171 = vmatpush1.bf16.msra.mxu0 %v4303
    %6172 = vmatprep.subr.bf16.mxu0 %v4320
    %6173 = vmatpush1.bf16.msra.mxu0 %v4319
    %6174 = vmatprep.mubr.bf16.mxu0 %v145
    %6175 = vmatmul.mubr.bf16.gmra.mrb[0].mxu0 %v144
    %v6176 = vpop.f32.mrb[0].mxu0
    %v6177 = vadd.f32 %v6136, %v6176
    %v6178 = vpop.f32.mrb[0].mxu0
    %v6179 = vadd.f32 %v6138, %v6178
    %v6180 = vpop.f32.mrb[0].mxu0
    %v6181 = vpop.f32.mrb[0].mxu0
    %6182 = vdwg.mxu0
    %6183 = vmatprep.subr.bf16.mxu0 %v4336
    %6184 = vmatpush1.bf16.msra.mxu0 %v4335
    %6185 = vmatprep.subr.bf16.mxu0 %v4352
    %6186 = vmatpush1.bf16.msra.mxu0 %v4351
    %6187 = vmatprep.subr.bf16.mxu0 %v4368
    %6188 = vmatpush1.bf16.msra.mxu0 %v4367
    %6189 = vmatprep.subr.bf16.mxu0 %v4384
    %6190 = vmatpush1.bf16.msra.mxu0 %v4383
    %6191 = vmatprep.subr.bf16.mxu0 %v4400
    %6192 = vmatpush1.bf16.msra.mxu0 %v4399
    %6193 = vmatprep.subr.bf16.mxu0 %v4416
    %6194 = vmatpush1.bf16.msra.mxu0 %v4415
    %6195 = vmatprep.subr.bf16.mxu0 %v4432
    %6196 = vmatpush1.bf16.msra.mxu0 %v4431
    %6197 = vmatprep.subr.bf16.mxu0 %v4448
    %6198 = vmatpush1.bf16.msra.mxu0 %v4447
    %6199 = vmatprep.subr.bf16.mxu0 %v4464
    %6200 = vmatpush1.bf16.msra.mxu0 %v4463
    %6201 = vmatprep.subr.bf16.mxu0 %v4480
    %6202 = vmatpush1.bf16.msra.mxu0 %v4479
    %6203 = vmatprep.subr.bf16.mxu0 %v4496
    %6204 = vmatpush1.bf16.msra.mxu0 %v4495
    %6205 = vmatprep.subr.bf16.mxu0 %v4512
    %6206 = vmatpush1.bf16.msra.mxu0 %v4511
    %6207 = vmatprep.subr.bf16.mxu0 %v4528
    %6208 = vmatpush1.bf16.msra.mxu0 %v4527
    %6209 = vmatprep.subr.bf16.mxu0 %v4544
    %6210 = vmatpush1.bf16.msra.mxu0 %v4543
    %6211 = vmatprep.subr.bf16.mxu0 %v4560
    %6212 = vmatpush1.bf16.msra.mxu0 %v4559
    %6213 = vmatprep.subr.bf16.mxu0 %v4576
    %6214 = vmatpush1.bf16.msra.mxu0 %v4575
    %6215 = vmatprep.mubr.bf16.mxu0 %v147
    %6216 = vmatmul.mubr.bf16.gmra.mrb[0].mxu0 %v146
    %v6217 = vpop.f32.mrb[0].mxu0
    %v6218 = vadd.f32 %v6177, %v6217
    %v6219 = vpop.f32.mrb[0].mxu0
    %v6220 = vadd.f32 %v6179, %v6219
    %v6221 = vpop.f32.mrb[0].mxu0
    %v6222 = vpop.f32.mrb[0].mxu0
    %6223 = vdwg.mxu0
    %6224 = vmatprep.subr.bf16.mxu0 %v4592
    %6225 = vmatpush1.bf16.msra.mxu0 %v4591
    %6226 = vmatprep.subr.bf16.mxu0 %v4608
    %6227 = vmatpush1.bf16.msra.mxu0 %v4607
    %6228 = vmatprep.subr.bf16.mxu0 %v4624
    %6229 = vmatpush1.bf16.msra.mxu0 %v4623
    %6230 = vmatprep.subr.bf16.mxu0 %v4640
    %6231 = vmatpush1.bf16.msra.mxu0 %v4639
    %6232 = vmatprep.subr.bf16.mxu0 %v4656
    %6233 = vmatpush1.bf16.msra.mxu0 %v4655
    %6234 = vmatprep.subr.bf16.mxu0 %v4672
    %6235 = vmatpush1.bf16.msra.mxu0 %v4671
    %6236 = vmatprep.subr.bf16.mxu0 %v4688
    %6237 = vmatpush1.bf16.msra.mxu0 %v4687
    %6238 = vmatprep.subr.bf16.mxu0 %v4704
    %6239 = vmatpush1.bf16.msra.mxu0 %v4703
    %6240 = vmatprep.subr.bf16.mxu0 0
    %6241 = vmatpush1.bf16.msra.mxu0 0
    %6242 = vmatprep.subr.bf16.mxu0 0
    %6243 = vmatpush1.bf16.msra.mxu0 0
    %6244 = vmatprep.subr.bf16.mxu0 0
    %6245 = vmatpush1.bf16.msra.mxu0 0
    %6246 = vmatprep.subr.bf16.mxu0 0
    %6247 = vmatpush1.bf16.msra.mxu0 0
    %6248 = vmatprep.subr.bf16.mxu0 0
    %6249 = vmatpush1.bf16.msra.mxu0 0
    %6250 = vmatprep.subr.bf16.mxu0 0
    %6251 = vmatpush1.bf16.msra.mxu0 0
    %6252 = vmatprep.subr.bf16.mxu0 0
    %6253 = vmatpush1.bf16.msra.mxu0 0
    %6254 = vmatprep.subr.bf16.mxu0 0
    %6255 = vmatpush1.bf16.msra.mxu0 0
    %6256 = vmatprep.mubr.bf16.mxu0 0
    %6257 = vmatmul.mubr.bf16.gmra.mrb[0].mxu0 %v148
    %v6258 = vpop.f32.mrb[0].mxu0
    %v6259 = vadd.f32 %v6218, %v6258
    %v6260 = vpop.f32.mrb[0].mxu0
    %v6261 = vadd.f32 %v6220, %v6260
    %v6262 = vpop.f32.mrb[0].mxu0
    %v6263 = vpop.f32.mrb[0].mxu0
    %6264 = vdwg.mxu0
    %6265 = vmatprep.subr.bf16.mxu0 %v3826
    %6266 = vmatpush1.bf16.msra.mxu0 %v3825
    %6267 = vmatprep.subr.bf16.mxu0 %v3842
    %6268 = vmatpush1.bf16.msra.mxu0 %v3841
    %6269 = vmatprep.subr.bf16.mxu0 %v3858
    %6270 = vmatpush1.bf16.msra.mxu0 %v3857
    %6271 = vmatprep.subr.bf16.mxu0 %v3874
    %6272 = vmatpush1.bf16.msra.mxu0 %v3873
    %6273 = vmatprep.subr.bf16.mxu0 %v3890
    %6274 = vmatpush1.bf16.msra.mxu0 %v3889
    %6275 = vmatprep.subr.bf16.mxu0 %v3906
    %6276 = vmatpush1.bf16.msra.mxu0 %v3905
    %6277 = vmatprep.subr.bf16.mxu0 %v3922
    %6278 = vmatpush1.bf16.msra.mxu0 %v3921
    %6279 = vmatprep.subr.bf16.mxu0 %v3938
    %6280 = vmatpush1.bf16.msra.mxu0 %v3937
    %6281 = vmatprep.subr.bf16.mxu0 %v3954
    %6282 = vmatpush1.bf16.msra.mxu0 %v3953
    %6283 = vmatprep.subr.bf16.mxu0 %v3970
    %6284 = vmatpush1.bf16.msra.mxu0 %v3969
    %6285 = vmatprep.subr.bf16.mxu0 %v3986
    %6286 = vmatpush1.bf16.msra.mxu0 %v3985
    %6287 = vmatprep.subr.bf16.mxu0 %v4002
    %6288 = vmatpush1.bf16.msra.mxu0 %v4001
    %6289 = vmatprep.subr.bf16.mxu0 %v4018
    %6290 = vmatpush1.bf16.msra.mxu0 %v4017
    %6291 = vmatprep.subr.bf16.mxu0 %v4034
    %6292 = vmatpush1.bf16.msra.mxu0 %v4033
    %6293 = vmatprep.subr.bf16.mxu0 %v4050
    %6294 = vmatpush1.bf16.msra.mxu0 %v4049
    %6295 = vmatprep.subr.bf16.mxu0 %v4066
    %6296 = vmatpush1.bf16.msra.mxu0 %v4065
    %6297 = vmatprep.mubr.bf16.mxu0 %v143
    %6298 = vmatmul.mubr.bf16.gmra.mrb[0].mxu0 %v142
    %v6299 = vpop.f32.mrb[0].mxu0
    %v6300 = vadd.f32 %v1084, %v6299
    %v6301 = vpop.f32.mrb[0].mxu0
    %v6302 = vadd.f32 %v1088, %v6301
    %v6303 = vpop.f32.mrb[0].mxu0
    %v6304 = vpop.f32.mrb[0].mxu0
    %6305 = vdwg.mxu0
    %6306 = vmatprep.subr.bf16.mxu0 %v4082
    %6307 = vmatpush1.bf16.msra.mxu0 %v4081
    %6308 = vmatprep.subr.bf16.mxu0 %v4098
    %6309 = vmatpush1.bf16.msra.mxu0 %v4097
    %6310 = vmatprep.subr.bf16.mxu0 %v4114
    %6311 = vmatpush1.bf16.msra.mxu0 %v4113
    %6312 = vmatprep.subr.bf16.mxu0 %v4130
    %6313 = vmatpush1.bf16.msra.mxu0 %v4129
    %6314 = vmatprep.subr.bf16.mxu0 %v4146
    %6315 = vmatpush1.bf16.msra.mxu0 %v4145
    %6316 = vmatprep.subr.bf16.mxu0 %v4162
    %6317 = vmatpush1.bf16.msra.mxu0 %v4161
    %6318 = vmatprep.subr.bf16.mxu0 %v4178
    %6319 = vmatpush1.bf16.msra.mxu0 %v4177
    %6320 = vmatprep.subr.bf16.mxu0 %v4194
    %6321 = vmatpush1.bf16.msra.mxu0 %v4193
    %6322 = vmatprep.subr.bf16.mxu0 %v4210
    %6323 = vmatpush1.bf16.msra.mxu0 %v4209
    %6324 = vmatprep.subr.bf16.mxu0 %v4226
    %6325 = vmatpush1.bf16.msra.mxu0 %v4225
    %6326 = vmatprep.subr.bf16.mxu0 %v4242
    %6327 = vmatpush1.bf16.msra.mxu0 %v4241
    %6328 = vmatprep.subr.bf16.mxu0 %v4258
    %6329 = vmatpush1.bf16.msra.mxu0 %v4257
    %6330 = vmatprep.subr.bf16.mxu0 %v4274
    %6331 = vmatpush1.bf16.msra.mxu0 %v4273
    %6332 = vmatprep.subr.bf16.mxu0 %v4290
    %6333 = vmatpush1.bf16.msra.mxu0 %v4289
    %6334 = vmatprep.subr.bf16.mxu0 %v4306
    %6335 = vmatpush1.bf16.msra.mxu0 %v4305
    %6336 = vmatprep.subr.bf16.mxu0 %v4322
    %6337 = vmatpush1.bf16.msra.mxu0 %v4321
    %6338 = vmatprep.mubr.bf16.mxu0 %v145
    %6339 = vmatmul.mubr.bf16.gmra.mrb[0].mxu0 %v144
    %v6340 = vpop.f32.mrb[0].mxu0
    %v6341 = vadd.f32 %v6300, %v6340
    %v6342 = vpop.f32.mrb[0].mxu0
    %v6343 = vadd.f32 %v6302, %v6342
    %v6344 = vpop.f32.mrb[0].mxu0
    %v6345 = vpop.f32.mrb[0].mxu0
    %6346 = vdwg.mxu0
    %6347 = vmatprep.subr.bf16.mxu0 %v4338
    %6348 = vmatpush1.bf16.msra.mxu0 %v4337
    %6349 = vmatprep.subr.bf16.mxu0 %v4354
    %6350 = vmatpush1.bf16.msra.mxu0 %v4353
    %6351 = vmatprep.subr.bf16.mxu0 %v4370
    %6352 = vmatpush1.bf16.msra.mxu0 %v4369
    %6353 = vmatprep.subr.bf16.mxu0 %v4386
    %6354 = vmatpush1.bf16.msra.mxu0 %v4385
    %6355 = vmatprep.subr.bf16.mxu0 %v4402
    %6356 = vmatpush1.bf16.msra.mxu0 %v4401
    %6357 = vmatprep.subr.bf16.mxu0 %v4418
    %6358 = vmatpush1.bf16.msra.mxu0 %v4417
    %6359 = vmatprep.subr.bf16.mxu0 %v4434
    %6360 = vmatpush1.bf16.msra.mxu0 %v4433
    %6361 = vmatprep.subr.bf16.mxu0 %v4450
    %6362 = vmatpush1.bf16.msra.mxu0 %v4449
    %6363 = vmatprep.subr.bf16.mxu0 %v4466
    %6364 = vmatpush1.bf16.msra.mxu0 %v4465
    %6365 = vmatprep.subr.bf16.mxu0 %v4482
    %6366 = vmatpush1.bf16.msra.mxu0 %v4481
    %6367 = vmatprep.subr.bf16.mxu0 %v4498
    %6368 = vmatpush1.bf16.msra.mxu0 %v4497
    %6369 = vmatprep.subr.bf16.mxu0 %v4514
    %6370 = vmatpush1.bf16.msra.mxu0 %v4513
    %6371 = vmatprep.subr.bf16.mxu0 %v4530
    %6372 = vmatpush1.bf16.msra.mxu0 %v4529
    %6373 = vmatprep.subr.bf16.mxu0 %v4546
    %6374 = vmatpush1.bf16.msra.mxu0 %v4545
    %6375 = vmatprep.subr.bf16.mxu0 %v4562
    %6376 = vmatpush1.bf16.msra.mxu0 %v4561
    %6377 = vmatprep.subr.bf16.mxu0 %v4578
    %6378 = vmatpush1.bf16.msra.mxu0 %v4577
    %6379 = vmatprep.mubr.bf16.mxu0 %v147
    %6380 = vmatmul.mubr.bf16.gmra.mrb[0].mxu0 %v146
    %v6381 = vpop.f32.mrb[0].mxu0
    %v6382 = vadd.f32 %v6341, %v6381
    %v6383 = vpop.f32.mrb[0].mxu0
    %v6384 = vadd.f32 %v6343, %v6383
    %v6385 = vpop.f32.mrb[0].mxu0
    %v6386 = vpop.f32.mrb[0].mxu0
    %6387 = vdwg.mxu0
    %6388 = vmatprep.subr.bf16.mxu0 %v4594
    %6389 = vmatpush1.bf16.msra.mxu0 %v4593
    %6390 = vmatprep.subr.bf16.mxu0 %v4610
    %6391 = vmatpush1.bf16.msra.mxu0 %v4609
    %6392 = vmatprep.subr.bf16.mxu0 %v4626
    %6393 = vmatpush1.bf16.msra.mxu0 %v4625
    %6394 = vmatprep.subr.bf16.mxu0 %v4642
    %6395 = vmatpush1.bf16.msra.mxu0 %v4641
    %6396 = vmatprep.subr.bf16.mxu0 %v4658
    %6397 = vmatpush1.bf16.msra.mxu0 %v4657
    %6398 = vmatprep.subr.bf16.mxu0 %v4674
    %6399 = vmatpush1.bf16.msra.mxu0 %v4673
    %6400 = vmatprep.subr.bf16.mxu0 %v4690
    %6401 = vmatpush1.bf16.msra.mxu0 %v4689
    %6402 = vmatprep.subr.bf16.mxu0 %v4706
    %6403 = vmatpush1.bf16.msra.mxu0 %v4705
    %6404 = vmatprep.subr.bf16.mxu0 0
    %6405 = vmatpush1.bf16.msra.mxu0 0
    %6406 = vmatprep.subr.bf16.mxu0 0
    %6407 = vmatpush1.bf16.msra.mxu0 0
    %6408 = vmatprep.subr.bf16.mxu0 0
    %6409 = vmatpush1.bf16.msra.mxu0 0
    %6410 = vmatprep.subr.bf16.mxu0 0
    %6411 = vmatpush1.bf16.msra.mxu0 0
    %6412 = vmatprep.subr.bf16.mxu0 0
    %6413 = vmatpush1.bf16.msra.mxu0 0
    %6414 = vmatprep.subr.bf16.mxu0 0
    %6415 = vmatpush1.bf16.msra.mxu0 0
    %6416 = vmatprep.subr.bf16.mxu0 0
    %6417 = vmatpush1.bf16.msra.mxu0 0
    %6418 = vmatprep.subr.bf16.mxu0 0
    %6419 = vmatpush1.bf16.msra.mxu0 0
    %6420 = vmatprep.mubr.bf16.mxu0 0
    %6421 = vmatmul.mubr.bf16.gmra.mrb[0].mxu0 %v148
    %v6422 = vpop.f32.mrb[0].mxu0
    %v6423 = vadd.f32 %v6382, %v6422
    %v6424 = vpop.f32.mrb[0].mxu0
    %v6425 = vadd.f32 %v6384, %v6424
    %v6426 = vpop.f32.mrb[0].mxu0
    %v6427 = vpop.f32.mrb[0].mxu0
    %6428 = vdwg.mxu0
    %6429 = vmatprep.subr.bf16.mxu0 %v3828
    %6430 = vmatpush1.bf16.msra.mxu0 %v3827
    %6431 = vmatprep.subr.bf16.mxu0 %v3844
    %6432 = vmatpush1.bf16.msra.mxu0 %v3843
    %6433 = vmatprep.subr.bf16.mxu0 %v3860
    %6434 = vmatpush1.bf16.msra.mxu0 %v3859
    %6435 = vmatprep.subr.bf16.mxu0 %v3876
    %6436 = vmatpush1.bf16.msra.mxu0 %v3875
    %6437 = vmatprep.subr.bf16.mxu0 %v3892
    %6438 = vmatpush1.bf16.msra.mxu0 %v3891
    %6439 = vmatprep.subr.bf16.mxu0 %v3908
    %6440 = vmatpush1.bf16.msra.mxu0 %v3907
    %6441 = vmatprep.subr.bf16.mxu0 %v3924
    %6442 = vmatpush1.bf16.msra.mxu0 %v3923
    %6443 = vmatprep.subr.bf16.mxu0 %v3940
    %6444 = vmatpush1.bf16.msra.mxu0 %v3939
    %6445 = vmatprep.subr.bf16.mxu0 %v3956
    %6446 = vmatpush1.bf16.msra.mxu0 %v3955
    %6447 = vmatprep.subr.bf16.mxu0 %v3972
    %6448 = vmatpush1.bf16.msra.mxu0 %v3971
    %6449 = vmatprep.subr.bf16.mxu0 %v3988
    %6450 = vmatpush1.bf16.msra.mxu0 %v3987
    %6451 = vmatprep.subr.bf16.mxu0 %v4004
    %6452 = vmatpush1.bf16.msra.mxu0 %v4003
    %6453 = vmatprep.subr.bf16.mxu0 %v4020
    %6454 = vmatpush1.bf16.msra.mxu0 %v4019
    %6455 = vmatprep.subr.bf16.mxu0 %v4036
    %6456 = vmatpush1.bf16.msra.mxu0 %v4035
    %6457 = vmatprep.subr.bf16.mxu0 %v4052
    %6458 = vmatpush1.bf16.msra.mxu0 %v4051
    %6459 = vmatprep.subr.bf16.mxu0 %v4068
    %6460 = vmatpush1.bf16.msra.mxu0 %v4067
    %6461 = vmatprep.mubr.bf16.mxu0 %v143
    %6462 = vmatmul.mubr.bf16.gmra.mrb[0].mxu0 %v142
    %v6463 = vpop.f32.mrb[0].mxu0
    %v6464 = vadd.f32 %v1092, %v6463
    %v6465 = vpop.f32.mrb[0].mxu0
    %v6466 = vadd.f32 %v1096, %v6465
    %v6467 = vpop.f32.mrb[0].mxu0
    %v6468 = vpop.f32.mrb[0].mxu0
    %6469 = vdwg.mxu0
    %6470 = vmatprep.subr.bf16.mxu0 %v4084
    %6471 = vmatpush1.bf16.msra.mxu0 %v4083
    %6472 = vmatprep.subr.bf16.mxu0 %v4100
    %6473 = vmatpush1.bf16.msra.mxu0 %v4099
    %6474 = vmatprep.subr.bf16.mxu0 %v4116
    %6475 = vmatpush1.bf16.msra.mxu0 %v4115
    %6476 = vmatprep.subr.bf16.mxu0 %v4132
    %6477 = vmatpush1.bf16.msra.mxu0 %v4131
    %6478 = vmatprep.subr.bf16.mxu0 %v4148
    %6479 = vmatpush1.bf16.msra.mxu0 %v4147
    %6480 = vmatprep.subr.bf16.mxu0 %v4164
    %6481 = vmatpush1.bf16.msra.mxu0 %v4163
    %6482 = vmatprep.subr.bf16.mxu0 %v4180
    %6483 = vmatpush1.bf16.msra.mxu0 %v4179
    %6484 = vmatprep.subr.bf16.mxu0 %v4196
    %6485 = vmatpush1.bf16.msra.mxu0 %v4195
    %6486 = vmatprep.subr.bf16.mxu0 %v4212
    %6487 = vmatpush1.bf16.msra.mxu0 %v4211
    %6488 = vmatprep.subr.bf16.mxu0 %v4228
    %6489 = vmatpush1.bf16.msra.mxu0 %v4227
    %6490 = vmatprep.subr.bf16.mxu0 %v4244
    %6491 = vmatpush1.bf16.msra.mxu0 %v4243
    %6492 = vmatprep.subr.bf16.mxu0 %v4260
    %6493 = vmatpush1.bf16.msra.mxu0 %v4259
    %6494 = vmatprep.subr.bf16.mxu0 %v4276
    %6495 = vmatpush1.bf16.msra.mxu0 %v4275
    %6496 = vmatprep.subr.bf16.mxu0 %v4292
    %6497 = vmatpush1.bf16.msra.mxu0 %v4291
    %6498 = vmatprep.subr.bf16.mxu0 %v4308
    %6499 = vmatpush1.bf16.msra.mxu0 %v4307
    %6500 = vmatprep.subr.bf16.mxu0 %v4324
    %6501 = vmatpush1.bf16.msra.mxu0 %v4323
    %6502 = vmatprep.mubr.bf16.mxu0 %v145
    %6503 = vmatmul.mubr.bf16.gmra.mrb[0].mxu0 %v144
    %v6504 = vpop.f32.mrb[0].mxu0
    %v6505 = vadd.f32 %v6464, %v6504
    %v6506 = vpop.f32.mrb[0].mxu0
    %v6507 = vadd.f32 %v6466, %v6506
    %v6508 = vpop.f32.mrb[0].mxu0
    %v6509 = vpop.f32.mrb[0].mxu0
    %6510 = vdwg.mxu0
    %6511 = vmatprep.subr.bf16.mxu0 %v4340
    %6512 = vmatpush1.bf16.msra.mxu0 %v4339
    %6513 = vmatprep.subr.bf16.mxu0 %v4356
    %6514 = vmatpush1.bf16.msra.mxu0 %v4355
    %6515 = vmatprep.subr.bf16.mxu0 %v4372
    %6516 = vmatpush1.bf16.msra.mxu0 %v4371
    %6517 = vmatprep.subr.bf16.mxu0 %v4388
    %6518 = vmatpush1.bf16.msra.mxu0 %v4387
    %6519 = vmatprep.subr.bf16.mxu0 %v4404
    %6520 = vmatpush1.bf16.msra.mxu0 %v4403
    %6521 = vmatprep.subr.bf16.mxu0 %v4420
    %6522 = vmatpush1.bf16.msra.mxu0 %v4419
    %6523 = vmatprep.subr.bf16.mxu0 %v4436
    %6524 = vmatpush1.bf16.msra.mxu0 %v4435
    %6525 = vmatprep.subr.bf16.mxu0 %v4452
    %6526 = vmatpush1.bf16.msra.mxu0 %v4451
    %6527 = vmatprep.subr.bf16.mxu0 %v4468
    %6528 = vmatpush1.bf16.msra.mxu0 %v4467
    %6529 = vmatprep.subr.bf16.mxu0 %v4484
    %6530 = vmatpush1.bf16.msra.mxu0 %v4483
    %6531 = vmatprep.subr.bf16.mxu0 %v4500
    %6532 = vmatpush1.bf16.msra.mxu0 %v4499
    %6533 = vmatprep.subr.bf16.mxu0 %v4516
    %6534 = vmatpush1.bf16.msra.mxu0 %v4515
    %6535 = vmatprep.subr.bf16.mxu0 %v4532
    %6536 = vmatpush1.bf16.msra.mxu0 %v4531
    %6537 = vmatprep.subr.bf16.mxu0 %v4548
    %6538 = vmatpush1.bf16.msra.mxu0 %v4547
    %6539 = vmatprep.subr.bf16.mxu0 %v4564
    %6540 = vmatpush1.bf16.msra.mxu0 %v4563
    %6541 = vmatprep.subr.bf16.mxu0 %v4580
    %6542 = vmatpush1.bf16.msra.mxu0 %v4579
    %6543 = vmatprep.mubr.bf16.mxu0 %v147
    %6544 = vmatmul.mubr.bf16.gmra.mrb[0].mxu0 %v146
    %v6545 = vpop.f32.mrb[0].mxu0
    %v6546 = vadd.f32 %v6505, %v6545
    %v6547 = vpop.f32.mrb[0].mxu0
    %v6548 = vadd.f32 %v6507, %v6547
    %v6549 = vpop.f32.mrb[0].mxu0
    %v6550 = vpop.f32.mrb[0].mxu0
    %6551 = vdwg.mxu0
    %6552 = vmatprep.subr.bf16.mxu0 %v4596
    %6553 = vmatpush1.bf16.msra.mxu0 %v4595
    %6554 = vmatprep.subr.bf16.mxu0 %v4612
    %6555 = vmatpush1.bf16.msra.mxu0 %v4611
    %6556 = vmatprep.subr.bf16.mxu0 %v4628
    %6557 = vmatpush1.bf16.msra.mxu0 %v4627
    %6558 = vmatprep.subr.bf16.mxu0 %v4644
    %6559 = vmatpush1.bf16.msra.mxu0 %v4643
    %6560 = vmatprep.subr.bf16.mxu0 %v4660
    %6561 = vmatpush1.bf16.msra.mxu0 %v4659
    %6562 = vmatprep.subr.bf16.mxu0 %v4676
    %6563 = vmatpush1.bf16.msra.mxu0 %v4675
    %6564 = vmatprep.subr.bf16.mxu0 %v4692
    %6565 = vmatpush1.bf16.msra.mxu0 %v4691
    %6566 = vmatprep.subr.bf16.mxu0 %v4708
    %6567 = vmatpush1.bf16.msra.mxu0 %v4707
    %6568 = vmatprep.subr.bf16.mxu0 0
    %6569 = vmatpush1.bf16.msra.mxu0 0
    %6570 = vmatprep.subr.bf16.mxu0 0
    %6571 = vmatpush1.bf16.msra.mxu0 0
    %6572 = vmatprep.subr.bf16.mxu0 0
    %6573 = vmatpush1.bf16.msra.mxu0 0
    %6574 = vmatprep.subr.bf16.mxu0 0
    %6575 = vmatpush1.bf16.msra.mxu0 0
    %6576 = vmatprep.subr.bf16.mxu0 0
    %6577 = vmatpush1.bf16.msra.mxu0 0
    %6578 = vmatprep.subr.bf16.mxu0 0
    %6579 = vmatpush1.bf16.msra.mxu0 0
    %6580 = vmatprep.subr.bf16.mxu0 0
    %6581 = vmatpush1.bf16.msra.mxu0 0
    %6582 = vmatprep.subr.bf16.mxu0 0
    %6583 = vmatpush1.bf16.msra.mxu0 0
    %6584 = vmatprep.mubr.bf16.mxu0 0
    %6585 = vmatmul.mubr.bf16.gmra.mrb[0].mxu0 %v148
    %v6586 = vpop.f32.mrb[0].mxu0
    %v6587 = vadd.f32 %v6546, %v6586
    %v6588 = vpop.f32.mrb[0].mxu0
    %v6589 = vadd.f32 %v6548, %v6588
    %v6590 = vpop.f32.mrb[0].mxu0
    %v6591 = vpop.f32.mrb[0].mxu0
    %6592 = vdwg.mxu0
    %6593 = vmatprep.subr.bf16.mxu0 %v3830
    %6594 = vmatpush1.bf16.msra.mxu0 %v3829
    %6595 = vmatprep.subr.bf16.mxu0 %v3846
    %6596 = vmatpush1.bf16.msra.mxu0 %v3845
    %6597 = vmatprep.subr.bf16.mxu0 %v3862
    %6598 = vmatpush1.bf16.msra.mxu0 %v3861
    %6599 = vmatprep.subr.bf16.mxu0 %v3878
    %6600 = vmatpush1.bf16.msra.mxu0 %v3877
    %6601 = vmatprep.subr.bf16.mxu0 %v3894
    %6602 = vmatpush1.bf16.msra.mxu0 %v3893
    %6603 = vmatprep.subr.bf16.mxu0 %v3910
    %6604 = vmatpush1.bf16.msra.mxu0 %v3909
    %6605 = vmatprep.subr.bf16.mxu0 %v3926
    %6606 = vmatpush1.bf16.msra.mxu0 %v3925
    %6607 = vmatprep.subr.bf16.mxu0 %v3942
    %6608 = vmatpush1.bf16.msra.mxu0 %v3941
    %6609 = vmatprep.subr.bf16.mxu0 %v3958
    %6610 = vmatpush1.bf16.msra.mxu0 %v3957
    %6611 = vmatprep.subr.bf16.mxu0 %v3974
    %6612 = vmatpush1.bf16.msra.mxu0 %v3973
    %6613 = vmatprep.subr.bf16.mxu0 %v3990
    %6614 = vmatpush1.bf16.msra.mxu0 %v3989
    %6615 = vmatprep.subr.bf16.mxu0 %v4006
    %6616 = vmatpush1.bf16.msra.mxu0 %v4005
    %6617 = vmatprep.subr.bf16.mxu0 %v4022
    %6618 = vmatpush1.bf16.msra.mxu0 %v4021
    %6619 = vmatprep.subr.bf16.mxu0 %v4038
    %6620 = vmatpush1.bf16.msra.mxu0 %v4037
    %6621 = vmatprep.subr.bf16.mxu0 %v4054
    %6622 = vmatpush1.bf16.msra.mxu0 %v4053
    %6623 = vmatprep.subr.bf16.mxu0 %v4070
    %6624 = vmatpush1.bf16.msra.mxu0 %v4069
    %6625 = vmatprep.mubr.bf16.mxu0 %v143
    %6626 = vmatmul.mubr.bf16.gmra.mrb[0].mxu0 %v142
    %v6627 = vpop.f32.mrb[0].mxu0
    %v6628 = vadd.f32 %v1100, %v6627
    %v6629 = vpop.f32.mrb[0].mxu0
    %v6630 = vadd.f32 %v1104, %v6629
    %v6631 = vpop.f32.mrb[0].mxu0
    %v6632 = vpop.f32.mrb[0].mxu0
    %6633 = vdwg.mxu0
    %6634 = vmatprep.subr.bf16.mxu0 %v4086
    %6635 = vmatpush1.bf16.msra.mxu0 %v4085
    %6636 = vmatprep.subr.bf16.mxu0 %v4102
    %6637 = vmatpush1.bf16.msra.mxu0 %v4101
    %6638 = vmatprep.subr.bf16.mxu0 %v4118
    %6639 = vmatpush1.bf16.msra.mxu0 %v4117
    %6640 = vmatprep.subr.bf16.mxu0 %v4134
    %6641 = vmatpush1.bf16.msra.mxu0 %v4133
    %6642 = vmatprep.subr.bf16.mxu0 %v4150
    %6643 = vmatpush1.bf16.msra.mxu0 %v4149
    %6644 = vmatprep.subr.bf16.mxu0 %v4166
    %6645 = vmatpush1.bf16.msra.mxu0 %v4165
    %6646 = vmatprep.subr.bf16.mxu0 %v4182
    %6647 = vmatpush1.bf16.msra.mxu0 %v4181
    %6648 = vmatprep.subr.bf16.mxu0 %v4198
    %6649 = vmatpush1.bf16.msra.mxu0 %v4197
    %6650 = vmatprep.subr.bf16.mxu0 %v4214
    %6651 = vmatpush1.bf16.msra.mxu0 %v4213
    %6652 = vmatprep.subr.bf16.mxu0 %v4230
    %6653 = vmatpush1.bf16.msra.mxu0 %v4229
    %6654 = vmatprep.subr.bf16.mxu0 %v4246
    %6655 = vmatpush1.bf16.msra.mxu0 %v4245
    %6656 = vmatprep.subr.bf16.mxu0 %v4262
    %6657 = vmatpush1.bf16.msra.mxu0 %v4261
    %6658 = vmatprep.subr.bf16.mxu0 %v4278
    %6659 = vmatpush1.bf16.msra.mxu0 %v4277
    %6660 = vmatprep.subr.bf16.mxu0 %v4294
    %6661 = vmatpush1.bf16.msra.mxu0 %v4293
    %6662 = vmatprep.subr.bf16.mxu0 %v4310
    %6663 = vmatpush1.bf16.msra.mxu0 %v4309
    %6664 = vmatprep.subr.bf16.mxu0 %v4326
    %6665 = vmatpush1.bf16.msra.mxu0 %v4325
    %6666 = vmatprep.mubr.bf16.mxu0 %v145
    %6667 = vmatmul.mubr.bf16.gmra.mrb[0].mxu0 %v144
    %v6668 = vpop.f32.mrb[0].mxu0
    %v6669 = vadd.f32 %v6628, %v6668
    %v6670 = vpop.f32.mrb[0].mxu0
    %v6671 = vadd.f32 %v6630, %v6670
    %v6672 = vpop.f32.mrb[0].mxu0
    %v6673 = vpop.f32.mrb[0].mxu0
    %6674 = vdwg.mxu0
    %6675 = vmatprep.subr.bf16.mxu0 %v4342
    %6676 = vmatpush1.bf16.msra.mxu0 %v4341
    %6677 = vmatprep.subr.bf16.mxu0 %v4358
    %6678 = vmatpush1.bf16.msra.mxu0 %v4357
    %6679 = vmatprep.subr.bf16.mxu0 %v4374
    %6680 = vmatpush1.bf16.msra.mxu0 %v4373
    %6681 = vmatprep.subr.bf16.mxu0 %v4390
    %6682 = vmatpush1.bf16.msra.mxu0 %v4389
    %6683 = vmatprep.subr.bf16.mxu0 %v4406
    %6684 = vmatpush1.bf16.msra.mxu0 %v4405
    %6685 = vmatprep.subr.bf16.mxu0 %v4422
    %6686 = vmatpush1.bf16.msra.mxu0 %v4421
    %6687 = vmatprep.subr.bf16.mxu0 %v4438
    %6688 = vmatpush1.bf16.msra.mxu0 %v4437
    %6689 = vmatprep.subr.bf16.mxu0 %v4454
    %6690 = vmatpush1.bf16.msra.mxu0 %v4453
    %6691 = vmatprep.subr.bf16.mxu0 %v4470
    %6692 = vmatpush1.bf16.msra.mxu0 %v4469
    %6693 = vmatprep.subr.bf16.mxu0 %v4486
    %6694 = vmatpush1.bf16.msra.mxu0 %v4485
    %6695 = vmatprep.subr.bf16.mxu0 %v4502
    %6696 = vmatpush1.bf16.msra.mxu0 %v4501
    %6697 = vmatprep.subr.bf16.mxu0 %v4518
    %6698 = vmatpush1.bf16.msra.mxu0 %v4517
    %6699 = vmatprep.subr.bf16.mxu0 %v4534
    %6700 = vmatpush1.bf16.msra.mxu0 %v4533
    %6701 = vmatprep.subr.bf16.mxu0 %v4550
    %6702 = vmatpush1.bf16.msra.mxu0 %v4549
    %6703 = vmatprep.subr.bf16.mxu0 %v4566
    %6704 = vmatpush1.bf16.msra.mxu0 %v4565
    %6705 = vmatprep.subr.bf16.mxu0 %v4582
    %6706 = vmatpush1.bf16.msra.mxu0 %v4581
    %6707 = vmatprep.mubr.bf16.mxu0 %v147
    %6708 = vmatmul.mubr.bf16.gmra.mrb[0].mxu0 %v146
    %v6709 = vpop.f32.mrb[0].mxu0
    %v6710 = vadd.f32 %v6669, %v6709
    %v6711 = vpop.f32.mrb[0].mxu0
    %v6712 = vadd.f32 %v6671, %v6711
    %v6713 = vpop.f32.mrb[0].mxu0
    %v6714 = vpop.f32.mrb[0].mxu0
    %6715 = vdwg.mxu0
    %6716 = vmatprep.subr.bf16.mxu0 %v4598
    %6717 = vmatpush1.bf16.msra.mxu0 %v4597
    %6718 = vmatprep.subr.bf16.mxu0 %v4614
    %6719 = vmatpush1.bf16.msra.mxu0 %v4613
    %6720 = vmatprep.subr.bf16.mxu0 %v4630
    %6721 = vmatpush1.bf16.msra.mxu0 %v4629
    %6722 = vmatprep.subr.bf16.mxu0 %v4646
    %6723 = vmatpush1.bf16.msra.mxu0 %v4645
    %6724 = vmatprep.subr.bf16.mxu0 %v4662
    %6725 = vmatpush1.bf16.msra.mxu0 %v4661
    %6726 = vmatprep.subr.bf16.mxu0 %v4678
    %6727 = vmatpush1.bf16.msra.mxu0 %v4677
    %6728 = vmatprep.subr.bf16.mxu0 %v4694
    %6729 = vmatpush1.bf16.msra.mxu0 %v4693
    %6730 = vmatprep.subr.bf16.mxu0 %v4710
    %6731 = vmatpush1.bf16.msra.mxu0 %v4709
    %6732 = vmatprep.subr.bf16.mxu0 0
    %6733 = vmatpush1.bf16.msra.mxu0 0
    %6734 = vmatprep.subr.bf16.mxu0 0
    %6735 = vmatpush1.bf16.msra.mxu0 0
    %6736 = vmatprep.subr.bf16.mxu0 0
    %6737 = vmatpush1.bf16.msra.mxu0 0
    %6738 = vmatprep.subr.bf16.mxu0 0
    %6739 = vmatpush1.bf16.msra.mxu0 0
    %6740 = vmatprep.subr.bf16.mxu0 0
    %6741 = vmatpush1.bf16.msra.mxu0 0
    %6742 = vmatprep.subr.bf16.mxu0 0
    %6743 = vmatpush1.bf16.msra.mxu0 0
    %6744 = vmatprep.subr.bf16.mxu0 0
    %6745 = vmatpush1.bf16.msra.mxu0 0
    %6746 = vmatprep.subr.bf16.mxu0 0
    %6747 = vmatpush1.bf16.msra.mxu0 0
    %6748 = vmatprep.mubr.bf16.mxu0 0
    %6749 = vmatmul.mubr.bf16.gmra.mrb[0].mxu0 %v148
    %v6750 = vpop.f32.mrb[0].mxu0
    %v6751 = vadd.f32 %v6710, %v6750
    %v6752 = vpop.f32.mrb[0].mxu0
    %v6753 = vadd.f32 %v6712, %v6752
    %v6754 = vpop.f32.mrb[0].mxu0
    %v6755 = vpop.f32.mrb[0].mxu0
    %6756 = vdwg.mxu0
    %6757 = vmatprep.subr.bf16.mxu0 %v3832
    %6758 = vmatpush1.bf16.msra.mxu0 %v3831
    %6759 = vmatprep.subr.bf16.mxu0 %v3848
    %6760 = vmatpush1.bf16.msra.mxu0 %v3847
    %6761 = vmatprep.subr.bf16.mxu0 %v3864
    %6762 = vmatpush1.bf16.msra.mxu0 %v3863
    %6763 = vmatprep.subr.bf16.mxu0 %v3880
    %6764 = vmatpush1.bf16.msra.mxu0 %v3879
    %6765 = vmatprep.subr.bf16.mxu0 %v3896
    %6766 = vmatpush1.bf16.msra.mxu0 %v3895
    %6767 = vmatprep.subr.bf16.mxu0 %v3912
    %6768 = vmatpush1.bf16.msra.mxu0 %v3911
    %6769 = vmatprep.subr.bf16.mxu0 %v3928
    %6770 = vmatpush1.bf16.msra.mxu0 %v3927
    %6771 = vmatprep.subr.bf16.mxu0 %v3944
    %6772 = vmatpush1.bf16.msra.mxu0 %v3943
    %6773 = vmatprep.subr.bf16.mxu0 %v3960
    %6774 = vmatpush1.bf16.msra.mxu0 %v3959
    %6775 = vmatprep.subr.bf16.mxu0 %v3976
    %6776 = vmatpush1.bf16.msra.mxu0 %v3975
    %6777 = vmatprep.subr.bf16.mxu0 %v3992
    %6778 = vmatpush1.bf16.msra.mxu0 %v3991
    %6779 = vmatprep.subr.bf16.mxu0 %v4008
    %6780 = vmatpush1.bf16.msra.mxu0 %v4007
    %6781 = vmatprep.subr.bf16.mxu0 %v4024
    %6782 = vmatpush1.bf16.msra.mxu0 %v4023
    %6783 = vmatprep.subr.bf16.mxu0 %v4040
    %6784 = vmatpush1.bf16.msra.mxu0 %v4039
    %6785 = vmatprep.subr.bf16.mxu0 %v4056
    %6786 = vmatpush1.bf16.msra.mxu0 %v4055
    %6787 = vmatprep.subr.bf16.mxu0 %v4072
    %6788 = vmatpush1.bf16.msra.mxu0 %v4071
    %6789 = vmatprep.mubr.bf16.mxu0 %v143
    %6790 = vmatmul.mubr.bf16.gmra.mrb[0].mxu0 %v142
    %v6791 = vpop.f32.mrb[0].mxu0
    %v6792 = vadd.f32 %v1108, %v6791
    %v6793 = vpop.f32.mrb[0].mxu0
    %v6794 = vadd.f32 %v1112, %v6793
    %v6795 = vpop.f32.mrb[0].mxu0
    %v6796 = vpop.f32.mrb[0].mxu0
    %6797 = vdwg.mxu0
    %6798 = vmatprep.subr.bf16.mxu0 %v4088
    %6799 = vmatpush1.bf16.msra.mxu0 %v4087
    %6800 = vmatprep.subr.bf16.mxu0 %v4104
    %6801 = vmatpush1.bf16.msra.mxu0 %v4103
    %6802 = vmatprep.subr.bf16.mxu0 %v4120
    %6803 = vmatpush1.bf16.msra.mxu0 %v4119
    %6804 = vmatprep.subr.bf16.mxu0 %v4136
    %6805 = vmatpush1.bf16.msra.mxu0 %v4135
    %6806 = vmatprep.subr.bf16.mxu0 %v4152
    %6807 = vmatpush1.bf16.msra.mxu0 %v4151
    %6808 = vmatprep.subr.bf16.mxu0 %v4168
    %6809 = vmatpush1.bf16.msra.mxu0 %v4167
    %6810 = vmatprep.subr.bf16.mxu0 %v4184
    %6811 = vmatpush1.bf16.msra.mxu0 %v4183
    %6812 = vmatprep.subr.bf16.mxu0 %v4200
    %6813 = vmatpush1.bf16.msra.mxu0 %v4199
    %6814 = vmatprep.subr.bf16.mxu0 %v4216
    %6815 = vmatpush1.bf16.msra.mxu0 %v4215
    %6816 = vmatprep.subr.bf16.mxu0 %v4232
    %6817 = vmatpush1.bf16.msra.mxu0 %v4231
    %6818 = vmatprep.subr.bf16.mxu0 %v4248
    %6819 = vmatpush1.bf16.msra.mxu0 %v4247
    %6820 = vmatprep.subr.bf16.mxu0 %v4264
    %6821 = vmatpush1.bf16.msra.mxu0 %v4263
    %6822 = vmatprep.subr.bf16.mxu0 %v4280
    %6823 = vmatpush1.bf16.msra.mxu0 %v4279
    %6824 = vmatprep.subr.bf16.mxu0 %v4296
    %6825 = vmatpush1.bf16.msra.mxu0 %v4295
    %6826 = vmatprep.subr.bf16.mxu0 %v4312
    %6827 = vmatpush1.bf16.msra.mxu0 %v4311
    %6828 = vmatprep.subr.bf16.mxu0 %v4328
    %6829 = vmatpush1.bf16.msra.mxu0 %v4327
    %6830 = vmatprep.mubr.bf16.mxu0 %v145
    %6831 = vmatmul.mubr.bf16.gmra.mrb[0].mxu0 %v144
    %v6832 = vpop.f32.mrb[0].mxu0
    %v6833 = vadd.f32 %v6792, %v6832
    %v6834 = vpop.f32.mrb[0].mxu0
    %v6835 = vadd.f32 %v6794, %v6834
    %v6836 = vpop.f32.mrb[0].mxu0
    %v6837 = vpop.f32.mrb[0].mxu0
    %6838 = vdwg.mxu0
    %6839 = vmatprep.subr.bf16.mxu0 %v4344
    %6840 = vmatpush1.bf16.msra.mxu0 %v4343
    %6841 = vmatprep.subr.bf16.mxu0 %v4360
    %6842 = vmatpush1.bf16.msra.mxu0 %v4359
    %6843 = vmatprep.subr.bf16.mxu0 %v4376
    %6844 = vmatpush1.bf16.msra.mxu0 %v4375
    %6845 = vmatprep.subr.bf16.mxu0 %v4392
    %6846 = vmatpush1.bf16.msra.mxu0 %v4391
    %6847 = vmatprep.subr.bf16.mxu0 %v4408
    %6848 = vmatpush1.bf16.msra.mxu0 %v4407
    %6849 = vmatprep.subr.bf16.mxu0 %v4424
    %6850 = vmatpush1.bf16.msra.mxu0 %v4423
    %6851 = vmatprep.subr.bf16.mxu0 %v4440
    %6852 = vmatpush1.bf16.msra.mxu0 %v4439
    %6853 = vmatprep.subr.bf16.mxu0 %v4456
    %6854 = vmatpush1.bf16.msra.mxu0 %v4455
    %6855 = vmatprep.subr.bf16.mxu0 %v4472
    %6856 = vmatpush1.bf16.msra.mxu0 %v4471
    %6857 = vmatprep.subr.bf16.mxu0 %v4488
    %6858 = vmatpush1.bf16.msra.mxu0 %v4487
    %6859 = vmatprep.subr.bf16.mxu0 %v4504
    %6860 = vmatpush1.bf16.msra.mxu0 %v4503
    %6861 = vmatprep.subr.bf16.mxu0 %v4520
    %6862 = vmatpush1.bf16.msra.mxu0 %v4519
    %6863 = vmatprep.subr.bf16.mxu0 %v4536
    %6864 = vmatpush1.bf16.msra.mxu0 %v4535
    %6865 = vmatprep.subr.bf16.mxu0 %v4552
    %6866 = vmatpush1.bf16.msra.mxu0 %v4551
    %6867 = vmatprep.subr.bf16.mxu0 %v4568
    %6868 = vmatpush1.bf16.msra.mxu0 %v4567
    %6869 = vmatprep.subr.bf16.mxu0 %v4584
    %6870 = vmatpush1.bf16.msra.mxu0 %v4583
    %6871 = vmatprep.mubr.bf16.mxu0 %v147
    %6872 = vmatmul.mubr.bf16.gmra.mrb[0].mxu0 %v146
    %v6873 = vpop.f32.mrb[0].mxu0
    %v6874 = vadd.f32 %v6833, %v6873
    %v6875 = vpop.f32.mrb[0].mxu0
    %v6876 = vadd.f32 %v6835, %v6875
    %v6877 = vpop.f32.mrb[0].mxu0
    %v6878 = vpop.f32.mrb[0].mxu0
    %6879 = vdwg.mxu0
    %6880 = vmatprep.subr.bf16.mxu0 %v4600
    %6881 = vmatpush1.bf16.msra.mxu0 %v4599
    %6882 = vmatprep.subr.bf16.mxu0 %v4616
    %6883 = vmatpush1.bf16.msra.mxu0 %v4615
    %6884 = vmatprep.subr.bf16.mxu0 %v4632
    %6885 = vmatpush1.bf16.msra.mxu0 %v4631
    %6886 = vmatprep.subr.bf16.mxu0 %v4648
    %6887 = vmatpush1.bf16.msra.mxu0 %v4647
    %6888 = vmatprep.subr.bf16.mxu0 %v4664
    %6889 = vmatpush1.bf16.msra.mxu0 %v4663
    %6890 = vmatprep.subr.bf16.mxu0 %v4680
    %6891 = vmatpush1.bf16.msra.mxu0 %v4679
    %6892 = vmatprep.subr.bf16.mxu0 %v4696
    %6893 = vmatpush1.bf16.msra.mxu0 %v4695
    %6894 = vmatprep.subr.bf16.mxu0 %v4712
    %6895 = vmatpush1.bf16.msra.mxu0 %v4711
    %6896 = vmatprep.subr.bf16.mxu0 0
    %6897 = vmatpush1.bf16.msra.mxu0 0
    %6898 = vmatprep.subr.bf16.mxu0 0
    %6899 = vmatpush1.bf16.msra.mxu0 0
    %6900 = vmatprep.subr.bf16.mxu0 0
    %6901 = vmatpush1.bf16.msra.mxu0 0
    %6902 = vmatprep.subr.bf16.mxu0 0
    %6903 = vmatpush1.bf16.msra.mxu0 0
    %6904 = vmatprep.subr.bf16.mxu0 0
    %6905 = vmatpush1.bf16.msra.mxu0 0
    %6906 = vmatprep.subr.bf16.mxu0 0
    %6907 = vmatpush1.bf16.msra.mxu0 0
    %6908 = vmatprep.subr.bf16.mxu0 0
    %6909 = vmatpush1.bf16.msra.mxu0 0
    %6910 = vmatprep.subr.bf16.mxu0 0
    %6911 = vmatpush1.bf16.msra.mxu0 0
    %6912 = vmatprep.mubr.bf16.mxu0 0
    %6913 = vmatmul.mubr.bf16.gmra.mrb[0].mxu0 %v148
    %v6914 = vpop.f32.mrb[0].mxu0
    %v6915 = vadd.f32 %v6874, %v6914
    %v6916 = vpop.f32.mrb[0].mxu0
    %v6917 = vadd.f32 %v6876, %v6916
    %v6918 = vpop.f32.mrb[0].mxu0
    %v6919 = vpop.f32.mrb[0].mxu0
    %6920 = vdwg.mxu0
    %v6921 = vxor.u32 %v5767, 2147483648
    %v6922 = vxor.u32 %v5769, 2147483648
    %v6923 = vxor.u32 %v5931, 2147483648
    %v6924 = vxor.u32 %v5933, 2147483648
    %v6925 = vxor.u32 %v6095, 2147483648
    %v6926 = vxor.u32 %v6097, 2147483648
    %v6927 = vxor.u32 %v6259, 2147483648
    %v6928 = vxor.u32 %v6261, 2147483648
    %v6929 = vxor.u32 %v6423, 2147483648
    %v6930 = vxor.u32 %v6425, 2147483648
    %v6931 = vxor.u32 %v6587, 2147483648
    %v6932 = vxor.u32 %v6589, 2147483648
    %v6933 = vxor.u32 %v6751, 2147483648
    %v6934 = vxor.u32 %v6753, 2147483648
    %v6935 = vxor.u32 %v6915, 2147483648
    %v6936 = vxor.u32 %v6917, 2147483648
    %v6937 = vmul.f32 %v6921, 1.442695
    %v6938 = vpow.pop %v6937
    %v6939 = vmul.f32 %v6922, 1.442695
    %v6940 = vpow.pop %v6939
    %v6941 = vmul.f32 %v6923, 1.442695
    %v6942 = vpow.pop %v6941
    %v6943 = vmul.f32 %v6924, 1.442695
    %v6944 = vpow.pop %v6943
    %v6945 = vmul.f32 %v6925, 1.442695
    %v6946 = vpow.pop %v6945
    %v6947 = vmul.f32 %v6926, 1.442695
    %v6948 = vpow.pop %v6947
    %v6949 = vmul.f32 %v6927, 1.442695
    %v6950 = vpow.pop %v6949
    %v6951 = vmul.f32 %v6928, 1.442695
    %v6952 = vpow.pop %v6951
    %v6953 = vmul.f32 %v6929, 1.442695
    %v6954 = vpow.pop %v6953
    %v6955 = vmul.f32 %v6930, 1.442695
    %v6956 = vpow.pop %v6955
    %v6957 = vmul.f32 %v6931, 1.442695
    %v6958 = vpow.pop %v6957
    %v6959 = vmul.f32 %v6932, 1.442695
    %v6960 = vpow.pop %v6959
    %v6961 = vmul.f32 %v6933, 1.442695
    %v6962 = vpow.pop %v6961
    %v6963 = vmul.f32 %v6934, 1.442695
    %v6964 = vpow.pop %v6963
    %v6965 = vmul.f32 %v6935, 1.442695
    %v6966 = vpow.pop %v6965
    %v6967 = vmul.f32 %v6936, 1.442695
    %v6968 = vpow.pop %v6967
    %v6969 = vadd.f32 %v6938, 1.0
    %v6970 = vadd.f32 %v6940, 1.0
    %v6971 = vadd.f32 %v6942, 1.0
    %v6972 = vadd.f32 %v6944, 1.0
    %v6973 = vadd.f32 %v6946, 1.0
    %v6974 = vadd.f32 %v6948, 1.0
    %v6975 = vadd.f32 %v6950, 1.0
    %v6976 = vadd.f32 %v6952, 1.0
    %v6977 = vadd.f32 %v6954, 1.0
    %v6978 = vadd.f32 %v6956, 1.0
    %v6979 = vadd.f32 %v6958, 1.0
    %v6980 = vadd.f32 %v6960, 1.0
    %v6981 = vadd.f32 %v6962, 1.0
    %v6982 = vadd.f32 %v6964, 1.0
    %v6983 = vadd.f32 %v6966, 1.0
    %v6984 = vadd.f32 %v6968, 1.0
    %v6985 = vrcp.pop %v6969
    %v6986 = vmul.f32 1.0, %v6985
    %v6987 = vrcp.pop %v6970
    %v6988 = vmul.f32 1.0, %v6987
    %v6989 = vrcp.pop %v6971
    %v6990 = vmul.f32 1.0, %v6989
    %v6991 = vrcp.pop %v6972
    %v6992 = vmul.f32 1.0, %v6991
    %v6993 = vrcp.pop %v6973
    %v6994 = vmul.f32 1.0, %v6993
    %v6995 = vrcp.pop %v6974
    %v6996 = vmul.f32 1.0, %v6995
    %v6997 = vrcp.pop %v6975
    %v6998 = vmul.f32 1.0, %v6997
    %v6999 = vrcp.pop %v6976
    %v7000 = vmul.f32 1.0, %v6999
    %v7001 = vrcp.pop %v6977
    %v7002 = vmul.f32 1.0, %v7001
    %v7003 = vrcp.pop %v6978
    %v7004 = vmul.f32 1.0, %v7003
    %v7005 = vrcp.pop %v6979
    %v7006 = vmul.f32 1.0, %v7005
    %v7007 = vrcp.pop %v6980
    %v7008 = vmul.f32 1.0, %v7007
    %v7009 = vrcp.pop %v6981
    %v7010 = vmul.f32 1.0, %v7009
    %v7011 = vrcp.pop %v6982
    %v7012 = vmul.f32 1.0, %v7011
    %v7013 = vrcp.pop %v6983
    %v7014 = vmul.f32 1.0, %v7013
    %v7015 = vrcp.pop %v6984
    %v7016 = vmul.f32 1.0, %v7015
    %v7017 = vpack.c.bf16 %v6986, %v6986
    %v7018 = vpack.c.bf16 %v6988, %v6988
    %v7019 = vpack.c.bf16 %v6990, %v6990
    %v7020 = vpack.c.bf16 %v6992, %v6992
    %v7021 = vpack.c.bf16 %v6994, %v6994
    %v7022 = vpack.c.bf16 %v6996, %v6996
    %v7023 = vpack.c.bf16 %v6998, %v6998
    %v7024 = vpack.c.bf16 %v7000, %v7000
    %v7025 = vpack.c.bf16 %v7002, %v7002
    %v7026 = vpack.c.bf16 %v7004, %v7004
    %v7027 = vpack.c.bf16 %v7006, %v7006
    %v7028 = vpack.c.bf16 %v7008, %v7008
    %v7029 = vpack.c.bf16 %v7010, %v7010
    %v7030 = vpack.c.bf16 %v7012, %v7012
    %v7031 = vpack.c.bf16 %v7014, %v7014
    %v7032 = vpack.c.bf16 %v7016, %v7016
    %v7033 = vld [vmem:[#allocation7] sm:$0xff]
    %v7034 = vld [vmem:[#allocation7 + $0x8] sm:$0xff]
    %v7035 = vld [vmem:[#allocation7 + $0x10] sm:$0xff]
    %v7036 = vld [vmem:[#allocation7 + $0x18] sm:$0xff]
    %v7037 = vld [vmem:[#allocation7 + $0x20] sm:$0xff]
    %v7038 = vld [vmem:[#allocation7 + $0x28] sm:$0xff]
    %v7039 = vld [vmem:[#allocation7 + $0x30] sm:$0xff]
    %v7040 = vld [vmem:[#allocation7 + $0x38] sm:$0xff]
    %v7041 = vld [vmem:[#allocation7 + $0x40] sm:$0xff]
    %v7042 = vld [vmem:[#allocation7 + $0x48] sm:$0xff]
    %v7043 = vld [vmem:[#allocation7 + $0x50] sm:$0xff]
    %v7044 = vld [vmem:[#allocation7 + $0x58] sm:$0xff]
    %v7045 = vld [vmem:[#allocation7 + $0x60] sm:$0xff]
    %v7046 = vld [vmem:[#allocation7 + $0x68] sm:$0xff]
    %v7047 = vld [vmem:[#allocation7 + $0x70] sm:$0xff]
    %v7048 = vld [vmem:[#allocation7 + $0x78] sm:$0xff]
    %v7049 = vld [vmem:[#allocation7 + $0x80] sm:$0xff]
    %v7050 = vld [vmem:[#allocation7 + $0x88] sm:$0xff]
    %v7051 = vld [vmem:[#allocation7 + $0x90] sm:$0xff]
    %v7052 = vld [vmem:[#allocation7 + $0x98] sm:$0xff]
    %v7053 = vld [vmem:[#allocation7 + $0xa0] sm:$0xff]
    %v7054 = vld [vmem:[#allocation7 + $0xa8] sm:$0xff]
    %v7055 = vld [vmem:[#allocation7 + $0xb0] sm:$0xff]
    %v7056 = vld [vmem:[#allocation7 + $0xb8] sm:$0xff]
    %v7057 = vld [vmem:[#allocation7 + $0xc0] sm:$0xff]
    %v7058 = vld [vmem:[#allocation7 + $0xc8] sm:$0xff]
    %v7059 = vld [vmem:[#allocation7 + $0xd0] sm:$0xff]
    %v7060 = vld [vmem:[#allocation7 + $0xd8] sm:$0xff]
    %v7061 = vld [vmem:[#allocation7 + $0xe0] sm:$0xff]
    %v7062 = vld [vmem:[#allocation7 + $0xe8] sm:$0xff]
    %v7063 = vld [vmem:[#allocation7 + $0xf0] sm:$0xff]
    %v7064 = vld [vmem:[#allocation7 + $0xf8] sm:$0xff]
    %v7065 = vld [vmem:[#allocation7 + $0x100] sm:$0xff]
    %v7066 = vld [vmem:[#allocation7 + $0x108] sm:$0xff]
    %v7067 = vld [vmem:[#allocation7 + $0x110] sm:$0xff]
    %v7068 = vld [vmem:[#allocation7 + $0x118] sm:$0xff]
    %v7069 = vld [vmem:[#allocation7 + $0x120] sm:$0xff]
    %v7070 = vld [vmem:[#allocation7 + $0x128] sm:$0xff]
    %v7071 = vld [vmem:[#allocation7 + $0x130] sm:$0xff]
    %v7072 = vld [vmem:[#allocation7 + $0x138] sm:$0xff]
    %v7073 = vld [vmem:[#allocation7 + $0x140] sm:$0xff]
    %v7074 = vld [vmem:[#allocation7 + $0x148] sm:$0xff]
    %v7075 = vld [vmem:[#allocation7 + $0x150] sm:$0xff]
    %v7076 = vld [vmem:[#allocation7 + $0x158] sm:$0xff]
    %v7077 = vld [vmem:[#allocation7 + $0x160] sm:$0xff]
    %v7078 = vld [vmem:[#allocation7 + $0x168] sm:$0xff]
    %v7079 = vld [vmem:[#allocation7 + $0x170] sm:$0xff]
    %v7080 = vld [vmem:[#allocation7 + $0x178] sm:$0xff]
    %v7081 = vld [vmem:[#allocation7 + $0x180] sm:$0xff]
    %v7082 = vld [vmem:[#allocation7 + $0x188] sm:$0xff]
    %v7083 = vld [vmem:[#allocation7 + $0x190] sm:$0xff]
    %v7084 = vld [vmem:[#allocation7 + $0x198] sm:$0xff]
    %v7085 = vld [vmem:[#allocation7 + $0x1a0] sm:$0xff]
    %v7086 = vld [vmem:[#allocation7 + $0x1a8] sm:$0xff]
    %v7087 = vld [vmem:[#allocation7 + $0x1b0] sm:$0xff]
    %v7088 = vld [vmem:[#allocation7 + $0x1b8] sm:$0xff]
    %v7089 = vld [vmem:[#allocation7 + $0x1c0] sm:$0xff]
    %v7090 = vld [vmem:[#allocation7 + $0x1c8] sm:$0xff]
    %v7091 = vld [vmem:[#allocation7 + $0x1d0] sm:$0xff]
    %v7092 = vld [vmem:[#allocation7 + $0x1d8] sm:$0xff]
    %v7093 = vld [vmem:[#allocation7 + $0x1e0] sm:$0xff]
    %v7094 = vld [vmem:[#allocation7 + $0x1e8] sm:$0xff]
    %v7095 = vld [vmem:[#allocation7 + $0x1f0] sm:$0xff]
    %v7096 = vld [vmem:[#allocation7 + $0x1f8] sm:$0xff]
    %v7097 = vld [vmem:[#allocation7 + $0x200] sm:$0xff]
    %v7098 = vld [vmem:[#allocation7 + $0x208] sm:$0xff]
    %v7099 = vld [vmem:[#allocation7 + $0x210] sm:$0xff]
    %v7100 = vld [vmem:[#allocation7 + $0x218] sm:$0xff]
    %v7101 = vld [vmem:[#allocation7 + $0x220] sm:$0xff]
    %v7102 = vld [vmem:[#allocation7 + $0x228] sm:$0xff]
    %v7103 = vld [vmem:[#allocation7 + $0x230] sm:$0xff]
    %v7104 = vld [vmem:[#allocation7 + $0x238] sm:$0xff]
    %v7105 = vld [vmem:[#allocation7 + $0x240] sm:$0xff]
    %v7106 = vld [vmem:[#allocation7 + $0x248] sm:$0xff]
    %v7107 = vld [vmem:[#allocation7 + $0x250] sm:$0xff]
    %v7108 = vld [vmem:[#allocation7 + $0x258] sm:$0xff]
    %v7109 = vld [vmem:[#allocation7 + $0x260] sm:$0xff]
    %v7110 = vld [vmem:[#allocation7 + $0x268] sm:$0xff]
    %v7111 = vld [vmem:[#allocation7 + $0x270] sm:$0xff]
    %v7112 = vld [vmem:[#allocation7 + $0x278] sm:$0xff]
    %v7113 = vld [vmem:[#allocation7 + $0x280] sm:$0xff]
    %v7114 = vld [vmem:[#allocation7 + $0x288] sm:$0xff]
    %v7115 = vld [vmem:[#allocation7 + $0x290] sm:$0xff]
    %v7116 = vld [vmem:[#allocation7 + $0x298] sm:$0xff]
    %v7117 = vld [vmem:[#allocation7 + $0x2a0] sm:$0xff]
    %v7118 = vld [vmem:[#allocation7 + $0x2a8] sm:$0xff]
    %v7119 = vld [vmem:[#allocation7 + $0x2b0] sm:$0xff]
    %v7120 = vld [vmem:[#allocation7 + $0x2b8] sm:$0xff]
    %v7121 = vld [vmem:[#allocation7 + $0x2c0] sm:$0xff]
    %v7122 = vld [vmem:[#allocation7 + $0x2c8] sm:$0xff]
    %v7123 = vld [vmem:[#allocation7 + $0x2d0] sm:$0xff]
    %v7124 = vld [vmem:[#allocation7 + $0x2d8] sm:$0xff]
    %v7125 = vld [vmem:[#allocation7 + $0x2e0] sm:$0xff]
    %v7126 = vld [vmem:[#allocation7 + $0x2e8] sm:$0xff]
    %v7127 = vld [vmem:[#allocation7 + $0x2f0] sm:$0xff]
    %v7128 = vld [vmem:[#allocation7 + $0x2f8] sm:$0xff]
    %v7129 = vld [vmem:[#allocation7 + $0x300] sm:$0xff]
    %v7130 = vld [vmem:[#allocation7 + $0x308] sm:$0xff]
    %v7131 = vld [vmem:[#allocation7 + $0x310] sm:$0xff]
    %v7132 = vld [vmem:[#allocation7 + $0x318] sm:$0xff]
    %v7133 = vld [vmem:[#allocation7 + $0x320] sm:$0xff]
    %v7134 = vld [vmem:[#allocation7 + $0x328] sm:$0xff]
    %v7135 = vld [vmem:[#allocation7 + $0x330] sm:$0xff]
    %v7136 = vld [vmem:[#allocation7 + $0x338] sm:$0xff]
    %v7137 = vld [vmem:[#allocation7 + $0x340] sm:$0xff]
    %v7138 = vld [vmem:[#allocation7 + $0x348] sm:$0xff]
    %v7139 = vld [vmem:[#allocation7 + $0x350] sm:$0xff]
    %v7140 = vld [vmem:[#allocation7 + $0x358] sm:$0xff]
    %v7141 = vld [vmem:[#allocation7 + $0x360] sm:$0xff]
    %v7142 = vld [vmem:[#allocation7 + $0x368] sm:$0xff]
    %v7143 = vld [vmem:[#allocation7 + $0x370] sm:$0xff]
    %v7144 = vld [vmem:[#allocation7 + $0x378] sm:$0xff]
    %v7145 = vld [vmem:[#allocation7 + $0x380] sm:$0xff]
    %v7146 = vld [vmem:[#allocation7 + $0x388] sm:$0xff]
    %v7147 = vld [vmem:[#allocation7 + $0x390] sm:$0xff]
    %v7148 = vld [vmem:[#allocation7 + $0x398] sm:$0xff]
    %v7149 = vld [vmem:[#allocation7 + $0x3a0] sm:$0xff]
    %v7150 = vld [vmem:[#allocation7 + $0x3a8] sm:$0xff]
    %v7151 = vld [vmem:[#allocation7 + $0x3b0] sm:$0xff]
    %v7152 = vld [vmem:[#allocation7 + $0x3b8] sm:$0xff]
    %v7153 = vld [vmem:[#allocation7 + $0x3c0] sm:$0xff]
    %v7154 = vld [vmem:[#allocation7 + $0x3c8] sm:$0xff]
    %v7155 = vld [vmem:[#allocation7 + $0x3d0] sm:$0xff]
    %v7156 = vld [vmem:[#allocation7 + $0x3d8] sm:$0xff]
    %v7157 = vld [vmem:[#allocation7 + $0x3e0] sm:$0xff]
    %v7158 = vld [vmem:[#allocation7 + $0x3e8] sm:$0xff]
    %v7159 = vld [vmem:[#allocation7 + $0x3f0] sm:$0xff]
    %v7160 = vld [vmem:[#allocation7 + $0x3f8] sm:$0xff]
    %v7161 = vld [vmem:[#allocation7 + $0x400] sm:$0xff]
    %v7162 = vld [vmem:[#allocation7 + $0x408] sm:$0xff]
    %v7163 = vld [vmem:[#allocation7 + $0x410] sm:$0xff]
    %v7164 = vld [vmem:[#allocation7 + $0x418] sm:$0xff]
    %v7165 = vld [vmem:[#allocation7 + $0x420] sm:$0xff]
    %v7166 = vld [vmem:[#allocation7 + $0x428] sm:$0xff]
    %v7167 = vld [vmem:[#allocation7 + $0x430] sm:$0xff]
    %v7168 = vld [vmem:[#allocation7 + $0x438] sm:$0xff]
    %v7169 = vld [vmem:[#allocation7 + $0x440] sm:$0xff]
    %v7170 = vld [vmem:[#allocation7 + $0x448] sm:$0xff]
    %v7171 = vld [vmem:[#allocation7 + $0x450] sm:$0xff]
    %v7172 = vld [vmem:[#allocation7 + $0x458] sm:$0xff]
    %v7173 = vld [vmem:[#allocation7 + $0x460] sm:$0xff]
    %v7174 = vld [vmem:[#allocation7 + $0x468] sm:$0xff]
    %v7175 = vld [vmem:[#allocation7 + $0x470] sm:$0xff]
    %v7176 = vld [vmem:[#allocation7 + $0x478] sm:$0xff]
    %v7177 = vld [vmem:[#allocation7 + $0x480] sm:$0xff]
    %v7178 = vld [vmem:[#allocation7 + $0x488] sm:$0xff]
    %v7179 = vld [vmem:[#allocation7 + $0x490] sm:$0xff]
    %v7180 = vld [vmem:[#allocation7 + $0x498] sm:$0xff]
    %v7181 = vld [vmem:[#allocation7 + $0x4a0] sm:$0xff]
    %v7182 = vld [vmem:[#allocation7 + $0x4a8] sm:$0xff]
    %v7183 = vld [vmem:[#allocation7 + $0x4b0] sm:$0xff]
    %v7184 = vld [vmem:[#allocation7 + $0x4b8] sm:$0xff]
    %v7185 = vld [vmem:[#allocation7 + $0x4c0] sm:$0xff]
    %v7186 = vld [vmem:[#allocation7 + $0x4c8] sm:$0xff]
    %v7187 = vld [vmem:[#allocation7 + $0x4d0] sm:$0xff]
    %v7188 = vld [vmem:[#allocation7 + $0x4d8] sm:$0xff]
    %v7189 = vld [vmem:[#allocation7 + $0x4e0] sm:$0xff]
    %v7190 = vld [vmem:[#allocation7 + $0x4e8] sm:$0xff]
    %v7191 = vld [vmem:[#allocation7 + $0x4f0] sm:$0xff]
    %v7192 = vld [vmem:[#allocation7 + $0x4f8] sm:$0xff]
    %v7193 = vld [vmem:[#allocation7 + $0x500] sm:$0xff]
    %v7194 = vld [vmem:[#allocation7 + $0x508] sm:$0xff]
    %v7195 = vld [vmem:[#allocation7 + $0x510] sm:$0xff]
    %v7196 = vld [vmem:[#allocation7 + $0x518] sm:$0xff]
    %v7197 = vld [vmem:[#allocation7 + $0x520] sm:$0xff]
    %v7198 = vld [vmem:[#allocation7 + $0x528] sm:$0xff]
    %v7199 = vld [vmem:[#allocation7 + $0x530] sm:$0xff]
    %v7200 = vld [vmem:[#allocation7 + $0x538] sm:$0xff]
    %v7201 = vld [vmem:[#allocation7 + $0x540] sm:$0xff]
    %v7202 = vld [vmem:[#allocation7 + $0x548] sm:$0xff]
    %v7203 = vld [vmem:[#allocation7 + $0x550] sm:$0xff]
    %v7204 = vld [vmem:[#allocation7 + $0x558] sm:$0xff]
    %v7205 = vld [vmem:[#allocation7 + $0x560] sm:$0xff]
    %v7206 = vld [vmem:[#allocation7 + $0x568] sm:$0xff]
    %v7207 = vld [vmem:[#allocation7 + $0x570] sm:$0xff]
    %v7208 = vld [vmem:[#allocation7 + $0x578] sm:$0xff]
    %v7209 = vld [vmem:[#allocation7 + $0x580] sm:$0xff]
    %v7210 = vld [vmem:[#allocation7 + $0x588] sm:$0xff]
    %v7211 = vld [vmem:[#allocation7 + $0x590] sm:$0xff]
    %v7212 = vld [vmem:[#allocation7 + $0x598] sm:$0xff]
    %v7213 = vld [vmem:[#allocation7 + $0x5a0] sm:$0xff]
    %v7214 = vld [vmem:[#allocation7 + $0x5a8] sm:$0xff]
    %v7215 = vld [vmem:[#allocation7 + $0x5b0] sm:$0xff]
    %v7216 = vld [vmem:[#allocation7 + $0x5b8] sm:$0xff]
    %v7217 = vld [vmem:[#allocation7 + $0x5c0] sm:$0xff]
    %v7218 = vld [vmem:[#allocation7 + $0x5c8] sm:$0xff]
    %v7219 = vld [vmem:[#allocation7 + $0x5d0] sm:$0xff]
    %v7220 = vld [vmem:[#allocation7 + $0x5d8] sm:$0xff]
    %v7221 = vld [vmem:[#allocation7 + $0x5e0] sm:$0xff]
    %v7222 = vld [vmem:[#allocation7 + $0x5e8] sm:$0xff]
    %v7223 = vld [vmem:[#allocation7 + $0x5f0] sm:$0xff]
    %v7224 = vld [vmem:[#allocation7 + $0x5f8] sm:$0xff]
    %v7225 = vld [vmem:[#allocation7 + $0x600] sm:$0xff]
    %v7226 = vld [vmem:[#allocation7 + $0x608] sm:$0xff]
    %v7227 = vld [vmem:[#allocation7 + $0x610] sm:$0xff]
    %v7228 = vld [vmem:[#allocation7 + $0x618] sm:$0xff]
    %v7229 = vld [vmem:[#allocation7 + $0x620] sm:$0xff]
    %v7230 = vld [vmem:[#allocation7 + $0x628] sm:$0xff]
    %v7231 = vld [vmem:[#allocation7 + $0x630] sm:$0xff]
    %v7232 = vld [vmem:[#allocation7 + $0x638] sm:$0xff]
    %v7233 = vld [vmem:[#allocation7 + $0x640] sm:$0xff]
    %v7234 = vld [vmem:[#allocation7 + $0x648] sm:$0xff]
    %v7235 = vld [vmem:[#allocation7 + $0x650] sm:$0xff]
    %v7236 = vld [vmem:[#allocation7 + $0x658] sm:$0xff]
    %v7237 = vld [vmem:[#allocation7 + $0x660] sm:$0xff]
    %v7238 = vld [vmem:[#allocation7 + $0x668] sm:$0xff]
    %v7239 = vld [vmem:[#allocation7 + $0x670] sm:$0xff]
    %v7240 = vld [vmem:[#allocation7 + $0x678] sm:$0xff]
    %v7241 = vld [vmem:[#allocation7 + $0x680] sm:$0xff]
    %v7242 = vld [vmem:[#allocation7 + $0x688] sm:$0xff]
    %v7243 = vld [vmem:[#allocation7 + $0x690] sm:$0xff]
    %v7244 = vld [vmem:[#allocation7 + $0x698] sm:$0xff]
    %v7245 = vld [vmem:[#allocation7 + $0x6a0] sm:$0xff]
    %v7246 = vld [vmem:[#allocation7 + $0x6a8] sm:$0xff]
    %v7247 = vld [vmem:[#allocation7 + $0x6b0] sm:$0xff]
    %v7248 = vld [vmem:[#allocation7 + $0x6b8] sm:$0xff]
    %v7249 = vld [vmem:[#allocation7 + $0x6c0] sm:$0xff]
    %v7250 = vld [vmem:[#allocation7 + $0x6c8] sm:$0xff]
    %v7251 = vld [vmem:[#allocation7 + $0x6d0] sm:$0xff]
    %v7252 = vld [vmem:[#allocation7 + $0x6d8] sm:$0xff]
    %v7253 = vld [vmem:[#allocation7 + $0x6e0] sm:$0xff]
    %v7254 = vld [vmem:[#allocation7 + $0x6e8] sm:$0xff]
    %v7255 = vld [vmem:[#allocation7 + $0x6f0] sm:$0xff]
    %v7256 = vld [vmem:[#allocation7 + $0x6f8] sm:$0xff]
    %v7257 = vld [vmem:[#allocation7 + $0x700] sm:$0xff]
    %v7258 = vld [vmem:[#allocation7 + $0x708] sm:$0xff]
    %v7259 = vld [vmem:[#allocation7 + $0x710] sm:$0xff]
    %v7260 = vld [vmem:[#allocation7 + $0x718] sm:$0xff]
    %v7261 = vld [vmem:[#allocation7 + $0x720] sm:$0xff]
    %v7262 = vld [vmem:[#allocation7 + $0x728] sm:$0xff]
    %v7263 = vld [vmem:[#allocation7 + $0x730] sm:$0xff]
    %v7264 = vld [vmem:[#allocation7 + $0x738] sm:$0xff]
    %v7265 = vld [vmem:[#allocation7 + $0x740] sm:$0xff]
    %v7266 = vld [vmem:[#allocation7 + $0x748] sm:$0xff]
    %v7267 = vld [vmem:[#allocation7 + $0x750] sm:$0xff]
    %v7268 = vld [vmem:[#allocation7 + $0x758] sm:$0xff]
    %v7269 = vld [vmem:[#allocation7 + $0x760] sm:$0xff]
    %v7270 = vld [vmem:[#allocation7 + $0x768] sm:$0xff]
    %v7271 = vld [vmem:[#allocation7 + $0x770] sm:$0xff]
    %v7272 = vld [vmem:[#allocation7 + $0x778] sm:$0xff]
    %v7273 = vld [vmem:[#allocation7 + $0x780] sm:$0xff]
    %v7274 = vld [vmem:[#allocation7 + $0x788] sm:$0xff]
    %v7275 = vld [vmem:[#allocation7 + $0x790] sm:$0xff]
    %v7276 = vld [vmem:[#allocation7 + $0x798] sm:$0xff]
    %v7277 = vld [vmem:[#allocation7 + $0x7a0] sm:$0xff]
    %v7278 = vld [vmem:[#allocation7 + $0x7a8] sm:$0xff]
    %v7279 = vld [vmem:[#allocation7 + $0x7b0] sm:$0xff]
    %v7280 = vld [vmem:[#allocation7 + $0x7b8] sm:$0xff]
    %v7281 = vld [vmem:[#allocation7 + $0x7c0] sm:$0xff]
    %v7282 = vld [vmem:[#allocation7 + $0x7c8] sm:$0xff]
    %v7283 = vld [vmem:[#allocation7 + $0x7d0] sm:$0xff]
    %v7284 = vld [vmem:[#allocation7 + $0x7d8] sm:$0xff]
    %v7285 = vld [vmem:[#allocation7 + $0x7e0] sm:$0xff]
    %v7286 = vld [vmem:[#allocation7 + $0x7e8] sm:$0xff]
    %v7287 = vld [vmem:[#allocation7 + $0x7f0] sm:$0xff]
    %v7288 = vld [vmem:[#allocation7 + $0x7f8] sm:$0xff]
    %v7289 = vld [vmem:[#allocation7 + $0x800] sm:$0xff]
    %v7290 = vld [vmem:[#allocation7 + $0x808] sm:$0xff]
    %v7291 = vld [vmem:[#allocation7 + $0x810] sm:$0xff]
    %v7292 = vld [vmem:[#allocation7 + $0x818] sm:$0xff]
    %v7293 = vld [vmem:[#allocation7 + $0x820] sm:$0xff]
    %v7294 = vld [vmem:[#allocation7 + $0x828] sm:$0xff]
    %v7295 = vld [vmem:[#allocation7 + $0x830] sm:$0xff]
    %v7296 = vld [vmem:[#allocation7 + $0x838] sm:$0xff]
    %v7297 = vld [vmem:[#allocation7 + $0x840] sm:$0xff]
    %v7298 = vld [vmem:[#allocation7 + $0x848] sm:$0xff]
    %v7299 = vld [vmem:[#allocation7 + $0x850] sm:$0xff]
    %v7300 = vld [vmem:[#allocation7 + $0x858] sm:$0xff]
    %v7301 = vld [vmem:[#allocation7 + $0x860] sm:$0xff]
    %v7302 = vld [vmem:[#allocation7 + $0x868] sm:$0xff]
    %v7303 = vld [vmem:[#allocation7 + $0x870] sm:$0xff]
    %v7304 = vld [vmem:[#allocation7 + $0x878] sm:$0xff]
    %v7305 = vld [vmem:[#allocation7 + $0x880] sm:$0xff]
    %v7306 = vld [vmem:[#allocation7 + $0x888] sm:$0xff]
    %v7307 = vld [vmem:[#allocation7 + $0x890] sm:$0xff]
    %v7308 = vld [vmem:[#allocation7 + $0x898] sm:$0xff]
    %v7309 = vld [vmem:[#allocation7 + $0x8a0] sm:$0xff]
    %v7310 = vld [vmem:[#allocation7 + $0x8a8] sm:$0xff]
    %v7311 = vld [vmem:[#allocation7 + $0x8b0] sm:$0xff]
    %v7312 = vld [vmem:[#allocation7 + $0x8b8] sm:$0xff]
    %v7313 = vld [vmem:[#allocation7 + $0x8c0] sm:$0xff]
    %v7314 = vld [vmem:[#allocation7 + $0x8c8] sm:$0xff]
    %v7315 = vld [vmem:[#allocation7 + $0x8d0] sm:$0xff]
    %v7316 = vld [vmem:[#allocation7 + $0x8d8] sm:$0xff]
    %v7317 = vld [vmem:[#allocation7 + $0x8e0] sm:$0xff]
    %v7318 = vld [vmem:[#allocation7 + $0x8e8] sm:$0xff]
    %v7319 = vld [vmem:[#allocation7 + $0x8f0] sm:$0xff]
    %v7320 = vld [vmem:[#allocation7 + $0x8f8] sm:$0xff]
    %v7321 = vld [vmem:[#allocation7 + $0x900] sm:$0xff]
    %v7322 = vld [vmem:[#allocation7 + $0x908] sm:$0xff]
    %v7323 = vld [vmem:[#allocation7 + $0x910] sm:$0xff]
    %v7324 = vld [vmem:[#allocation7 + $0x918] sm:$0xff]
    %v7325 = vld [vmem:[#allocation7 + $0x920] sm:$0xff]
    %v7326 = vld [vmem:[#allocation7 + $0x928] sm:$0xff]
    %v7327 = vld [vmem:[#allocation7 + $0x930] sm:$0xff]
    %v7328 = vld [vmem:[#allocation7 + $0x938] sm:$0xff]
    %v7329 = vld [vmem:[#allocation7 + $0x940] sm:$0xff]
    %v7330 = vld [vmem:[#allocation7 + $0x948] sm:$0xff]
    %v7331 = vld [vmem:[#allocation7 + $0x950] sm:$0xff]
    %v7332 = vld [vmem:[#allocation7 + $0x958] sm:$0xff]
    %v7333 = vld [vmem:[#allocation7 + $0x960] sm:$0xff]
    %v7334 = vld [vmem:[#allocation7 + $0x968] sm:$0xff]
    %v7335 = vld [vmem:[#allocation7 + $0x970] sm:$0xff]
    %v7336 = vld [vmem:[#allocation7 + $0x978] sm:$0xff]
    %v7337 = vld [vmem:[#allocation7 + $0x980] sm:$0xff]
    %v7338 = vld [vmem:[#allocation7 + $0x988] sm:$0xff]
    %v7339 = vld [vmem:[#allocation7 + $0x990] sm:$0xff]
    %v7340 = vld [vmem:[#allocation7 + $0x998] sm:$0xff]
    %v7341 = vld [vmem:[#allocation7 + $0x9a0] sm:$0xff]
    %v7342 = vld [vmem:[#allocation7 + $0x9a8] sm:$0xff]
    %v7343 = vld [vmem:[#allocation7 + $0x9b0] sm:$0xff]
    %v7344 = vld [vmem:[#allocation7 + $0x9b8] sm:$0xff]
    %v7345 = vld [vmem:[#allocation7 + $0x9c0] sm:$0xff]
    %v7346 = vld [vmem:[#allocation7 + $0x9c8] sm:$0xff]
    %v7347 = vld [vmem:[#allocation7 + $0x9d0] sm:$0xff]
    %v7348 = vld [vmem:[#allocation7 + $0x9d8] sm:$0xff]
    %v7349 = vld [vmem:[#allocation7 + $0x9e0] sm:$0xff]
    %v7350 = vld [vmem:[#allocation7 + $0x9e8] sm:$0xff]
    %v7351 = vld [vmem:[#allocation7 + $0x9f0] sm:$0xff]
    %v7352 = vld [vmem:[#allocation7 + $0x9f8] sm:$0xff]
    %v7353 = vld [vmem:[#allocation7 + $0xa00] sm:$0xff]
    %v7354 = vld [vmem:[#allocation7 + $0xa08] sm:$0xff]
    %v7355 = vld [vmem:[#allocation7 + $0xa10] sm:$0xff]
    %v7356 = vld [vmem:[#allocation7 + $0xa18] sm:$0xff]
    %v7357 = vld [vmem:[#allocation7 + $0xa20] sm:$0xff]
    %v7358 = vld [vmem:[#allocation7 + $0xa28] sm:$0xff]
    %v7359 = vld [vmem:[#allocation7 + $0xa30] sm:$0xff]
    %v7360 = vld [vmem:[#allocation7 + $0xa38] sm:$0xff]
    %v7361 = vld [vmem:[#allocation7 + $0xa40] sm:$0xff]
    %v7362 = vld [vmem:[#allocation7 + $0xa48] sm:$0xff]
    %v7363 = vld [vmem:[#allocation7 + $0xa50] sm:$0xff]
    %v7364 = vld [vmem:[#allocation7 + $0xa58] sm:$0xff]
    %v7365 = vld [vmem:[#allocation7 + $0xa60] sm:$0xff]
    %v7366 = vld [vmem:[#allocation7 + $0xa68] sm:$0xff]
    %v7367 = vld [vmem:[#allocation7 + $0xa70] sm:$0xff]
    %v7368 = vld [vmem:[#allocation7 + $0xa78] sm:$0xff]
    %v7369 = vld [vmem:[#allocation7 + $0xa80] sm:$0xff]
    %v7370 = vld [vmem:[#allocation7 + $0xa88] sm:$0xff]
    %v7371 = vld [vmem:[#allocation7 + $0xa90] sm:$0xff]
    %v7372 = vld [vmem:[#allocation7 + $0xa98] sm:$0xff]
    %v7373 = vld [vmem:[#allocation7 + $0xaa0] sm:$0xff]
    %v7374 = vld [vmem:[#allocation7 + $0xaa8] sm:$0xff]
    %v7375 = vld [vmem:[#allocation7 + $0xab0] sm:$0xff]
    %v7376 = vld [vmem:[#allocation7 + $0xab8] sm:$0xff]
    %v7377 = vld [vmem:[#allocation7 + $0xac0] sm:$0xff]
    %v7378 = vld [vmem:[#allocation7 + $0xac8] sm:$0xff]
    %v7379 = vld [vmem:[#allocation7 + $0xad0] sm:$0xff]
    %v7380 = vld [vmem:[#allocation7 + $0xad8] sm:$0xff]
    %v7381 = vld [vmem:[#allocation7 + $0xae0] sm:$0xff]
    %v7382 = vld [vmem:[#allocation7 + $0xae8] sm:$0xff]
    %v7383 = vld [vmem:[#allocation7 + $0xaf0] sm:$0xff]
    %v7384 = vld [vmem:[#allocation7 + $0xaf8] sm:$0xff]
    %v7385 = vld [vmem:[#allocation7 + $0xb00] sm:$0xff]
    %v7386 = vld [vmem:[#allocation7 + $0xb08] sm:$0xff]
    %v7387 = vld [vmem:[#allocation7 + $0xb10] sm:$0xff]
    %v7388 = vld [vmem:[#allocation7 + $0xb18] sm:$0xff]
    %v7389 = vld [vmem:[#allocation7 + $0xb20] sm:$0xff]
    %v7390 = vld [vmem:[#allocation7 + $0xb28] sm:$0xff]
    %v7391 = vld [vmem:[#allocation7 + $0xb30] sm:$0xff]
    %v7392 = vld [vmem:[#allocation7 + $0xb38] sm:$0xff]
    %v7393 = vld [vmem:[#allocation7 + $0xb40] sm:$0xff]
    %v7394 = vld [vmem:[#allocation7 + $0xb48] sm:$0xff]
    %v7395 = vld [vmem:[#allocation7 + $0xb50] sm:$0xff]
    %v7396 = vld [vmem:[#allocation7 + $0xb58] sm:$0xff]
    %v7397 = vld [vmem:[#allocation7 + $0xb60] sm:$0xff]
    %v7398 = vld [vmem:[#allocation7 + $0xb68] sm:$0xff]
    %v7399 = vld [vmem:[#allocation7 + $0xb70] sm:$0xff]
    %v7400 = vld [vmem:[#allocation7 + $0xb78] sm:$0xff]
    %v7401 = vld [vmem:[#allocation7 + $0xb80] sm:$0xff]
    %v7402 = vld [vmem:[#allocation7 + $0xb88] sm:$0xff]
    %v7403 = vld [vmem:[#allocation7 + $0xb90] sm:$0xff]
    %v7404 = vld [vmem:[#allocation7 + $0xb98] sm:$0xff]
    %v7405 = vld [vmem:[#allocation7 + $0xba0] sm:$0xff]
    %v7406 = vld [vmem:[#allocation7 + $0xba8] sm:$0xff]
    %v7407 = vld [vmem:[#allocation7 + $0xbb0] sm:$0xff]
    %v7408 = vld [vmem:[#allocation7 + $0xbb8] sm:$0xff]
    %v7409 = vld [vmem:[#allocation7 + $0xbc0] sm:$0xff]
    %v7410 = vld [vmem:[#allocation7 + $0xbc8] sm:$0xff]
    %v7411 = vld [vmem:[#allocation7 + $0xbd0] sm:$0xff]
    %v7412 = vld [vmem:[#allocation7 + $0xbd8] sm:$0xff]
    %v7413 = vld [vmem:[#allocation7 + $0xbe0] sm:$0xff]
    %v7414 = vld [vmem:[#allocation7 + $0xbe8] sm:$0xff]
    %v7415 = vld [vmem:[#allocation7 + $0xbf0] sm:$0xff]
    %v7416 = vld [vmem:[#allocation7 + $0xbf8] sm:$0xff]
    %v7417 = vld [vmem:[#allocation7 + $0xc00] sm:$0xff]
    %v7418 = vld [vmem:[#allocation7 + $0xc08] sm:$0xff]
    %v7419 = vld [vmem:[#allocation7 + $0xc10] sm:$0xff]
    %v7420 = vld [vmem:[#allocation7 + $0xc18] sm:$0xff]
    %v7421 = vld [vmem:[#allocation7 + $0xc20] sm:$0xff]
    %v7422 = vld [vmem:[#allocation7 + $0xc28] sm:$0xff]
    %v7423 = vld [vmem:[#allocation7 + $0xc30] sm:$0xff]
    %v7424 = vld [vmem:[#allocation7 + $0xc38] sm:$0xff]
    %v7425 = vld [vmem:[#allocation7 + $0xc40] sm:$0xff]
    %v7426 = vld [vmem:[#allocation7 + $0xc48] sm:$0xff]
    %v7427 = vld [vmem:[#allocation7 + $0xc50] sm:$0xff]
    %v7428 = vld [vmem:[#allocation7 + $0xc58] sm:$0xff]
    %v7429 = vld [vmem:[#allocation7 + $0xc60] sm:$0xff]
    %v7430 = vld [vmem:[#allocation7 + $0xc68] sm:$0xff]
    %v7431 = vld [vmem:[#allocation7 + $0xc70] sm:$0xff]
    %v7432 = vld [vmem:[#allocation7 + $0xc78] sm:$0xff]
    %v7433 = vld [vmem:[#allocation7 + $0xc80] sm:$0xff]
    %v7434 = vld [vmem:[#allocation7 + $0xc88] sm:$0xff]
    %v7435 = vld [vmem:[#allocation7 + $0xc90] sm:$0xff]
    %v7436 = vld [vmem:[#allocation7 + $0xc98] sm:$0xff]
    %v7437 = vld [vmem:[#allocation7 + $0xca0] sm:$0xff]
    %v7438 = vld [vmem:[#allocation7 + $0xca8] sm:$0xff]
    %v7439 = vld [vmem:[#allocation7 + $0xcb0] sm:$0xff]
    %v7440 = vld [vmem:[#allocation7 + $0xcb8] sm:$0xff]
    %v7441 = vld [vmem:[#allocation7 + $0xcc0] sm:$0xff]
    %v7442 = vld [vmem:[#allocation7 + $0xcc8] sm:$0xff]
    %v7443 = vld [vmem:[#allocation7 + $0xcd0] sm:$0xff]
    %v7444 = vld [vmem:[#allocation7 + $0xcd8] sm:$0xff]
    %v7445 = vld [vmem:[#allocation7 + $0xce0] sm:$0xff]
    %v7446 = vld [vmem:[#allocation7 + $0xce8] sm:$0xff]
    %v7447 = vld [vmem:[#allocation7 + $0xcf0] sm:$0xff]
    %v7448 = vld [vmem:[#allocation7 + $0xcf8] sm:$0xff]
    %v7449 = vld [vmem:[#allocation7 + $0xd00] sm:$0xff]
    %v7450 = vld [vmem:[#allocation7 + $0xd08] sm:$0xff]
    %v7451 = vld [vmem:[#allocation7 + $0xd10] sm:$0xff]
    %v7452 = vld [vmem:[#allocation7 + $0xd18] sm:$0xff]
    %v7453 = vld [vmem:[#allocation7 + $0xd20] sm:$0xff]
    %v7454 = vld [vmem:[#allocation7 + $0xd28] sm:$0xff]
    %v7455 = vld [vmem:[#allocation7 + $0xd30] sm:$0xff]
    %v7456 = vld [vmem:[#allocation7 + $0xd38] sm:$0xff]
    %v7457 = vld [vmem:[#allocation7 + $0xd40] sm:$0xff]
    %v7458 = vld [vmem:[#allocation7 + $0xd48] sm:$0xff]
    %v7459 = vld [vmem:[#allocation7 + $0xd50] sm:$0xff]
    %v7460 = vld [vmem:[#allocation7 + $0xd58] sm:$0xff]
    %v7461 = vld [vmem:[#allocation7 + $0xd60] sm:$0xff]
    %v7462 = vld [vmem:[#allocation7 + $0xd68] sm:$0xff]
    %v7463 = vld [vmem:[#allocation7 + $0xd70] sm:$0xff]
    %v7464 = vld [vmem:[#allocation7 + $0xd78] sm:$0xff]
    %v7465 = vld [vmem:[#allocation7 + $0xd80] sm:$0xff]
    %v7466 = vld [vmem:[#allocation7 + $0xd88] sm:$0xff]
    %v7467 = vld [vmem:[#allocation7 + $0xd90] sm:$0xff]
    %v7468 = vld [vmem:[#allocation7 + $0xd98] sm:$0xff]
    %v7469 = vld [vmem:[#allocation7 + $0xda0] sm:$0xff]
    %v7470 = vld [vmem:[#allocation7 + $0xda8] sm:$0xff]
    %v7471 = vld [vmem:[#allocation7 + $0xdb0] sm:$0xff]
    %v7472 = vld [vmem:[#allocation7 + $0xdb8] sm:$0xff]
    %v7473 = vld [vmem:[#allocation7 + $0xdc0] sm:$0xff]
    %v7474 = vld [vmem:[#allocation7 + $0xdc8] sm:$0xff]
    %v7475 = vld [vmem:[#allocation7 + $0xdd0] sm:$0xff]
    %v7476 = vld [vmem:[#allocation7 + $0xdd8] sm:$0xff]
    %v7477 = vld [vmem:[#allocation7 + $0xde0] sm:$0xff]
    %v7478 = vld [vmem:[#allocation7 + $0xde8] sm:$0xff]
    %v7479 = vld [vmem:[#allocation7 + $0xdf0] sm:$0xff]
    %v7480 = vld [vmem:[#allocation7 + $0xdf8] sm:$0xff]
    %v7481 = vld [vmem:[#allocation7 + $0xe00] sm:$0xff]
    %v7482 = vld [vmem:[#allocation7 + $0xe08] sm:$0xff]
    %v7483 = vld [vmem:[#allocation7 + $0xe10] sm:$0xff]
    %v7484 = vld [vmem:[#allocation7 + $0xe18] sm:$0xff]
    %v7485 = vld [vmem:[#allocation7 + $0xe20] sm:$0xff]
    %v7486 = vld [vmem:[#allocation7 + $0xe28] sm:$0xff]
    %v7487 = vld [vmem:[#allocation7 + $0xe30] sm:$0xff]
    %v7488 = vld [vmem:[#allocation7 + $0xe38] sm:$0xff]
    %v7489 = vld [vmem:[#allocation7 + $0xe40] sm:$0xff]
    %v7490 = vld [vmem:[#allocation7 + $0xe48] sm:$0xff]
    %v7491 = vld [vmem:[#allocation7 + $0xe50] sm:$0xff]
    %v7492 = vld [vmem:[#allocation7 + $0xe58] sm:$0xff]
    %v7493 = vld [vmem:[#allocation7 + $0xe60] sm:$0xff]
    %v7494 = vld [vmem:[#allocation7 + $0xe68] sm:$0xff]
    %v7495 = vld [vmem:[#allocation7 + $0xe70] sm:$0xff]
    %v7496 = vld [vmem:[#allocation7 + $0xe78] sm:$0xff]
    %v7497 = vld [vmem:[#allocation7 + $0xe80] sm:$0xff]
    %v7498 = vld [vmem:[#allocation7 + $0xe88] sm:$0xff]
    %v7499 = vld [vmem:[#allocation7 + $0xe90] sm:$0xff]
    %v7500 = vld [vmem:[#allocation7 + $0xe98] sm:$0xff]
    %v7501 = vld [vmem:[#allocation7 + $0xea0] sm:$0xff]
    %v7502 = vld [vmem:[#allocation7 + $0xea8] sm:$0xff]
    %v7503 = vld [vmem:[#allocation7 + $0xeb0] sm:$0xff]
    %v7504 = vld [vmem:[#allocation7 + $0xeb8] sm:$0xff]
    %v7505 = vld [vmem:[#allocation7 + $0xec0] sm:$0xff]
    %v7506 = vld [vmem:[#allocation7 + $0xec8] sm:$0xff]
    %v7507 = vld [vmem:[#allocation7 + $0xed0] sm:$0xff]
    %v7508 = vld [vmem:[#allocation7 + $0xed8] sm:$0xff]
    %v7509 = vld [vmem:[#allocation7 + $0xee0] sm:$0xff]
    %v7510 = vld [vmem:[#allocation7 + $0xee8] sm:$0xff]
    %v7511 = vld [vmem:[#allocation7 + $0xef0] sm:$0xff]
    %v7512 = vld [vmem:[#allocation7 + $0xef8] sm:$0xff]
    %v7513 = vld [vmem:[#allocation7 + $0xf00] sm:$0xff]
    %v7514 = vld [vmem:[#allocation7 + $0xf08] sm:$0xff]
    %v7515 = vld [vmem:[#allocation7 + $0xf10] sm:$0xff]
    %v7516 = vld [vmem:[#allocation7 + $0xf18] sm:$0xff]
    %v7517 = vld [vmem:[#allocation7 + $0xf20] sm:$0xff]
    %v7518 = vld [vmem:[#allocation7 + $0xf28] sm:$0xff]
    %v7519 = vld [vmem:[#allocation7 + $0xf30] sm:$0xff]
    %v7520 = vld [vmem:[#allocation7 + $0xf38] sm:$0xff]
    %v7521 = vld [vmem:[#allocation7 + $0xf40] sm:$0xff]
    %v7522 = vld [vmem:[#allocation7 + $0xf48] sm:$0xff]
    %v7523 = vld [vmem:[#allocation7 + $0xf50] sm:$0xff]
    %v7524 = vld [vmem:[#allocation7 + $0xf58] sm:$0xff]
    %v7525 = vld [vmem:[#allocation7 + $0xf60] sm:$0xff]
    %v7526 = vld [vmem:[#allocation7 + $0xf68] sm:$0xff]
    %v7527 = vld [vmem:[#allocation7 + $0xf70] sm:$0xff]
    %v7528 = vld [vmem:[#allocation7 + $0xf78] sm:$0xff]
    %v7529 = vld [vmem:[#allocation7 + $0xf80] sm:$0xff]
    %v7530 = vld [vmem:[#allocation7 + $0xf88] sm:$0xff]
    %v7531 = vld [vmem:[#allocation7 + $0xf90] sm:$0xff]
    %v7532 = vld [vmem:[#allocation7 + $0xf98] sm:$0xff]
    %v7533 = vld [vmem:[#allocation7 + $0xfa0] sm:$0xff]
    %v7534 = vld [vmem:[#allocation7 + $0xfa8] sm:$0xff]
    %v7535 = vld [vmem:[#allocation7 + $0xfb0] sm:$0xff]
    %v7536 = vld [vmem:[#allocation7 + $0xfb8] sm:$0xff]
    %v7537 = vld [vmem:[#allocation7 + $0xfc0] sm:$0xff]
    %v7538 = vld [vmem:[#allocation7 + $0xfc8] sm:$0xff]
    %v7539 = vld [vmem:[#allocation7 + $0xfd0] sm:$0xff]
    %v7540 = vld [vmem:[#allocation7 + $0xfd8] sm:$0xff]
    %v7541 = vld [vmem:[#allocation7 + $0xfe0] sm:$0xff]
    %v7542 = vld [vmem:[#allocation7 + $0xfe8] sm:$0xff]
    %v7543 = vld [vmem:[#allocation7 + $0xff0] sm:$0xff]
    %v7544 = vld [vmem:[#allocation7 + $0xff8] sm:$0xff]
    %v7545 = vld [vmem:[#allocation8] sm:$0xf]
    %v7547 = vlaneseq
    %v7548 = vshrl.u32 %v7547, 7
    %v7549 = vsub.s32 0, %v7548
    %v7550 = vrot.slane %v7545, %v7549
    %v7551 = vlaneseq
    %v7552 = vshrl.u32 %v7551, 7
    %v7553 = vsub.s32 1, %v7552
    %v7554 = vrot.slane %v7545, %v7553
    %v7555 = vlaneseq
    %v7556 = vshrl.u32 %v7555, 7
    %v7557 = vsub.s32 2, %v7556
    %v7558 = vrot.slane %v7545, %v7557
    %v7559 = vlaneseq
    %v7560 = vshrl.u32 %v7559, 7
    %v7561 = vsub.s32 3, %v7560
    %v7562 = vrot.slane %v7545, %v7561
    %v8079 = vunpack.c.l.b16 %v7033
    %v8080 = vunpack.c.h.b16 %v7033
    %v8081 = vunpack.c.l.b16 %v7034
    %v8082 = vunpack.c.h.b16 %v7034
    %v8083 = vunpack.c.l.b16 %v7035
    %v8084 = vunpack.c.h.b16 %v7035
    %v8085 = vunpack.c.l.b16 %v7036
    %v8086 = vunpack.c.h.b16 %v7036
    %v8087 = vunpack.c.l.b16 %v7037
    %v8088 = vunpack.c.h.b16 %v7037
    %v8089 = vunpack.c.l.b16 %v7038
    %v8090 = vunpack.c.h.b16 %v7038
    %v8091 = vunpack.c.l.b16 %v7039
    %v8092 = vunpack.c.h.b16 %v7039
    %v8093 = vunpack.c.l.b16 %v7040
    %v8094 = vunpack.c.h.b16 %v7040
    %v8095 = vunpack.c.l.b16 %v7041
    %v8096 = vunpack.c.h.b16 %v7041
    %v8097 = vunpack.c.l.b16 %v7042
    %v8098 = vunpack.c.h.b16 %v7042
    %v8099 = vunpack.c.l.b16 %v7043
    %v8100 = vunpack.c.h.b16 %v7043
    %v8101 = vunpack.c.l.b16 %v7044
    %v8102 = vunpack.c.h.b16 %v7044
    %v8103 = vunpack.c.l.b16 %v7045
    %v8104 = vunpack.c.h.b16 %v7045
    %v8105 = vunpack.c.l.b16 %v7046
    %v8106 = vunpack.c.h.b16 %v7046
    %v8107 = vunpack.c.l.b16 %v7047
    %v8108 = vunpack.c.h.b16 %v7047
    %v8109 = vunpack.c.l.b16 %v7048
    %v8110 = vunpack.c.h.b16 %v7048
    %v8111 = vunpack.c.l.b16 %v7049
    %v8112 = vunpack.c.h.b16 %v7049
    %v8113 = vunpack.c.l.b16 %v7050
    %v8114 = vunpack.c.h.b16 %v7050
    %v8115 = vunpack.c.l.b16 %v7051
    %v8116 = vunpack.c.h.b16 %v7051
    %v8117 = vunpack.c.l.b16 %v7052
    %v8118 = vunpack.c.h.b16 %v7052
    %v8119 = vunpack.c.l.b16 %v7053
    %v8120 = vunpack.c.h.b16 %v7053
    %v8121 = vunpack.c.l.b16 %v7054
    %v8122 = vunpack.c.h.b16 %v7054
    %v8123 = vunpack.c.l.b16 %v7055
    %v8124 = vunpack.c.h.b16 %v7055
    %v8125 = vunpack.c.l.b16 %v7056
    %v8126 = vunpack.c.h.b16 %v7056
    %v8127 = vunpack.c.l.b16 %v7057
    %v8128 = vunpack.c.h.b16 %v7057
    %v8129 = vunpack.c.l.b16 %v7058
    %v8130 = vunpack.c.h.b16 %v7058
    %v8131 = vunpack.c.l.b16 %v7059
    %v8132 = vunpack.c.h.b16 %v7059
    %v8133 = vunpack.c.l.b16 %v7060
    %v8134 = vunpack.c.h.b16 %v7060
    %v8135 = vunpack.c.l.b16 %v7061
    %v8136 = vunpack.c.h.b16 %v7061
    %v8137 = vunpack.c.l.b16 %v7062
    %v8138 = vunpack.c.h.b16 %v7062
    %v8139 = vunpack.c.l.b16 %v7063
    %v8140 = vunpack.c.h.b16 %v7063
    %v8141 = vunpack.c.l.b16 %v7064
    %v8142 = vunpack.c.h.b16 %v7064
    %v8143 = vunpack.c.l.b16 %v7065
    %v8144 = vunpack.c.h.b16 %v7065
    %v8145 = vunpack.c.l.b16 %v7066
    %v8146 = vunpack.c.h.b16 %v7066
    %v8147 = vunpack.c.l.b16 %v7067
    %v8148 = vunpack.c.h.b16 %v7067
    %v8149 = vunpack.c.l.b16 %v7068
    %v8150 = vunpack.c.h.b16 %v7068
    %v8151 = vunpack.c.l.b16 %v7069
    %v8152 = vunpack.c.h.b16 %v7069
    %v8153 = vunpack.c.l.b16 %v7070
    %v8154 = vunpack.c.h.b16 %v7070
    %v8155 = vunpack.c.l.b16 %v7071
    %v8156 = vunpack.c.h.b16 %v7071
    %v8157 = vunpack.c.l.b16 %v7072
    %v8158 = vunpack.c.h.b16 %v7072
    %v8159 = vunpack.c.l.b16 %v7073
    %v8160 = vunpack.c.h.b16 %v7073
    %v8161 = vunpack.c.l.b16 %v7074
    %v8162 = vunpack.c.h.b16 %v7074
    %v8163 = vunpack.c.l.b16 %v7075
    %v8164 = vunpack.c.h.b16 %v7075
    %v8165 = vunpack.c.l.b16 %v7076
    %v8166 = vunpack.c.h.b16 %v7076
    %v8167 = vunpack.c.l.b16 %v7077
    %v8168 = vunpack.c.h.b16 %v7077
    %v8169 = vunpack.c.l.b16 %v7078
    %v8170 = vunpack.c.h.b16 %v7078
    %v8171 = vunpack.c.l.b16 %v7079
    %v8172 = vunpack.c.h.b16 %v7079
    %v8173 = vunpack.c.l.b16 %v7080
    %v8174 = vunpack.c.h.b16 %v7080
    %v8175 = vunpack.c.l.b16 %v7081
    %v8176 = vunpack.c.h.b16 %v7081
    %v8177 = vunpack.c.l.b16 %v7082
    %v8178 = vunpack.c.h.b16 %v7082
    %v8179 = vunpack.c.l.b16 %v7083
    %v8180 = vunpack.c.h.b16 %v7083
    %v8181 = vunpack.c.l.b16 %v7084
    %v8182 = vunpack.c.h.b16 %v7084
    %v8183 = vunpack.c.l.b16 %v7085
    %v8184 = vunpack.c.h.b16 %v7085
    %v8185 = vunpack.c.l.b16 %v7086
    %v8186 = vunpack.c.h.b16 %v7086
    %v8187 = vunpack.c.l.b16 %v7087
    %v8188 = vunpack.c.h.b16 %v7087
    %v8189 = vunpack.c.l.b16 %v7088
    %v8190 = vunpack.c.h.b16 %v7088
    %v8191 = vunpack.c.l.b16 %v7089
    %v8192 = vunpack.c.h.b16 %v7089
    %v8193 = vunpack.c.l.b16 %v7090
    %v8194 = vunpack.c.h.b16 %v7090
    %v8195 = vunpack.c.l.b16 %v7091
    %v8196 = vunpack.c.h.b16 %v7091
    %v8197 = vunpack.c.l.b16 %v7092
    %v8198 = vunpack.c.h.b16 %v7092
    %v8199 = vunpack.c.l.b16 %v7093
    %v8200 = vunpack.c.h.b16 %v7093
    %v8201 = vunpack.c.l.b16 %v7094
    %v8202 = vunpack.c.h.b16 %v7094
    %v8203 = vunpack.c.l.b16 %v7095
    %v8204 = vunpack.c.h.b16 %v7095
    %v8205 = vunpack.c.l.b16 %v7096
    %v8206 = vunpack.c.h.b16 %v7096
    %v8207 = vunpack.c.l.b16 %v7097
    %v8208 = vunpack.c.h.b16 %v7097
    %v8209 = vunpack.c.l.b16 %v7098
    %v8210 = vunpack.c.h.b16 %v7098
    %v8211 = vunpack.c.l.b16 %v7099
    %v8212 = vunpack.c.h.b16 %v7099
    %v8213 = vunpack.c.l.b16 %v7100
    %v8214 = vunpack.c.h.b16 %v7100
    %v8215 = vunpack.c.l.b16 %v7101
    %v8216 = vunpack.c.h.b16 %v7101
    %v8217 = vunpack.c.l.b16 %v7102
    %v8218 = vunpack.c.h.b16 %v7102
    %v8219 = vunpack.c.l.b16 %v7103
    %v8220 = vunpack.c.h.b16 %v7103
    %v8221 = vunpack.c.l.b16 %v7104
    %v8222 = vunpack.c.h.b16 %v7104
    %v8223 = vunpack.c.l.b16 %v7105
    %v8224 = vunpack.c.h.b16 %v7105
    %v8225 = vunpack.c.l.b16 %v7106
    %v8226 = vunpack.c.h.b16 %v7106
    %v8227 = vunpack.c.l.b16 %v7107
    %v8228 = vunpack.c.h.b16 %v7107
    %v8229 = vunpack.c.l.b16 %v7108
    %v8230 = vunpack.c.h.b16 %v7108
    %v8231 = vunpack.c.l.b16 %v7109
    %v8232 = vunpack.c.h.b16 %v7109
    %v8233 = vunpack.c.l.b16 %v7110
    %v8234 = vunpack.c.h.b16 %v7110
    %v8235 = vunpack.c.l.b16 %v7111
    %v8236 = vunpack.c.h.b16 %v7111
    %v8237 = vunpack.c.l.b16 %v7112
    %v8238 = vunpack.c.h.b16 %v7112
    %v8239 = vunpack.c.l.b16 %v7113
    %v8240 = vunpack.c.h.b16 %v7113
    %v8241 = vunpack.c.l.b16 %v7114
    %v8242 = vunpack.c.h.b16 %v7114
    %v8243 = vunpack.c.l.b16 %v7115
    %v8244 = vunpack.c.h.b16 %v7115
    %v8245 = vunpack.c.l.b16 %v7116
    %v8246 = vunpack.c.h.b16 %v7116
    %v8247 = vunpack.c.l.b16 %v7117
    %v8248 = vunpack.c.h.b16 %v7117
    %v8249 = vunpack.c.l.b16 %v7118
    %v8250 = vunpack.c.h.b16 %v7118
    %v8251 = vunpack.c.l.b16 %v7119
    %v8252 = vunpack.c.h.b16 %v7119
    %v8253 = vunpack.c.l.b16 %v7120
    %v8254 = vunpack.c.h.b16 %v7120
    %v8255 = vunpack.c.l.b16 %v7121
    %v8256 = vunpack.c.h.b16 %v7121
    %v8257 = vunpack.c.l.b16 %v7122
    %v8258 = vunpack.c.h.b16 %v7122
    %v8259 = vunpack.c.l.b16 %v7123
    %v8260 = vunpack.c.h.b16 %v7123
    %v8261 = vunpack.c.l.b16 %v7124
    %v8262 = vunpack.c.h.b16 %v7124
    %v8263 = vunpack.c.l.b16 %v7125
    %v8264 = vunpack.c.h.b16 %v7125
    %v8265 = vunpack.c.l.b16 %v7126
    %v8266 = vunpack.c.h.b16 %v7126
    %v8267 = vunpack.c.l.b16 %v7127
    %v8268 = vunpack.c.h.b16 %v7127
    %v8269 = vunpack.c.l.b16 %v7128
    %v8270 = vunpack.c.h.b16 %v7128
    %v8271 = vunpack.c.l.b16 %v7129
    %v8272 = vunpack.c.h.b16 %v7129
    %v8273 = vunpack.c.l.b16 %v7130
    %v8274 = vunpack.c.h.b16 %v7130
    %v8275 = vunpack.c.l.b16 %v7131
    %v8276 = vunpack.c.h.b16 %v7131
    %v8277 = vunpack.c.l.b16 %v7132
    %v8278 = vunpack.c.h.b16 %v7132
    %v8279 = vunpack.c.l.b16 %v7133
    %v8280 = vunpack.c.h.b16 %v7133
    %v8281 = vunpack.c.l.b16 %v7134
    %v8282 = vunpack.c.h.b16 %v7134
    %v8283 = vunpack.c.l.b16 %v7135
    %v8284 = vunpack.c.h.b16 %v7135
    %v8285 = vunpack.c.l.b16 %v7136
    %v8286 = vunpack.c.h.b16 %v7136
    %v8287 = vunpack.c.l.b16 %v7137
    %v8288 = vunpack.c.h.b16 %v7137
    %v8289 = vunpack.c.l.b16 %v7138
    %v8290 = vunpack.c.h.b16 %v7138
    %v8291 = vunpack.c.l.b16 %v7139
    %v8292 = vunpack.c.h.b16 %v7139
    %v8293 = vunpack.c.l.b16 %v7140
    %v8294 = vunpack.c.h.b16 %v7140
    %v8295 = vunpack.c.l.b16 %v7141
    %v8296 = vunpack.c.h.b16 %v7141
    %v8297 = vunpack.c.l.b16 %v7142
    %v8298 = vunpack.c.h.b16 %v7142
    %v8299 = vunpack.c.l.b16 %v7143
    %v8300 = vunpack.c.h.b16 %v7143
    %v8301 = vunpack.c.l.b16 %v7144
    %v8302 = vunpack.c.h.b16 %v7144
    %v8303 = vunpack.c.l.b16 %v7145
    %v8304 = vunpack.c.h.b16 %v7145
    %v8305 = vunpack.c.l.b16 %v7146
    %v8306 = vunpack.c.h.b16 %v7146
    %v8307 = vunpack.c.l.b16 %v7147
    %v8308 = vunpack.c.h.b16 %v7147
    %v8309 = vunpack.c.l.b16 %v7148
    %v8310 = vunpack.c.h.b16 %v7148
    %v8311 = vunpack.c.l.b16 %v7149
    %v8312 = vunpack.c.h.b16 %v7149
    %v8313 = vunpack.c.l.b16 %v7150
    %v8314 = vunpack.c.h.b16 %v7150
    %v8315 = vunpack.c.l.b16 %v7151
    %v8316 = vunpack.c.h.b16 %v7151
    %v8317 = vunpack.c.l.b16 %v7152
    %v8318 = vunpack.c.h.b16 %v7152
    %v8319 = vunpack.c.l.b16 %v7153
    %v8320 = vunpack.c.h.b16 %v7153
    %v8321 = vunpack.c.l.b16 %v7154
    %v8322 = vunpack.c.h.b16 %v7154
    %v8323 = vunpack.c.l.b16 %v7155
    %v8324 = vunpack.c.h.b16 %v7155
    %v8325 = vunpack.c.l.b16 %v7156
    %v8326 = vunpack.c.h.b16 %v7156
    %v8327 = vunpack.c.l.b16 %v7157
    %v8328 = vunpack.c.h.b16 %v7157
    %v8329 = vunpack.c.l.b16 %v7158
    %v8330 = vunpack.c.h.b16 %v7158
    %v8331 = vunpack.c.l.b16 %v7159
    %v8332 = vunpack.c.h.b16 %v7159
    %v8333 = vunpack.c.l.b16 %v7160
    %v8334 = vunpack.c.h.b16 %v7160
    %v8335 = vunpack.c.l.b16 %v7161
    %v8336 = vunpack.c.h.b16 %v7161
    %v8337 = vunpack.c.l.b16 %v7162
    %v8338 = vunpack.c.h.b16 %v7162
    %v8339 = vunpack.c.l.b16 %v7163
    %v8340 = vunpack.c.h.b16 %v7163
    %v8341 = vunpack.c.l.b16 %v7164
    %v8342 = vunpack.c.h.b16 %v7164
    %v8343 = vunpack.c.l.b16 %v7165
    %v8344 = vunpack.c.h.b16 %v7165
    %v8345 = vunpack.c.l.b16 %v7166
    %v8346 = vunpack.c.h.b16 %v7166
    %v8347 = vunpack.c.l.b16 %v7167
    %v8348 = vunpack.c.h.b16 %v7167
    %v8349 = vunpack.c.l.b16 %v7168
    %v8350 = vunpack.c.h.b16 %v7168
    %v8351 = vunpack.c.l.b16 %v7169
    %v8352 = vunpack.c.h.b16 %v7169
    %v8353 = vunpack.c.l.b16 %v7170
    %v8354 = vunpack.c.h.b16 %v7170
    %v8355 = vunpack.c.l.b16 %v7171
    %v8356 = vunpack.c.h.b16 %v7171
    %v8357 = vunpack.c.l.b16 %v7172
    %v8358 = vunpack.c.h.b16 %v7172
    %v8359 = vunpack.c.l.b16 %v7173
    %v8360 = vunpack.c.h.b16 %v7173
    %v8361 = vunpack.c.l.b16 %v7174
    %v8362 = vunpack.c.h.b16 %v7174
    %v8363 = vunpack.c.l.b16 %v7175
    %v8364 = vunpack.c.h.b16 %v7175
    %v8365 = vunpack.c.l.b16 %v7176
    %v8366 = vunpack.c.h.b16 %v7176
    %v8367 = vunpack.c.l.b16 %v7177
    %v8368 = vunpack.c.h.b16 %v7177
    %v8369 = vunpack.c.l.b16 %v7178
    %v8370 = vunpack.c.h.b16 %v7178
    %v8371 = vunpack.c.l.b16 %v7179
    %v8372 = vunpack.c.h.b16 %v7179
    %v8373 = vunpack.c.l.b16 %v7180
    %v8374 = vunpack.c.h.b16 %v7180
    %v8375 = vunpack.c.l.b16 %v7181
    %v8376 = vunpack.c.h.b16 %v7181
    %v8377 = vunpack.c.l.b16 %v7182
    %v8378 = vunpack.c.h.b16 %v7182
    %v8379 = vunpack.c.l.b16 %v7183
    %v8380 = vunpack.c.h.b16 %v7183
    %v8381 = vunpack.c.l.b16 %v7184
    %v8382 = vunpack.c.h.b16 %v7184
    %v8383 = vunpack.c.l.b16 %v7185
    %v8384 = vunpack.c.h.b16 %v7185
    %v8385 = vunpack.c.l.b16 %v7186
    %v8386 = vunpack.c.h.b16 %v7186
    %v8387 = vunpack.c.l.b16 %v7187
    %v8388 = vunpack.c.h.b16 %v7187
    %v8389 = vunpack.c.l.b16 %v7188
    %v8390 = vunpack.c.h.b16 %v7188
    %v8391 = vunpack.c.l.b16 %v7189
    %v8392 = vunpack.c.h.b16 %v7189
    %v8393 = vunpack.c.l.b16 %v7190
    %v8394 = vunpack.c.h.b16 %v7190
    %v8395 = vunpack.c.l.b16 %v7191
    %v8396 = vunpack.c.h.b16 %v7191
    %v8397 = vunpack.c.l.b16 %v7192
    %v8398 = vunpack.c.h.b16 %v7192
    %v8399 = vunpack.c.l.b16 %v7193
    %v8400 = vunpack.c.h.b16 %v7193
    %v8401 = vunpack.c.l.b16 %v7194
    %v8402 = vunpack.c.h.b16 %v7194
    %v8403 = vunpack.c.l.b16 %v7195
    %v8404 = vunpack.c.h.b16 %v7195
    %v8405 = vunpack.c.l.b16 %v7196
    %v8406 = vunpack.c.h.b16 %v7196
    %v8407 = vunpack.c.l.b16 %v7197
    %v8408 = vunpack.c.h.b16 %v7197
    %v8409 = vunpack.c.l.b16 %v7198
    %v8410 = vunpack.c.h.b16 %v7198
    %v8411 = vunpack.c.l.b16 %v7199
    %v8412 = vunpack.c.h.b16 %v7199
    %v8413 = vunpack.c.l.b16 %v7200
    %v8414 = vunpack.c.h.b16 %v7200
    %v8415 = vunpack.c.l.b16 %v7201
    %v8416 = vunpack.c.h.b16 %v7201
    %v8417 = vunpack.c.l.b16 %v7202
    %v8418 = vunpack.c.h.b16 %v7202
    %v8419 = vunpack.c.l.b16 %v7203
    %v8420 = vunpack.c.h.b16 %v7203
    %v8421 = vunpack.c.l.b16 %v7204
    %v8422 = vunpack.c.h.b16 %v7204
    %v8423 = vunpack.c.l.b16 %v7205
    %v8424 = vunpack.c.h.b16 %v7205
    %v8425 = vunpack.c.l.b16 %v7206
    %v8426 = vunpack.c.h.b16 %v7206
    %v8427 = vunpack.c.l.b16 %v7207
    %v8428 = vunpack.c.h.b16 %v7207
    %v8429 = vunpack.c.l.b16 %v7208
    %v8430 = vunpack.c.h.b16 %v7208
    %v8431 = vunpack.c.l.b16 %v7209
    %v8432 = vunpack.c.h.b16 %v7209
    %v8433 = vunpack.c.l.b16 %v7210
    %v8434 = vunpack.c.h.b16 %v7210
    %v8435 = vunpack.c.l.b16 %v7211
    %v8436 = vunpack.c.h.b16 %v7211
    %v8437 = vunpack.c.l.b16 %v7212
    %v8438 = vunpack.c.h.b16 %v7212
    %v8439 = vunpack.c.l.b16 %v7213
    %v8440 = vunpack.c.h.b16 %v7213
    %v8441 = vunpack.c.l.b16 %v7214
    %v8442 = vunpack.c.h.b16 %v7214
    %v8443 = vunpack.c.l.b16 %v7215
    %v8444 = vunpack.c.h.b16 %v7215
    %v8445 = vunpack.c.l.b16 %v7216
    %v8446 = vunpack.c.h.b16 %v7216
    %v8447 = vunpack.c.l.b16 %v7217
    %v8448 = vunpack.c.h.b16 %v7217
    %v8449 = vunpack.c.l.b16 %v7218
    %v8450 = vunpack.c.h.b16 %v7218
    %v8451 = vunpack.c.l.b16 %v7219
    %v8452 = vunpack.c.h.b16 %v7219
    %v8453 = vunpack.c.l.b16 %v7220
    %v8454 = vunpack.c.h.b16 %v7220
    %v8455 = vunpack.c.l.b16 %v7221
    %v8456 = vunpack.c.h.b16 %v7221
    %v8457 = vunpack.c.l.b16 %v7222
    %v8458 = vunpack.c.h.b16 %v7222
    %v8459 = vunpack.c.l.b16 %v7223
    %v8460 = vunpack.c.h.b16 %v7223
    %v8461 = vunpack.c.l.b16 %v7224
    %v8462 = vunpack.c.h.b16 %v7224
    %v8463 = vunpack.c.l.b16 %v7225
    %v8464 = vunpack.c.h.b16 %v7225
    %v8465 = vunpack.c.l.b16 %v7226
    %v8466 = vunpack.c.h.b16 %v7226
    %v8467 = vunpack.c.l.b16 %v7227
    %v8468 = vunpack.c.h.b16 %v7227
    %v8469 = vunpack.c.l.b16 %v7228
    %v8470 = vunpack.c.h.b16 %v7228
    %v8471 = vunpack.c.l.b16 %v7229
    %v8472 = vunpack.c.h.b16 %v7229
    %v8473 = vunpack.c.l.b16 %v7230
    %v8474 = vunpack.c.h.b16 %v7230
    %v8475 = vunpack.c.l.b16 %v7231
    %v8476 = vunpack.c.h.b16 %v7231
    %v8477 = vunpack.c.l.b16 %v7232
    %v8478 = vunpack.c.h.b16 %v7232
    %v8479 = vunpack.c.l.b16 %v7233
    %v8480 = vunpack.c.h.b16 %v7233
    %v8481 = vunpack.c.l.b16 %v7234
    %v8482 = vunpack.c.h.b16 %v7234
    %v8483 = vunpack.c.l.b16 %v7235
    %v8484 = vunpack.c.h.b16 %v7235
    %v8485 = vunpack.c.l.b16 %v7236
    %v8486 = vunpack.c.h.b16 %v7236
    %v8487 = vunpack.c.l.b16 %v7237
    %v8488 = vunpack.c.h.b16 %v7237
    %v8489 = vunpack.c.l.b16 %v7238
    %v8490 = vunpack.c.h.b16 %v7238
    %v8491 = vunpack.c.l.b16 %v7239
    %v8492 = vunpack.c.h.b16 %v7239
    %v8493 = vunpack.c.l.b16 %v7240
    %v8494 = vunpack.c.h.b16 %v7240
    %v8495 = vunpack.c.l.b16 %v7241
    %v8496 = vunpack.c.h.b16 %v7241
    %v8497 = vunpack.c.l.b16 %v7242
    %v8498 = vunpack.c.h.b16 %v7242
    %v8499 = vunpack.c.l.b16 %v7243
    %v8500 = vunpack.c.h.b16 %v7243
    %v8501 = vunpack.c.l.b16 %v7244
    %v8502 = vunpack.c.h.b16 %v7244
    %v8503 = vunpack.c.l.b16 %v7245
    %v8504 = vunpack.c.h.b16 %v7245
    %v8505 = vunpack.c.l.b16 %v7246
    %v8506 = vunpack.c.h.b16 %v7246
    %v8507 = vunpack.c.l.b16 %v7247
    %v8508 = vunpack.c.h.b16 %v7247
    %v8509 = vunpack.c.l.b16 %v7248
    %v8510 = vunpack.c.h.b16 %v7248
    %v8511 = vunpack.c.l.b16 %v7249
    %v8512 = vunpack.c.h.b16 %v7249
    %v8513 = vunpack.c.l.b16 %v7250
    %v8514 = vunpack.c.h.b16 %v7250
    %v8515 = vunpack.c.l.b16 %v7251
    %v8516 = vunpack.c.h.b16 %v7251
    %v8517 = vunpack.c.l.b16 %v7252
    %v8518 = vunpack.c.h.b16 %v7252
    %v8519 = vunpack.c.l.b16 %v7253
    %v8520 = vunpack.c.h.b16 %v7253
    %v8521 = vunpack.c.l.b16 %v7254
    %v8522 = vunpack.c.h.b16 %v7254
    %v8523 = vunpack.c.l.b16 %v7255
    %v8524 = vunpack.c.h.b16 %v7255
    %v8525 = vunpack.c.l.b16 %v7256
    %v8526 = vunpack.c.h.b16 %v7256
    %v8527 = vunpack.c.l.b16 %v7257
    %v8528 = vunpack.c.h.b16 %v7257
    %v8529 = vunpack.c.l.b16 %v7258
    %v8530 = vunpack.c.h.b16 %v7258
    %v8531 = vunpack.c.l.b16 %v7259
    %v8532 = vunpack.c.h.b16 %v7259
    %v8533 = vunpack.c.l.b16 %v7260
    %v8534 = vunpack.c.h.b16 %v7260
    %v8535 = vunpack.c.l.b16 %v7261
    %v8536 = vunpack.c.h.b16 %v7261
    %v8537 = vunpack.c.l.b16 %v7262
    %v8538 = vunpack.c.h.b16 %v7262
    %v8539 = vunpack.c.l.b16 %v7263
    %v8540 = vunpack.c.h.b16 %v7263
    %v8541 = vunpack.c.l.b16 %v7264
    %v8542 = vunpack.c.h.b16 %v7264
    %v8543 = vunpack.c.l.b16 %v7265
    %v8544 = vunpack.c.h.b16 %v7265
    %v8545 = vunpack.c.l.b16 %v7266
    %v8546 = vunpack.c.h.b16 %v7266
    %v8547 = vunpack.c.l.b16 %v7267
    %v8548 = vunpack.c.h.b16 %v7267
    %v8549 = vunpack.c.l.b16 %v7268
    %v8550 = vunpack.c.h.b16 %v7268
    %v8551 = vunpack.c.l.b16 %v7269
    %v8552 = vunpack.c.h.b16 %v7269
    %v8553 = vunpack.c.l.b16 %v7270
    %v8554 = vunpack.c.h.b16 %v7270
    %v8555 = vunpack.c.l.b16 %v7271
    %v8556 = vunpack.c.h.b16 %v7271
    %v8557 = vunpack.c.l.b16 %v7272
    %v8558 = vunpack.c.h.b16 %v7272
    %v8559 = vunpack.c.l.b16 %v7273
    %v8560 = vunpack.c.h.b16 %v7273
    %v8561 = vunpack.c.l.b16 %v7274
    %v8562 = vunpack.c.h.b16 %v7274
    %v8563 = vunpack.c.l.b16 %v7275
    %v8564 = vunpack.c.h.b16 %v7275
    %v8565 = vunpack.c.l.b16 %v7276
    %v8566 = vunpack.c.h.b16 %v7276
    %v8567 = vunpack.c.l.b16 %v7277
    %v8568 = vunpack.c.h.b16 %v7277
    %v8569 = vunpack.c.l.b16 %v7278
    %v8570 = vunpack.c.h.b16 %v7278
    %v8571 = vunpack.c.l.b16 %v7279
    %v8572 = vunpack.c.h.b16 %v7279
    %v8573 = vunpack.c.l.b16 %v7280
    %v8574 = vunpack.c.h.b16 %v7280
    %v8575 = vunpack.c.l.b16 %v7281
    %v8576 = vunpack.c.h.b16 %v7281
    %v8577 = vunpack.c.l.b16 %v7282
    %v8578 = vunpack.c.h.b16 %v7282
    %v8579 = vunpack.c.l.b16 %v7283
    %v8580 = vunpack.c.h.b16 %v7283
    %v8581 = vunpack.c.l.b16 %v7284
    %v8582 = vunpack.c.h.b16 %v7284
    %v8583 = vunpack.c.l.b16 %v7285
    %v8584 = vunpack.c.h.b16 %v7285
    %v8585 = vunpack.c.l.b16 %v7286
    %v8586 = vunpack.c.h.b16 %v7286
    %v8587 = vunpack.c.l.b16 %v7287
    %v8588 = vunpack.c.h.b16 %v7287
    %v8589 = vunpack.c.l.b16 %v7288
    %v8590 = vunpack.c.h.b16 %v7288
    %v8591 = vunpack.c.l.b16 %v7289
    %v8592 = vunpack.c.h.b16 %v7289
    %v8593 = vunpack.c.l.b16 %v7290
    %v8594 = vunpack.c.h.b16 %v7290
    %v8595 = vunpack.c.l.b16 %v7291
    %v8596 = vunpack.c.h.b16 %v7291
    %v8597 = vunpack.c.l.b16 %v7292
    %v8598 = vunpack.c.h.b16 %v7292
    %v8599 = vunpack.c.l.b16 %v7293
    %v8600 = vunpack.c.h.b16 %v7293
    %v8601 = vunpack.c.l.b16 %v7294
    %v8602 = vunpack.c.h.b16 %v7294
    %v8603 = vunpack.c.l.b16 %v7295
    %v8604 = vunpack.c.h.b16 %v7295
    %v8605 = vunpack.c.l.b16 %v7296
    %v8606 = vunpack.c.h.b16 %v7296
    %v8607 = vunpack.c.l.b16 %v7297
    %v8608 = vunpack.c.h.b16 %v7297
    %v8609 = vunpack.c.l.b16 %v7298
    %v8610 = vunpack.c.h.b16 %v7298
    %v8611 = vunpack.c.l.b16 %v7299
    %v8612 = vunpack.c.h.b16 %v7299
    %v8613 = vunpack.c.l.b16 %v7300
    %v8614 = vunpack.c.h.b16 %v7300
    %v8615 = vunpack.c.l.b16 %v7301
    %v8616 = vunpack.c.h.b16 %v7301
    %v8617 = vunpack.c.l.b16 %v7302
    %v8618 = vunpack.c.h.b16 %v7302
    %v8619 = vunpack.c.l.b16 %v7303
    %v8620 = vunpack.c.h.b16 %v7303
    %v8621 = vunpack.c.l.b16 %v7304
    %v8622 = vunpack.c.h.b16 %v7304
    %v8623 = vunpack.c.l.b16 %v7305
    %v8624 = vunpack.c.h.b16 %v7305
    %v8625 = vunpack.c.l.b16 %v7306
    %v8626 = vunpack.c.h.b16 %v7306
    %v8627 = vunpack.c.l.b16 %v7307
    %v8628 = vunpack.c.h.b16 %v7307
    %v8629 = vunpack.c.l.b16 %v7308
    %v8630 = vunpack.c.h.b16 %v7308
    %v8631 = vunpack.c.l.b16 %v7309
    %v8632 = vunpack.c.h.b16 %v7309
    %v8633 = vunpack.c.l.b16 %v7310
    %v8634 = vunpack.c.h.b16 %v7310
    %v8635 = vunpack.c.l.b16 %v7311
    %v8636 = vunpack.c.h.b16 %v7311
    %v8637 = vunpack.c.l.b16 %v7312
    %v8638 = vunpack.c.h.b16 %v7312
    %v8639 = vunpack.c.l.b16 %v7313
    %v8640 = vunpack.c.h.b16 %v7313
    %v8641 = vunpack.c.l.b16 %v7314
    %v8642 = vunpack.c.h.b16 %v7314
    %v8643 = vunpack.c.l.b16 %v7315
    %v8644 = vunpack.c.h.b16 %v7315
    %v8645 = vunpack.c.l.b16 %v7316
    %v8646 = vunpack.c.h.b16 %v7316
    %v8647 = vunpack.c.l.b16 %v7317
    %v8648 = vunpack.c.h.b16 %v7317
    %v8649 = vunpack.c.l.b16 %v7318
    %v8650 = vunpack.c.h.b16 %v7318
    %v8651 = vunpack.c.l.b16 %v7319
    %v8652 = vunpack.c.h.b16 %v7319
    %v8653 = vunpack.c.l.b16 %v7320
    %v8654 = vunpack.c.h.b16 %v7320
    %v8655 = vunpack.c.l.b16 %v7321
    %v8656 = vunpack.c.h.b16 %v7321
    %v8657 = vunpack.c.l.b16 %v7322
    %v8658 = vunpack.c.h.b16 %v7322
    %v8659 = vunpack.c.l.b16 %v7323
    %v8660 = vunpack.c.h.b16 %v7323
    %v8661 = vunpack.c.l.b16 %v7324
    %v8662 = vunpack.c.h.b16 %v7324
    %v8663 = vunpack.c.l.b16 %v7325
    %v8664 = vunpack.c.h.b16 %v7325
    %v8665 = vunpack.c.l.b16 %v7326
    %v8666 = vunpack.c.h.b16 %v7326
    %v8667 = vunpack.c.l.b16 %v7327
    %v8668 = vunpack.c.h.b16 %v7327
    %v8669 = vunpack.c.l.b16 %v7328
    %v8670 = vunpack.c.h.b16 %v7328
    %v8671 = vunpack.c.l.b16 %v7329
    %v8672 = vunpack.c.h.b16 %v7329
    %v8673 = vunpack.c.l.b16 %v7330
    %v8674 = vunpack.c.h.b16 %v7330
    %v8675 = vunpack.c.l.b16 %v7331
    %v8676 = vunpack.c.h.b16 %v7331
    %v8677 = vunpack.c.l.b16 %v7332
    %v8678 = vunpack.c.h.b16 %v7332
    %v8679 = vunpack.c.l.b16 %v7333
    %v8680 = vunpack.c.h.b16 %v7333
    %v8681 = vunpack.c.l.b16 %v7334
    %v8682 = vunpack.c.h.b16 %v7334
    %v8683 = vunpack.c.l.b16 %v7335
    %v8684 = vunpack.c.h.b16 %v7335
    %v8685 = vunpack.c.l.b16 %v7336
    %v8686 = vunpack.c.h.b16 %v7336
    %v8687 = vunpack.c.l.b16 %v7337
    %v8688 = vunpack.c.h.b16 %v7337
    %v8689 = vunpack.c.l.b16 %v7338
    %v8690 = vunpack.c.h.b16 %v7338
    %v8691 = vunpack.c.l.b16 %v7339
    %v8692 = vunpack.c.h.b16 %v7339
    %v8693 = vunpack.c.l.b16 %v7340
    %v8694 = vunpack.c.h.b16 %v7340
    %v8695 = vunpack.c.l.b16 %v7341
    %v8696 = vunpack.c.h.b16 %v7341
    %v8697 = vunpack.c.l.b16 %v7342
    %v8698 = vunpack.c.h.b16 %v7342
    %v8699 = vunpack.c.l.b16 %v7343
    %v8700 = vunpack.c.h.b16 %v7343
    %v8701 = vunpack.c.l.b16 %v7344
    %v8702 = vunpack.c.h.b16 %v7344
    %v8703 = vunpack.c.l.b16 %v7345
    %v8704 = vunpack.c.h.b16 %v7345
    %v8705 = vunpack.c.l.b16 %v7346
    %v8706 = vunpack.c.h.b16 %v7346
    %v8707 = vunpack.c.l.b16 %v7347
    %v8708 = vunpack.c.h.b16 %v7347
    %v8709 = vunpack.c.l.b16 %v7348
    %v8710 = vunpack.c.h.b16 %v7348
    %v8711 = vunpack.c.l.b16 %v7349
    %v8712 = vunpack.c.h.b16 %v7349
    %v8713 = vunpack.c.l.b16 %v7350
    %v8714 = vunpack.c.h.b16 %v7350
    %v8715 = vunpack.c.l.b16 %v7351
    %v8716 = vunpack.c.h.b16 %v7351
    %v8717 = vunpack.c.l.b16 %v7352
    %v8718 = vunpack.c.h.b16 %v7352
    %v8719 = vunpack.c.l.b16 %v7353
    %v8720 = vunpack.c.h.b16 %v7353
    %v8721 = vunpack.c.l.b16 %v7354
    %v8722 = vunpack.c.h.b16 %v7354
    %v8723 = vunpack.c.l.b16 %v7355
    %v8724 = vunpack.c.h.b16 %v7355
    %v8725 = vunpack.c.l.b16 %v7356
    %v8726 = vunpack.c.h.b16 %v7356
    %v8727 = vunpack.c.l.b16 %v7357
    %v8728 = vunpack.c.h.b16 %v7357
    %v8729 = vunpack.c.l.b16 %v7358
    %v8730 = vunpack.c.h.b16 %v7358
    %v8731 = vunpack.c.l.b16 %v7359
    %v8732 = vunpack.c.h.b16 %v7359
    %v8733 = vunpack.c.l.b16 %v7360
    %v8734 = vunpack.c.h.b16 %v7360
    %v8735 = vunpack.c.l.b16 %v7361
    %v8736 = vunpack.c.h.b16 %v7361
    %v8737 = vunpack.c.l.b16 %v7362
    %v8738 = vunpack.c.h.b16 %v7362
    %v8739 = vunpack.c.l.b16 %v7363
    %v8740 = vunpack.c.h.b16 %v7363
    %v8741 = vunpack.c.l.b16 %v7364
    %v8742 = vunpack.c.h.b16 %v7364
    %v8743 = vunpack.c.l.b16 %v7365
    %v8744 = vunpack.c.h.b16 %v7365
    %v8745 = vunpack.c.l.b16 %v7366
    %v8746 = vunpack.c.h.b16 %v7366
    %v8747 = vunpack.c.l.b16 %v7367
    %v8748 = vunpack.c.h.b16 %v7367
    %v8749 = vunpack.c.l.b16 %v7368
    %v8750 = vunpack.c.h.b16 %v7368
    %v8751 = vunpack.c.l.b16 %v7369
    %v8752 = vunpack.c.h.b16 %v7369
    %v8753 = vunpack.c.l.b16 %v7370
    %v8754 = vunpack.c.h.b16 %v7370
    %v8755 = vunpack.c.l.b16 %v7371
    %v8756 = vunpack.c.h.b16 %v7371
    %v8757 = vunpack.c.l.b16 %v7372
    %v8758 = vunpack.c.h.b16 %v7372
    %v8759 = vunpack.c.l.b16 %v7373
    %v8760 = vunpack.c.h.b16 %v7373
    %v8761 = vunpack.c.l.b16 %v7374
    %v8762 = vunpack.c.h.b16 %v7374
    %v8763 = vunpack.c.l.b16 %v7375
    %v8764 = vunpack.c.h.b16 %v7375
    %v8765 = vunpack.c.l.b16 %v7376
    %v8766 = vunpack.c.h.b16 %v7376
    %v8767 = vunpack.c.l.b16 %v7377
    %v8768 = vunpack.c.h.b16 %v7377
    %v8769 = vunpack.c.l.b16 %v7378
    %v8770 = vunpack.c.h.b16 %v7378
    %v8771 = vunpack.c.l.b16 %v7379
    %v8772 = vunpack.c.h.b16 %v7379
    %v8773 = vunpack.c.l.b16 %v7380
    %v8774 = vunpack.c.h.b16 %v7380
    %v8775 = vunpack.c.l.b16 %v7381
    %v8776 = vunpack.c.h.b16 %v7381
    %v8777 = vunpack.c.l.b16 %v7382
    %v8778 = vunpack.c.h.b16 %v7382
    %v8779 = vunpack.c.l.b16 %v7383
    %v8780 = vunpack.c.h.b16 %v7383
    %v8781 = vunpack.c.l.b16 %v7384
    %v8782 = vunpack.c.h.b16 %v7384
    %v8783 = vunpack.c.l.b16 %v7385
    %v8784 = vunpack.c.h.b16 %v7385
    %v8785 = vunpack.c.l.b16 %v7386
    %v8786 = vunpack.c.h.b16 %v7386
    %v8787 = vunpack.c.l.b16 %v7387
    %v8788 = vunpack.c.h.b16 %v7387
    %v8789 = vunpack.c.l.b16 %v7388
    %v8790 = vunpack.c.h.b16 %v7388
    %v8791 = vunpack.c.l.b16 %v7389
    %v8792 = vunpack.c.h.b16 %v7389
    %v8793 = vunpack.c.l.b16 %v7390
    %v8794 = vunpack.c.h.b16 %v7390
    %v8795 = vunpack.c.l.b16 %v7391
    %v8796 = vunpack.c.h.b16 %v7391
    %v8797 = vunpack.c.l.b16 %v7392
    %v8798 = vunpack.c.h.b16 %v7392
    %v8799 = vunpack.c.l.b16 %v7393
    %v8800 = vunpack.c.h.b16 %v7393
    %v8801 = vunpack.c.l.b16 %v7394
    %v8802 = vunpack.c.h.b16 %v7394
    %v8803 = vunpack.c.l.b16 %v7395
    %v8804 = vunpack.c.h.b16 %v7395
    %v8805 = vunpack.c.l.b16 %v7396
    %v8806 = vunpack.c.h.b16 %v7396
    %v8807 = vunpack.c.l.b16 %v7397
    %v8808 = vunpack.c.h.b16 %v7397
    %v8809 = vunpack.c.l.b16 %v7398
    %v8810 = vunpack.c.h.b16 %v7398
    %v8811 = vunpack.c.l.b16 %v7399
    %v8812 = vunpack.c.h.b16 %v7399
    %v8813 = vunpack.c.l.b16 %v7400
    %v8814 = vunpack.c.h.b16 %v7400
    %v8815 = vunpack.c.l.b16 %v7401
    %v8816 = vunpack.c.h.b16 %v7401
    %v8817 = vunpack.c.l.b16 %v7402
    %v8818 = vunpack.c.h.b16 %v7402
    %v8819 = vunpack.c.l.b16 %v7403
    %v8820 = vunpack.c.h.b16 %v7403
    %v8821 = vunpack.c.l.b16 %v7404
    %v8822 = vunpack.c.h.b16 %v7404
    %v8823 = vunpack.c.l.b16 %v7405
    %v8824 = vunpack.c.h.b16 %v7405
    %v8825 = vunpack.c.l.b16 %v7406
    %v8826 = vunpack.c.h.b16 %v7406
    %v8827 = vunpack.c.l.b16 %v7407
    %v8828 = vunpack.c.h.b16 %v7407
    %v8829 = vunpack.c.l.b16 %v7408
    %v8830 = vunpack.c.h.b16 %v7408
    %v8831 = vunpack.c.l.b16 %v7409
    %v8832 = vunpack.c.h.b16 %v7409
    %v8833 = vunpack.c.l.b16 %v7410
    %v8834 = vunpack.c.h.b16 %v7410
    %v8835 = vunpack.c.l.b16 %v7411
    %v8836 = vunpack.c.h.b16 %v7411
    %v8837 = vunpack.c.l.b16 %v7412
    %v8838 = vunpack.c.h.b16 %v7412
    %v8839 = vunpack.c.l.b16 %v7413
    %v8840 = vunpack.c.h.b16 %v7413
    %v8841 = vunpack.c.l.b16 %v7414
    %v8842 = vunpack.c.h.b16 %v7414
    %v8843 = vunpack.c.l.b16 %v7415
    %v8844 = vunpack.c.h.b16 %v7415
    %v8845 = vunpack.c.l.b16 %v7416
    %v8846 = vunpack.c.h.b16 %v7416
    %v8847 = vunpack.c.l.b16 %v7417
    %v8848 = vunpack.c.h.b16 %v7417
    %v8849 = vunpack.c.l.b16 %v7418
    %v8850 = vunpack.c.h.b16 %v7418
    %v8851 = vunpack.c.l.b16 %v7419
    %v8852 = vunpack.c.h.b16 %v7419
    %v8853 = vunpack.c.l.b16 %v7420
    %v8854 = vunpack.c.h.b16 %v7420
    %v8855 = vunpack.c.l.b16 %v7421
    %v8856 = vunpack.c.h.b16 %v7421
    %v8857 = vunpack.c.l.b16 %v7422
    %v8858 = vunpack.c.h.b16 %v7422
    %v8859 = vunpack.c.l.b16 %v7423
    %v8860 = vunpack.c.h.b16 %v7423
    %v8861 = vunpack.c.l.b16 %v7424
    %v8862 = vunpack.c.h.b16 %v7424
    %v8863 = vunpack.c.l.b16 %v7425
    %v8864 = vunpack.c.h.b16 %v7425
    %v8865 = vunpack.c.l.b16 %v7426
    %v8866 = vunpack.c.h.b16 %v7426
    %v8867 = vunpack.c.l.b16 %v7427
    %v8868 = vunpack.c.h.b16 %v7427
    %v8869 = vunpack.c.l.b16 %v7428
    %v8870 = vunpack.c.h.b16 %v7428
    %v8871 = vunpack.c.l.b16 %v7429
    %v8872 = vunpack.c.h.b16 %v7429
    %v8873 = vunpack.c.l.b16 %v7430
    %v8874 = vunpack.c.h.b16 %v7430
    %v8875 = vunpack.c.l.b16 %v7431
    %v8876 = vunpack.c.h.b16 %v7431
    %v8877 = vunpack.c.l.b16 %v7432
    %v8878 = vunpack.c.h.b16 %v7432
    %v8879 = vunpack.c.l.b16 %v7433
    %v8880 = vunpack.c.h.b16 %v7433
    %v8881 = vunpack.c.l.b16 %v7434
    %v8882 = vunpack.c.h.b16 %v7434
    %v8883 = vunpack.c.l.b16 %v7435
    %v8884 = vunpack.c.h.b16 %v7435
    %v8885 = vunpack.c.l.b16 %v7436
    %v8886 = vunpack.c.h.b16 %v7436
    %v8887 = vunpack.c.l.b16 %v7437
    %v8888 = vunpack.c.h.b16 %v7437
    %v8889 = vunpack.c.l.b16 %v7438
    %v8890 = vunpack.c.h.b16 %v7438
    %v8891 = vunpack.c.l.b16 %v7439
    %v8892 = vunpack.c.h.b16 %v7439
    %v8893 = vunpack.c.l.b16 %v7440
    %v8894 = vunpack.c.h.b16 %v7440
    %v8895 = vunpack.c.l.b16 %v7441
    %v8896 = vunpack.c.h.b16 %v7441
    %v8897 = vunpack.c.l.b16 %v7442
    %v8898 = vunpack.c.h.b16 %v7442
    %v8899 = vunpack.c.l.b16 %v7443
    %v8900 = vunpack.c.h.b16 %v7443
    %v8901 = vunpack.c.l.b16 %v7444
    %v8902 = vunpack.c.h.b16 %v7444
    %v8903 = vunpack.c.l.b16 %v7445
    %v8904 = vunpack.c.h.b16 %v7445
    %v8905 = vunpack.c.l.b16 %v7446
    %v8906 = vunpack.c.h.b16 %v7446
    %v8907 = vunpack.c.l.b16 %v7447
    %v8908 = vunpack.c.h.b16 %v7447
    %v8909 = vunpack.c.l.b16 %v7448
    %v8910 = vunpack.c.h.b16 %v7448
    %v8911 = vunpack.c.l.b16 %v7449
    %v8912 = vunpack.c.h.b16 %v7449
    %v8913 = vunpack.c.l.b16 %v7450
    %v8914 = vunpack.c.h.b16 %v7450
    %v8915 = vunpack.c.l.b16 %v7451
    %v8916 = vunpack.c.h.b16 %v7451
    %v8917 = vunpack.c.l.b16 %v7452
    %v8918 = vunpack.c.h.b16 %v7452
    %v8919 = vunpack.c.l.b16 %v7453
    %v8920 = vunpack.c.h.b16 %v7453
    %v8921 = vunpack.c.l.b16 %v7454
    %v8922 = vunpack.c.h.b16 %v7454
    %v8923 = vunpack.c.l.b16 %v7455
    %v8924 = vunpack.c.h.b16 %v7455
    %v8925 = vunpack.c.l.b16 %v7456
    %v8926 = vunpack.c.h.b16 %v7456
    %v8927 = vunpack.c.l.b16 %v7457
    %v8928 = vunpack.c.h.b16 %v7457
    %v8929 = vunpack.c.l.b16 %v7458
    %v8930 = vunpack.c.h.b16 %v7458
    %v8931 = vunpack.c.l.b16 %v7459
    %v8932 = vunpack.c.h.b16 %v7459
    %v8933 = vunpack.c.l.b16 %v7460
    %v8934 = vunpack.c.h.b16 %v7460
    %v8935 = vunpack.c.l.b16 %v7461
    %v8936 = vunpack.c.h.b16 %v7461
    %v8937 = vunpack.c.l.b16 %v7462
    %v8938 = vunpack.c.h.b16 %v7462
    %v8939 = vunpack.c.l.b16 %v7463
    %v8940 = vunpack.c.h.b16 %v7463
    %v8941 = vunpack.c.l.b16 %v7464
    %v8942 = vunpack.c.h.b16 %v7464
    %v8943 = vunpack.c.l.b16 %v7465
    %v8944 = vunpack.c.h.b16 %v7465
    %v8945 = vunpack.c.l.b16 %v7466
    %v8946 = vunpack.c.h.b16 %v7466
    %v8947 = vunpack.c.l.b16 %v7467
    %v8948 = vunpack.c.h.b16 %v7467
    %v8949 = vunpack.c.l.b16 %v7468
    %v8950 = vunpack.c.h.b16 %v7468
    %v8951 = vunpack.c.l.b16 %v7469
    %v8952 = vunpack.c.h.b16 %v7469
    %v8953 = vunpack.c.l.b16 %v7470
    %v8954 = vunpack.c.h.b16 %v7470
    %v8955 = vunpack.c.l.b16 %v7471
    %v8956 = vunpack.c.h.b16 %v7471
    %v8957 = vunpack.c.l.b16 %v7472
    %v8958 = vunpack.c.h.b16 %v7472
    %v8959 = vunpack.c.l.b16 %v7473
    %v8960 = vunpack.c.h.b16 %v7473
    %v8961 = vunpack.c.l.b16 %v7474
    %v8962 = vunpack.c.h.b16 %v7474
    %v8963 = vunpack.c.l.b16 %v7475
    %v8964 = vunpack.c.h.b16 %v7475
    %v8965 = vunpack.c.l.b16 %v7476
    %v8966 = vunpack.c.h.b16 %v7476
    %v8967 = vunpack.c.l.b16 %v7477
    %v8968 = vunpack.c.h.b16 %v7477
    %v8969 = vunpack.c.l.b16 %v7478
    %v8970 = vunpack.c.h.b16 %v7478
    %v8971 = vunpack.c.l.b16 %v7479
    %v8972 = vunpack.c.h.b16 %v7479
    %v8973 = vunpack.c.l.b16 %v7480
    %v8974 = vunpack.c.h.b16 %v7480
    %v8975 = vunpack.c.l.b16 %v7481
    %v8976 = vunpack.c.h.b16 %v7481
    %v8977 = vunpack.c.l.b16 %v7482
    %v8978 = vunpack.c.h.b16 %v7482
    %v8979 = vunpack.c.l.b16 %v7483
    %v8980 = vunpack.c.h.b16 %v7483
    %v8981 = vunpack.c.l.b16 %v7484
    %v8982 = vunpack.c.h.b16 %v7484
    %v8983 = vunpack.c.l.b16 %v7485
    %v8984 = vunpack.c.h.b16 %v7485
    %v8985 = vunpack.c.l.b16 %v7486
    %v8986 = vunpack.c.h.b16 %v7486
    %v8987 = vunpack.c.l.b16 %v7487
    %v8988 = vunpack.c.h.b16 %v7487
    %v8989 = vunpack.c.l.b16 %v7488
    %v8990 = vunpack.c.h.b16 %v7488
    %v8991 = vunpack.c.l.b16 %v7489
    %v8992 = vunpack.c.h.b16 %v7489
    %v8993 = vunpack.c.l.b16 %v7490
    %v8994 = vunpack.c.h.b16 %v7490
    %v8995 = vunpack.c.l.b16 %v7491
    %v8996 = vunpack.c.h.b16 %v7491
    %v8997 = vunpack.c.l.b16 %v7492
    %v8998 = vunpack.c.h.b16 %v7492
    %v8999 = vunpack.c.l.b16 %v7493
    %v9000 = vunpack.c.h.b16 %v7493
    %v9001 = vunpack.c.l.b16 %v7494
    %v9002 = vunpack.c.h.b16 %v7494
    %v9003 = vunpack.c.l.b16 %v7495
    %v9004 = vunpack.c.h.b16 %v7495
    %v9005 = vunpack.c.l.b16 %v7496
    %v9006 = vunpack.c.h.b16 %v7496
    %v9007 = vunpack.c.l.b16 %v7497
    %v9008 = vunpack.c.h.b16 %v7497
    %v9009 = vunpack.c.l.b16 %v7498
    %v9010 = vunpack.c.h.b16 %v7498
    %v9011 = vunpack.c.l.b16 %v7499
    %v9012 = vunpack.c.h.b16 %v7499
    %v9013 = vunpack.c.l.b16 %v7500
    %v9014 = vunpack.c.h.b16 %v7500
    %v9015 = vunpack.c.l.b16 %v7501
    %v9016 = vunpack.c.h.b16 %v7501
    %v9017 = vunpack.c.l.b16 %v7502
    %v9018 = vunpack.c.h.b16 %v7502
    %v9019 = vunpack.c.l.b16 %v7503
    %v9020 = vunpack.c.h.b16 %v7503
    %v9021 = vunpack.c.l.b16 %v7504
    %v9022 = vunpack.c.h.b16 %v7504
    %v9023 = vunpack.c.l.b16 %v7505
    %v9024 = vunpack.c.h.b16 %v7505
    %v9025 = vunpack.c.l.b16 %v7506
    %v9026 = vunpack.c.h.b16 %v7506
    %v9027 = vunpack.c.l.b16 %v7507
    %v9028 = vunpack.c.h.b16 %v7507
    %v9029 = vunpack.c.l.b16 %v7508
    %v9030 = vunpack.c.h.b16 %v7508
    %v9031 = vunpack.c.l.b16 %v7509
    %v9032 = vunpack.c.h.b16 %v7509
    %v9033 = vunpack.c.l.b16 %v7510
    %v9034 = vunpack.c.h.b16 %v7510
    %v9035 = vunpack.c.l.b16 %v7511
    %v9036 = vunpack.c.h.b16 %v7511
    %v9037 = vunpack.c.l.b16 %v7512
    %v9038 = vunpack.c.h.b16 %v7512
    %v9039 = vunpack.c.l.b16 %v7513
    %v9040 = vunpack.c.h.b16 %v7513
    %v9041 = vunpack.c.l.b16 %v7514
    %v9042 = vunpack.c.h.b16 %v7514
    %v9043 = vunpack.c.l.b16 %v7515
    %v9044 = vunpack.c.h.b16 %v7515
    %v9045 = vunpack.c.l.b16 %v7516
    %v9046 = vunpack.c.h.b16 %v7516
    %v9047 = vunpack.c.l.b16 %v7517
    %v9048 = vunpack.c.h.b16 %v7517
    %v9049 = vunpack.c.l.b16 %v7518
    %v9050 = vunpack.c.h.b16 %v7518
    %v9051 = vunpack.c.l.b16 %v7519
    %v9052 = vunpack.c.h.b16 %v7519
    %v9053 = vunpack.c.l.b16 %v7520
    %v9054 = vunpack.c.h.b16 %v7520
    %v9055 = vunpack.c.l.b16 %v7521
    %v9056 = vunpack.c.h.b16 %v7521
    %v9057 = vunpack.c.l.b16 %v7522
    %v9058 = vunpack.c.h.b16 %v7522
    %v9059 = vunpack.c.l.b16 %v7523
    %v9060 = vunpack.c.h.b16 %v7523
    %v9061 = vunpack.c.l.b16 %v7524
    %v9062 = vunpack.c.h.b16 %v7524
    %v9063 = vunpack.c.l.b16 %v7525
    %v9064 = vunpack.c.h.b16 %v7525
    %v9065 = vunpack.c.l.b16 %v7526
    %v9066 = vunpack.c.h.b16 %v7526
    %v9067 = vunpack.c.l.b16 %v7527
    %v9068 = vunpack.c.h.b16 %v7527
    %v9069 = vunpack.c.l.b16 %v7528
    %v9070 = vunpack.c.h.b16 %v7528
    %v9071 = vunpack.c.l.b16 %v7529
    %v9072 = vunpack.c.h.b16 %v7529
    %v9073 = vunpack.c.l.b16 %v7530
    %v9074 = vunpack.c.h.b16 %v7530
    %v9075 = vunpack.c.l.b16 %v7531
    %v9076 = vunpack.c.h.b16 %v7531
    %v9077 = vunpack.c.l.b16 %v7532
    %v9078 = vunpack.c.h.b16 %v7532
    %v9079 = vunpack.c.l.b16 %v7533
    %v9080 = vunpack.c.h.b16 %v7533
    %v9081 = vunpack.c.l.b16 %v7534
    %v9082 = vunpack.c.h.b16 %v7534
    %v9083 = vunpack.c.l.b16 %v7535
    %v9084 = vunpack.c.h.b16 %v7535
    %v9085 = vunpack.c.l.b16 %v7536
    %v9086 = vunpack.c.h.b16 %v7536
    %v9087 = vunpack.c.l.b16 %v7537
    %v9088 = vunpack.c.h.b16 %v7537
    %v9089 = vunpack.c.l.b16 %v7538
    %v9090 = vunpack.c.h.b16 %v7538
    %v9091 = vunpack.c.l.b16 %v7539
    %v9092 = vunpack.c.h.b16 %v7539
    %v9093 = vunpack.c.l.b16 %v7540
    %v9094 = vunpack.c.h.b16 %v7540
    %v9095 = vunpack.c.l.b16 %v7541
    %v9096 = vunpack.c.h.b16 %v7541
    %v9097 = vunpack.c.l.b16 %v7542
    %v9098 = vunpack.c.h.b16 %v7542
    %v9099 = vunpack.c.l.b16 %v7543
    %v9100 = vunpack.c.h.b16 %v7543
    %v9101 = vunpack.c.l.b16 %v7544
    %v9102 = vunpack.c.h.b16 %v7544
    %v9103 = vpack.c.b16 %v8083, %v8079
    %v9104 = vpack.c.b16 %v8084, %v8080
    %v9105 = vpack.c.b16 %v8085, %v8081
    %v9106 = vpack.c.b16 %v8086, %v8082
    %v9107 = vpack.c.b16 %v8091, %v8087
    %v9108 = vpack.c.b16 %v8092, %v8088
    %v9109 = vpack.c.b16 %v8093, %v8089
    %v9110 = vpack.c.b16 %v8094, %v8090
    %v9111 = vpack.c.b16 %v8099, %v8095
    %v9112 = vpack.c.b16 %v8100, %v8096
    %v9113 = vpack.c.b16 %v8101, %v8097
    %v9114 = vpack.c.b16 %v8102, %v8098
    %v9115 = vpack.c.b16 %v8107, %v8103
    %v9116 = vpack.c.b16 %v8108, %v8104
    %v9117 = vpack.c.b16 %v8109, %v8105
    %v9118 = vpack.c.b16 %v8110, %v8106
    %v9119 = vpack.c.b16 %v8115, %v8111
    %v9120 = vpack.c.b16 %v8116, %v8112
    %v9121 = vpack.c.b16 %v8117, %v8113
    %v9122 = vpack.c.b16 %v8118, %v8114
    %v9123 = vpack.c.b16 %v8123, %v8119
    %v9124 = vpack.c.b16 %v8124, %v8120
    %v9125 = vpack.c.b16 %v8125, %v8121
    %v9126 = vpack.c.b16 %v8126, %v8122
    %v9127 = vpack.c.b16 %v8131, %v8127
    %v9128 = vpack.c.b16 %v8132, %v8128
    %v9129 = vpack.c.b16 %v8133, %v8129
    %v9130 = vpack.c.b16 %v8134, %v8130
    %v9131 = vpack.c.b16 %v8139, %v8135
    %v9132 = vpack.c.b16 %v8140, %v8136
    %v9133 = vpack.c.b16 %v8141, %v8137
    %v9134 = vpack.c.b16 %v8142, %v8138
    %v9135 = vpack.c.b16 %v8147, %v8143
    %v9136 = vpack.c.b16 %v8148, %v8144
    %v9137 = vpack.c.b16 %v8149, %v8145
    %v9138 = vpack.c.b16 %v8150, %v8146
    %v9139 = vpack.c.b16 %v8155, %v8151
    %v9140 = vpack.c.b16 %v8156, %v8152
    %v9141 = vpack.c.b16 %v8157, %v8153
    %v9142 = vpack.c.b16 %v8158, %v8154
    %v9143 = vpack.c.b16 %v8163, %v8159
    %v9144 = vpack.c.b16 %v8164, %v8160
    %v9145 = vpack.c.b16 %v8165, %v8161
    %v9146 = vpack.c.b16 %v8166, %v8162
    %v9147 = vpack.c.b16 %v8171, %v8167
    %v9148 = vpack.c.b16 %v8172, %v8168
    %v9149 = vpack.c.b16 %v8173, %v8169
    %v9150 = vpack.c.b16 %v8174, %v8170
    %v9151 = vpack.c.b16 %v8179, %v8175
    %v9152 = vpack.c.b16 %v8180, %v8176
    %v9153 = vpack.c.b16 %v8181, %v8177
    %v9154 = vpack.c.b16 %v8182, %v8178
    %v9155 = vpack.c.b16 %v8187, %v8183
    %v9156 = vpack.c.b16 %v8188, %v8184
    %v9157 = vpack.c.b16 %v8189, %v8185
    %v9158 = vpack.c.b16 %v8190, %v8186
    %v9159 = vpack.c.b16 %v8195, %v8191
    %v9160 = vpack.c.b16 %v8196, %v8192
    %v9161 = vpack.c.b16 %v8197, %v8193
    %v9162 = vpack.c.b16 %v8198, %v8194
    %v9163 = vpack.c.b16 %v8203, %v8199
    %v9164 = vpack.c.b16 %v8204, %v8200
    %v9165 = vpack.c.b16 %v8205, %v8201
    %v9166 = vpack.c.b16 %v8206, %v8202
    %v9167 = vpack.c.b16 %v8211, %v8207
    %v9168 = vpack.c.b16 %v8212, %v8208
    %v9169 = vpack.c.b16 %v8213, %v8209
    %v9170 = vpack.c.b16 %v8214, %v8210
    %v9171 = vpack.c.b16 %v8219, %v8215
    %v9172 = vpack.c.b16 %v8220, %v8216
    %v9173 = vpack.c.b16 %v8221, %v8217
    %v9174 = vpack.c.b16 %v8222, %v8218
    %v9175 = vpack.c.b16 %v8227, %v8223
    %v9176 = vpack.c.b16 %v8228, %v8224
    %v9177 = vpack.c.b16 %v8229, %v8225
    %v9178 = vpack.c.b16 %v8230, %v8226
    %v9179 = vpack.c.b16 %v8235, %v8231
    %v9180 = vpack.c.b16 %v8236, %v8232
    %v9181 = vpack.c.b16 %v8237, %v8233
    %v9182 = vpack.c.b16 %v8238, %v8234
    %v9183 = vpack.c.b16 %v8243, %v8239
    %v9184 = vpack.c.b16 %v8244, %v8240
    %v9185 = vpack.c.b16 %v8245, %v8241
    %v9186 = vpack.c.b16 %v8246, %v8242
    %v9187 = vpack.c.b16 %v8251, %v8247
    %v9188 = vpack.c.b16 %v8252, %v8248
    %v9189 = vpack.c.b16 %v8253, %v8249
    %v9190 = vpack.c.b16 %v8254, %v8250
    %v9191 = vpack.c.b16 %v8259, %v8255
    %v9192 = vpack.c.b16 %v8260, %v8256
    %v9193 = vpack.c.b16 %v8261, %v8257
    %v9194 = vpack.c.b16 %v8262, %v8258
    %v9195 = vpack.c.b16 %v8267, %v8263
    %v9196 = vpack.c.b16 %v8268, %v8264
    %v9197 = vpack.c.b16 %v8269, %v8265
    %v9198 = vpack.c.b16 %v8270, %v8266
    %v9199 = vpack.c.b16 %v8275, %v8271
    %v9200 = vpack.c.b16 %v8276, %v8272
    %v9201 = vpack.c.b16 %v8277, %v8273
    %v9202 = vpack.c.b16 %v8278, %v8274
    %v9203 = vpack.c.b16 %v8283, %v8279
    %v9204 = vpack.c.b16 %v8284, %v8280
    %v9205 = vpack.c.b16 %v8285, %v8281
    %v9206 = vpack.c.b16 %v8286, %v8282
    %v9207 = vpack.c.b16 %v8291, %v8287
    %v9208 = vpack.c.b16 %v8292, %v8288
    %v9209 = vpack.c.b16 %v8293, %v8289
    %v9210 = vpack.c.b16 %v8294, %v8290
    %v9211 = vpack.c.b16 %v8299, %v8295
    %v9212 = vpack.c.b16 %v8300, %v8296
    %v9213 = vpack.c.b16 %v8301, %v8297
    %v9214 = vpack.c.b16 %v8302, %v8298
    %v9215 = vpack.c.b16 %v8307, %v8303
    %v9216 = vpack.c.b16 %v8308, %v8304
    %v9217 = vpack.c.b16 %v8309, %v8305
    %v9218 = vpack.c.b16 %v8310, %v8306
    %v9219 = vpack.c.b16 %v8315, %v8311
    %v9220 = vpack.c.b16 %v8316, %v8312
    %v9221 = vpack.c.b16 %v8317, %v8313
    %v9222 = vpack.c.b16 %v8318, %v8314
    %v9223 = vpack.c.b16 %v8323, %v8319
    %v9224 = vpack.c.b16 %v8324, %v8320
    %v9225 = vpack.c.b16 %v8325, %v8321
    %v9226 = vpack.c.b16 %v8326, %v8322
    %v9227 = vpack.c.b16 %v8331, %v8327
    %v9228 = vpack.c.b16 %v8332, %v8328
    %v9229 = vpack.c.b16 %v8333, %v8329
    %v9230 = vpack.c.b16 %v8334, %v8330
    %v9231 = vpack.c.b16 %v8339, %v8335
    %v9232 = vpack.c.b16 %v8340, %v8336
    %v9233 = vpack.c.b16 %v8341, %v8337
    %v9234 = vpack.c.b16 %v8342, %v8338
    %v9235 = vpack.c.b16 %v8347, %v8343
    %v9236 = vpack.c.b16 %v8348, %v8344
    %v9237 = vpack.c.b16 %v8349, %v8345
    %v9238 = vpack.c.b16 %v8350, %v8346
    %v9239 = vpack.c.b16 %v8355, %v8351
    %v9240 = vpack.c.b16 %v8356, %v8352
    %v9241 = vpack.c.b16 %v8357, %v8353
    %v9242 = vpack.c.b16 %v8358, %v8354
    %v9243 = vpack.c.b16 %v8363, %v8359
    %v9244 = vpack.c.b16 %v8364, %v8360
    %v9245 = vpack.c.b16 %v8365, %v8361
    %v9246 = vpack.c.b16 %v8366, %v8362
    %v9247 = vpack.c.b16 %v8371, %v8367
    %v9248 = vpack.c.b16 %v8372, %v8368
    %v9249 = vpack.c.b16 %v8373, %v8369
    %v9250 = vpack.c.b16 %v8374, %v8370
    %v9251 = vpack.c.b16 %v8379, %v8375
    %v9252 = vpack.c.b16 %v8380, %v8376
    %v9253 = vpack.c.b16 %v8381, %v8377
    %v9254 = vpack.c.b16 %v8382, %v8378
    %v9255 = vpack.c.b16 %v8387, %v8383
    %v9256 = vpack.c.b16 %v8388, %v8384
    %v9257 = vpack.c.b16 %v8389, %v8385
    %v9258 = vpack.c.b16 %v8390, %v8386
    %v9259 = vpack.c.b16 %v8395, %v8391
    %v9260 = vpack.c.b16 %v8396, %v8392
    %v9261 = vpack.c.b16 %v8397, %v8393
    %v9262 = vpack.c.b16 %v8398, %v8394
    %v9263 = vpack.c.b16 %v8403, %v8399
    %v9264 = vpack.c.b16 %v8404, %v8400
    %v9265 = vpack.c.b16 %v8405, %v8401
    %v9266 = vpack.c.b16 %v8406, %v8402
    %v9267 = vpack.c.b16 %v8411, %v8407
    %v9268 = vpack.c.b16 %v8412, %v8408
    %v9269 = vpack.c.b16 %v8413, %v8409
    %v9270 = vpack.c.b16 %v8414, %v8410
    %v9271 = vpack.c.b16 %v8419, %v8415
    %v9272 = vpack.c.b16 %v8420, %v8416
    %v9273 = vpack.c.b16 %v8421, %v8417
    %v9274 = vpack.c.b16 %v8422, %v8418
    %v9275 = vpack.c.b16 %v8427, %v8423
    %v9276 = vpack.c.b16 %v8428, %v8424
    %v9277 = vpack.c.b16 %v8429, %v8425
    %v9278 = vpack.c.b16 %v8430, %v8426
    %v9279 = vpack.c.b16 %v8435, %v8431
    %v9280 = vpack.c.b16 %v8436, %v8432
    %v9281 = vpack.c.b16 %v8437, %v8433
    %v9282 = vpack.c.b16 %v8438, %v8434
    %v9283 = vpack.c.b16 %v8443, %v8439
    %v9284 = vpack.c.b16 %v8444, %v8440
    %v9285 = vpack.c.b16 %v8445, %v8441
    %v9286 = vpack.c.b16 %v8446, %v8442
    %v9287 = vpack.c.b16 %v8451, %v8447
    %v9288 = vpack.c.b16 %v8452, %v8448
    %v9289 = vpack.c.b16 %v8453, %v8449
    %v9290 = vpack.c.b16 %v8454, %v8450
    %v9291 = vpack.c.b16 %v8459, %v8455
    %v9292 = vpack.c.b16 %v8460, %v8456
    %v9293 = vpack.c.b16 %v8461, %v8457
    %v9294 = vpack.c.b16 %v8462, %v8458
    %v9295 = vpack.c.b16 %v8467, %v8463
    %v9296 = vpack.c.b16 %v8468, %v8464
    %v9297 = vpack.c.b16 %v8469, %v8465
    %v9298 = vpack.c.b16 %v8470, %v8466
    %v9299 = vpack.c.b16 %v8475, %v8471
    %v9300 = vpack.c.b16 %v8476, %v8472
    %v9301 = vpack.c.b16 %v8477, %v8473
    %v9302 = vpack.c.b16 %v8478, %v8474
    %v9303 = vpack.c.b16 %v8483, %v8479
    %v9304 = vpack.c.b16 %v8484, %v8480
    %v9305 = vpack.c.b16 %v8485, %v8481
    %v9306 = vpack.c.b16 %v8486, %v8482
    %v9307 = vpack.c.b16 %v8491, %v8487
    %v9308 = vpack.c.b16 %v8492, %v8488
    %v9309 = vpack.c.b16 %v8493, %v8489
    %v9310 = vpack.c.b16 %v8494, %v8490
    %v9311 = vpack.c.b16 %v8499, %v8495
    %v9312 = vpack.c.b16 %v8500, %v8496
    %v9313 = vpack.c.b16 %v8501, %v8497
    %v9314 = vpack.c.b16 %v8502, %v8498
    %v9315 = vpack.c.b16 %v8507, %v8503
    %v9316 = vpack.c.b16 %v8508, %v8504
    %v9317 = vpack.c.b16 %v8509, %v8505
    %v9318 = vpack.c.b16 %v8510, %v8506
    %v9319 = vpack.c.b16 %v8515, %v8511
    %v9320 = vpack.c.b16 %v8516, %v8512
    %v9321 = vpack.c.b16 %v8517, %v8513
    %v9322 = vpack.c.b16 %v8518, %v8514
    %v9323 = vpack.c.b16 %v8523, %v8519
    %v9324 = vpack.c.b16 %v8524, %v8520
    %v9325 = vpack.c.b16 %v8525, %v8521
    %v9326 = vpack.c.b16 %v8526, %v8522
    %v9327 = vpack.c.b16 %v8531, %v8527
    %v9328 = vpack.c.b16 %v8532, %v8528
    %v9329 = vpack.c.b16 %v8533, %v8529
    %v9330 = vpack.c.b16 %v8534, %v8530
    %v9331 = vpack.c.b16 %v8539, %v8535
    %v9332 = vpack.c.b16 %v8540, %v8536
    %v9333 = vpack.c.b16 %v8541, %v8537
    %v9334 = vpack.c.b16 %v8542, %v8538
    %v9335 = vpack.c.b16 %v8547, %v8543
    %v9336 = vpack.c.b16 %v8548, %v8544
    %v9337 = vpack.c.b16 %v8549, %v8545
    %v9338 = vpack.c.b16 %v8550, %v8546
    %v9339 = vpack.c.b16 %v8555, %v8551
    %v9340 = vpack.c.b16 %v8556, %v8552
    %v9341 = vpack.c.b16 %v8557, %v8553
    %v9342 = vpack.c.b16 %v8558, %v8554
    %v9343 = vpack.c.b16 %v8563, %v8559
    %v9344 = vpack.c.b16 %v8564, %v8560
    %v9345 = vpack.c.b16 %v8565, %v8561
    %v9346 = vpack.c.b16 %v8566, %v8562
    %v9347 = vpack.c.b16 %v8571, %v8567
    %v9348 = vpack.c.b16 %v8572, %v8568
    %v9349 = vpack.c.b16 %v8573, %v8569
    %v9350 = vpack.c.b16 %v8574, %v8570
    %v9351 = vpack.c.b16 %v8579, %v8575
    %v9352 = vpack.c.b16 %v8580, %v8576
    %v9353 = vpack.c.b16 %v8581, %v8577
    %v9354 = vpack.c.b16 %v8582, %v8578
    %v9355 = vpack.c.b16 %v8587, %v8583
    %v9356 = vpack.c.b16 %v8588, %v8584
    %v9357 = vpack.c.b16 %v8589, %v8585
    %v9358 = vpack.c.b16 %v8590, %v8586
    %v9359 = vpack.c.b16 %v8595, %v8591
    %v9360 = vpack.c.b16 %v8596, %v8592
    %v9361 = vpack.c.b16 %v8597, %v8593
    %v9362 = vpack.c.b16 %v8598, %v8594
    %v9363 = vpack.c.b16 %v8603, %v8599
    %v9364 = vpack.c.b16 %v8604, %v8600
    %v9365 = vpack.c.b16 %v8605, %v8601
    %v9366 = vpack.c.b16 %v8606, %v8602
    %v9367 = vpack.c.b16 %v8611, %v8607
    %v9368 = vpack.c.b16 %v8612, %v8608
    %v9369 = vpack.c.b16 %v8613, %v8609
    %v9370 = vpack.c.b16 %v8614, %v8610
    %v9371 = vpack.c.b16 %v8619, %v8615
    %v9372 = vpack.c.b16 %v8620, %v8616
    %v9373 = vpack.c.b16 %v8621, %v8617
    %v9374 = vpack.c.b16 %v8622, %v8618
    %v9375 = vpack.c.b16 %v8627, %v8623
    %v9376 = vpack.c.b16 %v8628, %v8624
    %v9377 = vpack.c.b16 %v8629, %v8625
    %v9378 = vpack.c.b16 %v8630, %v8626
    %v9379 = vpack.c.b16 %v8635, %v8631
    %v9380 = vpack.c.b16 %v8636, %v8632
    %v9381 = vpack.c.b16 %v8637, %v8633
    %v9382 = vpack.c.b16 %v8638, %v8634
    %v9383 = vpack.c.b16 %v8643, %v8639
    %v9384 = vpack.c.b16 %v8644, %v8640
    %v9385 = vpack.c.b16 %v8645, %v8641
    %v9386 = vpack.c.b16 %v8646, %v8642
    %v9387 = vpack.c.b16 %v8651, %v8647
    %v9388 = vpack.c.b16 %v8652, %v8648
    %v9389 = vpack.c.b16 %v8653, %v8649
    %v9390 = vpack.c.b16 %v8654, %v8650
    %v9391 = vpack.c.b16 %v8659, %v8655
    %v9392 = vpack.c.b16 %v8660, %v8656
    %v9393 = vpack.c.b16 %v8661, %v8657
    %v9394 = vpack.c.b16 %v8662, %v8658
    %v9395 = vpack.c.b16 %v8667, %v8663
    %v9396 = vpack.c.b16 %v8668, %v8664
    %v9397 = vpack.c.b16 %v8669, %v8665
    %v9398 = vpack.c.b16 %v8670, %v8666
    %v9399 = vpack.c.b16 %v8675, %v8671
    %v9400 = vpack.c.b16 %v8676, %v8672
    %v9401 = vpack.c.b16 %v8677, %v8673
    %v9402 = vpack.c.b16 %v8678, %v8674
    %v9403 = vpack.c.b16 %v8683, %v8679
    %v9404 = vpack.c.b16 %v8684, %v8680
    %v9405 = vpack.c.b16 %v8685, %v8681
    %v9406 = vpack.c.b16 %v8686, %v8682
    %v9407 = vpack.c.b16 %v8691, %v8687
    %v9408 = vpack.c.b16 %v8692, %v8688
    %v9409 = vpack.c.b16 %v8693, %v8689
    %v9410 = vpack.c.b16 %v8694, %v8690
    %v9411 = vpack.c.b16 %v8699, %v8695
    %v9412 = vpack.c.b16 %v8700, %v8696
    %v9413 = vpack.c.b16 %v8701, %v8697
    %v9414 = vpack.c.b16 %v8702, %v8698
    %v9415 = vpack.c.b16 %v8707, %v8703
    %v9416 = vpack.c.b16 %v8708, %v8704
    %v9417 = vpack.c.b16 %v8709, %v8705
    %v9418 = vpack.c.b16 %v8710, %v8706
    %v9419 = vpack.c.b16 %v8715, %v8711
    %v9420 = vpack.c.b16 %v8716, %v8712
    %v9421 = vpack.c.b16 %v8717, %v8713
    %v9422 = vpack.c.b16 %v8718, %v8714
    %v9423 = vpack.c.b16 %v8723, %v8719
    %v9424 = vpack.c.b16 %v8724, %v8720
    %v9425 = vpack.c.b16 %v8725, %v8721
    %v9426 = vpack.c.b16 %v8726, %v8722
    %v9427 = vpack.c.b16 %v8731, %v8727
    %v9428 = vpack.c.b16 %v8732, %v8728
    %v9429 = vpack.c.b16 %v8733, %v8729
    %v9430 = vpack.c.b16 %v8734, %v8730
    %v9431 = vpack.c.b16 %v8739, %v8735
    %v9432 = vpack.c.b16 %v8740, %v8736
    %v9433 = vpack.c.b16 %v8741, %v8737
    %v9434 = vpack.c.b16 %v8742, %v8738
    %v9435 = vpack.c.b16 %v8747, %v8743
    %v9436 = vpack.c.b16 %v8748, %v8744
    %v9437 = vpack.c.b16 %v8749, %v8745
    %v9438 = vpack.c.b16 %v8750, %v8746
    %v9439 = vpack.c.b16 %v8755, %v8751
    %v9440 = vpack.c.b16 %v8756, %v8752
    %v9441 = vpack.c.b16 %v8757, %v8753
    %v9442 = vpack.c.b16 %v8758, %v8754
    %v9443 = vpack.c.b16 %v8763, %v8759
    %v9444 = vpack.c.b16 %v8764, %v8760
    %v9445 = vpack.c.b16 %v8765, %v8761
    %v9446 = vpack.c.b16 %v8766, %v8762
    %v9447 = vpack.c.b16 %v8771, %v8767
    %v9448 = vpack.c.b16 %v8772, %v8768
    %v9449 = vpack.c.b16 %v8773, %v8769
    %v9450 = vpack.c.b16 %v8774, %v8770
    %v9451 = vpack.c.b16 %v8779, %v8775
    %v9452 = vpack.c.b16 %v8780, %v8776
    %v9453 = vpack.c.b16 %v8781, %v8777
    %v9454 = vpack.c.b16 %v8782, %v8778
    %v9455 = vpack.c.b16 %v8787, %v8783
    %v9456 = vpack.c.b16 %v8788, %v8784
    %v9457 = vpack.c.b16 %v8789, %v8785
    %v9458 = vpack.c.b16 %v8790, %v8786
    %v9459 = vpack.c.b16 %v8795, %v8791
    %v9460 = vpack.c.b16 %v8796, %v8792
    %v9461 = vpack.c.b16 %v8797, %v8793
    %v9462 = vpack.c.b16 %v8798, %v8794
    %v9463 = vpack.c.b16 %v8803, %v8799
    %v9464 = vpack.c.b16 %v8804, %v8800
    %v9465 = vpack.c.b16 %v8805, %v8801
    %v9466 = vpack.c.b16 %v8806, %v8802
    %v9467 = vpack.c.b16 %v8811, %v8807
    %v9468 = vpack.c.b16 %v8812, %v8808
    %v9469 = vpack.c.b16 %v8813, %v8809
    %v9470 = vpack.c.b16 %v8814, %v8810
    %v9471 = vpack.c.b16 %v8819, %v8815
    %v9472 = vpack.c.b16 %v8820, %v8816
    %v9473 = vpack.c.b16 %v8821, %v8817
    %v9474 = vpack.c.b16 %v8822, %v8818
    %v9475 = vpack.c.b16 %v8827, %v8823
    %v9476 = vpack.c.b16 %v8828, %v8824
    %v9477 = vpack.c.b16 %v8829, %v8825
    %v9478 = vpack.c.b16 %v8830, %v8826
    %v9479 = vpack.c.b16 %v8835, %v8831
    %v9480 = vpack.c.b16 %v8836, %v8832
    %v9481 = vpack.c.b16 %v8837, %v8833
    %v9482 = vpack.c.b16 %v8838, %v8834
    %v9483 = vpack.c.b16 %v8843, %v8839
    %v9484 = vpack.c.b16 %v8844, %v8840
    %v9485 = vpack.c.b16 %v8845, %v8841
    %v9486 = vpack.c.b16 %v8846, %v8842
    %v9487 = vpack.c.b16 %v8851, %v8847
    %v9488 = vpack.c.b16 %v8852, %v8848
    %v9489 = vpack.c.b16 %v8853, %v8849
    %v9490 = vpack.c.b16 %v8854, %v8850
    %v9491 = vpack.c.b16 %v8859, %v8855
    %v9492 = vpack.c.b16 %v8860, %v8856
    %v9493 = vpack.c.b16 %v8861, %v8857
    %v9494 = vpack.c.b16 %v8862, %v8858
    %v9495 = vpack.c.b16 %v8867, %v8863
    %v9496 = vpack.c.b16 %v8868, %v8864
    %v9497 = vpack.c.b16 %v8869, %v8865
    %v9498 = vpack.c.b16 %v8870, %v8866
    %v9499 = vpack.c.b16 %v8875, %v8871
    %v9500 = vpack.c.b16 %v8876, %v8872
    %v9501 = vpack.c.b16 %v8877, %v8873
    %v9502 = vpack.c.b16 %v8878, %v8874
    %v9503 = vpack.c.b16 %v8883, %v8879
    %v9504 = vpack.c.b16 %v8884, %v8880
    %v9505 = vpack.c.b16 %v8885, %v8881
    %v9506 = vpack.c.b16 %v8886, %v8882
    %v9507 = vpack.c.b16 %v8891, %v8887
    %v9508 = vpack.c.b16 %v8892, %v8888
    %v9509 = vpack.c.b16 %v8893, %v8889
    %v9510 = vpack.c.b16 %v8894, %v8890
    %v9511 = vpack.c.b16 %v8899, %v8895
    %v9512 = vpack.c.b16 %v8900, %v8896
    %v9513 = vpack.c.b16 %v8901, %v8897
    %v9514 = vpack.c.b16 %v8902, %v8898
    %v9515 = vpack.c.b16 %v8907, %v8903
    %v9516 = vpack.c.b16 %v8908, %v8904
    %v9517 = vpack.c.b16 %v8909, %v8905
    %v9518 = vpack.c.b16 %v8910, %v8906
    %v9519 = vpack.c.b16 %v8915, %v8911
    %v9520 = vpack.c.b16 %v8916, %v8912
    %v9521 = vpack.c.b16 %v8917, %v8913
    %v9522 = vpack.c.b16 %v8918, %v8914
    %v9523 = vpack.c.b16 %v8923, %v8919
    %v9524 = vpack.c.b16 %v8924, %v8920
    %v9525 = vpack.c.b16 %v8925, %v8921
    %v9526 = vpack.c.b16 %v8926, %v8922
    %v9527 = vpack.c.b16 %v8931, %v8927
    %v9528 = vpack.c.b16 %v8932, %v8928
    %v9529 = vpack.c.b16 %v8933, %v8929
    %v9530 = vpack.c.b16 %v8934, %v8930
    %v9531 = vpack.c.b16 %v8939, %v8935
    %v9532 = vpack.c.b16 %v8940, %v8936
    %v9533 = vpack.c.b16 %v8941, %v8937
    %v9534 = vpack.c.b16 %v8942, %v8938
    %v9535 = vpack.c.b16 %v8947, %v8943
    %v9536 = vpack.c.b16 %v8948, %v8944
    %v9537 = vpack.c.b16 %v8949, %v8945
    %v9538 = vpack.c.b16 %v8950, %v8946
    %v9539 = vpack.c.b16 %v8955, %v8951
    %v9540 = vpack.c.b16 %v8956, %v8952
    %v9541 = vpack.c.b16 %v8957, %v8953
    %v9542 = vpack.c.b16 %v8958, %v8954
    %v9543 = vpack.c.b16 %v8963, %v8959
    %v9544 = vpack.c.b16 %v8964, %v8960
    %v9545 = vpack.c.b16 %v8965, %v8961
    %v9546 = vpack.c.b16 %v8966, %v8962
    %v9547 = vpack.c.b16 %v8971, %v8967
    %v9548 = vpack.c.b16 %v8972, %v8968
    %v9549 = vpack.c.b16 %v8973, %v8969
    %v9550 = vpack.c.b16 %v8974, %v8970
    %v9551 = vpack.c.b16 %v8979, %v8975
    %v9552 = vpack.c.b16 %v8980, %v8976
    %v9553 = vpack.c.b16 %v8981, %v8977
    %v9554 = vpack.c.b16 %v8982, %v8978
    %v9555 = vpack.c.b16 %v8987, %v8983
    %v9556 = vpack.c.b16 %v8988, %v8984
    %v9557 = vpack.c.b16 %v8989, %v8985
    %v9558 = vpack.c.b16 %v8990, %v8986
    %v9559 = vpack.c.b16 %v8995, %v8991
    %v9560 = vpack.c.b16 %v8996, %v8992
    %v9561 = vpack.c.b16 %v8997, %v8993
    %v9562 = vpack.c.b16 %v8998, %v8994
    %v9563 = vpack.c.b16 %v9003, %v8999
    %v9564 = vpack.c.b16 %v9004, %v9000
    %v9565 = vpack.c.b16 %v9005, %v9001
    %v9566 = vpack.c.b16 %v9006, %v9002
    %v9567 = vpack.c.b16 %v9011, %v9007
    %v9568 = vpack.c.b16 %v9012, %v9008
    %v9569 = vpack.c.b16 %v9013, %v9009
    %v9570 = vpack.c.b16 %v9014, %v9010
    %v9571 = vpack.c.b16 %v9019, %v9015
    %v9572 = vpack.c.b16 %v9020, %v9016
    %v9573 = vpack.c.b16 %v9021, %v9017
    %v9574 = vpack.c.b16 %v9022, %v9018
    %v9575 = vpack.c.b16 %v9027, %v9023
    %v9576 = vpack.c.b16 %v9028, %v9024
    %v9577 = vpack.c.b16 %v9029, %v9025
    %v9578 = vpack.c.b16 %v9030, %v9026
    %v9579 = vpack.c.b16 %v9035, %v9031
    %v9580 = vpack.c.b16 %v9036, %v9032
    %v9581 = vpack.c.b16 %v9037, %v9033
    %v9582 = vpack.c.b16 %v9038, %v9034
    %v9583 = vpack.c.b16 %v9043, %v9039
    %v9584 = vpack.c.b16 %v9044, %v9040
    %v9585 = vpack.c.b16 %v9045, %v9041
    %v9586 = vpack.c.b16 %v9046, %v9042
    %v9587 = vpack.c.b16 %v9051, %v9047
    %v9588 = vpack.c.b16 %v9052, %v9048
    %v9589 = vpack.c.b16 %v9053, %v9049
    %v9590 = vpack.c.b16 %v9054, %v9050
    %v9591 = vpack.c.b16 %v9059, %v9055
    %v9592 = vpack.c.b16 %v9060, %v9056
    %v9593 = vpack.c.b16 %v9061, %v9057
    %v9594 = vpack.c.b16 %v9062, %v9058
    %v9595 = vpack.c.b16 %v9067, %v9063
    %v9596 = vpack.c.b16 %v9068, %v9064
    %v9597 = vpack.c.b16 %v9069, %v9065
    %v9598 = vpack.c.b16 %v9070, %v9066
    %v9599 = vpack.c.b16 %v9075, %v9071
    %v9600 = vpack.c.b16 %v9076, %v9072
    %v9601 = vpack.c.b16 %v9077, %v9073
    %v9602 = vpack.c.b16 %v9078, %v9074
    %v9603 = vpack.c.b16 %v9083, %v9079
    %v9604 = vpack.c.b16 %v9084, %v9080
    %v9605 = vpack.c.b16 %v9085, %v9081
    %v9606 = vpack.c.b16 %v9086, %v9082
    %v9607 = vpack.c.b16 %v9091, %v9087
    %v9608 = vpack.c.b16 %v9092, %v9088
    %v9609 = vpack.c.b16 %v9093, %v9089
    %v9610 = vpack.c.b16 %v9094, %v9090
    %v9611 = vpack.c.b16 %v9099, %v9095
    %v9612 = vpack.c.b16 %v9100, %v9096
    %v9613 = vpack.c.b16 %v9101, %v9097
    %v9614 = vpack.c.b16 %v9102, %v9098
    %10127 = vmatprep.subr.bf16.mxu0 %v9104
    %10128 = vmatpush1.bf16.msra.mxu0 %v9103
    %10129 = vmatprep.subr.bf16.mxu0 %v9108
    %10130 = vmatpush1.bf16.msra.mxu0 %v9107
    %10131 = vmatprep.subr.bf16.mxu0 %v9112
    %10132 = vmatpush1.bf16.msra.mxu0 %v9111
    %10133 = vmatprep.subr.bf16.mxu0 %v9116
    %10134 = vmatpush1.bf16.msra.mxu0 %v9115
    %10135 = vmatprep.subr.bf16.mxu0 %v9120
    %10136 = vmatpush1.bf16.msra.mxu0 %v9119
    %10137 = vmatprep.subr.bf16.mxu0 %v9124
    %10138 = vmatpush1.bf16.msra.mxu0 %v9123
    %10139 = vmatprep.subr.bf16.mxu0 %v9128
    %10140 = vmatpush1.bf16.msra.mxu0 %v9127
    %10141 = vmatprep.subr.bf16.mxu0 %v9132
    %10142 = vmatpush1.bf16.msra.mxu0 %v9131
    %10143 = vmatprep.subr.bf16.mxu0 %v9136
    %10144 = vmatpush1.bf16.msra.mxu0 %v9135
    %10145 = vmatprep.subr.bf16.mxu0 %v9140
    %10146 = vmatpush1.bf16.msra.mxu0 %v9139
    %10147 = vmatprep.subr.bf16.mxu0 %v9144
    %10148 = vmatpush1.bf16.msra.mxu0 %v9143
    %10149 = vmatprep.subr.bf16.mxu0 %v9148
    %10150 = vmatpush1.bf16.msra.mxu0 %v9147
    %10151 = vmatprep.subr.bf16.mxu0 %v9152
    %10152 = vmatpush1.bf16.msra.mxu0 %v9151
    %10153 = vmatprep.subr.bf16.mxu0 %v9156
    %10154 = vmatpush1.bf16.msra.mxu0 %v9155
    %10155 = vmatprep.subr.bf16.mxu0 %v9160
    %10156 = vmatpush1.bf16.msra.mxu0 %v9159
    %10157 = vmatprep.subr.bf16.mxu0 %v9164
    %10158 = vmatpush1.bf16.msra.mxu0 %v9163
    %10159 = vmatprep.mubr.bf16.mxu0 %v7018
    %10160 = vmatmul.mubr.bf16.gmra.mrb[0].mxu0 %v7017
    %v10161 = vpop.f32.mrb[0].mxu0
    %v10162 = vadd.f32 %v7550, %v10161
    %v10163 = vpop.f32.mrb[0].mxu0
    %v10164 = vadd.f32 %v7554, %v10163
    %v10165 = vpop.f32.mrb[0].mxu0
    %v10166 = vpop.f32.mrb[0].mxu0
    %10167 = vdwg.mxu0
    %10168 = vmatprep.subr.bf16.mxu0 %v9168
    %10169 = vmatpush1.bf16.msra.mxu0 %v9167
    %10170 = vmatprep.subr.bf16.mxu0 %v9172
    %10171 = vmatpush1.bf16.msra.mxu0 %v9171
    %10172 = vmatprep.subr.bf16.mxu0 %v9176
    %10173 = vmatpush1.bf16.msra.mxu0 %v9175
    %10174 = vmatprep.subr.bf16.mxu0 %v9180
    %10175 = vmatpush1.bf16.msra.mxu0 %v9179
    %10176 = vmatprep.subr.bf16.mxu0 %v9184
    %10177 = vmatpush1.bf16.msra.mxu0 %v9183
    %10178 = vmatprep.subr.bf16.mxu0 %v9188
    %10179 = vmatpush1.bf16.msra.mxu0 %v9187
    %10180 = vmatprep.subr.bf16.mxu0 %v9192
    %10181 = vmatpush1.bf16.msra.mxu0 %v9191
    %10182 = vmatprep.subr.bf16.mxu0 %v9196
    %10183 = vmatpush1.bf16.msra.mxu0 %v9195
    %10184 = vmatprep.subr.bf16.mxu0 %v9200
    %10185 = vmatpush1.bf16.msra.mxu0 %v9199
    %10186 = vmatprep.subr.bf16.mxu0 %v9204
    %10187 = vmatpush1.bf16.msra.mxu0 %v9203
    %10188 = vmatprep.subr.bf16.mxu0 %v9208
    %10189 = vmatpush1.bf16.msra.mxu0 %v9207
    %10190 = vmatprep.subr.bf16.mxu0 %v9212
    %10191 = vmatpush1.bf16.msra.mxu0 %v9211
    %10192 = vmatprep.subr.bf16.mxu0 %v9216
    %10193 = vmatpush1.bf16.msra.mxu0 %v9215
    %10194 = vmatprep.subr.bf16.mxu0 %v9220
    %10195 = vmatpush1.bf16.msra.mxu0 %v9219
    %10196 = vmatprep.subr.bf16.mxu0 %v9224
    %10197 = vmatpush1.bf16.msra.mxu0 %v9223
    %10198 = vmatprep.subr.bf16.mxu0 %v9228
    %10199 = vmatpush1.bf16.msra.mxu0 %v9227
    %10200 = vmatprep.mubr.bf16.mxu0 %v7020
    %10201 = vmatmul.mubr.bf16.gmra.mrb[0].mxu0 %v7019
    %v10202 = vpop.f32.mrb[0].mxu0
    %v10203 = vadd.f32 %v10162, %v10202
    %v10204 = vpop.f32.mrb[0].mxu0
    %v10205 = vadd.f32 %v10164, %v10204
    %v10206 = vpop.f32.mrb[0].mxu0
    %v10207 = vpop.f32.mrb[0].mxu0
    %10208 = vdwg.mxu0
    %10209 = vmatprep.subr.bf16.mxu0 %v9232
    %10210 = vmatpush1.bf16.msra.mxu0 %v9231
    %10211 = vmatprep.subr.bf16.mxu0 %v9236
    %10212 = vmatpush1.bf16.msra.mxu0 %v9235
    %10213 = vmatprep.subr.bf16.mxu0 %v9240
    %10214 = vmatpush1.bf16.msra.mxu0 %v9239
    %10215 = vmatprep.subr.bf16.mxu0 %v9244
    %10216 = vmatpush1.bf16.msra.mxu0 %v9243
    %10217 = vmatprep.subr.bf16.mxu0 %v9248
    %10218 = vmatpush1.bf16.msra.mxu0 %v9247
    %10219 = vmatprep.subr.bf16.mxu0 %v9252
    %10220 = vmatpush1.bf16.msra.mxu0 %v9251
    %10221 = vmatprep.subr.bf16.mxu0 %v9256
    %10222 = vmatpush1.bf16.msra.mxu0 %v9255
    %10223 = vmatprep.subr.bf16.mxu0 %v9260
    %10224 = vmatpush1.bf16.msra.mxu0 %v9259
    %10225 = vmatprep.subr.bf16.mxu0 %v9264
    %10226 = vmatpush1.bf16.msra.mxu0 %v9263
    %10227 = vmatprep.subr.bf16.mxu0 %v9268
    %10228 = vmatpush1.bf16.msra.mxu0 %v9267
    %10229 = vmatprep.subr.bf16.mxu0 %v9272
    %10230 = vmatpush1.bf16.msra.mxu0 %v9271
    %10231 = vmatprep.subr.bf16.mxu0 %v9276
    %10232 = vmatpush1.bf16.msra.mxu0 %v9275
    %10233 = vmatprep.subr.bf16.mxu0 %v9280
    %10234 = vmatpush1.bf16.msra.mxu0 %v9279
    %10235 = vmatprep.subr.bf16.mxu0 %v9284
    %10236 = vmatpush1.bf16.msra.mxu0 %v9283
    %10237 = vmatprep.subr.bf16.mxu0 %v9288
    %10238 = vmatpush1.bf16.msra.mxu0 %v9287
    %10239 = vmatprep.subr.bf16.mxu0 %v9292
    %10240 = vmatpush1.bf16.msra.mxu0 %v9291
    %10241 = vmatprep.mubr.bf16.mxu0 %v7022
    %10242 = vmatmul.mubr.bf16.gmra.mrb[0].mxu0 %v7021
    %v10243 = vpop.f32.mrb[0].mxu0
    %v10244 = vadd.f32 %v10203, %v10243
    %v10245 = vpop.f32.mrb[0].mxu0
    %v10246 = vadd.f32 %v10205, %v10245
    %v10247 = vpop.f32.mrb[0].mxu0
    %v10248 = vpop.f32.mrb[0].mxu0
    %10249 = vdwg.mxu0
    %10250 = vmatprep.subr.bf16.mxu0 %v9296
    %10251 = vmatpush1.bf16.msra.mxu0 %v9295
    %10252 = vmatprep.subr.bf16.mxu0 %v9300
    %10253 = vmatpush1.bf16.msra.mxu0 %v9299
    %10254 = vmatprep.subr.bf16.mxu0 %v9304
    %10255 = vmatpush1.bf16.msra.mxu0 %v9303
    %10256 = vmatprep.subr.bf16.mxu0 %v9308
    %10257 = vmatpush1.bf16.msra.mxu0 %v9307
    %10258 = vmatprep.subr.bf16.mxu0 %v9312
    %10259 = vmatpush1.bf16.msra.mxu0 %v9311
    %10260 = vmatprep.subr.bf16.mxu0 %v9316
    %10261 = vmatpush1.bf16.msra.mxu0 %v9315
    %10262 = vmatprep.subr.bf16.mxu0 %v9320
    %10263 = vmatpush1.bf16.msra.mxu0 %v9319
    %10264 = vmatprep.subr.bf16.mxu0 %v9324
    %10265 = vmatpush1.bf16.msra.mxu0 %v9323
    %10266 = vmatprep.subr.bf16.mxu0 %v9328
    %10267 = vmatpush1.bf16.msra.mxu0 %v9327
    %10268 = vmatprep.subr.bf16.mxu0 %v9332
    %10269 = vmatpush1.bf16.msra.mxu0 %v9331
    %10270 = vmatprep.subr.bf16.mxu0 %v9336
    %10271 = vmatpush1.bf16.msra.mxu0 %v9335
    %10272 = vmatprep.subr.bf16.mxu0 %v9340
    %10273 = vmatpush1.bf16.msra.mxu0 %v9339
    %10274 = vmatprep.subr.bf16.mxu0 %v9344
    %10275 = vmatpush1.bf16.msra.mxu0 %v9343
    %10276 = vmatprep.subr.bf16.mxu0 %v9348
    %10277 = vmatpush1.bf16.msra.mxu0 %v9347
    %10278 = vmatprep.subr.bf16.mxu0 %v9352
    %10279 = vmatpush1.bf16.msra.mxu0 %v9351
    %10280 = vmatprep.subr.bf16.mxu0 %v9356
    %10281 = vmatpush1.bf16.msra.mxu0 %v9355
    %10282 = vmatprep.mubr.bf16.mxu0 %v7024
    %10283 = vmatmul.mubr.bf16.gmra.mrb[0].mxu0 %v7023
    %v10284 = vpop.f32.mrb[0].mxu0
    %v10285 = vadd.f32 %v10244, %v10284
    %v10286 = vpop.f32.mrb[0].mxu0
    %v10287 = vadd.f32 %v10246, %v10286
    %v10288 = vpop.f32.mrb[0].mxu0
    %v10289 = vpop.f32.mrb[0].mxu0
    %10290 = vdwg.mxu0
    %10291 = vmatprep.subr.bf16.mxu0 %v9360
    %10292 = vmatpush1.bf16.msra.mxu0 %v9359
    %10293 = vmatprep.subr.bf16.mxu0 %v9364
    %10294 = vmatpush1.bf16.msra.mxu0 %v9363
    %10295 = vmatprep.subr.bf16.mxu0 %v9368
    %10296 = vmatpush1.bf16.msra.mxu0 %v9367
    %10297 = vmatprep.subr.bf16.mxu0 %v9372
    %10298 = vmatpush1.bf16.msra.mxu0 %v9371
    %10299 = vmatprep.subr.bf16.mxu0 %v9376
    %10300 = vmatpush1.bf16.msra.mxu0 %v9375
    %10301 = vmatprep.subr.bf16.mxu0 %v9380
    %10302 = vmatpush1.bf16.msra.mxu0 %v9379
    %10303 = vmatprep.subr.bf16.mxu0 %v9384
    %10304 = vmatpush1.bf16.msra.mxu0 %v9383
    %10305 = vmatprep.subr.bf16.mxu0 %v9388
    %10306 = vmatpush1.bf16.msra.mxu0 %v9387
    %10307 = vmatprep.subr.bf16.mxu0 %v9392
    %10308 = vmatpush1.bf16.msra.mxu0 %v9391
    %10309 = vmatprep.subr.bf16.mxu0 %v9396
    %10310 = vmatpush1.bf16.msra.mxu0 %v9395
    %10311 = vmatprep.subr.bf16.mxu0 %v9400
    %10312 = vmatpush1.bf16.msra.mxu0 %v9399
    %10313 = vmatprep.subr.bf16.mxu0 %v9404
    %10314 = vmatpush1.bf16.msra.mxu0 %v9403
    %10315 = vmatprep.subr.bf16.mxu0 %v9408
    %10316 = vmatpush1.bf16.msra.mxu0 %v9407
    %10317 = vmatprep.subr.bf16.mxu0 %v9412
    %10318 = vmatpush1.bf16.msra.mxu0 %v9411
    %10319 = vmatprep.subr.bf16.mxu0 %v9416
    %10320 = vmatpush1.bf16.msra.mxu0 %v9415
    %10321 = vmatprep.subr.bf16.mxu0 %v9420
    %10322 = vmatpush1.bf16.msra.mxu0 %v9419
    %10323 = vmatprep.mubr.bf16.mxu0 %v7026
    %10324 = vmatmul.mubr.bf16.gmra.mrb[0].mxu0 %v7025
    %v10325 = vpop.f32.mrb[0].mxu0
    %v10326 = vadd.f32 %v10285, %v10325
    %v10327 = vpop.f32.mrb[0].mxu0
    %v10328 = vadd.f32 %v10287, %v10327
    %v10329 = vpop.f32.mrb[0].mxu0
    %v10330 = vpop.f32.mrb[0].mxu0
    %10331 = vdwg.mxu0
    %10332 = vmatprep.subr.bf16.mxu0 %v9424
    %10333 = vmatpush1.bf16.msra.mxu0 %v9423
    %10334 = vmatprep.subr.bf16.mxu0 %v9428
    %10335 = vmatpush1.bf16.msra.mxu0 %v9427
    %10336 = vmatprep.subr.bf16.mxu0 %v9432
    %10337 = vmatpush1.bf16.msra.mxu0 %v9431
    %10338 = vmatprep.subr.bf16.mxu0 %v9436
    %10339 = vmatpush1.bf16.msra.mxu0 %v9435
    %10340 = vmatprep.subr.bf16.mxu0 %v9440
    %10341 = vmatpush1.bf16.msra.mxu0 %v9439
    %10342 = vmatprep.subr.bf16.mxu0 %v9444
    %10343 = vmatpush1.bf16.msra.mxu0 %v9443
    %10344 = vmatprep.subr.bf16.mxu0 %v9448
    %10345 = vmatpush1.bf16.msra.mxu0 %v9447
    %10346 = vmatprep.subr.bf16.mxu0 %v9452
    %10347 = vmatpush1.bf16.msra.mxu0 %v9451
    %10348 = vmatprep.subr.bf16.mxu0 %v9456
    %10349 = vmatpush1.bf16.msra.mxu0 %v9455
    %10350 = vmatprep.subr.bf16.mxu0 %v9460
    %10351 = vmatpush1.bf16.msra.mxu0 %v9459
    %10352 = vmatprep.subr.bf16.mxu0 %v9464
    %10353 = vmatpush1.bf16.msra.mxu0 %v9463
    %10354 = vmatprep.subr.bf16.mxu0 %v9468
    %10355 = vmatpush1.bf16.msra.mxu0 %v9467
    %10356 = vmatprep.subr.bf16.mxu0 %v9472
    %10357 = vmatpush1.bf16.msra.mxu0 %v9471
    %10358 = vmatprep.subr.bf16.mxu0 %v9476
    %10359 = vmatpush1.bf16.msra.mxu0 %v9475
    %10360 = vmatprep.subr.bf16.mxu0 %v9480
    %10361 = vmatpush1.bf16.msra.mxu0 %v9479
    %10362 = vmatprep.subr.bf16.mxu0 %v9484
    %10363 = vmatpush1.bf16.msra.mxu0 %v9483
    %10364 = vmatprep.mubr.bf16.mxu0 %v7028
    %10365 = vmatmul.mubr.bf16.gmra.mrb[0].mxu0 %v7027
    %v10366 = vpop.f32.mrb[0].mxu0
    %v10367 = vadd.f32 %v10326, %v10366
    %v10368 = vpop.f32.mrb[0].mxu0
    %v10369 = vadd.f32 %v10328, %v10368
    %v10370 = vpop.f32.mrb[0].mxu0
    %v10371 = vpop.f32.mrb[0].mxu0
    %10372 = vdwg.mxu0
    %10373 = vmatprep.subr.bf16.mxu0 %v9488
    %10374 = vmatpush1.bf16.msra.mxu0 %v9487
    %10375 = vmatprep.subr.bf16.mxu0 %v9492
    %10376 = vmatpush1.bf16.msra.mxu0 %v9491
    %10377 = vmatprep.subr.bf16.mxu0 %v9496
    %10378 = vmatpush1.bf16.msra.mxu0 %v9495
    %10379 = vmatprep.subr.bf16.mxu0 %v9500
    %10380 = vmatpush1.bf16.msra.mxu0 %v9499
    %10381 = vmatprep.subr.bf16.mxu0 %v9504
    %10382 = vmatpush1.bf16.msra.mxu0 %v9503
    %10383 = vmatprep.subr.bf16.mxu0 %v9508
    %10384 = vmatpush1.bf16.msra.mxu0 %v9507
    %10385 = vmatprep.subr.bf16.mxu0 %v9512
    %10386 = vmatpush1.bf16.msra.mxu0 %v9511
    %10387 = vmatprep.subr.bf16.mxu0 %v9516
    %10388 = vmatpush1.bf16.msra.mxu0 %v9515
    %10389 = vmatprep.subr.bf16.mxu0 %v9520
    %10390 = vmatpush1.bf16.msra.mxu0 %v9519
    %10391 = vmatprep.subr.bf16.mxu0 %v9524
    %10392 = vmatpush1.bf16.msra.mxu0 %v9523
    %10393 = vmatprep.subr.bf16.mxu0 %v9528
    %10394 = vmatpush1.bf16.msra.mxu0 %v9527
    %10395 = vmatprep.subr.bf16.mxu0 %v9532
    %10396 = vmatpush1.bf16.msra.mxu0 %v9531
    %10397 = vmatprep.subr.bf16.mxu0 %v9536
    %10398 = vmatpush1.bf16.msra.mxu0 %v9535
    %10399 = vmatprep.subr.bf16.mxu0 %v9540
    %10400 = vmatpush1.bf16.msra.mxu0 %v9539
    %10401 = vmatprep.subr.bf16.mxu0 %v9544
    %10402 = vmatpush1.bf16.msra.mxu0 %v9543
    %10403 = vmatprep.subr.bf16.mxu0 %v9548
    %10404 = vmatpush1.bf16.msra.mxu0 %v9547
    %10405 = vmatprep.mubr.bf16.mxu0 %v7030
    %10406 = vmatmul.mubr.bf16.gmra.mrb[0].mxu0 %v7029
    %v10407 = vpop.f32.mrb[0].mxu0
    %v10408 = vadd.f32 %v10367, %v10407
    %v10409 = vpop.f32.mrb[0].mxu0
    %v10410 = vadd.f32 %v10369, %v10409
    %v10411 = vpop.f32.mrb[0].mxu0
    %v10412 = vpop.f32.mrb[0].mxu0
    %10413 = vdwg.mxu0
    %10414 = vmatprep.subr.bf16.mxu0 %v9552
    %10415 = vmatpush1.bf16.msra.mxu0 %v9551
    %10416 = vmatprep.subr.bf16.mxu0 %v9556
    %10417 = vmatpush1.bf16.msra.mxu0 %v9555
    %10418 = vmatprep.subr.bf16.mxu0 %v9560
    %10419 = vmatpush1.bf16.msra.mxu0 %v9559
    %10420 = vmatprep.subr.bf16.mxu0 %v9564
    %10421 = vmatpush1.bf16.msra.mxu0 %v9563
    %10422 = vmatprep.subr.bf16.mxu0 %v9568
    %10423 = vmatpush1.bf16.msra.mxu0 %v9567
    %10424 = vmatprep.subr.bf16.mxu0 %v9572
    %10425 = vmatpush1.bf16.msra.mxu0 %v9571
    %10426 = vmatprep.subr.bf16.mxu0 %v9576
    %10427 = vmatpush1.bf16.msra.mxu0 %v9575
    %10428 = vmatprep.subr.bf16.mxu0 %v9580
    %10429 = vmatpush1.bf16.msra.mxu0 %v9579
    %10430 = vmatprep.subr.bf16.mxu0 %v9584
    %10431 = vmatpush1.bf16.msra.mxu0 %v9583
    %10432 = vmatprep.subr.bf16.mxu0 %v9588
    %10433 = vmatpush1.bf16.msra.mxu0 %v9587
    %10434 = vmatprep.subr.bf16.mxu0 %v9592
    %10435 = vmatpush1.bf16.msra.mxu0 %v9591
    %10436 = vmatprep.subr.bf16.mxu0 %v9596
    %10437 = vmatpush1.bf16.msra.mxu0 %v9595
    %10438 = vmatprep.subr.bf16.mxu0 %v9600
    %10439 = vmatpush1.bf16.msra.mxu0 %v9599
    %10440 = vmatprep.subr.bf16.mxu0 %v9604
    %10441 = vmatpush1.bf16.msra.mxu0 %v9603
    %10442 = vmatprep.subr.bf16.mxu0 %v9608
    %10443 = vmatpush1.bf16.msra.mxu0 %v9607
    %10444 = vmatprep.subr.bf16.mxu0 %v9612
    %10445 = vmatpush1.bf16.msra.mxu0 %v9611
    %10446 = vmatprep.mubr.bf16.mxu0 %v7032
    %10447 = vmatmul.mubr.bf16.gmra.mrb[0].mxu0 %v7031
    %v10448 = vpop.f32.mrb[0].mxu0
    %v10449 = vadd.f32 %v10408, %v10448
    %v10450 = vpop.f32.mrb[0].mxu0
    %v10451 = vadd.f32 %v10410, %v10450
    %v10452 = vpop.f32.mrb[0].mxu0
    %v10453 = vpop.f32.mrb[0].mxu0
    %10454 = vdwg.mxu0
    %10455 = vmatprep.subr.bf16.mxu0 %v9106
    %10456 = vmatpush1.bf16.msra.mxu0 %v9105
    %10457 = vmatprep.subr.bf16.mxu0 %v9110
    %10458 = vmatpush1.bf16.msra.mxu0 %v9109
    %10459 = vmatprep.subr.bf16.mxu0 %v9114
    %10460 = vmatpush1.bf16.msra.mxu0 %v9113
    %10461 = vmatprep.subr.bf16.mxu0 %v9118
    %10462 = vmatpush1.bf16.msra.mxu0 %v9117
    %10463 = vmatprep.subr.bf16.mxu0 %v9122
    %10464 = vmatpush1.bf16.msra.mxu0 %v9121
    %10465 = vmatprep.subr.bf16.mxu0 %v9126
    %10466 = vmatpush1.bf16.msra.mxu0 %v9125
    %10467 = vmatprep.subr.bf16.mxu0 %v9130
    %10468 = vmatpush1.bf16.msra.mxu0 %v9129
    %10469 = vmatprep.subr.bf16.mxu0 %v9134
    %10470 = vmatpush1.bf16.msra.mxu0 %v9133
    %10471 = vmatprep.subr.bf16.mxu0 %v9138
    %10472 = vmatpush1.bf16.msra.mxu0 %v9137
    %10473 = vmatprep.subr.bf16.mxu0 %v9142
    %10474 = vmatpush1.bf16.msra.mxu0 %v9141
    %10475 = vmatprep.subr.bf16.mxu0 %v9146
    %10476 = vmatpush1.bf16.msra.mxu0 %v9145
    %10477 = vmatprep.subr.bf16.mxu0 %v9150
    %10478 = vmatpush1.bf16.msra.mxu0 %v9149
    %10479 = vmatprep.subr.bf16.mxu0 %v9154
    %10480 = vmatpush1.bf16.msra.mxu0 %v9153
    %10481 = vmatprep.subr.bf16.mxu0 %v9158
    %10482 = vmatpush1.bf16.msra.mxu0 %v9157
    %10483 = vmatprep.subr.bf16.mxu0 %v9162
    %10484 = vmatpush1.bf16.msra.mxu0 %v9161
    %10485 = vmatprep.subr.bf16.mxu0 %v9166
    %10486 = vmatpush1.bf16.msra.mxu0 %v9165
    %10487 = vmatprep.mubr.bf16.mxu0 %v7018
    %10488 = vmatmul.mubr.bf16.gmra.mrb[0].mxu0 %v7017
    %v10489 = vpop.f32.mrb[0].mxu0
    %v10490 = vadd.f32 %v7558, %v10489
    %v10491 = vpop.f32.mrb[0].mxu0
    %v10492 = vadd.f32 %v7562, %v10491
    %v10493 = vpop.f32.mrb[0].mxu0
    %v10494 = vpop.f32.mrb[0].mxu0
    %10495 = vdwg.mxu0
    %10496 = vmatprep.subr.bf16.mxu0 %v9170
    %10497 = vmatpush1.bf16.msra.mxu0 %v9169
    %10498 = vmatprep.subr.bf16.mxu0 %v9174
    %10499 = vmatpush1.bf16.msra.mxu0 %v9173
    %10500 = vmatprep.subr.bf16.mxu0 %v9178
    %10501 = vmatpush1.bf16.msra.mxu0 %v9177
    %10502 = vmatprep.subr.bf16.mxu0 %v9182
    %10503 = vmatpush1.bf16.msra.mxu0 %v9181
    %10504 = vmatprep.subr.bf16.mxu0 %v9186
    %10505 = vmatpush1.bf16.msra.mxu0 %v9185
    %10506 = vmatprep.subr.bf16.mxu0 %v9190
    %10507 = vmatpush1.bf16.msra.mxu0 %v9189
    %10508 = vmatprep.subr.bf16.mxu0 %v9194
    %10509 = vmatpush1.bf16.msra.mxu0 %v9193
    %10510 = vmatprep.subr.bf16.mxu0 %v9198
    %10511 = vmatpush1.bf16.msra.mxu0 %v9197
    %10512 = vmatprep.subr.bf16.mxu0 %v9202
    %10513 = vmatpush1.bf16.msra.mxu0 %v9201
    %10514 = vmatprep.subr.bf16.mxu0 %v9206
    %10515 = vmatpush1.bf16.msra.mxu0 %v9205
    %10516 = vmatprep.subr.bf16.mxu0 %v9210
    %10517 = vmatpush1.bf16.msra.mxu0 %v9209
    %10518 = vmatprep.subr.bf16.mxu0 %v9214
    %10519 = vmatpush1.bf16.msra.mxu0 %v9213
    %10520 = vmatprep.subr.bf16.mxu0 %v9218
    %10521 = vmatpush1.bf16.msra.mxu0 %v9217
    %10522 = vmatprep.subr.bf16.mxu0 %v9222
    %10523 = vmatpush1.bf16.msra.mxu0 %v9221
    %10524 = vmatprep.subr.bf16.mxu0 %v9226
    %10525 = vmatpush1.bf16.msra.mxu0 %v9225
    %10526 = vmatprep.subr.bf16.mxu0 %v9230
    %10527 = vmatpush1.bf16.msra.mxu0 %v9229
    %10528 = vmatprep.mubr.bf16.mxu0 %v7020
    %10529 = vmatmul.mubr.bf16.gmra.mrb[0].mxu0 %v7019
    %v10530 = vpop.f32.mrb[0].mxu0
    %v10531 = vadd.f32 %v10490, %v10530
    %v10532 = vpop.f32.mrb[0].mxu0
    %v10533 = vadd.f32 %v10492, %v10532
    %v10534 = vpop.f32.mrb[0].mxu0
    %v10535 = vpop.f32.mrb[0].mxu0
    %10536 = vdwg.mxu0
    %10537 = vmatprep.subr.bf16.mxu0 %v9234
    %10538 = vmatpush1.bf16.msra.mxu0 %v9233
    %10539 = vmatprep.subr.bf16.mxu0 %v9238
    %10540 = vmatpush1.bf16.msra.mxu0 %v9237
    %10541 = vmatprep.subr.bf16.mxu0 %v9242
    %10542 = vmatpush1.bf16.msra.mxu0 %v9241
    %10543 = vmatprep.subr.bf16.mxu0 %v9246
    %10544 = vmatpush1.bf16.msra.mxu0 %v9245
    %10545 = vmatprep.subr.bf16.mxu0 %v9250
    %10546 = vmatpush1.bf16.msra.mxu0 %v9249
    %10547 = vmatprep.subr.bf16.mxu0 %v9254
    %10548 = vmatpush1.bf16.msra.mxu0 %v9253
    %10549 = vmatprep.subr.bf16.mxu0 %v9258
    %10550 = vmatpush1.bf16.msra.mxu0 %v9257
    %10551 = vmatprep.subr.bf16.mxu0 %v9262
    %10552 = vmatpush1.bf16.msra.mxu0 %v9261
    %10553 = vmatprep.subr.bf16.mxu0 %v9266
    %10554 = vmatpush1.bf16.msra.mxu0 %v9265
    %10555 = vmatprep.subr.bf16.mxu0 %v9270
    %10556 = vmatpush1.bf16.msra.mxu0 %v9269
    %10557 = vmatprep.subr.bf16.mxu0 %v9274
    %10558 = vmatpush1.bf16.msra.mxu0 %v9273
    %10559 = vmatprep.subr.bf16.mxu0 %v9278
    %10560 = vmatpush1.bf16.msra.mxu0 %v9277
    %10561 = vmatprep.subr.bf16.mxu0 %v9282
    %10562 = vmatpush1.bf16.msra.mxu0 %v9281
    %10563 = vmatprep.subr.bf16.mxu0 %v9286
    %10564 = vmatpush1.bf16.msra.mxu0 %v9285
    %10565 = vmatprep.subr.bf16.mxu0 %v9290
    %10566 = vmatpush1.bf16.msra.mxu0 %v9289
    %10567 = vmatprep.subr.bf16.mxu0 %v9294
    %10568 = vmatpush1.bf16.msra.mxu0 %v9293
    %10569 = vmatprep.mubr.bf16.mxu0 %v7022
    %10570 = vmatmul.mubr.bf16.gmra.mrb[0].mxu0 %v7021
    %v10571 = vpop.f32.mrb[0].mxu0
    %v10572 = vadd.f32 %v10531, %v10571
    %v10573 = vpop.f32.mrb[0].mxu0
    %v10574 = vadd.f32 %v10533, %v10573
    %v10575 = vpop.f32.mrb[0].mxu0
    %v10576 = vpop.f32.mrb[0].mxu0
    %10577 = vdwg.mxu0
    %10578 = vmatprep.subr.bf16.mxu0 %v9298
    %10579 = vmatpush1.bf16.msra.mxu0 %v9297
    %10580 = vmatprep.subr.bf16.mxu0 %v9302
    %10581 = vmatpush1.bf16.msra.mxu0 %v9301
    %10582 = vmatprep.subr.bf16.mxu0 %v9306
    %10583 = vmatpush1.bf16.msra.mxu0 %v9305
    %10584 = vmatprep.subr.bf16.mxu0 %v9310
    %10585 = vmatpush1.bf16.msra.mxu0 %v9309
    %10586 = vmatprep.subr.bf16.mxu0 %v9314
    %10587 = vmatpush1.bf16.msra.mxu0 %v9313
    %10588 = vmatprep.subr.bf16.mxu0 %v9318
    %10589 = vmatpush1.bf16.msra.mxu0 %v9317
    %10590 = vmatprep.subr.bf16.mxu0 %v9322
    %10591 = vmatpush1.bf16.msra.mxu0 %v9321
    %10592 = vmatprep.subr.bf16.mxu0 %v9326
    %10593 = vmatpush1.bf16.msra.mxu0 %v9325
    %10594 = vmatprep.subr.bf16.mxu0 %v9330
    %10595 = vmatpush1.bf16.msra.mxu0 %v9329
    %10596 = vmatprep.subr.bf16.mxu0 %v9334
    %10597 = vmatpush1.bf16.msra.mxu0 %v9333
    %10598 = vmatprep.subr.bf16.mxu0 %v9338
    %10599 = vmatpush1.bf16.msra.mxu0 %v9337
    %10600 = vmatprep.subr.bf16.mxu0 %v9342
    %10601 = vmatpush1.bf16.msra.mxu0 %v9341
    %10602 = vmatprep.subr.bf16.mxu0 %v9346
    %10603 = vmatpush1.bf16.msra.mxu0 %v9345
    %10604 = vmatprep.subr.bf16.mxu0 %v9350
    %10605 = vmatpush1.bf16.msra.mxu0 %v9349
    %10606 = vmatprep.subr.bf16.mxu0 %v9354
    %10607 = vmatpush1.bf16.msra.mxu0 %v9353
    %10608 = vmatprep.subr.bf16.mxu0 %v9358
    %10609 = vmatpush1.bf16.msra.mxu0 %v9357
    %10610 = vmatprep.mubr.bf16.mxu0 %v7024
    %10611 = vmatmul.mubr.bf16.gmra.mrb[0].mxu0 %v7023
    %v10612 = vpop.f32.mrb[0].mxu0
    %v10613 = vadd.f32 %v10572, %v10612
    %v10614 = vpop.f32.mrb[0].mxu0
    %v10615 = vadd.f32 %v10574, %v10614
    %v10616 = vpop.f32.mrb[0].mxu0
    %v10617 = vpop.f32.mrb[0].mxu0
    %10618 = vdwg.mxu0
    %10619 = vmatprep.subr.bf16.mxu0 %v9362
    %10620 = vmatpush1.bf16.msra.mxu0 %v9361
    %10621 = vmatprep.subr.bf16.mxu0 %v9366
    %10622 = vmatpush1.bf16.msra.mxu0 %v9365
    %10623 = vmatprep.subr.bf16.mxu0 %v9370
    %10624 = vmatpush1.bf16.msra.mxu0 %v9369
    %10625 = vmatprep.subr.bf16.mxu0 %v9374
    %10626 = vmatpush1.bf16.msra.mxu0 %v9373
    %10627 = vmatprep.subr.bf16.mxu0 %v9378
    %10628 = vmatpush1.bf16.msra.mxu0 %v9377
    %10629 = vmatprep.subr.bf16.mxu0 %v9382
    %10630 = vmatpush1.bf16.msra.mxu0 %v9381
    %10631 = vmatprep.subr.bf16.mxu0 %v9386
    %10632 = vmatpush1.bf16.msra.mxu0 %v9385
    %10633 = vmatprep.subr.bf16.mxu0 %v9390
    %10634 = vmatpush1.bf16.msra.mxu0 %v9389
    %10635 = vmatprep.subr.bf16.mxu0 %v9394
    %10636 = vmatpush1.bf16.msra.mxu0 %v9393
    %10637 = vmatprep.subr.bf16.mxu0 %v9398
    %10638 = vmatpush1.bf16.msra.mxu0 %v9397
    %10639 = vmatprep.subr.bf16.mxu0 %v9402
    %10640 = vmatpush1.bf16.msra.mxu0 %v9401
    %10641 = vmatprep.subr.bf16.mxu0 %v9406
    %10642 = vmatpush1.bf16.msra.mxu0 %v9405
    %10643 = vmatprep.subr.bf16.mxu0 %v9410
    %10644 = vmatpush1.bf16.msra.mxu0 %v9409
    %10645 = vmatprep.subr.bf16.mxu0 %v9414
    %10646 = vmatpush1.bf16.msra.mxu0 %v9413
    %10647 = vmatprep.subr.bf16.mxu0 %v9418
    %10648 = vmatpush1.bf16.msra.mxu0 %v9417
    %10649 = vmatprep.subr.bf16.mxu0 %v9422
    %10650 = vmatpush1.bf16.msra.mxu0 %v9421
    %10651 = vmatprep.mubr.bf16.mxu0 %v7026
    %10652 = vmatmul.mubr.bf16.gmra.mrb[0].mxu0 %v7025
    %v10653 = vpop.f32.mrb[0].mxu0
    %v10654 = vadd.f32 %v10613, %v10653
    %v10655 = vpop.f32.mrb[0].mxu0
    %v10656 = vadd.f32 %v10615, %v10655
    %v10657 = vpop.f32.mrb[0].mxu0
    %v10658 = vpop.f32.mrb[0].mxu0
    %10659 = vdwg.mxu0
    %10660 = vmatprep.subr.bf16.mxu0 %v9426
    %10661 = vmatpush1.bf16.msra.mxu0 %v9425
    %10662 = vmatprep.subr.bf16.mxu0 %v9430
    %10663 = vmatpush1.bf16.msra.mxu0 %v9429
    %10664 = vmatprep.subr.bf16.mxu0 %v9434
    %10665 = vmatpush1.bf16.msra.mxu0 %v9433
    %10666 = vmatprep.subr.bf16.mxu0 %v9438
    %10667 = vmatpush1.bf16.msra.mxu0 %v9437
    %10668 = vmatprep.subr.bf16.mxu0 %v9442
    %10669 = vmatpush1.bf16.msra.mxu0 %v9441
    %10670 = vmatprep.subr.bf16.mxu0 %v9446
    %10671 = vmatpush1.bf16.msra.mxu0 %v9445
    %10672 = vmatprep.subr.bf16.mxu0 %v9450
    %10673 = vmatpush1.bf16.msra.mxu0 %v9449
    %10674 = vmatprep.subr.bf16.mxu0 %v9454
    %10675 = vmatpush1.bf16.msra.mxu0 %v9453
    %10676 = vmatprep.subr.bf16.mxu0 %v9458
    %10677 = vmatpush1.bf16.msra.mxu0 %v9457
    %10678 = vmatprep.subr.bf16.mxu0 %v9462
    %10679 = vmatpush1.bf16.msra.mxu0 %v9461
    %10680 = vmatprep.subr.bf16.mxu0 %v9466
    %10681 = vmatpush1.bf16.msra.mxu0 %v9465
    %10682 = vmatprep.subr.bf16.mxu0 %v9470
    %10683 = vmatpush1.bf16.msra.mxu0 %v9469
    %10684 = vmatprep.subr.bf16.mxu0 %v9474
    %10685 = vmatpush1.bf16.msra.mxu0 %v9473
    %10686 = vmatprep.subr.bf16.mxu0 %v9478
    %10687 = vmatpush1.bf16.msra.mxu0 %v9477
    %10688 = vmatprep.subr.bf16.mxu0 %v9482
    %10689 = vmatpush1.bf16.msra.mxu0 %v9481
    %10690 = vmatprep.subr.bf16.mxu0 %v9486
    %10691 = vmatpush1.bf16.msra.mxu0 %v9485
    %10692 = vmatprep.mubr.bf16.mxu0 %v7028
    %10693 = vmatmul.mubr.bf16.gmra.mrb[0].mxu0 %v7027
    %v10694 = vpop.f32.mrb[0].mxu0
    %v10695 = vadd.f32 %v10654, %v10694
    %v10696 = vpop.f32.mrb[0].mxu0
    %v10697 = vadd.f32 %v10656, %v10696
    %v10698 = vpop.f32.mrb[0].mxu0
    %v10699 = vpop.f32.mrb[0].mxu0
    %10700 = vdwg.mxu0
    %10701 = vmatprep.subr.bf16.mxu0 %v9490
    %10702 = vmatpush1.bf16.msra.mxu0 %v9489
    %10703 = vmatprep.subr.bf16.mxu0 %v9494
    %10704 = vmatpush1.bf16.msra.mxu0 %v9493
    %10705 = vmatprep.subr.bf16.mxu0 %v9498
    %10706 = vmatpush1.bf16.msra.mxu0 %v9497
    %10707 = vmatprep.subr.bf16.mxu0 %v9502
    %10708 = vmatpush1.bf16.msra.mxu0 %v9501
    %10709 = vmatprep.subr.bf16.mxu0 %v9506
    %10710 = vmatpush1.bf16.msra.mxu0 %v9505
    %10711 = vmatprep.subr.bf16.mxu0 %v9510
    %10712 = vmatpush1.bf16.msra.mxu0 %v9509
    %10713 = vmatprep.subr.bf16.mxu0 %v9514
    %10714 = vmatpush1.bf16.msra.mxu0 %v9513
    %10715 = vmatprep.subr.bf16.mxu0 %v9518
    %10716 = vmatpush1.bf16.msra.mxu0 %v9517
    %10717 = vmatprep.subr.bf16.mxu0 %v9522
    %10718 = vmatpush1.bf16.msra.mxu0 %v9521
    %10719 = vmatprep.subr.bf16.mxu0 %v9526
    %10720 = vmatpush1.bf16.msra.mxu0 %v9525
    %10721 = vmatprep.subr.bf16.mxu0 %v9530
    %10722 = vmatpush1.bf16.msra.mxu0 %v9529
    %10723 = vmatprep.subr.bf16.mxu0 %v9534
    %10724 = vmatpush1.bf16.msra.mxu0 %v9533
    %10725 = vmatprep.subr.bf16.mxu0 %v9538
    %10726 = vmatpush1.bf16.msra.mxu0 %v9537
    %10727 = vmatprep.subr.bf16.mxu0 %v9542
    %10728 = vmatpush1.bf16.msra.mxu0 %v9541
    %10729 = vmatprep.subr.bf16.mxu0 %v9546
    %10730 = vmatpush1.bf16.msra.mxu0 %v9545
    %10731 = vmatprep.subr.bf16.mxu0 %v9550
    %10732 = vmatpush1.bf16.msra.mxu0 %v9549
    %10733 = vmatprep.mubr.bf16.mxu0 %v7030
    %10734 = vmatmul.mubr.bf16.gmra.mrb[0].mxu0 %v7029
    %v10735 = vpop.f32.mrb[0].mxu0
    %v10736 = vadd.f32 %v10695, %v10735
    %v10737 = vpop.f32.mrb[0].mxu0
    %v10738 = vadd.f32 %v10697, %v10737
    %v10739 = vpop.f32.mrb[0].mxu0
    %v10740 = vpop.f32.mrb[0].mxu0
    %10741 = vdwg.mxu0
    %10742 = vmatprep.subr.bf16.mxu0 %v9554
    %10743 = vmatpush1.bf16.msra.mxu0 %v9553
    %10744 = vmatprep.subr.bf16.mxu0 %v9558
    %10745 = vmatpush1.bf16.msra.mxu0 %v9557
    %10746 = vmatprep.subr.bf16.mxu0 %v9562
    %10747 = vmatpush1.bf16.msra.mxu0 %v9561
    %10748 = vmatprep.subr.bf16.mxu0 %v9566
    %10749 = vmatpush1.bf16.msra.mxu0 %v9565
    %10750 = vmatprep.subr.bf16.mxu0 %v9570
    %10751 = vmatpush1.bf16.msra.mxu0 %v9569
    %10752 = vmatprep.subr.bf16.mxu0 %v9574
    %10753 = vmatpush1.bf16.msra.mxu0 %v9573
    %10754 = vmatprep.subr.bf16.mxu0 %v9578
    %10755 = vmatpush1.bf16.msra.mxu0 %v9577
    %10756 = vmatprep.subr.bf16.mxu0 %v9582
    %10757 = vmatpush1.bf16.msra.mxu0 %v9581
    %10758 = vmatprep.subr.bf16.mxu0 %v9586
    %10759 = vmatpush1.bf16.msra.mxu0 %v9585
    %10760 = vmatprep.subr.bf16.mxu0 %v9590
    %10761 = vmatpush1.bf16.msra.mxu0 %v9589
    %10762 = vmatprep.subr.bf16.mxu0 %v9594
    %10763 = vmatpush1.bf16.msra.mxu0 %v9593
    %10764 = vmatprep.subr.bf16.mxu0 %v9598
    %10765 = vmatpush1.bf16.msra.mxu0 %v9597
    %10766 = vmatprep.subr.bf16.mxu0 %v9602
    %10767 = vmatpush1.bf16.msra.mxu0 %v9601
    %10768 = vmatprep.subr.bf16.mxu0 %v9606
    %10769 = vmatpush1.bf16.msra.mxu0 %v9605
    %10770 = vmatprep.subr.bf16.mxu0 %v9610
    %10771 = vmatpush1.bf16.msra.mxu0 %v9609
    %10772 = vmatprep.subr.bf16.mxu0 %v9614
    %10773 = vmatpush1.bf16.msra.mxu0 %v9613
    %10774 = vmatprep.mubr.bf16.mxu0 %v7032
    %10775 = vmatmul.mubr.bf16.gmra.mrb[0].mxu0 %v7031
    %v10776 = vpop.f32.mrb[0].mxu0
    %v10777 = vadd.f32 %v10736, %v10776
    %v10778 = vpop.f32.mrb[0].mxu0
    %v10779 = vadd.f32 %v10738, %v10778
    %v10780 = vpop.f32.mrb[0].mxu0
    %v10781 = vpop.f32.mrb[0].mxu0
    %10782 = vdwg.mxu0
    %v10783 = vxor.u32 %v10449, 2147483648
    %v10784 = vxor.u32 %v10451, 2147483648
    %v10785 = vxor.u32 %v10777, 2147483648
    %v10786 = vxor.u32 %v10779, 2147483648
    %v10787 = vmul.f32 %v10783, 1.442695
    %v10788 = vpow.pop %v10787
    %v10789 = vmul.f32 %v10784, 1.442695
    %v10790 = vpow.pop %v10789
    %v10791 = vmul.f32 %v10785, 1.442695
    %v10792 = vpow.pop %v10791
    %v10793 = vmul.f32 %v10786, 1.442695
    %v10794 = vpow.pop %v10793
    %v10795 = vadd.f32 %v10788, 1.0
    %v10796 = vadd.f32 %v10790, 1.0
    %v10797 = vadd.f32 %v10792, 1.0
    %v10798 = vadd.f32 %v10794, 1.0
    %v10799 = vrcp.pop %v10795
    %v10800 = vmul.f32 1.0, %v10799
    %v10801 = vrcp.pop %v10796
    %v10802 = vmul.f32 1.0, %v10801
    %v10803 = vrcp.pop %v10797
    %v10804 = vmul.f32 1.0, %v10803
    %v10805 = vrcp.pop %v10798
    %v10806 = vmul.f32 1.0, %v10805
    %v10807 = vpack.c.bf16 %v10800, %v10800
    %v10808 = vpack.c.bf16 %v10802, %v10802
    %v10809 = vpack.c.bf16 %v10804, %v10804
    %v10810 = vpack.c.bf16 %v10806, %v10806
    %v10811 = vld [vmem:[#allocation10] sm:$0xff]
    %v10812 = vld [vmem:[#allocation10 + $0x8] sm:$0xff]
    %v10813 = vld [vmem:[#allocation10 + $0x10] sm:$0xff]
    %v10814 = vld [vmem:[#allocation10 + $0x18] sm:$0xff]
    %v10815 = vld [vmem:[#allocation10 + $0x20] sm:$0xff]
    %v10816 = vld [vmem:[#allocation10 + $0x28] sm:$0xff]
    %v10817 = vld [vmem:[#allocation10 + $0x30] sm:$0xff]
    %v10818 = vld [vmem:[#allocation10 + $0x38] sm:$0xff]
    %v10819 = vld [vmem:[#allocation10 + $0x40] sm:$0xff]
    %v10820 = vld [vmem:[#allocation10 + $0x48] sm:$0xff]
    %v10821 = vld [vmem:[#allocation10 + $0x50] sm:$0xff]
    %v10822 = vld [vmem:[#allocation10 + $0x58] sm:$0xff]
    %v10823 = vld [vmem:[#allocation10 + $0x60] sm:$0xff]
    %v10824 = vld [vmem:[#allocation10 + $0x68] sm:$0xff]
    %v10825 = vld [vmem:[#allocation10 + $0x70] sm:$0xff]
    %v10826 = vld [vmem:[#allocation10 + $0x78] sm:$0xff]
    %v10827 = vld [vmem:[#allocation10 + $0x80] sm:$0xff]
    %v10828 = vld [vmem:[#allocation10 + $0x88] sm:$0xff]
    %v10829 = vld [vmem:[#allocation10 + $0x90] sm:$0xff]
    %v10830 = vld [vmem:[#allocation10 + $0x98] sm:$0xff]
    %v10831 = vld [vmem:[#allocation10 + $0xa0] sm:$0xff]
    %v10832 = vld [vmem:[#allocation10 + $0xa8] sm:$0xff]
    %v10833 = vld [vmem:[#allocation10 + $0xb0] sm:$0xff]
    %v10834 = vld [vmem:[#allocation10 + $0xb8] sm:$0xff]
    %v10835 = vld [vmem:[#allocation10 + $0xc0] sm:$0xff]
    %v10836 = vld [vmem:[#allocation10 + $0xc8] sm:$0xff]
    %v10837 = vld [vmem:[#allocation10 + $0xd0] sm:$0xff]
    %v10838 = vld [vmem:[#allocation10 + $0xd8] sm:$0xff]
    %v10839 = vld [vmem:[#allocation10 + $0xe0] sm:$0xff]
    %v10840 = vld [vmem:[#allocation10 + $0xe8] sm:$0xff]
    %v10841 = vld [vmem:[#allocation10 + $0xf0] sm:$0xff]
    %v10842 = vld [vmem:[#allocation10 + $0xf8] sm:$0xff]
    %v10843 = vld [vmem:[#allocation10 + $0x100] sm:$0xff]
    %v10844 = vld [vmem:[#allocation10 + $0x108] sm:$0xff]
    %v10845 = vld [vmem:[#allocation10 + $0x110] sm:$0xff]
    %v10846 = vld [vmem:[#allocation10 + $0x118] sm:$0xff]
    %v10847 = vld [vmem:[#allocation10 + $0x120] sm:$0xff]
    %v10848 = vld [vmem:[#allocation10 + $0x128] sm:$0xff]
    %v10849 = vld [vmem:[#allocation10 + $0x130] sm:$0xff]
    %v10850 = vld [vmem:[#allocation10 + $0x138] sm:$0xff]
    %v10851 = vld [vmem:[#allocation10 + $0x140] sm:$0xff]
    %v10852 = vld [vmem:[#allocation10 + $0x148] sm:$0xff]
    %v10853 = vld [vmem:[#allocation10 + $0x150] sm:$0xff]
    %v10854 = vld [vmem:[#allocation10 + $0x158] sm:$0xff]
    %v10855 = vld [vmem:[#allocation10 + $0x160] sm:$0xff]
    %v10856 = vld [vmem:[#allocation10 + $0x168] sm:$0xff]
    %v10857 = vld [vmem:[#allocation10 + $0x170] sm:$0xff]
    %v10858 = vld [vmem:[#allocation10 + $0x178] sm:$0xff]
    %v10859 = vld [vmem:[#allocation10 + $0x180] sm:$0xff]
    %v10860 = vld [vmem:[#allocation10 + $0x188] sm:$0xff]
    %v10861 = vld [vmem:[#allocation10 + $0x190] sm:$0xff]
    %v10862 = vld [vmem:[#allocation10 + $0x198] sm:$0xff]
    %v10863 = vld [vmem:[#allocation10 + $0x1a0] sm:$0xff]
    %v10864 = vld [vmem:[#allocation10 + $0x1a8] sm:$0xff]
    %v10865 = vld [vmem:[#allocation10 + $0x1b0] sm:$0xff]
    %v10866 = vld [vmem:[#allocation10 + $0x1b8] sm:$0xff]
    %v10867 = vld [vmem:[#allocation10 + $0x1c0] sm:$0xff]
    %v10868 = vld [vmem:[#allocation10 + $0x1c8] sm:$0xff]
    %v10869 = vld [vmem:[#allocation10 + $0x1d0] sm:$0xff]
    %v10870 = vld [vmem:[#allocation10 + $0x1d8] sm:$0xff]
    %v10871 = vld [vmem:[#allocation10 + $0x1e0] sm:$0xff]
    %v10872 = vld [vmem:[#allocation10 + $0x1e8] sm:$0xff]
    %v10873 = vld [vmem:[#allocation10 + $0x1f0] sm:$0xff]
    %v10874 = vld [vmem:[#allocation10 + $0x1f8] sm:$0xff]
    %v10875 = vld [vmem:[#allocation11] sm:$0x3]
    %v10877 = vlaneseq
    %v10878 = vshrl.u32 %v10877, 7
    %v10879 = vsub.s32 0, %v10878
    %v10880 = vrot.slane %v10875, %v10879
    %v10881 = vlaneseq
    %v10882 = vshrl.u32 %v10881, 7
    %v10883 = vsub.s32 1, %v10882
    %v10884 = vrot.slane %v10875, %v10883
    %v10951 = vunpack.c.l.b16 %v10811
    %v10952 = vunpack.c.h.b16 %v10811
    %v10953 = vunpack.c.l.b16 %v10812
    %v10954 = vunpack.c.h.b16 %v10812
    %v10955 = vunpack.c.l.b16 %v10813
    %v10956 = vunpack.c.h.b16 %v10813
    %v10957 = vunpack.c.l.b16 %v10814
    %v10958 = vunpack.c.h.b16 %v10814
    %v10959 = vunpack.c.l.b16 %v10815
    %v10960 = vunpack.c.h.b16 %v10815
    %v10961 = vunpack.c.l.b16 %v10816
    %v10962 = vunpack.c.h.b16 %v10816
    %v10963 = vunpack.c.l.b16 %v10817
    %v10964 = vunpack.c.h.b16 %v10817
    %v10965 = vunpack.c.l.b16 %v10818
    %v10966 = vunpack.c.h.b16 %v10818
    %v10967 = vunpack.c.l.b16 %v10819
    %v10968 = vunpack.c.h.b16 %v10819
    %v10969 = vunpack.c.l.b16 %v10820
    %v10970 = vunpack.c.h.b16 %v10820
    %v10971 = vunpack.c.l.b16 %v10821
    %v10972 = vunpack.c.h.b16 %v10821
    %v10973 = vunpack.c.l.b16 %v10822
    %v10974 = vunpack.c.h.b16 %v10822
    %v10975 = vunpack.c.l.b16 %v10823
    %v10976 = vunpack.c.h.b16 %v10823
    %v10977 = vunpack.c.l.b16 %v10824
    %v10978 = vunpack.c.h.b16 %v10824
    %v10979 = vunpack.c.l.b16 %v10825
    %v10980 = vunpack.c.h.b16 %v10825
    %v10981 = vunpack.c.l.b16 %v10826
    %v10982 = vunpack.c.h.b16 %v10826
    %v10983 = vunpack.c.l.b16 %v10827
    %v10984 = vunpack.c.h.b16 %v10827
    %v10985 = vunpack.c.l.b16 %v10828
    %v10986 = vunpack.c.h.b16 %v10828
    %v10987 = vunpack.c.l.b16 %v10829
    %v10988 = vunpack.c.h.b16 %v10829
    %v10989 = vunpack.c.l.b16 %v10830
    %v10990 = vunpack.c.h.b16 %v10830
    %v10991 = vunpack.c.l.b16 %v10831
    %v10992 = vunpack.c.h.b16 %v10831
    %v10993 = vunpack.c.l.b16 %v10832
    %v10994 = vunpack.c.h.b16 %v10832
    %v10995 = vunpack.c.l.b16 %v10833
    %v10996 = vunpack.c.h.b16 %v10833
    %v10997 = vunpack.c.l.b16 %v10834
    %v10998 = vunpack.c.h.b16 %v10834
    %v10999 = vunpack.c.l.b16 %v10835
    %v11000 = vunpack.c.h.b16 %v10835
    %v11001 = vunpack.c.l.b16 %v10836
    %v11002 = vunpack.c.h.b16 %v10836
    %v11003 = vunpack.c.l.b16 %v10837
    %v11004 = vunpack.c.h.b16 %v10837
    %v11005 = vunpack.c.l.b16 %v10838
    %v11006 = vunpack.c.h.b16 %v10838
    %v11007 = vunpack.c.l.b16 %v10839
    %v11008 = vunpack.c.h.b16 %v10839
    %v11009 = vunpack.c.l.b16 %v10840
    %v11010 = vunpack.c.h.b16 %v10840
    %v11011 = vunpack.c.l.b16 %v10841
    %v11012 = vunpack.c.h.b16 %v10841
    %v11013 = vunpack.c.l.b16 %v10842
    %v11014 = vunpack.c.h.b16 %v10842
    %v11015 = vunpack.c.l.b16 %v10843
    %v11016 = vunpack.c.h.b16 %v10843
    %v11017 = vunpack.c.l.b16 %v10844
    %v11018 = vunpack.c.h.b16 %v10844
    %v11019 = vunpack.c.l.b16 %v10845
    %v11020 = vunpack.c.h.b16 %v10845
    %v11021 = vunpack.c.l.b16 %v10846
    %v11022 = vunpack.c.h.b16 %v10846
    %v11023 = vunpack.c.l.b16 %v10847
    %v11024 = vunpack.c.h.b16 %v10847
    %v11025 = vunpack.c.l.b16 %v10848
    %v11026 = vunpack.c.h.b16 %v10848
    %v11027 = vunpack.c.l.b16 %v10849
    %v11028 = vunpack.c.h.b16 %v10849
    %v11029 = vunpack.c.l.b16 %v10850
    %v11030 = vunpack.c.h.b16 %v10850
    %v11031 = vunpack.c.l.b16 %v10851
    %v11032 = vunpack.c.h.b16 %v10851
    %v11033 = vunpack.c.l.b16 %v10852
    %v11034 = vunpack.c.h.b16 %v10852
    %v11035 = vunpack.c.l.b16 %v10853
    %v11036 = vunpack.c.h.b16 %v10853
    %v11037 = vunpack.c.l.b16 %v10854
    %v11038 = vunpack.c.h.b16 %v10854
    %v11039 = vunpack.c.l.b16 %v10855
    %v11040 = vunpack.c.h.b16 %v10855
    %v11041 = vunpack.c.l.b16 %v10856
    %v11042 = vunpack.c.h.b16 %v10856
    %v11043 = vunpack.c.l.b16 %v10857
    %v11044 = vunpack.c.h.b16 %v10857
    %v11045 = vunpack.c.l.b16 %v10858
    %v11046 = vunpack.c.h.b16 %v10858
    %v11047 = vunpack.c.l.b16 %v10859
    %v11048 = vunpack.c.h.b16 %v10859
    %v11049 = vunpack.c.l.b16 %v10860
    %v11050 = vunpack.c.h.b16 %v10860
    %v11051 = vunpack.c.l.b16 %v10861
    %v11052 = vunpack.c.h.b16 %v10861
    %v11053 = vunpack.c.l.b16 %v10862
    %v11054 = vunpack.c.h.b16 %v10862
    %v11055 = vunpack.c.l.b16 %v10863
    %v11056 = vunpack.c.h.b16 %v10863
    %v11057 = vunpack.c.l.b16 %v10864
    %v11058 = vunpack.c.h.b16 %v10864
    %v11059 = vunpack.c.l.b16 %v10865
    %v11060 = vunpack.c.h.b16 %v10865
    %v11061 = vunpack.c.l.b16 %v10866
    %v11062 = vunpack.c.h.b16 %v10866
    %v11063 = vunpack.c.l.b16 %v10867
    %v11064 = vunpack.c.h.b16 %v10867
    %v11065 = vunpack.c.l.b16 %v10868
    %v11066 = vunpack.c.h.b16 %v10868
    %v11067 = vunpack.c.l.b16 %v10869
    %v11068 = vunpack.c.h.b16 %v10869
    %v11069 = vunpack.c.l.b16 %v10870
    %v11070 = vunpack.c.h.b16 %v10870
    %v11071 = vunpack.c.l.b16 %v10871
    %v11072 = vunpack.c.h.b16 %v10871
    %v11073 = vunpack.c.l.b16 %v10872
    %v11074 = vunpack.c.h.b16 %v10872
    %v11075 = vunpack.c.l.b16 %v10873
    %v11076 = vunpack.c.h.b16 %v10873
    %v11077 = vunpack.c.l.b16 %v10874
    %v11078 = vunpack.c.h.b16 %v10874
    %v11079 = vpack.c.b16 %v10953, %v10951
    %v11080 = vpack.c.b16 %v10954, %v10952
    %v11081 = vpack.c.b16 %v10957, %v10955
    %v11082 = vpack.c.b16 %v10958, %v10956
    %v11083 = vpack.c.b16 %v10961, %v10959
    %v11084 = vpack.c.b16 %v10962, %v10960
    %v11085 = vpack.c.b16 %v10965, %v10963
    %v11086 = vpack.c.b16 %v10966, %v10964
    %v11087 = vpack.c.b16 %v10969, %v10967
    %v11088 = vpack.c.b16 %v10970, %v10968
    %v11089 = vpack.c.b16 %v10973, %v10971
    %v11090 = vpack.c.b16 %v10974, %v10972
    %v11091 = vpack.c.b16 %v10977, %v10975
    %v11092 = vpack.c.b16 %v10978, %v10976
    %v11093 = vpack.c.b16 %v10981, %v10979
    %v11094 = vpack.c.b16 %v10982, %v10980
    %v11095 = vpack.c.b16 %v10985, %v10983
    %v11096 = vpack.c.b16 %v10986, %v10984
    %v11097 = vpack.c.b16 %v10989, %v10987
    %v11098 = vpack.c.b16 %v10990, %v10988
    %v11099 = vpack.c.b16 %v10993, %v10991
    %v11100 = vpack.c.b16 %v10994, %v10992
    %v11101 = vpack.c.b16 %v10997, %v10995
    %v11102 = vpack.c.b16 %v10998, %v10996
    %v11103 = vpack.c.b16 %v11001, %v10999
    %v11104 = vpack.c.b16 %v11002, %v11000
    %v11105 = vpack.c.b16 %v11005, %v11003
    %v11106 = vpack.c.b16 %v11006, %v11004
    %v11107 = vpack.c.b16 %v11009, %v11007
    %v11108 = vpack.c.b16 %v11010, %v11008
    %v11109 = vpack.c.b16 %v11013, %v11011
    %v11110 = vpack.c.b16 %v11014, %v11012
    %v11111 = vpack.c.b16 %v11017, %v11015
    %v11112 = vpack.c.b16 %v11018, %v11016
    %v11113 = vpack.c.b16 %v11021, %v11019
    %v11114 = vpack.c.b16 %v11022, %v11020
    %v11115 = vpack.c.b16 %v11025, %v11023
    %v11116 = vpack.c.b16 %v11026, %v11024
    %v11117 = vpack.c.b16 %v11029, %v11027
    %v11118 = vpack.c.b16 %v11030, %v11028
    %v11119 = vpack.c.b16 %v11033, %v11031
    %v11120 = vpack.c.b16 %v11034, %v11032
    %v11121 = vpack.c.b16 %v11037, %v11035
    %v11122 = vpack.c.b16 %v11038, %v11036
    %v11123 = vpack.c.b16 %v11041, %v11039
    %v11124 = vpack.c.b16 %v11042, %v11040
    %v11125 = vpack.c.b16 %v11045, %v11043
    %v11126 = vpack.c.b16 %v11046, %v11044
    %v11127 = vpack.c.b16 %v11049, %v11047
    %v11128 = vpack.c.b16 %v11050, %v11048
    %v11129 = vpack.c.b16 %v11053, %v11051
    %v11130 = vpack.c.b16 %v11054, %v11052
    %v11131 = vpack.c.b16 %v11057, %v11055
    %v11132 = vpack.c.b16 %v11058, %v11056
    %v11133 = vpack.c.b16 %v11061, %v11059
    %v11134 = vpack.c.b16 %v11062, %v11060
    %v11135 = vpack.c.b16 %v11065, %v11063
    %v11136 = vpack.c.b16 %v11066, %v11064
    %v11137 = vpack.c.b16 %v11069, %v11067
    %v11138 = vpack.c.b16 %v11070, %v11068
    %v11139 = vpack.c.b16 %v11073, %v11071
    %v11140 = vpack.c.b16 %v11074, %v11072
    %v11141 = vpack.c.b16 %v11077, %v11075
    %v11142 = vpack.c.b16 %v11078, %v11076
    %11207 = vmatprep.subr.bf16.mxu0 %v11080
    %11208 = vmatpush1.bf16.msra.mxu0 %v11079
    %11209 = vmatprep.subr.bf16.mxu0 %v11082
    %11210 = vmatpush1.bf16.msra.mxu0 %v11081
    %11211 = vmatprep.subr.bf16.mxu0 %v11084
    %11212 = vmatpush1.bf16.msra.mxu0 %v11083
    %11213 = vmatprep.subr.bf16.mxu0 %v11086
    %11214 = vmatpush1.bf16.msra.mxu0 %v11085
    %11215 = vmatprep.subr.bf16.mxu0 %v11088
    %11216 = vmatpush1.bf16.msra.mxu0 %v11087
    %11217 = vmatprep.subr.bf16.mxu0 %v11090
    %11218 = vmatpush1.bf16.msra.mxu0 %v11089
    %11219 = vmatprep.subr.bf16.mxu0 %v11092
    %11220 = vmatpush1.bf16.msra.mxu0 %v11091
    %11221 = vmatprep.subr.bf16.mxu0 %v11094
    %11222 = vmatpush1.bf16.msra.mxu0 %v11093
    %11223 = vmatprep.subr.bf16.mxu0 %v11096
    %11224 = vmatpush1.bf16.msra.mxu0 %v11095
    %11225 = vmatprep.subr.bf16.mxu0 %v11098
    %11226 = vmatpush1.bf16.msra.mxu0 %v11097
    %11227 = vmatprep.subr.bf16.mxu0 %v11100
    %11228 = vmatpush1.bf16.msra.mxu0 %v11099
    %11229 = vmatprep.subr.bf16.mxu0 %v11102
    %11230 = vmatpush1.bf16.msra.mxu0 %v11101
    %11231 = vmatprep.subr.bf16.mxu0 %v11104
    %11232 = vmatpush1.bf16.msra.mxu0 %v11103
    %11233 = vmatprep.subr.bf16.mxu0 %v11106
    %11234 = vmatpush1.bf16.msra.mxu0 %v11105
    %11235 = vmatprep.subr.bf16.mxu0 %v11108
    %11236 = vmatpush1.bf16.msra.mxu0 %v11107
    %11237 = vmatprep.subr.bf16.mxu0 %v11110
    %11238 = vmatpush1.bf16.msra.mxu0 %v11109
    %11239 = vmatprep.mubr.bf16.mxu0 %v10808
    %11240 = vmatmul.mubr.bf16.gmra.mrb[0].mxu0 %v10807
    %v11241 = vpop.f32.mrb[0].mxu0
    %v11242 = vadd.f32 %v10880, %v11241
    %v11243 = vpop.f32.mrb[0].mxu0
    %v11244 = vadd.f32 %v10884, %v11243
    %v11245 = vpop.f32.mrb[0].mxu0
    %v11246 = vpop.f32.mrb[0].mxu0
    %11247 = vdwg.mxu0
    %11248 = vmatprep.subr.bf16.mxu0 %v11112
    %11249 = vmatpush1.bf16.msra.mxu0 %v11111
    %11250 = vmatprep.subr.bf16.mxu0 %v11114
    %11251 = vmatpush1.bf16.msra.mxu0 %v11113
    %11252 = vmatprep.subr.bf16.mxu0 %v11116
    %11253 = vmatpush1.bf16.msra.mxu0 %v11115
    %11254 = vmatprep.subr.bf16.mxu0 %v11118
    %11255 = vmatpush1.bf16.msra.mxu0 %v11117
    %11256 = vmatprep.subr.bf16.mxu0 %v11120
    %11257 = vmatpush1.bf16.msra.mxu0 %v11119
    %11258 = vmatprep.subr.bf16.mxu0 %v11122
    %11259 = vmatpush1.bf16.msra.mxu0 %v11121
    %11260 = vmatprep.subr.bf16.mxu0 %v11124
    %11261 = vmatpush1.bf16.msra.mxu0 %v11123
    %11262 = vmatprep.subr.bf16.mxu0 %v11126
    %11263 = vmatpush1.bf16.msra.mxu0 %v11125
    %11264 = vmatprep.subr.bf16.mxu0 %v11128
    %11265 = vmatpush1.bf16.msra.mxu0 %v11127
    %11266 = vmatprep.subr.bf16.mxu0 %v11130
    %11267 = vmatpush1.bf16.msra.mxu0 %v11129
    %11268 = vmatprep.subr.bf16.mxu0 %v11132
    %11269 = vmatpush1.bf16.msra.mxu0 %v11131
    %11270 = vmatprep.subr.bf16.mxu0 %v11134
    %11271 = vmatpush1.bf16.msra.mxu0 %v11133
    %11272 = vmatprep.subr.bf16.mxu0 %v11136
    %11273 = vmatpush1.bf16.msra.mxu0 %v11135
    %11274 = vmatprep.subr.bf16.mxu0 %v11138
    %11275 = vmatpush1.bf16.msra.mxu0 %v11137
    %11276 = vmatprep.subr.bf16.mxu0 %v11140
    %11277 = vmatpush1.bf16.msra.mxu0 %v11139
    %11278 = vmatprep.subr.bf16.mxu0 %v11142
    %11279 = vmatpush1.bf16.msra.mxu0 %v11141
    %11280 = vmatprep.mubr.bf16.mxu0 %v10810
    %11281 = vmatmul.mubr.bf16.gmra.mrb[0].mxu0 %v10809
    %v11282 = vpop.f32.mrb[0].mxu0
    %v11283 = vadd.f32 %v11242, %v11282
    %v11284 = vpop.f32.mrb[0].mxu0
    %v11285 = vadd.f32 %v11244, %v11284
    %v11286 = vpop.f32.mrb[0].mxu0
    %v11287 = vpop.f32.mrb[0].mxu0
    %11288 = vdwg.mxu0
    %v11289 = vxor.u32 %v11283, 2147483648
    %v11290 = vxor.u32 %v11285, 2147483648
    %v11291 = vmul.f32 %v11289, 1.442695
    %v11292 = vpow.pop %v11291
    %v11293 = vmul.f32 %v11290, 1.442695
    %v11294 = vpow.pop %v11293
    %v11295 = vadd.f32 %v11292, 1.0
    %v11296 = vadd.f32 %v11294, 1.0
    %v11297 = vrcp.pop %v11295
    %v11298 = vmul.f32 1.0, %v11297
    %v11299 = vrcp.pop %v11296
    %v11300 = vmul.f32 1.0, %v11299
    %v11301 = vpack.c.bf16 %v11298, %v11298
    %v11302 = vpack.c.bf16 %v11300, %v11300
    %v11303 = vld [vmem:[#allocation13] sm:$0xf]
    %v11304 = vld [vmem:[#allocation13 + $0x4] sm:$0xf]
    %v11305 = vld [vmem:[#allocation13 + $0x8] sm:$0xf]
    %v11306 = vld [vmem:[#allocation13 + $0xc] sm:$0xf]
    %v11307 = vld [vmem:[#allocation13 + $0x10] sm:$0xf]
    %v11308 = vld [vmem:[#allocation13 + $0x14] sm:$0xf]
    %v11309 = vld [vmem:[#allocation13 + $0x18] sm:$0xf]
    %v11310 = vld [vmem:[#allocation13 + $0x1c] sm:$0xf]
    %v11311 = vld [vmem:[#allocation13 + $0x20] sm:$0xf]
    %v11312 = vld [vmem:[#allocation13 + $0x24] sm:$0xf]
    %v11313 = vld [vmem:[#allocation13 + $0x28] sm:$0xf]
    %v11314 = vld [vmem:[#allocation13 + $0x2c] sm:$0xf]
    %v11315 = vld [vmem:[#allocation13 + $0x30] sm:$0xf]
    %v11316 = vld [vmem:[#allocation13 + $0x34] sm:$0xf]
    %v11317 = vld [vmem:[#allocation13 + $0x38] sm:$0xf]
    %v11318 = vld [vmem:[#allocation13 + $0x3c] sm:$0xf]
    %v11319 = vld [vmem:[#allocation13 + $0x40] sm:$0xf]
    %v11320 = vld [vmem:[#allocation13 + $0x44] sm:$0xf]
    %v11321 = vld [vmem:[#allocation13 + $0x48] sm:$0xf]
    %v11322 = vld [vmem:[#allocation13 + $0x4c] sm:$0xf]
    %v11323 = vld [vmem:[#allocation13 + $0x50] sm:$0xf]
    %v11324 = vld [vmem:[#allocation13 + $0x54] sm:$0xf]
    %v11325 = vld [vmem:[#allocation13 + $0x58] sm:$0xf]
    %v11326 = vld [vmem:[#allocation13 + $0x5c] sm:$0xf]
    %v11327 = vld [vmem:[#allocation13 + $0x60] sm:$0xf]
    %v11328 = vld [vmem:[#allocation13 + $0x64] sm:$0xf]
    %v11329 = vld [vmem:[#allocation13 + $0x68] sm:$0xf]
    %v11330 = vld [vmem:[#allocation13 + $0x6c] sm:$0xf]
    %v11331 = vld [vmem:[#allocation13 + $0x70] sm:$0xf]
    %v11332 = vld [vmem:[#allocation13 + $0x74] sm:$0xf]
    %v11333 = vld [vmem:[#allocation13 + $0x78] sm:$0xf]
    %v11334 = vld [vmem:[#allocation13 + $0x7c] sm:$0xf]
    %v11335 = vld [vmem:[#allocation14] sm:$0x1]
    %v11337 = vlaneseq
    %v11338 = vshrl.u32 %v11337, 7
    %v11339 = vsub.s32 0, %v11338
    %v11340 = vrot.slane %v11335, %v11339
    %v11374 = vunpack.c.l.b16 %v11303
    %v11375 = vunpack.c.l.b16 %v11304
    %v11376 = vunpack.c.l.b16 %v11305
    %v11377 = vunpack.c.l.b16 %v11306
    %v11378 = vunpack.c.l.b16 %v11307
    %v11379 = vunpack.c.l.b16 %v11308
    %v11380 = vunpack.c.l.b16 %v11309
    %v11381 = vunpack.c.l.b16 %v11310
    %v11382 = vunpack.c.l.b16 %v11311
    %v11383 = vunpack.c.l.b16 %v11312
    %v11384 = vunpack.c.l.b16 %v11313
    %v11385 = vunpack.c.l.b16 %v11314
    %v11386 = vunpack.c.l.b16 %v11315
    %v11387 = vunpack.c.l.b16 %v11316
    %v11388 = vunpack.c.l.b16 %v11317
    %v11389 = vunpack.c.l.b16 %v11318
    %v11390 = vunpack.c.l.b16 %v11319
    %v11391 = vunpack.c.l.b16 %v11320
    %v11392 = vunpack.c.l.b16 %v11321
    %v11393 = vunpack.c.l.b16 %v11322
    %v11394 = vunpack.c.l.b16 %v11323
    %v11395 = vunpack.c.l.b16 %v11324
    %v11396 = vunpack.c.l.b16 %v11325
    %v11397 = vunpack.c.l.b16 %v11326
    %v11398 = vunpack.c.l.b16 %v11327
    %v11399 = vunpack.c.l.b16 %v11328
    %v11400 = vunpack.c.l.b16 %v11329
    %v11401 = vunpack.c.l.b16 %v11330
    %v11402 = vunpack.c.l.b16 %v11331
    %v11403 = vunpack.c.l.b16 %v11332
    %v11404 = vunpack.c.l.b16 %v11333
    %v11405 = vunpack.c.l.b16 %v11334
    %v11406 = vpack.c.b16 %v11375, %v11374
    %v11407 = vpack.c.b16 %v11377, %v11376
    %v11408 = vpack.c.b16 %v11379, %v11378
    %v11409 = vpack.c.b16 %v11381, %v11380
    %v11410 = vpack.c.b16 %v11383, %v11382
    %v11411 = vpack.c.b16 %v11385, %v11384
    %v11412 = vpack.c.b16 %v11387, %v11386
    %v11413 = vpack.c.b16 %v11389, %v11388
    %v11414 = vpack.c.b16 %v11391, %v11390
    %v11415 = vpack.c.b16 %v11393, %v11392
    %v11416 = vpack.c.b16 %v11395, %v11394
    %v11417 = vpack.c.b16 %v11397, %v11396
    %v11418 = vpack.c.b16 %v11399, %v11398
    %v11419 = vpack.c.b16 %v11401, %v11400
    %v11420 = vpack.c.b16 %v11403, %v11402
    %v11421 = vpack.c.b16 %v11405, %v11404
    %11438 = vmatprep.subr.bf16.mxu0 0
    %11439 = vmatpush1.bf16.msra.mxu0 %v11406
    %11440 = vmatprep.subr.bf16.mxu0 0
    %11441 = vmatpush1.bf16.msra.mxu0 %v11407
    %11442 = vmatprep.subr.bf16.mxu0 0
    %11443 = vmatpush1.bf16.msra.mxu0 %v11408
    %11444 = vmatprep.subr.bf16.mxu0 0
    %11445 = vmatpush1.bf16.msra.mxu0 %v11409
    %11446 = vmatprep.subr.bf16.mxu0 0
    %11447 = vmatpush1.bf16.msra.mxu0 %v11410
    %11448 = vmatprep.subr.bf16.mxu0 0
    %11449 = vmatpush1.bf16.msra.mxu0 %v11411
    %11450 = vmatprep.subr.bf16.mxu0 0
    %11451 = vmatpush1.bf16.msra.mxu0 %v11412
    %11452 = vmatprep.subr.bf16.mxu0 0
    %11453 = vmatpush1.bf16.msra.mxu0 %v11413
    %11454 = vmatprep.subr.bf16.mxu0 0
    %11455 = vmatpush1.bf16.msra.mxu0 %v11414
    %11456 = vmatprep.subr.bf16.mxu0 0
    %11457 = vmatpush1.bf16.msra.mxu0 %v11415
    %11458 = vmatprep.subr.bf16.mxu0 0
    %11459 = vmatpush1.bf16.msra.mxu0 %v11416
    %11460 = vmatprep.subr.bf16.mxu0 0
    %11461 = vmatpush1.bf16.msra.mxu0 %v11417
    %11462 = vmatprep.subr.bf16.mxu0 0
    %11463 = vmatpush1.bf16.msra.mxu0 %v11418
    %11464 = vmatprep.subr.bf16.mxu0 0
    %11465 = vmatpush1.bf16.msra.mxu0 %v11419
    %11466 = vmatprep.subr.bf16.mxu0 0
    %11467 = vmatpush1.bf16.msra.mxu0 %v11420
    %11468 = vmatprep.subr.bf16.mxu0 0
    %11469 = vmatpush1.bf16.msra.mxu0 %v11421
    %11470 = vmatprep.mubr.bf16.mxu0 %v11302
    %11471 = vmatmul.mubr.bf16.gmra.mrb[0].mxu0 %v11301
    %v11472 = vpop.f32.mrb[0].mxu0
    %v11473 = vadd.f32 %v11340, %v11472
    %v11474 = vpop.f32.mrb[0].mxu0
    %v11475 = vpop.f32.mrb[0].mxu0
    %v11476 = vpop.f32.mrb[0].mxu0
    %11477 = vdwg.mxu0
    %11478 = vst [vmem:[#allocation16] sm:$0xff] %v11473
    // Predicated region
    $region70: #{classifier_forward.1} parent=1 // pred_check
      _
    $region71: #{classifier_forward.1} parent=1 // pred_check_branch
      %11480 = sbr.rel (0) target = $region73
    $region72: #{classifier_forward.1} parent=1 // pred_region
      %s11482 = ssub.s32 128, 128
      %11483 = vsyncadd [#allocation4], %s11482
      %s11485 = sshll.u32 [#allocation16], 4
      %s11486 = int_to_ptr.vmem [resolvable:$true] %s11485
      %11488 = dma.vmem_to_hbm [thread:$0]  %s11486, 128, %s9, [#allocation4]
    $region73: #{classifier_forward.1} parent=1 // pred_fallthru
      _
    // Predicated region
    $region74: #{classifier_forward.1} parent=1 // pred_check
      _
    $region75: #{classifier_forward.1} parent=1 // pred_check_branch
      %11490 = sbr.rel (0) target = $region77
    $region76: #{classifier_forward.1} parent=1 // pred_region
      %11491 = dma.done [#allocation4], 128
    $region77: #{classifier_forward.1} parent=1 // pred_fallthru
      _
    %11492 = vsyncpa [#allocation3], 1
    %11493 = vsyncpa [#allocation6], 1
    %11494 = vsyncpa [#allocation9], 1
    %11495 = vsyncpa [#allocation12], 1
    %11496 = vsyncpa [#allocation15], 1
    %11497 = vsyncpa [#allocation4], 1

</llo_original>
